<compile_context>
chip_gen: v7x
topology: tpu7x:2x2x1
jax: 0.10.0
libtpu: 0.0.40
codegen_flags: <defaults>
</compile_context>

<pallas_src>
import functools

import jax
import jax.numpy as jnp
from jax.experimental import pallas as pl
from jax.experimental.pallas import tpu as pltpu

EXPANSION = 4
BLOCKS = (3, 8, 36, 3)                 # ResNet-152 block counts
BASE_WIDTH = 8                         # scaled down from 64 for the demo
WIDTHS = tuple(BASE_WIDTH * m for m in (1, 2, 4, 8))
STRIDES = (1, 2, 2, 2)
FEAT_DIM = WIDTHS[-1] * EXPANSION      # analogue of resnet152.fc.in_features
BN_EPS = 1e-5
LANE = 128                             # TPU lane width; channels padded to multiples of this
_TM = 256                              # M tile (used when M is large & divisible)


def _pad_c(c):
    return ((c + LANE - 1) // LANE) * LANE


# ---------------------------------------------------------------------------
# Pallas kernels
# ---------------------------------------------------------------------------
def _mm_kernel(x_ref, w_ref, s_ref, o_ref, *, relu):
    """o = act(x @ w + shift)   (bf16 in, f32 MXU accumulation, bf16 out)."""
    y = jnp.dot(x_ref[...], w_ref[...], preferred_element_type=jnp.float32)
    y = y + s_ref[...]
    if relu:
        y = jnp.maximum(y, 0.0)
    o_ref[...] = y.astype(o_ref.dtype)


def _mm_res_kernel(x_ref, w_ref, s_ref, r_ref, o_ref, *, relu):
    """o = act(x @ w + shift + residual)."""
    y = jnp.dot(x_ref[...], w_ref[...], preferred_element_type=jnp.float32)
    y = y + s_ref[...] + r_ref[...].astype(jnp.float32)
    if relu:
        y = jnp.maximum(y, 0.0)
    o_ref[...] = y.astype(o_ref.dtype)


def _max9_kernel(x_ref, o_ref):
    # x_ref: (9, M, C) stacked shifted windows -> elementwise max over the 9 taps.
    o_ref[...] = jnp.max(x_ref[...], axis=0)


def _mean_kernel(x_ref, o_ref):
    # x_ref: (N, H*W, C) -> global average pool over the spatial axis (f32 output).
    o_ref[...] = jnp.mean(x_ref[...].astype(jnp.float32), axis=1)


# ---------------------------------------------------------------------------
# Fused matmul + shift [+ residual] + ReLU wrapper
# ---------------------------------------------------------------------------
def _matmul_shift_act(x, w, shift, *, residual, relu):
    """y = act(x @ w + shift [+ residual]).  x:(M,K), w:(K,N) bf16, shift:(1,N) f32."""
    M, K = x.shape
    N = w.shape[1]
    x = x.astype(jnp.bfloat16)

    # Tile M (marked "parallel": feeds both TensorCores on v7x, bounds VMEM per step).
    TM = _TM if (M > _TM and M % _TM == 0) else M
    nM = M // TM

    in_specs = [
        pl.BlockSpec((TM, K), lambda i: (i, 0)),   # activations (full-extent K block)
        pl.BlockSpec((K, N), lambda i: (0, 0)),    # BN-folded weights
        pl.BlockSpec((1, N), lambda i: (0, 0)),    # BN shift
    ]
    args = [x, w, shift]
    if residual is None:
        kernel = functools.partial(_mm_kernel, relu=relu)
    else:
        kernel = functools.partial(_mm_res_kernel, relu=relu)
        in_specs.append(pl.BlockSpec((TM, N), lambda i: (i, 0)))
        args.append(residual.astype(jnp.bfloat16))

    return pl.pallas_call(
        kernel,
        out_shape=jax.ShapeDtypeStruct((M, N), jnp.bfloat16),
        grid=(nM,),
        in_specs=in_specs,
        out_specs=pl.BlockSpec((TM, N), lambda i: (i, 0)),
        compiler_params=pltpu.CompilerParams(dimension_semantics=("parallel",)),
    )(*args)


# ---------------------------------------------------------------------------
# Conv / pooling wrappers (glue is plain JAX traced inside the outer jit)
# ---------------------------------------------------------------------------
def _im2col(x, kh, kw, stride, pad):
    """x: (N,H,W,C) -> patches (N*Ho*Wo, kh*kw*C)."""
    N, H, W, C = x.shape
    if pad:
        x = jnp.pad(x, ((0, 0), (pad, pad), (pad, pad), (0, 0)))
    Ho = (H + 2 * pad - kh) // stride + 1
    Wo = (W + 2 * pad - kw) // stride + 1
    cols = [x[:, i:i + stride * (Ho - 1) + 1:stride,
              j:j + stride * (Wo - 1) + 1:stride, :]
            for i in range(kh) for j in range(kw)]
    patches = jnp.concatenate(cols, axis=-1)            # (N, Ho, Wo, kh*kw*C)
    return patches.reshape(N * Ho * Wo, kh * kw * C), (N, Ho, Wo)


def conv1x1_bn_act(x, w, shift, *, relu, stride=1, residual=None):
    """1x1 conv (= matmul) + folded-BN shift [+ residual] [+ ReLU] on NHWC."""
    if stride != 1:
        x = x[:, ::stride, ::stride, :]
    N, H, W, C = x.shape
    M = N * H * W
    res = None if residual is None else residual.reshape(M, -1)
    y = _matmul_shift_act(x.reshape(M, C), w, shift, residual=res, relu=relu)
    return y.reshape(N, H, W, w.shape[1])


def conv_kxk_bn_act(x, w, shift, *, k, stride, pad, relu):
    """kxk conv via im2col + fused matmul (no residual on these paths)."""
    patches, (N, Ho, Wo) = _im2col(x, k, k, stride, pad)
    y = _matmul_shift_act(patches, w, shift, residual=None, relu=relu)
    return y.reshape(N, Ho, Wo, w.shape[1])


def maxpool_3x3_s2_p1(x):
    """PyTorch MaxPool2d(kernel_size=3, stride=2, padding=1) on NHWC (lane-dense C)."""
    N, H, W, C = x.shape
    Ho = (H + 2 - 3) // 2 + 1
    Wo = (W + 2 - 3) // 2 + 1
    xp = jnp.pad(x, ((0, 0), (1, 1), (1, 1), (0, 0)), constant_values=-jnp.inf)
    taps = [xp[:, i:i + 2 * (Ho - 1) + 1:2, j:j + 2 * (Wo - 1) + 1:2, :]
            for i in range(3) for j in range(3)]
    stacked = jnp.stack(taps, axis=0).reshape(9, N * Ho * Wo, C)
    out = pl.pallas_call(
        _max9_kernel,
        out_shape=jax.ShapeDtypeStruct((N * Ho * Wo, C), x.dtype),
        grid=(1,),
        in_specs=[pl.BlockSpec((9, N * Ho * Wo, C), lambda i: (0, 0, 0))],
        out_specs=pl.BlockSpec((N * Ho * Wo, C), lambda i: (0, 0)),
    )(stacked)
    return out.reshape(N, Ho, Wo, C)


def avgpool_flatten(x):
    """AdaptiveAvgPool2d((1,1)) + view(N, -1) on NHWC -> (N, C) f32."""
    N, H, W, C = x.shape
    xr = x.reshape(N, H * W, C)
    return pl.pallas_call(
        _mean_kernel,
        out_shape=jax.ShapeDtypeStruct((N, C), jnp.float32),
        grid=(1,),
        in_specs=[pl.BlockSpec((N, H * W, C), lambda i: (0, 0, 0))],
        out_specs=pl.BlockSpec((N, C), lambda i: (0, 0)),
    )(xr)


# ---------------------------------------------------------------------------
# Synthetic, deterministic parameters (ResNet-152 topology, scaled-down widths,
# BN folded into the conv weights, channels padded to LANE multiples, bf16 weights)
# ---------------------------------------------------------------------------
class ParamGen:
    def __init__(self, key):
        self._key = key
        self._i = 0

    def next(self, shape, scale=1.0):
        k = jax.random.fold_in(self._key, self._i)
        self._i += 1
        return scale * jax.random.normal(k, shape, dtype=jnp.float32)


def _make_conv_bn(pg, kh, kw, cin, cout, pad_in=True):
    """Returns (weight (kh*kw*cin_p, cout_p) bf16 with BN scale folded in, shift (1,cout_p) f32)."""
    w = pg.next((kh, kw, cin, cout), scale=0.5 / float(kh * kw * cin) ** 0.5)
    gamma = 1.0 + 0.05 * pg.next((cout,))
    beta = 0.05 * pg.next((cout,))
    mean = 0.05 * pg.next((cout,))
    var = 1.0 + jnp.abs(pg.next((cout,)))
    scale = gamma / jnp.sqrt(var + BN_EPS)
    shift = beta - mean * scale
    w = w * scale                                    # fold BN scale (inference mode)
    cin_p = _pad_c(cin) if pad_in else cin
    cout_p = _pad_c(cout)
    w = jnp.pad(w, ((0, 0), (0, 0), (0, cin_p - cin), (0, cout_p - cout)))
    shift = jnp.pad(shift, (0, cout_p - cout))       # padded channels get shift 0 -> stay 0
    return (w.reshape(kh * kw * cin_p, cout_p).astype(jnp.bfloat16),
            shift.reshape(1, cout_p).astype(jnp.float32))


def _make_bottleneck(pg, inplanes, width, stride):
    out_c = width * EXPANSION
    p = {}
    p["w1"], p["s1"] = _make_conv_bn(pg, 1, 1, inplanes, width)
    p["w2"], p["s2"] = _make_conv_bn(pg, 3, 3, width, width)
    p["w3"], p["s3"] = _make_conv_bn(pg, 1, 1, width, out_c)
    if stride != 1 or inplanes != out_c:
        p["dsw"], p["dss"] = _make_conv_bn(pg, 1, 1, inplanes, out_c)
    return p


def make_resnet152fc_params(key, in_ch=3):
    pg = ParamGen(key)
    conv1_w, conv1_s = _make_conv_bn(pg, 7, 7, in_ch, BASE_WIDTH, pad_in=False)
    params = {"conv1_w": conv1_w, "conv1_s": conv1_s, "layers": []}
    inplanes = BASE_WIDTH
    for nblocks, width, stride in zip(BLOCKS, WIDTHS, STRIDES):
        first = _make_bottleneck(pg, inplanes, width, stride)
        inplanes = width * EXPANSION
        rest = [_make_bottleneck(pg, inplanes, width, 1) for _ in range(nblocks - 1)]
        rest_stacked = (jax.tree_util.tree_map(lambda *xs: jnp.stack(xs, 0), *rest)
                        if rest else None)
        params["layers"].append({"first": first, "rest": rest_stacked})
    return params


# ---------------------------------------------------------------------------
# Forward pass (mirrors ResNet152Fc.forward) — intended to run under one jax.jit
# ---------------------------------------------------------------------------
def _bottleneck_forward(x, p, stride):
    out = conv1x1_bn_act(x, p["w1"], p["s1"], relu=True)
    out = conv_kxk_bn_act(out, p["w2"], p["s2"], k=3, stride=stride, pad=1, relu=True)
    if "dsw" in p:
        identity = conv1x1_bn_act(x, p["dsw"], p["dss"], stride=stride, relu=False)
    else:
        identity = x
    # conv3 + BN shift + residual add + ReLU fused in one Pallas kernel
    return conv1x1_bn_act(out, p["w3"], p["s3"], relu=True, residual=identity)


def resnet152fc_forward(params, x_nchw):
    x = jnp.transpose(x_nchw, (0, 2, 3, 1)).astype(jnp.bfloat16)   # NCHW -> NHWC, bf16
    x = conv_kxk_bn_act(x, params["conv1_w"], params["conv1_s"],
                        k=7, stride=2, pad=3, relu=True)
    x = maxpool_3x3_s2_p1(x)
    for layer, stride in zip(params["layers"], STRIDES):
        x = _bottleneck_forward(x, layer["first"], stride)
        if layer["rest"] is not None:
            def body(h, bp):
                return _bottleneck_forward(h, bp, 1), None
            x, _ = jax.lax.scan(body, x, layer["rest"])
    feats = avgpool_flatten(x)          # (N, C_pad) f32
    return feats[:, :FEAT_DIM]          # drop lane padding -> x.view(x.size(0), -1) analogue


# ---------------------------------------------------------------------------
if __name__ == "__main__":
    key = jax.random.PRNGKey(0)
    params = make_resnet152fc_params(jax.random.fold_in(key, 1))
    # small input consistent with the module: NCHW, 3 input channels
    x = jax.random.normal(jax.random.fold_in(key, 2), (2, 3, 32, 32), dtype=jnp.float32)

    forward = jax.jit(resnet152fc_forward)
    feats = jax.block_until_ready(forward(params, x))

    assert feats.shape == (2, FEAT_DIM), feats.shape
    assert bool(jnp.all(jnp.isfinite(feats)))
    print("KERNEL_OK")
</pallas_src>

<mosaic_0001>
module attributes {stable_mosaic.version = 11 : i64} {
  func.func @_mm_kernel(%arg0: i32, %arg1: memref<256x147xbf16, #tpu.memory_space<vmem>>, %arg2: memref<147x128xbf16, #tpu.memory_space<vmem>>, %arg3: memref<1x128xf32, #tpu.memory_space<vmem>>, %arg4: memref<256x128xbf16, #tpu.memory_space<vmem>>) attributes {dimension_semantics = [#tpu.dimension_semantics<parallel>], iteration_bounds = array<i64: 2>, scalar_prefetch = 0 : i64, scratch_operands = 0 : i64, tpu.core_type = #tpu.core_type<tc>, window_params = [{transform_indices = @transform_0, window_bounds = array<i64: 256, 147>}, {pipeline_mode = #tpu.pipeline_mode<synchronous>, transform_indices = @transform_1, window_bounds = array<i64: 147, 128>}, {pipeline_mode = #tpu.pipeline_mode<synchronous>, transform_indices = @transform_2, window_bounds = array<i64: 1, 128>}, {transform_indices = @transform_3, window_bounds = array<i64: 256, 128>}]} {
    %c0 = arith.constant 0 : index
    %c0_0 = arith.constant 0 : index
    %0 = vector.load %arg1[%c0, %c0_0] : memref<256x147xbf16, #tpu.memory_space<vmem>>, vector<256x147xbf16>
    %c0_1 = arith.constant 0 : index
    %c0_2 = arith.constant 0 : index
    %1 = vector.load %arg2[%c0_1, %c0_2] : memref<147x128xbf16, #tpu.memory_space<vmem>>, vector<147x128xbf16>
    %cst = arith.constant dense<0.000000e+00> : vector<256x128xf32>
    %2 = tpu.matmul %0, %1, %cst {dimension_numbers = #tpu.dot_dimension_numbers<[1], [0], [0], [1], [0, 0, 1, 1], [], []>} : vector<256x147xbf16>, vector<147x128xbf16>, vector<256x128xf32> -> vector<256x128xf32>
    %c0_3 = arith.constant 0 : index
    %c0_4 = arith.constant 0 : index
    %3 = vector.load %arg3[%c0_3, %c0_4] : memref<1x128xf32, #tpu.memory_space<vmem>>, vector<1x128xf32>
    %4 = vector.broadcast %3 : vector<1x128xf32> to vector<256x128xf32>
    %5 = arith.addf %2, %4 : vector<256x128xf32>
    %cst_5 = arith.constant 0.000000e+00 : f32
    %6 = vector.broadcast %cst_5 : f32 to vector<256x128xf32>
    %7 = arith.maximumf %5, %6 : vector<256x128xf32>
    %8 = arith.truncf %7 : vector<256x128xf32> to vector<256x128xbf16>
    %c0_6 = arith.constant 0 : index
    %c0_7 = arith.constant 0 : index
    %9 = vector.load %arg4[%c0_6, %c0_7] : memref<256x128xbf16, #tpu.memory_space<vmem>>, vector<256x128xbf16>
    tpu.vector_store %arg4[%c0_6, %c0_7], %8 {strides = array<i32>} : memref<256x128xbf16, #tpu.memory_space<vmem>>, vector<256x128xbf16>,
    return
  }
  func.func @transform_0(%arg0: i32) -> (i32, i32) {
    %c0_i32 = arith.constant 0 : i32
    %c0_i32_0 = arith.constant 0 : i32
    return %arg0, %c0_i32 : i32, i32
  }
  func.func @transform_1(%arg0: i32) -> (i32, i32) {
    %c0_i32 = arith.constant 0 : i32
    %c0_i32_0 = arith.constant 0 : i32
    %c0_i32_1 = arith.constant 0 : i32
    return %c0_i32, %c0_i32_0 : i32, i32
  }
  func.func @transform_2(%arg0: i32) -> (i32, i32) {
    %c0_i32 = arith.constant 0 : i32
    %c0_i32_0 = arith.constant 0 : i32
    %c0_i32_1 = arith.constant 0 : i32
    return %c0_i32, %c0_i32_0 : i32, i32
  }
  func.func @transform_3(%arg0: i32) -> (i32, i32) {
    %c0_i32 = arith.constant 0 : i32
    %c0_i32_0 = arith.constant 0 : i32
    return %arg0, %c0_i32 : i32, i32
  }
}

module attributes {stable_mosaic.version = 11 : i64} {
  func.func @_max9_kernel(%arg0: i32, %arg1: memref<9x128x128xbf16, #tpu.memory_space<vmem>>, %arg2: memref<128x128xbf16, #tpu.memory_space<vmem>>) attributes {dimension_semantics = [#tpu.dimension_semantics<arbitrary>], iteration_bounds = array<i64: 1>, scalar_prefetch = 0 : i64, scratch_operands = 0 : i64, tpu.core_type = #tpu.core_type<tc>, window_params = [{pipeline_mode = #tpu.pipeline_mode<synchronous>, transform_indices = @transform_0, window_bounds = array<i64: 9, 128, 128>}, {pipeline_mode = #tpu.pipeline_mode<synchronous>, transform_indices = @transform_1, window_bounds = array<i64: 128, 128>}]} {
    %c0 = arith.constant 0 : index
    %c0_0 = arith.constant 0 : index
    %c0_1 = arith.constant 0 : index
    %0 = vector.load %arg1[%c0, %c0_0, %c0_1] : memref<9x128x128xbf16, #tpu.memory_space<vmem>>, vector<9x128x128xbf16>
    %cst = arith.constant dense<0xFF80> : vector<128x128xbf16>
    %1 = vector.multi_reduction <maximumf>, %0, %cst [0] : vector<9x128x128xbf16> to vector<128x128xbf16>
    %c0_2 = arith.constant 0 : index
    %c0_3 = arith.constant 0 : index
    %2 = vector.load %arg2[%c0_2, %c0_3] : memref<128x128xbf16, #tpu.memory_space<vmem>>, vector<128x128xbf16>
    tpu.vector_store %arg2[%c0_2, %c0_3], %1 {strides = array<i32>} : memref<128x128xbf16, #tpu.memory_space<vmem>>, vector<128x128xbf16>,
    return
  }
  func.func @transform_0(%arg0: i32) -> (i32, i32, i32) {
    %c0_i32 = arith.constant 0 : i32
    %c0_i32_0 = arith.constant 0 : i32
    %c0_i32_1 = arith.constant 0 : i32
    %c0_i32_2 = arith.constant 0 : i32
    return %c0_i32, %c0_i32_0, %c0_i32_1 : i32, i32, i32
  }
  func.func @transform_1(%arg0: i32) -> (i32, i32) {
    %c0_i32 = arith.constant 0 : i32
    %c0_i32_0 = arith.constant 0 : i32
    %c0_i32_1 = arith.constant 0 : i32
    return %c0_i32, %c0_i32_0 : i32, i32
  }
}

module attributes {stable_mosaic.version = 11 : i64} {
  func.func @_mm_kernel(%arg0: i32, %arg1: memref<128x128xbf16, #tpu.memory_space<vmem>>, %arg2: memref<128x128xbf16, #tpu.memory_space<vmem>>, %arg3: memref<1x128xf32, #tpu.memory_space<vmem>>, %arg4: memref<128x128xbf16, #tpu.memory_space<vmem>>) attributes {dimension_semantics = [#tpu.dimension_semantics<parallel>], iteration_bounds = array<i64: 1>, scalar_prefetch = 0 : i64, scratch_operands = 0 : i64, tpu.core_type = #tpu.core_type<tc>, window_params = [{transform_indices = @transform_0, window_bounds = array<i64: 128, 128>}, {pipeline_mode = #tpu.pipeline_mode<synchronous>, transform_indices = @transform_1, window_bounds = array<i64: 128, 128>}, {pipeline_mode = #tpu.pipeline_mode<synchronous>, transform_indices = @transform_2, window_bounds = array<i64: 1, 128>}, {transform_indices = @transform_3, window_bounds = array<i64: 128, 128>}]} {
    %c0 = arith.constant 0 : index
    %c0_0 = arith.constant 0 : index
    %0 = vector.load %arg1[%c0, %c0_0] : memref<128x128xbf16, #tpu.memory_space<vmem>>, vector<128x128xbf16>
    %c0_1 = arith.constant 0 : index
    %c0_2 = arith.constant 0 : index
    %1 = vector.load %arg2[%c0_1, %c0_2] : memref<128x128xbf16, #tpu.memory_space<vmem>>, vector<128x128xbf16>
    %cst = arith.constant dense<0.000000e+00> : vector<128x128xf32>
    %2 = tpu.matmul %0, %1, %cst {dimension_numbers = #tpu.dot_dimension_numbers<[1], [0], [0], [1], [0, 0, 1, 1], [], []>} : vector<128x128xbf16>, vector<128x128xbf16>, vector<128x128xf32> -> vector<128x128xf32>
    %c0_3 = arith.constant 0 : index
    %c0_4 = arith.constant 0 : index
    %3 = vector.load %arg3[%c0_3, %c0_4] : memref<1x128xf32, #tpu.memory_space<vmem>>, vector<1x128xf32>
    %4 = vector.broadcast %3 : vector<1x128xf32> to vector<128x128xf32>
    %5 = arith.addf %2, %4 : vector<128x128xf32>
    %cst_5 = arith.constant 0.000000e+00 : f32
    %6 = vector.broadcast %cst_5 : f32 to vector<128x128xf32>
    %7 = arith.maximumf %5, %6 : vector<128x128xf32>
    %8 = arith.truncf %7 : vector<128x128xf32> to vector<128x128xbf16>
    %c0_6 = arith.constant 0 : index
    %c0_7 = arith.constant 0 : index
    %9 = vector.load %arg4[%c0_6, %c0_7] : memref<128x128xbf16, #tpu.memory_space<vmem>>, vector<128x128xbf16>
    tpu.vector_store %arg4[%c0_6, %c0_7], %8 {strides = array<i32>} : memref<128x128xbf16, #tpu.memory_space<vmem>>, vector<128x128xbf16>,
    return
  }
  func.func @transform_0(%arg0: i32) -> (i32, i32) {
    %c0_i32 = arith.constant 0 : i32
    %c0_i32_0 = arith.constant 0 : i32
    return %arg0, %c0_i32 : i32, i32
  }
  func.func @transform_1(%arg0: i32) -> (i32, i32) {
    %c0_i32 = arith.constant 0 : i32
    %c0_i32_0 = arith.constant 0 : i32
    %c0_i32_1 = arith.constant 0 : i32
    return %c0_i32, %c0_i32_0 : i32, i32
  }
  func.func @transform_2(%arg0: i32) -> (i32, i32) {
    %c0_i32 = arith.constant 0 : i32
    %c0_i32_0 = arith.constant 0 : i32
    %c0_i32_1 = arith.constant 0 : i32
    return %c0_i32, %c0_i32_0 : i32, i32
  }
  func.func @transform_3(%arg0: i32) -> (i32, i32) {
    %c0_i32 = arith.constant 0 : i32
    %c0_i32_0 = arith.constant 0 : i32
    return %arg0, %c0_i32 : i32, i32
  }
}

module attributes {stable_mosaic.version = 11 : i64} {
  func.func @_mm_kernel(%arg0: i32, %arg1: memref<128x128xbf16, #tpu.memory_space<vmem>>, %arg2: memref<128x128xbf16, #tpu.memory_space<vmem>>, %arg3: memref<1x128xf32, #tpu.memory_space<vmem>>, %arg4: memref<128x128xbf16, #tpu.memory_space<vmem>>) attributes {dimension_semantics = [#tpu.dimension_semantics<parallel>], iteration_bounds = array<i64: 1>, scalar_prefetch = 0 : i64, scratch_operands = 0 : i64, tpu.core_type = #tpu.core_type<tc>, window_params = [{transform_indices = @transform_0, window_bounds = array<i64: 128, 128>}, {pipeline_mode = #tpu.pipeline_mode<synchronous>, transform_indices = @transform_1, window_bounds = array<i64: 128, 128>}, {pipeline_mode = #tpu.pipeline_mode<synchronous>, transform_indices = @transform_2, window_bounds = array<i64: 1, 128>}, {transform_indices = @transform_3, window_bounds = array<i64: 128, 128>}]} {
    %c0 = arith.constant 0 : index
    %c0_0 = arith.constant 0 : index
    %0 = vector.load %arg1[%c0, %c0_0] : memref<128x128xbf16, #tpu.memory_space<vmem>>, vector<128x128xbf16>
    %c0_1 = arith.constant 0 : index
    %c0_2 = arith.constant 0 : index
    %1 = vector.load %arg2[%c0_1, %c0_2] : memref<128x128xbf16, #tpu.memory_space<vmem>>, vector<128x128xbf16>
    %cst = arith.constant dense<0.000000e+00> : vector<128x128xf32>
    %2 = tpu.matmul %0, %1, %cst {dimension_numbers = #tpu.dot_dimension_numbers<[1], [0], [0], [1], [0, 0, 1, 1], [], []>} : vector<128x128xbf16>, vector<128x128xbf16>, vector<128x128xf32> -> vector<128x128xf32>
    %c0_3 = arith.constant 0 : index
    %c0_4 = arith.constant 0 : index
    %3 = vector.load %arg3[%c0_3, %c0_4] : memref<1x128xf32, #tpu.memory_space<vmem>>, vector<1x128xf32>
    %4 = vector.broadcast %3 : vector<1x128xf32> to vector<128x128xf32>
    %5 = arith.addf %2, %4 : vector<128x128xf32>
    %6 = arith.truncf %5 : vector<128x128xf32> to vector<128x128xbf16>
    %c0_5 = arith.constant 0 : index
    %c0_6 = arith.constant 0 : index
    %7 = vector.load %arg4[%c0_5, %c0_6] : memref<128x128xbf16, #tpu.memory_space<vmem>>, vector<128x128xbf16>
    tpu.vector_store %arg4[%c0_5, %c0_6], %6 {strides = array<i32>} : memref<128x128xbf16, #tpu.memory_space<vmem>>, vector<128x128xbf16>,
    return
  }
  func.func @transform_0(%arg0: i32) -> (i32, i32) {
    %c0_i32 = arith.constant 0 : i32
    %c0_i32_0 = arith.constant 0 : i32
    return %arg0, %c0_i32 : i32, i32
  }
  func.func @transform_1(%arg0: i32) -> (i32, i32) {
    %c0_i32 = arith.constant 0 : i32
    %c0_i32_0 = arith.constant 0 : i32
    %c0_i32_1 = arith.constant 0 : i32
    return %c0_i32, %c0_i32_0 : i32, i32
  }
  func.func @transform_2(%arg0: i32) -> (i32, i32) {
    %c0_i32 = arith.constant 0 : i32
    %c0_i32_0 = arith.constant 0 : i32
    %c0_i32_1 = arith.constant 0 : i32
    return %c0_i32, %c0_i32_0 : i32, i32
  }
  func.func @transform_3(%arg0: i32) -> (i32, i32) {
    %c0_i32 = arith.constant 0 : i32
    %c0_i32_0 = arith.constant 0 : i32
    return %arg0, %c0_i32 : i32, i32
  }
}

module attributes {stable_mosaic.version = 11 : i64} {
  func.func @_mm_res_kernel(%arg0: i32, %arg1: memref<128x128xbf16, #tpu.memory_space<vmem>>, %arg2: memref<128x128xbf16, #tpu.memory_space<vmem>>, %arg3: memref<1x128xf32, #tpu.memory_space<vmem>>, %arg4: memref<128x128xbf16, #tpu.memory_space<vmem>>, %arg5: memref<128x128xbf16, #tpu.memory_space<vmem>>) attributes {dimension_semantics = [#tpu.dimension_semantics<parallel>], iteration_bounds = array<i64: 1>, scalar_prefetch = 0 : i64, scratch_operands = 0 : i64, tpu.core_type = #tpu.core_type<tc>, window_params = [{transform_indices = @transform_0, window_bounds = array<i64: 128, 128>}, {pipeline_mode = #tpu.pipeline_mode<synchronous>, transform_indices = @transform_1, window_bounds = array<i64: 128, 128>}, {pipeline_mode = #tpu.pipeline_mode<synchronous>, transform_indices = @transform_2, window_bounds = array<i64: 1, 128>}, {transform_indices = @transform_3, window_bounds = array<i64: 128, 128>}, {transform_indices = @transform_4, window_bounds = array<i64: 128, 128>}]} {
    %c0 = arith.constant 0 : index
    %c0_0 = arith.constant 0 : index
    %0 = vector.load %arg1[%c0, %c0_0] : memref<128x128xbf16, #tpu.memory_space<vmem>>, vector<128x128xbf16>
    %c0_1 = arith.constant 0 : index
    %c0_2 = arith.constant 0 : index
    %1 = vector.load %arg2[%c0_1, %c0_2] : memref<128x128xbf16, #tpu.memory_space<vmem>>, vector<128x128xbf16>
    %cst = arith.constant dense<0.000000e+00> : vector<128x128xf32>
    %2 = tpu.matmul %0, %1, %cst {dimension_numbers = #tpu.dot_dimension_numbers<[1], [0], [0], [1], [0, 0, 1, 1], [], []>} : vector<128x128xbf16>, vector<128x128xbf16>, vector<128x128xf32> -> vector<128x128xf32>
    %c0_3 = arith.constant 0 : index
    %c0_4 = arith.constant 0 : index
    %3 = vector.load %arg3[%c0_3, %c0_4] : memref<1x128xf32, #tpu.memory_space<vmem>>, vector<1x128xf32>
    %4 = vector.broadcast %3 : vector<1x128xf32> to vector<128x128xf32>
    %5 = arith.addf %2, %4 : vector<128x128xf32>
    %c0_5 = arith.constant 0 : index
    %c0_6 = arith.constant 0 : index
    %6 = vector.load %arg4[%c0_5, %c0_6] : memref<128x128xbf16, #tpu.memory_space<vmem>>, vector<128x128xbf16>
    %7 = arith.extf %6 : vector<128x128xbf16> to vector<128x128xf32>
    %8 = arith.addf %5, %7 : vector<128x128xf32>
    %cst_7 = arith.constant 0.000000e+00 : f32
    %9 = vector.broadcast %cst_7 : f32 to vector<128x128xf32>
    %10 = arith.maximumf %8, %9 : vector<128x128xf32>
    %11 = arith.truncf %10 : vector<128x128xf32> to vector<128x128xbf16>
    %c0_8 = arith.constant 0 : index
    %c0_9 = arith.constant 0 : index
    %12 = vector.load %arg5[%c0_8, %c0_9] : memref<128x128xbf16, #tpu.memory_space<vmem>>, vector<128x128xbf16>
    tpu.vector_store %arg5[%c0_8, %c0_9], %11 {strides = array<i32>} : memref<128x128xbf16, #tpu.memory_space<vmem>>, vector<128x128xbf16>,
    return
  }
  func.func @transform_0(%arg0: i32) -> (i32, i32) {
    %c0_i32 = arith.constant 0 : i32
    %c0_i32_0 = arith.constant 0 : i32
    return %arg0, %c0_i32 : i32, i32
  }
  func.func @transform_1(%arg0: i32) -> (i32, i32) {
    %c0_i32 = arith.constant 0 : i32
    %c0_i32_0 = arith.constant 0 : i32
    %c0_i32_1 = arith.constant 0 : i32
    return %c0_i32, %c0_i32_0 : i32, i32
  }
  func.func @transform_2(%arg0: i32) -> (i32, i32) {
    %c0_i32 = arith.constant 0 : i32
    %c0_i32_0 = arith.constant 0 : i32
    %c0_i32_1 = arith.constant 0 : i32
    return %c0_i32, %c0_i32_0 : i32, i32
  }
  func.func @transform_3(%arg0: i32) -> (i32, i32) {
    %c0_i32 = arith.constant 0 : i32
    %c0_i32_0 = arith.constant 0 : i32
    return %arg0, %c0_i32 : i32, i32
  }
  func.func @transform_4(%arg0: i32) -> (i32, i32) {
    %c0_i32 = arith.constant 0 : i32
    %c0_i32_0 = arith.constant 0 : i32
    return %arg0, %c0_i32 : i32, i32
  }
}

module attributes {stable_mosaic.version = 11 : i64} {
  func.func @_mm_kernel(%arg0: i32, %arg1: memref<128x1152xbf16, #tpu.memory_space<vmem>>, %arg2: memref<1152x128xbf16, #tpu.memory_space<vmem>>, %arg3: memref<1x128xf32, #tpu.memory_space<vmem>>, %arg4: memref<128x128xbf16, #tpu.memory_space<vmem>>) attributes {dimension_semantics = [#tpu.dimension_semantics<parallel>], iteration_bounds = array<i64: 1>, scalar_prefetch = 0 : i64, scratch_operands = 0 : i64, tpu.core_type = #tpu.core_type<tc>, window_params = [{transform_indices = @transform_0, window_bounds = array<i64: 128, 1152>}, {pipeline_mode = #tpu.pipeline_mode<synchronous>, transform_indices = @transform_1, window_bounds = array<i64: 1152, 128>}, {pipeline_mode = #tpu.pipeline_mode<synchronous>, transform_indices = @transform_2, window_bounds = array<i64: 1, 128>}, {transform_indices = @transform_3, window_bounds = array<i64: 128, 128>}]} {
    %c0 = arith.constant 0 : index
    %c0_0 = arith.constant 0 : index
    %0 = vector.load %arg1[%c0, %c0_0] : memref<128x1152xbf16, #tpu.memory_space<vmem>>, vector<128x1152xbf16>
    %c0_1 = arith.constant 0 : index
    %c0_2 = arith.constant 0 : index
    %1 = vector.load %arg2[%c0_1, %c0_2] : memref<1152x128xbf16, #tpu.memory_space<vmem>>, vector<1152x128xbf16>
    %cst = arith.constant dense<0.000000e+00> : vector<128x128xf32>
    %2 = tpu.matmul %0, %1, %cst {dimension_numbers = #tpu.dot_dimension_numbers<[1], [0], [0], [1], [0, 0, 1, 1], [], []>} : vector<128x1152xbf16>, vector<1152x128xbf16>, vector<128x128xf32> -> vector<128x128xf32>
    %c0_3 = arith.constant 0 : index
    %c0_4 = arith.constant 0 : index
    %3 = vector.load %arg3[%c0_3, %c0_4] : memref<1x128xf32, #tpu.memory_space<vmem>>, vector<1x128xf32>
    %4 = vector.broadcast %3 : vector<1x128xf32> to vector<128x128xf32>
    %5 = arith.addf %2, %4 : vector<128x128xf32>
    %cst_5 = arith.constant 0.000000e+00 : f32
    %6 = vector.broadcast %cst_5 : f32 to vector<128x128xf32>
    %7 = arith.maximumf %5, %6 : vector<128x128xf32>
    %8 = arith.truncf %7 : vector<128x128xf32> to vector<128x128xbf16>
    %c0_6 = arith.constant 0 : index
    %c0_7 = arith.constant 0 : index
    %9 = vector.load %arg4[%c0_6, %c0_7] : memref<128x128xbf16, #tpu.memory_space<vmem>>, vector<128x128xbf16>
    tpu.vector_store %arg4[%c0_6, %c0_7], %8 {strides = array<i32>} : memref<128x128xbf16, #tpu.memory_space<vmem>>, vector<128x128xbf16>,
    return
  }
  func.func @transform_0(%arg0: i32) -> (i32, i32) {
    %c0_i32 = arith.constant 0 : i32
    %c0_i32_0 = arith.constant 0 : i32
    return %arg0, %c0_i32 : i32, i32
  }
  func.func @transform_1(%arg0: i32) -> (i32, i32) {
    %c0_i32 = arith.constant 0 : i32
    %c0_i32_0 = arith.constant 0 : i32
    %c0_i32_1 = arith.constant 0 : i32
    return %c0_i32, %c0_i32_0 : i32, i32
  }
  func.func @transform_2(%arg0: i32) -> (i32, i32) {
    %c0_i32 = arith.constant 0 : i32
    %c0_i32_0 = arith.constant 0 : i32
    %c0_i32_1 = arith.constant 0 : i32
    return %c0_i32, %c0_i32_0 : i32, i32
  }
  func.func @transform_3(%arg0: i32) -> (i32, i32) {
    %c0_i32 = arith.constant 0 : i32
    %c0_i32_0 = arith.constant 0 : i32
    return %arg0, %c0_i32 : i32, i32
  }
}

module attributes {stable_mosaic.version = 11 : i64} {
  func.func @_mm_kernel(%arg0: i32, %arg1: memref<32x1152xbf16, #tpu.memory_space<vmem>>, %arg2: memref<1152x128xbf16, #tpu.memory_space<vmem>>, %arg3: memref<1x128xf32, #tpu.memory_space<vmem>>, %arg4: memref<32x128xbf16, #tpu.memory_space<vmem>>) attributes {dimension_semantics = [#tpu.dimension_semantics<parallel>], iteration_bounds = array<i64: 1>, scalar_prefetch = 0 : i64, scratch_operands = 0 : i64, tpu.core_type = #tpu.core_type<tc>, window_params = [{transform_indices = @transform_0, window_bounds = array<i64: 32, 1152>}, {pipeline_mode = #tpu.pipeline_mode<synchronous>, transform_indices = @transform_1, window_bounds = array<i64: 1152, 128>}, {pipeline_mode = #tpu.pipeline_mode<synchronous>, transform_indices = @transform_2, window_bounds = array<i64: 1, 128>}, {transform_indices = @transform_3, window_bounds = array<i64: 32, 128>}]} {
    %c0 = arith.constant 0 : index
    %c0_0 = arith.constant 0 : index
    %0 = vector.load %arg1[%c0, %c0_0] : memref<32x1152xbf16, #tpu.memory_space<vmem>>, vector<32x1152xbf16>
    %c0_1 = arith.constant 0 : index
    %c0_2 = arith.constant 0 : index
    %1 = vector.load %arg2[%c0_1, %c0_2] : memref<1152x128xbf16, #tpu.memory_space<vmem>>, vector<1152x128xbf16>
    %cst = arith.constant dense<0.000000e+00> : vector<32x128xf32>
    %2 = tpu.matmul %0, %1, %cst {dimension_numbers = #tpu.dot_dimension_numbers<[1], [0], [0], [1], [0, 0, 1, 1], [], []>} : vector<32x1152xbf16>, vector<1152x128xbf16>, vector<32x128xf32> -> vector<32x128xf32>
    %c0_3 = arith.constant 0 : index
    %c0_4 = arith.constant 0 : index
    %3 = vector.load %arg3[%c0_3, %c0_4] : memref<1x128xf32, #tpu.memory_space<vmem>>, vector<1x128xf32>
    %4 = vector.broadcast %3 : vector<1x128xf32> to vector<32x128xf32>
    %5 = arith.addf %2, %4 : vector<32x128xf32>
    %cst_5 = arith.constant 0.000000e+00 : f32
    %6 = vector.broadcast %cst_5 : f32 to vector<32x128xf32>
    %7 = arith.maximumf %5, %6 : vector<32x128xf32>
    %8 = arith.truncf %7 : vector<32x128xf32> to vector<32x128xbf16>
    %c0_6 = arith.constant 0 : index
    %c0_7 = arith.constant 0 : index
    %9 = vector.load %arg4[%c0_6, %c0_7] : memref<32x128xbf16, #tpu.memory_space<vmem>>, vector<32x128xbf16>
    tpu.vector_store %arg4[%c0_6, %c0_7], %8 {strides = array<i32>} : memref<32x128xbf16, #tpu.memory_space<vmem>>, vector<32x128xbf16>,
    return
  }
  func.func @transform_0(%arg0: i32) -> (i32, i32) {
    %c0_i32 = arith.constant 0 : i32
    %c0_i32_0 = arith.constant 0 : i32
    return %arg0, %c0_i32 : i32, i32
  }
  func.func @transform_1(%arg0: i32) -> (i32, i32) {
    %c0_i32 = arith.constant 0 : i32
    %c0_i32_0 = arith.constant 0 : i32
    %c0_i32_1 = arith.constant 0 : i32
    return %c0_i32, %c0_i32_0 : i32, i32
  }
  func.func @transform_2(%arg0: i32) -> (i32, i32) {
    %c0_i32 = arith.constant 0 : i32
    %c0_i32_0 = arith.constant 0 : i32
    %c0_i32_1 = arith.constant 0 : i32
    return %c0_i32, %c0_i32_0 : i32, i32
  }
  func.func @transform_3(%arg0: i32) -> (i32, i32) {
    %c0_i32 = arith.constant 0 : i32
    %c0_i32_0 = arith.constant 0 : i32
    return %arg0, %c0_i32 : i32, i32
  }
}

module attributes {stable_mosaic.version = 11 : i64} {
  func.func @_mm_kernel(%arg0: i32, %arg1: memref<32x128xbf16, #tpu.memory_space<vmem>>, %arg2: memref<128x128xbf16, #tpu.memory_space<vmem>>, %arg3: memref<1x128xf32, #tpu.memory_space<vmem>>, %arg4: memref<32x128xbf16, #tpu.memory_space<vmem>>) attributes {dimension_semantics = [#tpu.dimension_semantics<parallel>], iteration_bounds = array<i64: 1>, scalar_prefetch = 0 : i64, scratch_operands = 0 : i64, tpu.core_type = #tpu.core_type<tc>, window_params = [{transform_indices = @transform_0, window_bounds = array<i64: 32, 128>}, {pipeline_mode = #tpu.pipeline_mode<synchronous>, transform_indices = @transform_1, window_bounds = array<i64: 128, 128>}, {pipeline_mode = #tpu.pipeline_mode<synchronous>, transform_indices = @transform_2, window_bounds = array<i64: 1, 128>}, {transform_indices = @transform_3, window_bounds = array<i64: 32, 128>}]} {
    %c0 = arith.constant 0 : index
    %c0_0 = arith.constant 0 : index
    %0 = vector.load %arg1[%c0, %c0_0] : memref<32x128xbf16, #tpu.memory_space<vmem>>, vector<32x128xbf16>
    %c0_1 = arith.constant 0 : index
    %c0_2 = arith.constant 0 : index
    %1 = vector.load %arg2[%c0_1, %c0_2] : memref<128x128xbf16, #tpu.memory_space<vmem>>, vector<128x128xbf16>
    %cst = arith.constant dense<0.000000e+00> : vector<32x128xf32>
    %2 = tpu.matmul %0, %1, %cst {dimension_numbers = #tpu.dot_dimension_numbers<[1], [0], [0], [1], [0, 0, 1, 1], [], []>} : vector<32x128xbf16>, vector<128x128xbf16>, vector<32x128xf32> -> vector<32x128xf32>
    %c0_3 = arith.constant 0 : index
    %c0_4 = arith.constant 0 : index
    %3 = vector.load %arg3[%c0_3, %c0_4] : memref<1x128xf32, #tpu.memory_space<vmem>>, vector<1x128xf32>
    %4 = vector.broadcast %3 : vector<1x128xf32> to vector<32x128xf32>
    %5 = arith.addf %2, %4 : vector<32x128xf32>
    %6 = arith.truncf %5 : vector<32x128xf32> to vector<32x128xbf16>
    %c0_5 = arith.constant 0 : index
    %c0_6 = arith.constant 0 : index
    %7 = vector.load %arg4[%c0_5, %c0_6] : memref<32x128xbf16, #tpu.memory_space<vmem>>, vector<32x128xbf16>
    tpu.vector_store %arg4[%c0_5, %c0_6], %6 {strides = array<i32>} : memref<32x128xbf16, #tpu.memory_space<vmem>>, vector<32x128xbf16>,
    return
  }
  func.func @transform_0(%arg0: i32) -> (i32, i32) {
    %c0_i32 = arith.constant 0 : i32
    %c0_i32_0 = arith.constant 0 : i32
    return %arg0, %c0_i32 : i32, i32
  }
  func.func @transform_1(%arg0: i32) -> (i32, i32) {
    %c0_i32 = arith.constant 0 : i32
    %c0_i32_0 = arith.constant 0 : i32
    %c0_i32_1 = arith.constant 0 : i32
    return %c0_i32, %c0_i32_0 : i32, i32
  }
  func.func @transform_2(%arg0: i32) -> (i32, i32) {
    %c0_i32 = arith.constant 0 : i32
    %c0_i32_0 = arith.constant 0 : i32
    %c0_i32_1 = arith.constant 0 : i32
    return %c0_i32, %c0_i32_0 : i32, i32
  }
  func.func @transform_3(%arg0: i32) -> (i32, i32) {
    %c0_i32 = arith.constant 0 : i32
    %c0_i32_0 = arith.constant 0 : i32
    return %arg0, %c0_i32 : i32, i32
  }
}

module attributes {stable_mosaic.version = 11 : i64} {
  func.func @_mm_res_kernel(%arg0: i32, %arg1: memref<32x128xbf16, #tpu.memory_space<vmem>>, %arg2: memref<128x128xbf16, #tpu.memory_space<vmem>>, %arg3: memref<1x128xf32, #tpu.memory_space<vmem>>, %arg4: memref<32x128xbf16, #tpu.memory_space<vmem>>, %arg5: memref<32x128xbf16, #tpu.memory_space<vmem>>) attributes {dimension_semantics = [#tpu.dimension_semantics<parallel>], iteration_bounds = array<i64: 1>, scalar_prefetch = 0 : i64, scratch_operands = 0 : i64, tpu.core_type = #tpu.core_type<tc>, window_params = [{transform_indices = @transform_0, window_bounds = array<i64: 32, 128>}, {pipeline_mode = #tpu.pipeline_mode<synchronous>, transform_indices = @transform_1, window_bounds = array<i64: 128, 128>}, {pipeline_mode = #tpu.pipeline_mode<synchronous>, transform_indices = @transform_2, window_bounds = array<i64: 1, 128>}, {transform_indices = @transform_3, window_bounds = array<i64: 32, 128>}, {transform_indices = @transform_4, window_bounds = array<i64: 32, 128>}]} {
    %c0 = arith.constant 0 : index
    %c0_0 = arith.constant 0 : index
    %0 = vector.load %arg1[%c0, %c0_0] : memref<32x128xbf16, #tpu.memory_space<vmem>>, vector<32x128xbf16>
    %c0_1 = arith.constant 0 : index
    %c0_2 = arith.constant 0 : index
    %1 = vector.load %arg2[%c0_1, %c0_2] : memref<128x128xbf16, #tpu.memory_space<vmem>>, vector<128x128xbf16>
    %cst = arith.constant dense<0.000000e+00> : vector<32x128xf32>
    %2 = tpu.matmul %0, %1, %cst {dimension_numbers = #tpu.dot_dimension_numbers<[1], [0], [0], [1], [0, 0, 1, 1], [], []>} : vector<32x128xbf16>, vector<128x128xbf16>, vector<32x128xf32> -> vector<32x128xf32>
    %c0_3 = arith.constant 0 : index
    %c0_4 = arith.constant 0 : index
    %3 = vector.load %arg3[%c0_3, %c0_4] : memref<1x128xf32, #tpu.memory_space<vmem>>, vector<1x128xf32>
    %4 = vector.broadcast %3 : vector<1x128xf32> to vector<32x128xf32>
    %5 = arith.addf %2, %4 : vector<32x128xf32>
    %c0_5 = arith.constant 0 : index
    %c0_6 = arith.constant 0 : index
    %6 = vector.load %arg4[%c0_5, %c0_6] : memref<32x128xbf16, #tpu.memory_space<vmem>>, vector<32x128xbf16>
    %7 = arith.extf %6 : vector<32x128xbf16> to vector<32x128xf32>
    %8 = arith.addf %5, %7 : vector<32x128xf32>
    %cst_7 = arith.constant 0.000000e+00 : f32
    %9 = vector.broadcast %cst_7 : f32 to vector<32x128xf32>
    %10 = arith.maximumf %8, %9 : vector<32x128xf32>
    %11 = arith.truncf %10 : vector<32x128xf32> to vector<32x128xbf16>
    %c0_8 = arith.constant 0 : index
    %c0_9 = arith.constant 0 : index
    %12 = vector.load %arg5[%c0_8, %c0_9] : memref<32x128xbf16, #tpu.memory_space<vmem>>, vector<32x128xbf16>
    tpu.vector_store %arg5[%c0_8, %c0_9], %11 {strides = array<i32>} : memref<32x128xbf16, #tpu.memory_space<vmem>>, vector<32x128xbf16>,
    return
  }
  func.func @transform_0(%arg0: i32) -> (i32, i32) {
    %c0_i32 = arith.constant 0 : i32
    %c0_i32_0 = arith.constant 0 : i32
    return %arg0, %c0_i32 : i32, i32
  }
  func.func @transform_1(%arg0: i32) -> (i32, i32) {
    %c0_i32 = arith.constant 0 : i32
    %c0_i32_0 = arith.constant 0 : i32
    %c0_i32_1 = arith.constant 0 : i32
    return %c0_i32, %c0_i32_0 : i32, i32
  }
  func.func @transform_2(%arg0: i32) -> (i32, i32) {
    %c0_i32 = arith.constant 0 : i32
    %c0_i32_0 = arith.constant 0 : i32
    %c0_i32_1 = arith.constant 0 : i32
    return %c0_i32, %c0_i32_0 : i32, i32
  }
  func.func @transform_3(%arg0: i32) -> (i32, i32) {
    %c0_i32 = arith.constant 0 : i32
    %c0_i32_0 = arith.constant 0 : i32
    return %arg0, %c0_i32 : i32, i32
  }
  func.func @transform_4(%arg0: i32) -> (i32, i32) {
    %c0_i32 = arith.constant 0 : i32
    %c0_i32_0 = arith.constant 0 : i32
    return %arg0, %c0_i32 : i32, i32
  }
}

module attributes {stable_mosaic.version = 11 : i64} {
  func.func @_mm_kernel(%arg0: i32, %arg1: memref<32x128xbf16, #tpu.memory_space<vmem>>, %arg2: memref<128x128xbf16, #tpu.memory_space<vmem>>, %arg3: memref<1x128xf32, #tpu.memory_space<vmem>>, %arg4: memref<32x128xbf16, #tpu.memory_space<vmem>>) attributes {dimension_semantics = [#tpu.dimension_semantics<parallel>], iteration_bounds = array<i64: 1>, scalar_prefetch = 0 : i64, scratch_operands = 0 : i64, tpu.core_type = #tpu.core_type<tc>, window_params = [{transform_indices = @transform_0, window_bounds = array<i64: 32, 128>}, {pipeline_mode = #tpu.pipeline_mode<synchronous>, transform_indices = @transform_1, window_bounds = array<i64: 128, 128>}, {pipeline_mode = #tpu.pipeline_mode<synchronous>, transform_indices = @transform_2, window_bounds = array<i64: 1, 128>}, {transform_indices = @transform_3, window_bounds = array<i64: 32, 128>}]} {
    %c0 = arith.constant 0 : index
    %c0_0 = arith.constant 0 : index
    %0 = vector.load %arg1[%c0, %c0_0] : memref<32x128xbf16, #tpu.memory_space<vmem>>, vector<32x128xbf16>
    %c0_1 = arith.constant 0 : index
    %c0_2 = arith.constant 0 : index
    %1 = vector.load %arg2[%c0_1, %c0_2] : memref<128x128xbf16, #tpu.memory_space<vmem>>, vector<128x128xbf16>
    %cst = arith.constant dense<0.000000e+00> : vector<32x128xf32>
    %2 = tpu.matmul %0, %1, %cst {dimension_numbers = #tpu.dot_dimension_numbers<[1], [0], [0], [1], [0, 0, 1, 1], [], []>} : vector<32x128xbf16>, vector<128x128xbf16>, vector<32x128xf32> -> vector<32x128xf32>
    %c0_3 = arith.constant 0 : index
    %c0_4 = arith.constant 0 : index
    %3 = vector.load %arg3[%c0_3, %c0_4] : memref<1x128xf32, #tpu.memory_space<vmem>>, vector<1x128xf32>
    %4 = vector.broadcast %3 : vector<1x128xf32> to vector<32x128xf32>
    %5 = arith.addf %2, %4 : vector<32x128xf32>
    %cst_5 = arith.constant 0.000000e+00 : f32
    %6 = vector.broadcast %cst_5 : f32 to vector<32x128xf32>
    %7 = arith.maximumf %5, %6 : vector<32x128xf32>
    %8 = arith.truncf %7 : vector<32x128xf32> to vector<32x128xbf16>
    %c0_6 = arith.constant 0 : index
    %c0_7 = arith.constant 0 : index
    %9 = vector.load %arg4[%c0_6, %c0_7] : memref<32x128xbf16, #tpu.memory_space<vmem>>, vector<32x128xbf16>
    tpu.vector_store %arg4[%c0_6, %c0_7], %8 {strides = array<i32>} : memref<32x128xbf16, #tpu.memory_space<vmem>>, vector<32x128xbf16>,
    return
  }
  func.func @transform_0(%arg0: i32) -> (i32, i32) {
    %c0_i32 = arith.constant 0 : i32
    %c0_i32_0 = arith.constant 0 : i32
    return %arg0, %c0_i32 : i32, i32
  }
  func.func @transform_1(%arg0: i32) -> (i32, i32) {
    %c0_i32 = arith.constant 0 : i32
    %c0_i32_0 = arith.constant 0 : i32
    %c0_i32_1 = arith.constant 0 : i32
    return %c0_i32, %c0_i32_0 : i32, i32
  }
  func.func @transform_2(%arg0: i32) -> (i32, i32) {
    %c0_i32 = arith.constant 0 : i32
    %c0_i32_0 = arith.constant 0 : i32
    %c0_i32_1 = arith.constant 0 : i32
    return %c0_i32, %c0_i32_0 : i32, i32
  }
  func.func @transform_3(%arg0: i32) -> (i32, i32) {
    %c0_i32 = arith.constant 0 : i32
    %c0_i32_0 = arith.constant 0 : i32
    return %arg0, %c0_i32 : i32, i32
  }
}

module attributes {stable_mosaic.version = 11 : i64} {
  func.func @_mm_kernel(%arg0: i32, %arg1: memref<8x1152xbf16, #tpu.memory_space<vmem>>, %arg2: memref<1152x128xbf16, #tpu.memory_space<vmem>>, %arg3: memref<1x128xf32, #tpu.memory_space<vmem>>, %arg4: memref<8x128xbf16, #tpu.memory_space<vmem>>) attributes {dimension_semantics = [#tpu.dimension_semantics<parallel>], iteration_bounds = array<i64: 1>, scalar_prefetch = 0 : i64, scratch_operands = 0 : i64, tpu.core_type = #tpu.core_type<tc>, window_params = [{transform_indices = @transform_0, window_bounds = array<i64: 8, 1152>}, {pipeline_mode = #tpu.pipeline_mode<synchronous>, transform_indices = @transform_1, window_bounds = array<i64: 1152, 128>}, {pipeline_mode = #tpu.pipeline_mode<synchronous>, transform_indices = @transform_2, window_bounds = array<i64: 1, 128>}, {transform_indices = @transform_3, window_bounds = array<i64: 8, 128>}]} {
    %c0 = arith.constant 0 : index
    %c0_0 = arith.constant 0 : index
    %0 = vector.load %arg1[%c0, %c0_0] : memref<8x1152xbf16, #tpu.memory_space<vmem>>, vector<8x1152xbf16>
    %c0_1 = arith.constant 0 : index
    %c0_2 = arith.constant 0 : index
    %1 = vector.load %arg2[%c0_1, %c0_2] : memref<1152x128xbf16, #tpu.memory_space<vmem>>, vector<1152x128xbf16>
    %cst = arith.constant dense<0.000000e+00> : vector<8x128xf32>
    %2 = tpu.matmul %0, %1, %cst {dimension_numbers = #tpu.dot_dimension_numbers<[1], [0], [0], [1], [0, 0, 1, 1], [], []>} : vector<8x1152xbf16>, vector<1152x128xbf16>, vector<8x128xf32> -> vector<8x128xf32>
    %c0_3 = arith.constant 0 : index
    %c0_4 = arith.constant 0 : index
    %3 = vector.load %arg3[%c0_3, %c0_4] : memref<1x128xf32, #tpu.memory_space<vmem>>, vector<1x128xf32>
    %4 = vector.broadcast %3 : vector<1x128xf32> to vector<8x128xf32>
    %5 = arith.addf %2, %4 : vector<8x128xf32>
    %cst_5 = arith.constant 0.000000e+00 : f32
    %6 = vector.broadcast %cst_5 : f32 to vector<8x128xf32>
    %7 = arith.maximumf %5, %6 : vector<8x128xf32>
    %8 = arith.truncf %7 : vector<8x128xf32> to vector<8x128xbf16>
    %c0_6 = arith.constant 0 : index
    %c0_7 = arith.constant 0 : index
    %9 = vector.load %arg4[%c0_6, %c0_7] : memref<8x128xbf16, #tpu.memory_space<vmem>>, vector<8x128xbf16>
    tpu.vector_store %arg4[%c0_6, %c0_7], %8 {strides = array<i32>} : memref<8x128xbf16, #tpu.memory_space<vmem>>, vector<8x128xbf16>,
    return
  }
  func.func @transform_0(%arg0: i32) -> (i32, i32) {
    %c0_i32 = arith.constant 0 : i32
    %c0_i32_0 = arith.constant 0 : i32
    return %arg0, %c0_i32 : i32, i32
  }
  func.func @transform_1(%arg0: i32) -> (i32, i32) {
    %c0_i32 = arith.constant 0 : i32
    %c0_i32_0 = arith.constant 0 : i32
    %c0_i32_1 = arith.constant 0 : i32
    return %c0_i32, %c0_i32_0 : i32, i32
  }
  func.func @transform_2(%arg0: i32) -> (i32, i32) {
    %c0_i32 = arith.constant 0 : i32
    %c0_i32_0 = arith.constant 0 : i32
    %c0_i32_1 = arith.constant 0 : i32
    return %c0_i32, %c0_i32_0 : i32, i32
  }
  func.func @transform_3(%arg0: i32) -> (i32, i32) {
    %c0_i32 = arith.constant 0 : i32
    %c0_i32_0 = arith.constant 0 : i32
    return %arg0, %c0_i32 : i32, i32
  }
}

module attributes {stable_mosaic.version = 11 : i64} {
  func.func @_mm_kernel(%arg0: i32, %arg1: memref<8x128xbf16, #tpu.memory_space<vmem>>, %arg2: memref<128x128xbf16, #tpu.memory_space<vmem>>, %arg3: memref<1x128xf32, #tpu.memory_space<vmem>>, %arg4: memref<8x128xbf16, #tpu.memory_space<vmem>>) attributes {dimension_semantics = [#tpu.dimension_semantics<parallel>], iteration_bounds = array<i64: 1>, scalar_prefetch = 0 : i64, scratch_operands = 0 : i64, tpu.core_type = #tpu.core_type<tc>, window_params = [{transform_indices = @transform_0, window_bounds = array<i64: 8, 128>}, {pipeline_mode = #tpu.pipeline_mode<synchronous>, transform_indices = @transform_1, window_bounds = array<i64: 128, 128>}, {pipeline_mode = #tpu.pipeline_mode<synchronous>, transform_indices = @transform_2, window_bounds = array<i64: 1, 128>}, {transform_indices = @transform_3, window_bounds = array<i64: 8, 128>}]} {
    %c0 = arith.constant 0 : index
    %c0_0 = arith.constant 0 : index
    %0 = vector.load %arg1[%c0, %c0_0] : memref<8x128xbf16, #tpu.memory_space<vmem>>, vector<8x128xbf16>
    %c0_1 = arith.constant 0 : index
    %c0_2 = arith.constant 0 : index
    %1 = vector.load %arg2[%c0_1, %c0_2] : memref<128x128xbf16, #tpu.memory_space<vmem>>, vector<128x128xbf16>
    %cst = arith.constant dense<0.000000e+00> : vector<8x128xf32>
    %2 = tpu.matmul %0, %1, %cst {dimension_numbers = #tpu.dot_dimension_numbers<[1], [0], [0], [1], [0, 0, 1, 1], [], []>} : vector<8x128xbf16>, vector<128x128xbf16>, vector<8x128xf32> -> vector<8x128xf32>
    %c0_3 = arith.constant 0 : index
    %c0_4 = arith.constant 0 : index
    %3 = vector.load %arg3[%c0_3, %c0_4] : memref<1x128xf32, #tpu.memory_space<vmem>>, vector<1x128xf32>
    %4 = vector.broadcast %3 : vector<1x128xf32> to vector<8x128xf32>
    %5 = arith.addf %2, %4 : vector<8x128xf32>
    %6 = arith.truncf %5 : vector<8x128xf32> to vector<8x128xbf16>
    %c0_5 = arith.constant 0 : index
    %c0_6 = arith.constant 0 : index
    %7 = vector.load %arg4[%c0_5, %c0_6] : memref<8x128xbf16, #tpu.memory_space<vmem>>, vector<8x128xbf16>
    tpu.vector_store %arg4[%c0_5, %c0_6], %6 {strides = array<i32>} : memref<8x128xbf16, #tpu.memory_space<vmem>>, vector<8x128xbf16>,
    return
  }
  func.func @transform_0(%arg0: i32) -> (i32, i32) {
    %c0_i32 = arith.constant 0 : i32
    %c0_i32_0 = arith.constant 0 : i32
    return %arg0, %c0_i32 : i32, i32
  }
  func.func @transform_1(%arg0: i32) -> (i32, i32) {
    %c0_i32 = arith.constant 0 : i32
    %c0_i32_0 = arith.constant 0 : i32
    %c0_i32_1 = arith.constant 0 : i32
    return %c0_i32, %c0_i32_0 : i32, i32
  }
  func.func @transform_2(%arg0: i32) -> (i32, i32) {
    %c0_i32 = arith.constant 0 : i32
    %c0_i32_0 = arith.constant 0 : i32
    %c0_i32_1 = arith.constant 0 : i32
    return %c0_i32, %c0_i32_0 : i32, i32
  }
  func.func @transform_3(%arg0: i32) -> (i32, i32) {
    %c0_i32 = arith.constant 0 : i32
    %c0_i32_0 = arith.constant 0 : i32
    return %arg0, %c0_i32 : i32, i32
  }
}

module attributes {stable_mosaic.version = 11 : i64} {
  func.func @_mm_res_kernel(%arg0: i32, %arg1: memref<8x128xbf16, #tpu.memory_space<vmem>>, %arg2: memref<128x128xbf16, #tpu.memory_space<vmem>>, %arg3: memref<1x128xf32, #tpu.memory_space<vmem>>, %arg4: memref<8x128xbf16, #tpu.memory_space<vmem>>, %arg5: memref<8x128xbf16, #tpu.memory_space<vmem>>) attributes {dimension_semantics = [#tpu.dimension_semantics<parallel>], iteration_bounds = array<i64: 1>, scalar_prefetch = 0 : i64, scratch_operands = 0 : i64, tpu.core_type = #tpu.core_type<tc>, window_params = [{transform_indices = @transform_0, window_bounds = array<i64: 8, 128>}, {pipeline_mode = #tpu.pipeline_mode<synchronous>, transform_indices = @transform_1, window_bounds = array<i64: 128, 128>}, {pipeline_mode = #tpu.pipeline_mode<synchronous>, transform_indices = @transform_2, window_bounds = array<i64: 1, 128>}, {transform_indices = @transform_3, window_bounds = array<i64: 8, 128>}, {transform_indices = @transform_4, window_bounds = array<i64: 8, 128>}]} {
    %c0 = arith.constant 0 : index
    %c0_0 = arith.constant 0 : index
    %0 = vector.load %arg1[%c0, %c0_0] : memref<8x128xbf16, #tpu.memory_space<vmem>>, vector<8x128xbf16>
    %c0_1 = arith.constant 0 : index
    %c0_2 = arith.constant 0 : index
    %1 = vector.load %arg2[%c0_1, %c0_2] : memref<128x128xbf16, #tpu.memory_space<vmem>>, vector<128x128xbf16>
    %cst = arith.constant dense<0.000000e+00> : vector<8x128xf32>
    %2 = tpu.matmul %0, %1, %cst {dimension_numbers = #tpu.dot_dimension_numbers<[1], [0], [0], [1], [0, 0, 1, 1], [], []>} : vector<8x128xbf16>, vector<128x128xbf16>, vector<8x128xf32> -> vector<8x128xf32>
    %c0_3 = arith.constant 0 : index
    %c0_4 = arith.constant 0 : index
    %3 = vector.load %arg3[%c0_3, %c0_4] : memref<1x128xf32, #tpu.memory_space<vmem>>, vector<1x128xf32>
    %4 = vector.broadcast %3 : vector<1x128xf32> to vector<8x128xf32>
    %5 = arith.addf %2, %4 : vector<8x128xf32>
    %c0_5 = arith.constant 0 : index
    %c0_6 = arith.constant 0 : index
    %6 = vector.load %arg4[%c0_5, %c0_6] : memref<8x128xbf16, #tpu.memory_space<vmem>>, vector<8x128xbf16>
    %7 = arith.extf %6 : vector<8x128xbf16> to vector<8x128xf32>
    %8 = arith.addf %5, %7 : vector<8x128xf32>
    %cst_7 = arith.constant 0.000000e+00 : f32
    %9 = vector.broadcast %cst_7 : f32 to vector<8x128xf32>
    %10 = arith.maximumf %8, %9 : vector<8x128xf32>
    %11 = arith.truncf %10 : vector<8x128xf32> to vector<8x128xbf16>
    %c0_8 = arith.constant 0 : index
    %c0_9 = arith.constant 0 : index
    %12 = vector.load %arg5[%c0_8, %c0_9] : memref<8x128xbf16, #tpu.memory_space<vmem>>, vector<8x128xbf16>
    tpu.vector_store %arg5[%c0_8, %c0_9], %11 {strides = array<i32>} : memref<8x128xbf16, #tpu.memory_space<vmem>>, vector<8x128xbf16>,
    return
  }
  func.func @transform_0(%arg0: i32) -> (i32, i32) {
    %c0_i32 = arith.constant 0 : i32
    %c0_i32_0 = arith.constant 0 : i32
    return %arg0, %c0_i32 : i32, i32
  }
  func.func @transform_1(%arg0: i32) -> (i32, i32) {
    %c0_i32 = arith.constant 0 : i32
    %c0_i32_0 = arith.constant 0 : i32
    %c0_i32_1 = arith.constant 0 : i32
    return %c0_i32, %c0_i32_0 : i32, i32
  }
  func.func @transform_2(%arg0: i32) -> (i32, i32) {
    %c0_i32 = arith.constant 0 : i32
    %c0_i32_0 = arith.constant 0 : i32
    %c0_i32_1 = arith.constant 0 : i32
    return %c0_i32, %c0_i32_0 : i32, i32
  }
  func.func @transform_3(%arg0: i32) -> (i32, i32) {
    %c0_i32 = arith.constant 0 : i32
    %c0_i32_0 = arith.constant 0 : i32
    return %arg0, %c0_i32 : i32, i32
  }
  func.func @transform_4(%arg0: i32) -> (i32, i32) {
    %c0_i32 = arith.constant 0 : i32
    %c0_i32_0 = arith.constant 0 : i32
    return %arg0, %c0_i32 : i32, i32
  }
}

module attributes {stable_mosaic.version = 11 : i64} {
  func.func @_mm_kernel(%arg0: i32, %arg1: memref<8x128xbf16, #tpu.memory_space<vmem>>, %arg2: memref<128x128xbf16, #tpu.memory_space<vmem>>, %arg3: memref<1x128xf32, #tpu.memory_space<vmem>>, %arg4: memref<8x128xbf16, #tpu.memory_space<vmem>>) attributes {dimension_semantics = [#tpu.dimension_semantics<parallel>], iteration_bounds = array<i64: 1>, scalar_prefetch = 0 : i64, scratch_operands = 0 : i64, tpu.core_type = #tpu.core_type<tc>, window_params = [{transform_indices = @transform_0, window_bounds = array<i64: 8, 128>}, {pipeline_mode = #tpu.pipeline_mode<synchronous>, transform_indices = @transform_1, window_bounds = array<i64: 128, 128>}, {pipeline_mode = #tpu.pipeline_mode<synchronous>, transform_indices = @transform_2, window_bounds = array<i64: 1, 128>}, {transform_indices = @transform_3, window_bounds = array<i64: 8, 128>}]} {
    %c0 = arith.constant 0 : index
    %c0_0 = arith.constant 0 : index
    %0 = vector.load %arg1[%c0, %c0_0] : memref<8x128xbf16, #tpu.memory_space<vmem>>, vector<8x128xbf16>
    %c0_1 = arith.constant 0 : index
    %c0_2 = arith.constant 0 : index
    %1 = vector.load %arg2[%c0_1, %c0_2] : memref<128x128xbf16, #tpu.memory_space<vmem>>, vector<128x128xbf16>
    %cst = arith.constant dense<0.000000e+00> : vector<8x128xf32>
    %2 = tpu.matmul %0, %1, %cst {dimension_numbers = #tpu.dot_dimension_numbers<[1], [0], [0], [1], [0, 0, 1, 1], [], []>} : vector<8x128xbf16>, vector<128x128xbf16>, vector<8x128xf32> -> vector<8x128xf32>
    %c0_3 = arith.constant 0 : index
    %c0_4 = arith.constant 0 : index
    %3 = vector.load %arg3[%c0_3, %c0_4] : memref<1x128xf32, #tpu.memory_space<vmem>>, vector<1x128xf32>
    %4 = vector.broadcast %3 : vector<1x128xf32> to vector<8x128xf32>
    %5 = arith.addf %2, %4 : vector<8x128xf32>
    %cst_5 = arith.constant 0.000000e+00 : f32
    %6 = vector.broadcast %cst_5 : f32 to vector<8x128xf32>
    %7 = arith.maximumf %5, %6 : vector<8x128xf32>
    %8 = arith.truncf %7 : vector<8x128xf32> to vector<8x128xbf16>
    %c0_6 = arith.constant 0 : index
    %c0_7 = arith.constant 0 : index
    %9 = vector.load %arg4[%c0_6, %c0_7] : memref<8x128xbf16, #tpu.memory_space<vmem>>, vector<8x128xbf16>
    tpu.vector_store %arg4[%c0_6, %c0_7], %8 {strides = array<i32>} : memref<8x128xbf16, #tpu.memory_space<vmem>>, vector<8x128xbf16>,
    return
  }
  func.func @transform_0(%arg0: i32) -> (i32, i32) {
    %c0_i32 = arith.constant 0 : i32
    %c0_i32_0 = arith.constant 0 : i32
    return %arg0, %c0_i32 : i32, i32
  }
  func.func @transform_1(%arg0: i32) -> (i32, i32) {
    %c0_i32 = arith.constant 0 : i32
    %c0_i32_0 = arith.constant 0 : i32
    %c0_i32_1 = arith.constant 0 : i32
    return %c0_i32, %c0_i32_0 : i32, i32
  }
  func.func @transform_2(%arg0: i32) -> (i32, i32) {
    %c0_i32 = arith.constant 0 : i32
    %c0_i32_0 = arith.constant 0 : i32
    %c0_i32_1 = arith.constant 0 : i32
    return %c0_i32, %c0_i32_0 : i32, i32
  }
  func.func @transform_3(%arg0: i32) -> (i32, i32) {
    %c0_i32 = arith.constant 0 : i32
    %c0_i32_0 = arith.constant 0 : i32
    return %arg0, %c0_i32 : i32, i32
  }
}

module attributes {stable_mosaic.version = 11 : i64} {
  func.func @_mm_kernel(%arg0: i32, %arg1: memref<2x128xbf16, #tpu.memory_space<vmem>>, %arg2: memref<128x256xbf16, #tpu.memory_space<vmem>>, %arg3: memref<1x256xf32, #tpu.memory_space<vmem>>, %arg4: memref<2x256xbf16, #tpu.memory_space<vmem>>) attributes {dimension_semantics = [#tpu.dimension_semantics<parallel>], iteration_bounds = array<i64: 1>, scalar_prefetch = 0 : i64, scratch_operands = 0 : i64, tpu.core_type = #tpu.core_type<tc>, window_params = [{transform_indices = @transform_0, window_bounds = array<i64: 2, 128>}, {pipeline_mode = #tpu.pipeline_mode<synchronous>, transform_indices = @transform_1, window_bounds = array<i64: 128, 256>}, {pipeline_mode = #tpu.pipeline_mode<synchronous>, transform_indices = @transform_2, window_bounds = array<i64: 1, 256>}, {transform_indices = @transform_3, window_bounds = array<i64: 2, 256>}]} {
    %c0 = arith.constant 0 : index
    %c0_0 = arith.constant 0 : index
    %0 = vector.load %arg1[%c0, %c0_0] : memref<2x128xbf16, #tpu.memory_space<vmem>>, vector<2x128xbf16>
    %c0_1 = arith.constant 0 : index
    %c0_2 = arith.constant 0 : index
    %1 = vector.load %arg2[%c0_1, %c0_2] : memref<128x256xbf16, #tpu.memory_space<vmem>>, vector<128x256xbf16>
    %cst = arith.constant dense<0.000000e+00> : vector<2x256xf32>
    %2 = tpu.matmul %0, %1, %cst {dimension_numbers = #tpu.dot_dimension_numbers<[1], [0], [0], [1], [0, 0, 1, 1], [], []>} : vector<2x128xbf16>, vector<128x256xbf16>, vector<2x256xf32> -> vector<2x256xf32>
    %c0_3 = arith.constant 0 : index
    %c0_4 = arith.constant 0 : index
    %3 = vector.load %arg3[%c0_3, %c0_4] : memref<1x256xf32, #tpu.memory_space<vmem>>, vector<1x256xf32>
    %4 = vector.broadcast %3 : vector<1x256xf32> to vector<2x256xf32>
    %5 = arith.addf %2, %4 : vector<2x256xf32>
    %6 = arith.truncf %5 : vector<2x256xf32> to vector<2x256xbf16>
    %c0_5 = arith.constant 0 : index
    %c0_6 = arith.constant 0 : index
    %7 = vector.load %arg4[%c0_5, %c0_6] : memref<2x256xbf16, #tpu.memory_space<vmem>>, vector<2x256xbf16>
    tpu.vector_store %arg4[%c0_5, %c0_6], %6 {strides = array<i32>} : memref<2x256xbf16, #tpu.memory_space<vmem>>, vector<2x256xbf16>,
    return
  }
  func.func @transform_0(%arg0: i32) -> (i32, i32) {
    %c0_i32 = arith.constant 0 : i32
    %c0_i32_0 = arith.constant 0 : i32
    return %arg0, %c0_i32 : i32, i32
  }
  func.func @transform_1(%arg0: i32) -> (i32, i32) {
    %c0_i32 = arith.constant 0 : i32
    %c0_i32_0 = arith.constant 0 : i32
    %c0_i32_1 = arith.constant 0 : i32
    return %c0_i32, %c0_i32_0 : i32, i32
  }
  func.func @transform_2(%arg0: i32) -> (i32, i32) {
    %c0_i32 = arith.constant 0 : i32
    %c0_i32_0 = arith.constant 0 : i32
    %c0_i32_1 = arith.constant 0 : i32
    return %c0_i32, %c0_i32_0 : i32, i32
  }
  func.func @transform_3(%arg0: i32) -> (i32, i32) {
    %c0_i32 = arith.constant 0 : i32
    %c0_i32_0 = arith.constant 0 : i32
    return %arg0, %c0_i32 : i32, i32
  }
}

module attributes {stable_mosaic.version = 11 : i64} {
  func.func @_mm_kernel(%arg0: i32, %arg1: memref<2x1152xbf16, #tpu.memory_space<vmem>>, %arg2: memref<1152x128xbf16, #tpu.memory_space<vmem>>, %arg3: memref<1x128xf32, #tpu.memory_space<vmem>>, %arg4: memref<2x128xbf16, #tpu.memory_space<vmem>>) attributes {dimension_semantics = [#tpu.dimension_semantics<parallel>], iteration_bounds = array<i64: 1>, scalar_prefetch = 0 : i64, scratch_operands = 0 : i64, tpu.core_type = #tpu.core_type<tc>, window_params = [{transform_indices = @transform_0, window_bounds = array<i64: 2, 1152>}, {pipeline_mode = #tpu.pipeline_mode<synchronous>, transform_indices = @transform_1, window_bounds = array<i64: 1152, 128>}, {pipeline_mode = #tpu.pipeline_mode<synchronous>, transform_indices = @transform_2, window_bounds = array<i64: 1, 128>}, {transform_indices = @transform_3, window_bounds = array<i64: 2, 128>}]} {
    %c0 = arith.constant 0 : index
    %c0_0 = arith.constant 0 : index
    %0 = vector.load %arg1[%c0, %c0_0] : memref<2x1152xbf16, #tpu.memory_space<vmem>>, vector<2x1152xbf16>
    %c0_1 = arith.constant 0 : index
    %c0_2 = arith.constant 0 : index
    %1 = vector.load %arg2[%c0_1, %c0_2] : memref<1152x128xbf16, #tpu.memory_space<vmem>>, vector<1152x128xbf16>
    %cst = arith.constant dense<0.000000e+00> : vector<2x128xf32>
    %2 = tpu.matmul %0, %1, %cst {dimension_numbers = #tpu.dot_dimension_numbers<[1], [0], [0], [1], [0, 0, 1, 1], [], []>} : vector<2x1152xbf16>, vector<1152x128xbf16>, vector<2x128xf32> -> vector<2x128xf32>
    %c0_3 = arith.constant 0 : index
    %c0_4 = arith.constant 0 : index
    %3 = vector.load %arg3[%c0_3, %c0_4] : memref<1x128xf32, #tpu.memory_space<vmem>>, vector<1x128xf32>
    %4 = vector.broadcast %3 : vector<1x128xf32> to vector<2x128xf32>
    %5 = arith.addf %2, %4 : vector<2x128xf32>
    %cst_5 = arith.constant 0.000000e+00 : f32
    %6 = vector.broadcast %cst_5 : f32 to vector<2x128xf32>
    %7 = arith.maximumf %5, %6 : vector<2x128xf32>
    %8 = arith.truncf %7 : vector<2x128xf32> to vector<2x128xbf16>
    %c0_6 = arith.constant 0 : index
    %c0_7 = arith.constant 0 : index
    %9 = vector.load %arg4[%c0_6, %c0_7] : memref<2x128xbf16, #tpu.memory_space<vmem>>, vector<2x128xbf16>
    tpu.vector_store %arg4[%c0_6, %c0_7], %8 {strides = array<i32>} : memref<2x128xbf16, #tpu.memory_space<vmem>>, vector<2x128xbf16>,
    return
  }
  func.func @transform_0(%arg0: i32) -> (i32, i32) {
    %c0_i32 = arith.constant 0 : i32
    %c0_i32_0 = arith.constant 0 : i32
    return %arg0, %c0_i32 : i32, i32
  }
  func.func @transform_1(%arg0: i32) -> (i32, i32) {
    %c0_i32 = arith.constant 0 : i32
    %c0_i32_0 = arith.constant 0 : i32
    %c0_i32_1 = arith.constant 0 : i32
    return %c0_i32, %c0_i32_0 : i32, i32
  }
  func.func @transform_2(%arg0: i32) -> (i32, i32) {
    %c0_i32 = arith.constant 0 : i32
    %c0_i32_0 = arith.constant 0 : i32
    %c0_i32_1 = arith.constant 0 : i32
    return %c0_i32, %c0_i32_0 : i32, i32
  }
  func.func @transform_3(%arg0: i32) -> (i32, i32) {
    %c0_i32 = arith.constant 0 : i32
    %c0_i32_0 = arith.constant 0 : i32
    return %arg0, %c0_i32 : i32, i32
  }
}

module attributes {stable_mosaic.version = 11 : i64} {
  func.func @_mm_res_kernel(%arg0: i32, %arg1: memref<2x128xbf16, #tpu.memory_space<vmem>>, %arg2: memref<128x256xbf16, #tpu.memory_space<vmem>>, %arg3: memref<1x256xf32, #tpu.memory_space<vmem>>, %arg4: memref<2x256xbf16, #tpu.memory_space<vmem>>, %arg5: memref<2x256xbf16, #tpu.memory_space<vmem>>) attributes {dimension_semantics = [#tpu.dimension_semantics<parallel>], iteration_bounds = array<i64: 1>, scalar_prefetch = 0 : i64, scratch_operands = 0 : i64, tpu.core_type = #tpu.core_type<tc>, window_params = [{transform_indices = @transform_0, window_bounds = array<i64: 2, 128>}, {pipeline_mode = #tpu.pipeline_mode<synchronous>, transform_indices = @transform_1, window_bounds = array<i64: 128, 256>}, {pipeline_mode = #tpu.pipeline_mode<synchronous>, transform_indices = @transform_2, window_bounds = array<i64: 1, 256>}, {transform_indices = @transform_3, window_bounds = array<i64: 2, 256>}, {transform_indices = @transform_4, window_bounds = array<i64: 2, 256>}]} {
    %c0 = arith.constant 0 : index
    %c0_0 = arith.constant 0 : index
    %0 = vector.load %arg1[%c0, %c0_0] : memref<2x128xbf16, #tpu.memory_space<vmem>>, vector<2x128xbf16>
    %c0_1 = arith.constant 0 : index
    %c0_2 = arith.constant 0 : index
    %1 = vector.load %arg2[%c0_1, %c0_2] : memref<128x256xbf16, #tpu.memory_space<vmem>>, vector<128x256xbf16>
    %cst = arith.constant dense<0.000000e+00> : vector<2x256xf32>
    %2 = tpu.matmul %0, %1, %cst {dimension_numbers = #tpu.dot_dimension_numbers<[1], [0], [0], [1], [0, 0, 1, 1], [], []>} : vector<2x128xbf16>, vector<128x256xbf16>, vector<2x256xf32> -> vector<2x256xf32>
    %c0_3 = arith.constant 0 : index
    %c0_4 = arith.constant 0 : index
    %3 = vector.load %arg3[%c0_3, %c0_4] : memref<1x256xf32, #tpu.memory_space<vmem>>, vector<1x256xf32>
    %4 = vector.broadcast %3 : vector<1x256xf32> to vector<2x256xf32>
    %5 = arith.addf %2, %4 : vector<2x256xf32>
    %c0_5 = arith.constant 0 : index
    %c0_6 = arith.constant 0 : index
    %6 = vector.load %arg4[%c0_5, %c0_6] : memref<2x256xbf16, #tpu.memory_space<vmem>>, vector<2x256xbf16>
    %7 = arith.extf %6 : vector<2x256xbf16> to vector<2x256xf32>
    %8 = arith.addf %5, %7 : vector<2x256xf32>
    %cst_7 = arith.constant 0.000000e+00 : f32
    %9 = vector.broadcast %cst_7 : f32 to vector<2x256xf32>
    %10 = arith.maximumf %8, %9 : vector<2x256xf32>
    %11 = arith.truncf %10 : vector<2x256xf32> to vector<2x256xbf16>
    %c0_8 = arith.constant 0 : index
    %c0_9 = arith.constant 0 : index
    %12 = vector.load %arg5[%c0_8, %c0_9] : memref<2x256xbf16, #tpu.memory_space<vmem>>, vector<2x256xbf16>
    tpu.vector_store %arg5[%c0_8, %c0_9], %11 {strides = array<i32>} : memref<2x256xbf16, #tpu.memory_space<vmem>>, vector<2x256xbf16>,
    return
  }
  func.func @transform_0(%arg0: i32) -> (i32, i32) {
    %c0_i32 = arith.constant 0 : i32
    %c0_i32_0 = arith.constant 0 : i32
    return %arg0, %c0_i32 : i32, i32
  }
  func.func @transform_1(%arg0: i32) -> (i32, i32) {
    %c0_i32 = arith.constant 0 : i32
    %c0_i32_0 = arith.constant 0 : i32
    %c0_i32_1 = arith.constant 0 : i32
    return %c0_i32, %c0_i32_0 : i32, i32
  }
  func.func @transform_2(%arg0: i32) -> (i32, i32) {
    %c0_i32 = arith.constant 0 : i32
    %c0_i32_0 = arith.constant 0 : i32
    %c0_i32_1 = arith.constant 0 : i32
    return %c0_i32, %c0_i32_0 : i32, i32
  }
  func.func @transform_3(%arg0: i32) -> (i32, i32) {
    %c0_i32 = arith.constant 0 : i32
    %c0_i32_0 = arith.constant 0 : i32
    return %arg0, %c0_i32 : i32, i32
  }
  func.func @transform_4(%arg0: i32) -> (i32, i32) {
    %c0_i32 = arith.constant 0 : i32
    %c0_i32_0 = arith.constant 0 : i32
    return %arg0, %c0_i32 : i32, i32
  }
}

module attributes {stable_mosaic.version = 11 : i64} {
  func.func @_mm_kernel(%arg0: i32, %arg1: memref<2x256xbf16, #tpu.memory_space<vmem>>, %arg2: memref<256x128xbf16, #tpu.memory_space<vmem>>, %arg3: memref<1x128xf32, #tpu.memory_space<vmem>>, %arg4: memref<2x128xbf16, #tpu.memory_space<vmem>>) attributes {dimension_semantics = [#tpu.dimension_semantics<parallel>], iteration_bounds = array<i64: 1>, scalar_prefetch = 0 : i64, scratch_operands = 0 : i64, tpu.core_type = #tpu.core_type<tc>, window_params = [{transform_indices = @transform_0, window_bounds = array<i64: 2, 256>}, {pipeline_mode = #tpu.pipeline_mode<synchronous>, transform_indices = @transform_1, window_bounds = array<i64: 256, 128>}, {pipeline_mode = #tpu.pipeline_mode<synchronous>, transform_indices = @transform_2, window_bounds = array<i64: 1, 128>}, {transform_indices = @transform_3, window_bounds = array<i64: 2, 128>}]} {
    %c0 = arith.constant 0 : index
    %c0_0 = arith.constant 0 : index
    %0 = vector.load %arg1[%c0, %c0_0] : memref<2x256xbf16, #tpu.memory_space<vmem>>, vector<2x256xbf16>
    %c0_1 = arith.constant 0 : index
    %c0_2 = arith.constant 0 : index
    %1 = vector.load %arg2[%c0_1, %c0_2] : memref<256x128xbf16, #tpu.memory_space<vmem>>, vector<256x128xbf16>
    %cst = arith.constant dense<0.000000e+00> : vector<2x128xf32>
    %2 = tpu.matmul %0, %1, %cst {dimension_numbers = #tpu.dot_dimension_numbers<[1], [0], [0], [1], [0, 0, 1, 1], [], []>} : vector<2x256xbf16>, vector<256x128xbf16>, vector<2x128xf32> -> vector<2x128xf32>
    %c0_3 = arith.constant 0 : index
    %c0_4 = arith.constant 0 : index
    %3 = vector.load %arg3[%c0_3, %c0_4] : memref<1x128xf32, #tpu.memory_space<vmem>>, vector<1x128xf32>
    %4 = vector.broadcast %3 : vector<1x128xf32> to vector<2x128xf32>
    %5 = arith.addf %2, %4 : vector<2x128xf32>
    %cst_5 = arith.constant 0.000000e+00 : f32
    %6 = vector.broadcast %cst_5 : f32 to vector<2x128xf32>
    %7 = arith.maximumf %5, %6 : vector<2x128xf32>
    %8 = arith.truncf %7 : vector<2x128xf32> to vector<2x128xbf16>
    %c0_6 = arith.constant 0 : index
    %c0_7 = arith.constant 0 : index
    %9 = vector.load %arg4[%c0_6, %c0_7] : memref<2x128xbf16, #tpu.memory_space<vmem>>, vector<2x128xbf16>
    tpu.vector_store %arg4[%c0_6, %c0_7], %8 {strides = array<i32>} : memref<2x128xbf16, #tpu.memory_space<vmem>>, vector<2x128xbf16>,
    return
  }
  func.func @transform_0(%arg0: i32) -> (i32, i32) {
    %c0_i32 = arith.constant 0 : i32
    %c0_i32_0 = arith.constant 0 : i32
    return %arg0, %c0_i32 : i32, i32
  }
  func.func @transform_1(%arg0: i32) -> (i32, i32) {
    %c0_i32 = arith.constant 0 : i32
    %c0_i32_0 = arith.constant 0 : i32
    %c0_i32_1 = arith.constant 0 : i32
    return %c0_i32, %c0_i32_0 : i32, i32
  }
  func.func @transform_2(%arg0: i32) -> (i32, i32) {
    %c0_i32 = arith.constant 0 : i32
    %c0_i32_0 = arith.constant 0 : i32
    %c0_i32_1 = arith.constant 0 : i32
    return %c0_i32, %c0_i32_0 : i32, i32
  }
  func.func @transform_3(%arg0: i32) -> (i32, i32) {
    %c0_i32 = arith.constant 0 : i32
    %c0_i32_0 = arith.constant 0 : i32
    return %arg0, %c0_i32 : i32, i32
  }
}

module attributes {stable_mosaic.version = 11 : i64} {
  func.func @_mean_kernel(%arg0: i32, %arg1: memref<2x1x256xbf16, #tpu.memory_space<vmem>>, %arg2: memref<2x256xf32, #tpu.memory_space<vmem>>) attributes {dimension_semantics = [#tpu.dimension_semantics<arbitrary>], iteration_bounds = array<i64: 1>, scalar_prefetch = 0 : i64, scratch_operands = 0 : i64, tpu.core_type = #tpu.core_type<tc>, window_params = [{pipeline_mode = #tpu.pipeline_mode<synchronous>, transform_indices = @transform_0, window_bounds = array<i64: 2, 1, 256>}, {pipeline_mode = #tpu.pipeline_mode<synchronous>, transform_indices = @transform_1, window_bounds = array<i64: 2, 256>}]} {
    %c0 = arith.constant 0 : index
    %c0_0 = arith.constant 0 : index
    %c0_1 = arith.constant 0 : index
    %0 = vector.load %arg1[%c0, %c0_0, %c0_1] : memref<2x1x256xbf16, #tpu.memory_space<vmem>>, vector<2x1x256xbf16>
    %1 = arith.extf %0 : vector<2x1x256xbf16> to vector<2x1x256xf32>
    %cst = arith.constant dense<0.000000e+00> : vector<2x256xf32>
    %2 = vector.multi_reduction <add>, %1, %cst [1] : vector<2x1x256xf32> to vector<2x256xf32>
    %cst_2 = arith.constant 1.000000e+00 : f32
    %3 = vector.broadcast %cst_2 : f32 to vector<2x256xf32>
    %4 = arith.divf %2, %3 : vector<2x256xf32>
    %c0_3 = arith.constant 0 : index
    %c0_4 = arith.constant 0 : index
    %5 = vector.load %arg2[%c0_3, %c0_4] : memref<2x256xf32, #tpu.memory_space<vmem>>, vector<2x256xf32>
    tpu.vector_store %arg2[%c0_3, %c0_4], %4 {strides = array<i32>} : memref<2x256xf32, #tpu.memory_space<vmem>>, vector<2x256xf32>,
    return
  }
  func.func @transform_0(%arg0: i32) -> (i32, i32, i32) {
    %c0_i32 = arith.constant 0 : i32
    %c0_i32_0 = arith.constant 0 : i32
    %c0_i32_1 = arith.constant 0 : i32
    %c0_i32_2 = arith.constant 0 : i32
    return %c0_i32, %c0_i32_0, %c0_i32_1 : i32, i32, i32
  }
  func.func @transform_1(%arg0: i32) -> (i32, i32) {
    %c0_i32 = arith.constant 0 : i32
    %c0_i32_0 = arith.constant 0 : i32
    %c0_i32_1 = arith.constant 0 : i32
    return %c0_i32, %c0_i32_0 : i32, i32
  }
}

</mosaic_0001>

<llo_original>
// kernel: resnet152fc_forward.19
$region0: #{resnet152fc_forward.19}
  #allocation0 [shape = 'u32[]', space=smem, size = 0x4, offset = 0x4, fixed_abs, tag = 'smem constant byte address 0x4 - core index']
  #allocation1 [shape = 'u32[144,128]{1,0:T(1,128)}', space=vmem, size = 0x12000, scoped, tag = 'internal scratch']
  %s0 = inlined_call_operand.vmem [shape: bf16[512,147], index: 0, kind: input, shape index: {}]
  %s1 = inlined_call_operand.vmem [shape: bf16[147,128], index: 1, kind: input, shape index: {}]
  %s2 = inlined_call_operand.vmem [shape: f32[1,128], index: 2, kind: input, shape index: {}]
  %s3 = inlined_call_operand.vmem [shape: bf16[512,128], index: 3, kind: output, shape index: {}]
  %s4 = sld [smem:[#allocation0]]
  $region45: #{resnet152fc_forward.19} parent=0
    _
  %s6 = ssub.s32 1, %s4
  %s7 = scalar_select 0, %s6, %s4
  loop: start=0, step=1, limit=4
  $region2: #{resnet152fc_forward.19} parent=0 // loop_pre_header
    _
  $region3: #{resnet152fc_forward.19} parent=0 // loop_header
    %s9 = sphi 0, %s13
    %p10 = scmp.ge.s32.totalorder %s9, 4
    %s19 = sphi 0, %s21
    %s22 = sphi 0, %s19
    %s23 = sphi 0, %s22
    %s39 = sphi 0, %s23
    %s43 = sphi 0, %s43
    %s45 = sphi 0, %s43
    %s46 = sphi 0, %s45
    %s60 = sphi 0, %s46
    %s64 = sphi 0, %s64
    %s66 = sphi 0, %s64
    %s67 = sphi 0, %s66
    %s81 = sphi 0, %s67
    %s87 = sphi 0, %s89
    %s90 = sphi 0, %s87
    %s91 = sphi 0, %s90
    %s107 = sphi 0, %s91
  $region4: #{resnet152fc_forward.19} parent=0 // loop_header_branch
    %12 = sbr.rel (%p10) target = $region8
  $region5: #{resnet152fc_forward.19} parent=0 // loop_body
    %s14 = ssub.s32 %s9, 1
    %s15 = ssub.s32 %s9, 2
    %s16 = sadd.s32 %s9, 1
    %s17 = ssub.s32 %s9, %s16
    %p18 = scmp.eq.s32.totalorder %s17, 0
    %s20 = sadd.s32 %s19, 1
    %s21 = scalar_select %p18, %s19, %s20
    %p24 = pneg %p18
    %p25 = scmp.eq.s32.totalorder %s9, 1
    %p26 = por %p24, %p25
    %p27 = scmp.ne.s32.totalorder %s19, %s22
    %p28 = scmp.eq.s32.totalorder %s9, 0
    %p29 = por %p27, %p28
    %p30 = scmp.ne.s32.totalorder %s19, %s22
    %p31 = scmp.eq.s32.totalorder %s14, 1
    %p32 = por %p30, %p31
    %p33 = scmp.ne.s32.totalorder %s22, %s23
    %p34 = scmp.eq.s32.totalorder %s14, 0
    %p35 = por %p33, %p34
    %p36 = scmp.ne.s32.totalorder %s22, %s23
    %p37 = scmp.eq.s32.totalorder %s15, 1
    %p38 = por %p36, %p37
    %p40 = scmp.ne.s32.totalorder %s23, %s39
    %p41 = scmp.eq.s32.totalorder %s15, 0
    %p42 = por %p40, %p41
    %s44 = sadd.s32 %s43, 1
    %p47 = scmp.eq.s32.totalorder %s9, 1
    %p48 = scmp.ne.s32.totalorder %s43, %s45
    %p49 = scmp.eq.s32.totalorder %s9, 0
    %p50 = por %p48, %p49
    %p51 = scmp.ne.s32.totalorder %s43, %s45
    %p52 = scmp.eq.s32.totalorder %s14, 1
    %p53 = por %p51, %p52
    %p54 = scmp.ne.s32.totalorder %s45, %s46
    %p55 = scmp.eq.s32.totalorder %s14, 0
    %p56 = por %p54, %p55
    %p57 = scmp.ne.s32.totalorder %s45, %s46
    %p58 = scmp.eq.s32.totalorder %s15, 1
    %p59 = por %p57, %p58
    %p61 = scmp.ne.s32.totalorder %s46, %s60
    %p62 = scmp.eq.s32.totalorder %s15, 0
    %p63 = por %p61, %p62
    %s65 = sadd.s32 %s64, 1
    %p68 = scmp.eq.s32.totalorder %s9, 1
    %p69 = scmp.ne.s32.totalorder %s64, %s66
    %p70 = scmp.eq.s32.totalorder %s9, 0
    %p71 = por %p69, %p70
    %p72 = scmp.ne.s32.totalorder %s64, %s66
    %p73 = scmp.eq.s32.totalorder %s14, 1
    %p74 = por %p72, %p73
    %p75 = scmp.ne.s32.totalorder %s66, %s67
    %p76 = scmp.eq.s32.totalorder %s14, 0
    %p77 = por %p75, %p76
    %p78 = scmp.ne.s32.totalorder %s66, %s67
    %p79 = scmp.eq.s32.totalorder %s15, 1
    %p80 = por %p78, %p79
    %p82 = scmp.ne.s32.totalorder %s67, %s81
    %p83 = scmp.eq.s32.totalorder %s15, 0
    %p84 = por %p82, %p83
    %s85 = ssub.s32 %s9, %s16
    %p86 = scmp.eq.s32.totalorder %s85, 0
    %s88 = sadd.s32 %s87, 1
    %s89 = scalar_select %p86, %s87, %s88
    %p92 = pneg %p86
    %p93 = scmp.eq.s32.totalorder %s9, 1
    %p94 = por %p92, %p93
    %p95 = scmp.ne.s32.totalorder %s87, %s90
    %p96 = scmp.eq.s32.totalorder %s9, 0
    %p97 = por %p95, %p96
    %p98 = scmp.ne.s32.totalorder %s87, %s90
    %p99 = scmp.eq.s32.totalorder %s14, 1
    %p100 = por %p98, %p99
    %p101 = scmp.ne.s32.totalorder %s90, %s91
    %p102 = scmp.eq.s32.totalorder %s14, 0
    %p103 = por %p101, %p102
    %p104 = scmp.ne.s32.totalorder %s90, %s91
    %p105 = scmp.eq.s32.totalorder %s15, 1
    %p106 = por %p104, %p105
    %p108 = scmp.ne.s32.totalorder %s91, %s107
    %p109 = scmp.eq.s32.totalorder %s15, 0
    %p110 = por %p108, %p109
    %p111 = scmp.le.s32.totalorder 1, %s9
    %p112 = scmp.lt.s32.totalorder %s9, 3
    %p113 = pnand %p111, %p112
    %p114 = pneg %p113
    // Predicated region
    $region9: #{resnet152fc_forward.19} parent=5 // pred_check
      _
    $region10: #{resnet152fc_forward.19} parent=5 // pred_check_branch
      %116 = sbr.rel (%p113) target = $region12
    $region11: #{resnet152fc_forward.19} parent=5 // pred_region
      %s117 = ssub.s32 %s9, 1
      // Predicated region
      $region13: #{resnet152fc_forward.19} parent=11 // pred_check
        %p118 = pneg %p56
      $region14: #{resnet152fc_forward.19} parent=11 // pred_check_branch
        %120 = sbr.rel (%p118) target = $region16
      $region15: #{resnet152fc_forward.19} parent=11 // pred_region
        _
      $region16: #{resnet152fc_forward.19} parent=11 // pred_fallthru
        _
      // Predicated region
      $region17: #{resnet152fc_forward.19} parent=11 // pred_check
        %p121 = pneg %p77
      $region18: #{resnet152fc_forward.19} parent=11 // pred_check_branch
        %123 = sbr.rel (%p121) target = $region20
      $region19: #{resnet152fc_forward.19} parent=11 // pred_region
        _
      $region20: #{resnet152fc_forward.19} parent=11 // pred_fallthru
        _
    $region12: #{resnet152fc_forward.19} parent=5 // pred_fallthru
      _
    %p124 = scmp.lt.s32.totalorder %s9, 2
    // Predicated region
    $region21: #{resnet152fc_forward.19} parent=5 // pred_check
      %p125 = pneg %p124
    $region22: #{resnet152fc_forward.19} parent=5 // pred_check_branch
      %127 = sbr.rel (%p125) target = $region24
    $region23: #{resnet152fc_forward.19} parent=5 // pred_region
      // Predicated region
      $region25: #{resnet152fc_forward.19} parent=23 // pred_check
        %p128 = pneg %p29
      $region26: #{resnet152fc_forward.19} parent=23 // pred_check_branch
        %130 = sbr.rel (%p128) target = $region28
      $region27: #{resnet152fc_forward.19} parent=23 // pred_region
        %s131 = smul.u32 32, %s9
        %p132 = scmp.lt.s32.totalorder %s131, 63
        %s133 = scalar_select %p132, %s131, 63
        %s134 = smul.addr %s133, 2
        %s135 = smul.addr %s134, 4
        %s136 = scalar_lea.vmem %s0, %s135
        %s137 = smul.u32 32, %s9
      $region28: #{resnet152fc_forward.19} parent=23 // pred_fallthru
        _
    $region24: #{resnet152fc_forward.19} parent=5 // pred_fallthru
      _
    %p138 = scmp.le.s32.totalorder 1, %s9
    %p139 = scmp.lt.s32.totalorder %s9, 3
    %p140 = pnand %p138, %p139
    %p141 = pneg %p140
    // Predicated region
    $region29: #{resnet152fc_forward.19} parent=5 // pred_check
      _
    $region30: #{resnet152fc_forward.19} parent=5 // pred_check_branch
      %143 = sbr.rel (%p140) target = $region32
    $region31: #{resnet152fc_forward.19} parent=5 // pred_region
      %s144 = ssub.s32 %s9, 1
      %s145 = smul.u32 32, %s14
      %p146 = scmp.lt.s32.totalorder %s145, 63
      %s147 = scalar_select %p146, %s145, 63
      %s148 = smul.addr %s147, 2
      %s149 = smul.addr %s148, 4
      %s150 = scalar_lea.vmem %s0, %s149
      %p151 = pneg %p35
      %p152 = pneg %p32
      %p153 = pneg %p56
      %p154 = pneg %p53
      %p155 = pneg %p77
      %p156 = pneg %p74
      %p157 = pneg %p103
      %p158 = pneg %p100
      %s159 = smul.u32 32, %s14
      %p160 = scmp.lt.s32.totalorder %s159, 63
      %s161 = scalar_select %p160, %s159, 63
      %s162 = smul.addr %s161, 4
      %s163 = scalar_lea.vmem %s3, %s162
      %s164 = smul.u32 32, %s14
      %p165 = scmp.lt.s32.totalorder %s164, 63
      %s166 = scalar_select %p165, %s164, 63
      %s167 = smul.addr %s166, 2
      %s168 = smul.addr %s167, 4
      %s169 = scalar_lea.vmem %s0, %s168
      %s170 = smul.u32 32, %s14
      %s171 = smul.u32 32, %s14
      %p172 = scmp.lt.s32.totalorder %s171, 63
      %s173 = scalar_select %p172, %s171, 63
      %s174 = smul.addr %s173, 4
      %s175 = scalar_lea.vmem %s3, %s174
      %s176 = smul.u32 32, %s14
      %v178 = vld [vmem:[%s169] sm:$0xff]
      %v179 = vld [vmem:[%s169 + $0x8] sm:$0xff]
      %v180 = vld [vmem:[%s169 + $0x10] sm:$0xff]
      %v181 = vld [vmem:[%s169 + $0x18] sm:$0xff]
      %v182 = vld [vmem:[%s169 + $0x20] sm:$0xff]
      %v183 = vld [vmem:[%s169 + $0x28] sm:$0xff]
      %v184 = vld [vmem:[%s169 + $0x30] sm:$0xff]
      %v185 = vld [vmem:[%s169 + $0x38] sm:$0xff]
      %v186 = vld [vmem:[%s169 + $0x40] sm:$0xff]
      %v187 = vld [vmem:[%s169 + $0x48] sm:$0xff]
      %v188 = vld [vmem:[%s169 + $0x50] sm:$0xff]
      %v189 = vld [vmem:[%s169 + $0x58] sm:$0xff]
      %v190 = vld [vmem:[%s169 + $0x60] sm:$0xff]
      %v191 = vld [vmem:[%s169 + $0x68] sm:$0xff]
      %v192 = vld [vmem:[%s169 + $0x70] sm:$0xff]
      %v193 = vld [vmem:[%s169 + $0x78] sm:$0xff]
      %v194 = vld [vmem:[%s169 + $0x80] sm:$0xff]
      %v195 = vld [vmem:[%s169 + $0x88] sm:$0xff]
      %v196 = vld [vmem:[%s169 + $0x90] sm:$0xff]
      %v197 = vld [vmem:[%s169 + $0x98] sm:$0xff]
      %v198 = vld [vmem:[%s169 + $0xa0] sm:$0xff]
      %v199 = vld [vmem:[%s169 + $0xa8] sm:$0xff]
      %v200 = vld [vmem:[%s169 + $0xb0] sm:$0xff]
      %v201 = vld [vmem:[%s169 + $0xb8] sm:$0xff]
      %v202 = vld [vmem:[%s169 + $0xc0] sm:$0xff]
      %v203 = vld [vmem:[%s169 + $0xc8] sm:$0xff]
      %v204 = vld [vmem:[%s169 + $0xd0] sm:$0xff]
      %v205 = vld [vmem:[%s169 + $0xd8] sm:$0xff]
      %v206 = vld [vmem:[%s169 + $0xe0] sm:$0xff]
      %v207 = vld [vmem:[%s169 + $0xe8] sm:$0xff]
      %v208 = vld [vmem:[%s169 + $0xf0] sm:$0xff]
      %v209 = vld [vmem:[%s169 + $0xf8] sm:$0xff]
      %v210 = vld [vmem:[%s1] sm:$0xf]
      %v211 = vld [vmem:[%s1 + $0x4] sm:$0xf]
      %v212 = vld [vmem:[%s1 + $0x8] sm:$0xf]
      %v213 = vld [vmem:[%s1 + $0xc] sm:$0xf]
      %v214 = vld [vmem:[%s1 + $0x10] sm:$0xf]
      %v215 = vld [vmem:[%s1 + $0x14] sm:$0xf]
      %v216 = vld [vmem:[%s1 + $0x18] sm:$0xf]
      %v217 = vld [vmem:[%s1 + $0x1c] sm:$0xf]
      %v218 = vld [vmem:[%s1 + $0x20] sm:$0xf]
      %v219 = vld [vmem:[%s1 + $0x24] sm:$0xf]
      %v220 = vld [vmem:[%s1 + $0x28] sm:$0xf]
      %v221 = vld [vmem:[%s1 + $0x2c] sm:$0xf]
      %v222 = vld [vmem:[%s1 + $0x30] sm:$0xf]
      %v223 = vld [vmem:[%s1 + $0x34] sm:$0xf]
      %v224 = vld [vmem:[%s1 + $0x38] sm:$0xf]
      %v225 = vld [vmem:[%s1 + $0x3c] sm:$0xf]
      %v226 = vld [vmem:[%s1 + $0x40] sm:$0xf]
      %v227 = vld [vmem:[%s1 + $0x44] sm:$0xf]
      %v228 = vld [vmem:[%s1 + $0x48] sm:$0x3]
      %v229 = vld [vmem:[%s2] sm:$0x1]
      %v231 = vlaneseq
      %v232 = vshrl.u32 %v231, 7
      %v233 = vsub.s32 0, %v232
      %v234 = vrot.slane %v229, %v233
      %v268 = vunpack.c.l.b16 %v178
      %v269 = vunpack.c.h.b16 %v178
      %v270 = vunpack.c.l.b16 %v179
      %v271 = vunpack.c.h.b16 %v179
      %v272 = vunpack.c.l.b16 %v180
      %v273 = vunpack.c.h.b16 %v180
      %v274 = vunpack.c.l.b16 %v181
      %v275 = vunpack.c.h.b16 %v181
      %v276 = vunpack.c.l.b16 %v182
      %v277 = vunpack.c.h.b16 %v182
      %v278 = vunpack.c.l.b16 %v183
      %v279 = vunpack.c.h.b16 %v183
      %v280 = vunpack.c.l.b16 %v184
      %v281 = vunpack.c.h.b16 %v184
      %v282 = vunpack.c.l.b16 %v185
      %v283 = vunpack.c.h.b16 %v185
      %v284 = vunpack.c.l.b16 %v186
      %v285 = vunpack.c.h.b16 %v186
      %v286 = vunpack.c.l.b16 %v187
      %v287 = vunpack.c.h.b16 %v187
      %v288 = vunpack.c.l.b16 %v188
      %v289 = vunpack.c.h.b16 %v188
      %v290 = vunpack.c.l.b16 %v189
      %v291 = vunpack.c.h.b16 %v189
      %v292 = vunpack.c.l.b16 %v190
      %v293 = vunpack.c.h.b16 %v190
      %v294 = vunpack.c.l.b16 %v191
      %v295 = vunpack.c.h.b16 %v191
      %v296 = vunpack.c.l.b16 %v192
      %v297 = vunpack.c.h.b16 %v192
      %v298 = vunpack.c.l.b16 %v193
      %v299 = vunpack.c.h.b16 %v193
      %v300 = vunpack.c.l.b16 %v194
      %v301 = vunpack.c.h.b16 %v194
      %v302 = vunpack.c.l.b16 %v195
      %v303 = vunpack.c.h.b16 %v195
      %v304 = vunpack.c.l.b16 %v196
      %v305 = vunpack.c.h.b16 %v196
      %v306 = vunpack.c.l.b16 %v197
      %v307 = vunpack.c.h.b16 %v197
      %v308 = vunpack.c.l.b16 %v198
      %v309 = vunpack.c.h.b16 %v198
      %v310 = vunpack.c.l.b16 %v199
      %v311 = vunpack.c.h.b16 %v199
      %v312 = vunpack.c.l.b16 %v200
      %v313 = vunpack.c.h.b16 %v200
      %v314 = vunpack.c.l.b16 %v201
      %v315 = vunpack.c.h.b16 %v201
      %v316 = vunpack.c.l.b16 %v202
      %v317 = vunpack.c.h.b16 %v202
      %v318 = vunpack.c.l.b16 %v203
      %v319 = vunpack.c.h.b16 %v203
      %v320 = vunpack.c.l.b16 %v204
      %v321 = vunpack.c.h.b16 %v204
      %v322 = vunpack.c.l.b16 %v205
      %v323 = vunpack.c.h.b16 %v205
      %v324 = vunpack.c.l.b16 %v206
      %v325 = vunpack.c.h.b16 %v206
      %v326 = vunpack.c.l.b16 %v207
      %v327 = vunpack.c.h.b16 %v207
      %v328 = vunpack.c.l.b16 %v208
      %v329 = vunpack.c.h.b16 %v208
      %v330 = vunpack.c.l.b16 %v209
      %v331 = vunpack.c.h.b16 %v209
      %v332 = vpack.c.b16 %v270, %v268
      %v333 = vpack.c.b16 %v271, %v269
      %v334 = vpack.c.b16 %v274, %v272
      %v335 = vpack.c.b16 %v275, %v273
      %v336 = vpack.c.b16 %v278, %v276
      %v337 = vpack.c.b16 %v279, %v277
      %v338 = vpack.c.b16 %v282, %v280
      %v339 = vpack.c.b16 %v283, %v281
      %v340 = vpack.c.b16 %v286, %v284
      %v341 = vpack.c.b16 %v287, %v285
      %v342 = vpack.c.b16 %v290, %v288
      %v343 = vpack.c.b16 %v291, %v289
      %v344 = vpack.c.b16 %v294, %v292
      %v345 = vpack.c.b16 %v295, %v293
      %v346 = vpack.c.b16 %v298, %v296
      %v347 = vpack.c.b16 %v299, %v297
      %v348 = vpack.c.b16 %v302, %v300
      %v349 = vpack.c.b16 %v303, %v301
      %v350 = vpack.c.b16 %v306, %v304
      %v351 = vpack.c.b16 %v307, %v305
      %v352 = vpack.c.b16 %v310, %v308
      %v353 = vpack.c.b16 %v311, %v309
      %v354 = vpack.c.b16 %v314, %v312
      %v355 = vpack.c.b16 %v315, %v313
      %v356 = vpack.c.b16 %v318, %v316
      %v357 = vpack.c.b16 %v319, %v317
      %v358 = vpack.c.b16 %v322, %v320
      %v359 = vpack.c.b16 %v323, %v321
      %v360 = vpack.c.b16 %v326, %v324
      %v361 = vpack.c.b16 %v327, %v325
      %v362 = vpack.c.b16 %v330, %v328
      %v363 = vpack.c.b16 %v331, %v329
      %v399 = vunpack.c.l.b16 %v210
      %v400 = vunpack.c.l.b16 %v211
      %v401 = vunpack.c.l.b16 %v212
      %v402 = vunpack.c.l.b16 %v213
      %v403 = vunpack.c.l.b16 %v214
      %v404 = vunpack.c.l.b16 %v215
      %v405 = vunpack.c.l.b16 %v216
      %v406 = vunpack.c.l.b16 %v217
      %v407 = vunpack.c.l.b16 %v218
      %v408 = vunpack.c.l.b16 %v219
      %v409 = vunpack.c.l.b16 %v220
      %v410 = vunpack.c.l.b16 %v221
      %v411 = vunpack.c.l.b16 %v222
      %v412 = vunpack.c.l.b16 %v223
      %v413 = vunpack.c.l.b16 %v224
      %v414 = vunpack.c.l.b16 %v225
      %v415 = vunpack.c.l.b16 %v226
      %v416 = vunpack.c.l.b16 %v227
      %v417 = vunpack.c.l.b16 %v228
      %v418 = vpack.c.b16 %v400, %v399
      %v419 = vpack.c.b16 %v402, %v401
      %v420 = vpack.c.b16 %v404, %v403
      %v421 = vpack.c.b16 %v406, %v405
      %v422 = vpack.c.b16 %v408, %v407
      %v423 = vpack.c.b16 %v410, %v409
      %v424 = vpack.c.b16 %v412, %v411
      %v425 = vpack.c.b16 %v414, %v413
      %v426 = vpack.c.b16 %v416, %v415
      %v427 = vpack.c.b16 %v417, %v417
      %vm437 = vcmask 154624
      %v439 = vsel %vm437, %v333, 0
      %v442 = vsel %vm437, %v335, 0
      %v445 = vsel %vm437, %v337, 0
      %v448 = vsel %vm437, %v339, 0
      %v451 = vsel %vm437, %v341, 0
      %v454 = vsel %vm437, %v343, 0
      %v457 = vsel %vm437, %v345, 0
      %v460 = vsel %vm437, %v347, 0
      %v463 = vsel %vm437, %v349, 0
      %v466 = vsel %vm437, %v351, 0
      %v469 = vsel %vm437, %v353, 0
      %v472 = vsel %vm437, %v355, 0
      %v475 = vsel %vm437, %v357, 0
      %v478 = vsel %vm437, %v359, 0
      %v481 = vsel %vm437, %v361, 0
      %v484 = vsel %vm437, %v363, 0
      %vm486 = vcmask 1040384
      %vm487 = vcmask 1041408
      %v488 = vsel %vm486, 4294967295, 65535
      %v489 = vsel %vm487, %v488, 0
      %v491 = vand.u32 %v427, %v489
      %493 = vmatprep.subr.bf16.mxu0 0
      %494 = vmatpush1.bf16.msra.mxu0 %v418
      %495 = vmatprep.subr.bf16.mxu0 0
      %496 = vmatpush1.bf16.msra.mxu0 %v419
      %497 = vmatprep.subr.bf16.mxu0 0
      %498 = vmatpush1.bf16.msra.mxu0 %v420
      %499 = vmatprep.subr.bf16.mxu0 0
      %500 = vmatpush1.bf16.msra.mxu0 %v421
      %501 = vmatprep.subr.bf16.mxu0 0
      %502 = vmatpush1.bf16.msra.mxu0 %v422
      %503 = vmatprep.subr.bf16.mxu0 0
      %504 = vmatpush1.bf16.msra.mxu0 %v423
      %505 = vmatprep.subr.bf16.mxu0 0
      %506 = vmatpush1.bf16.msra.mxu0 %v424
      %507 = vmatprep.subr.bf16.mxu0 0
      %508 = vmatpush1.bf16.msra.mxu0 %v425
      %509 = vmatprep.subr.bf16.mxu0 0
      %510 = vmatpush1.bf16.msra.mxu0 %v426
      %511 = vmatprep.subr.bf16.mxu0 0
      %512 = vmatpush1.bf16.msra.mxu0 %v491
      %513 = vmatprep.subr.bf16.mxu0 0
      %514 = vmatpush1.bf16.msra.mxu0 0
      %515 = vmatprep.subr.bf16.mxu0 0
      %516 = vmatpush1.bf16.msra.mxu0 0
      %517 = vmatprep.subr.bf16.mxu0 0
      %518 = vmatpush1.bf16.msra.mxu0 0
      %519 = vmatprep.subr.bf16.mxu0 0
      %520 = vmatpush1.bf16.msra.mxu0 0
      %521 = vmatprep.subr.bf16.mxu0 0
      %522 = vmatpush1.bf16.msra.mxu0 0
      %523 = vmatprep.subr.bf16.mxu0 0
      %524 = vmatpush1.bf16.msra.mxu0 0
      %525 = vmatprep.mubr.bf16.mxu0 %v439
      %526 = vmatmul.mubr.bf16.gmra.mrb[0].mxu0 %v332
      %v527 = vpop.f32.mrb[0].mxu0
      %v528 = vadd.f32 %v234, %v527
      %v529 = vpop.f32.mrb[0].mxu0
      %v530 = vpop.f32.mrb[0].mxu0
      %v531 = vadd.f32 %v234, %v530
      %v532 = vpop.f32.mrb[0].mxu0
      %533 = vmatprep.mubr.bf16.mxu0 %v442
      %534 = vmatmul.mubr.bf16.gmra.mrb[0].mxu0 %v334
      %v535 = vpop.f32.mrb[0].mxu0
      %v536 = vadd.f32 %v234, %v535
      %v537 = vpop.f32.mrb[0].mxu0
      %v538 = vpop.f32.mrb[0].mxu0
      %v539 = vadd.f32 %v234, %v538
      %v540 = vpop.f32.mrb[0].mxu0
      %541 = vmatprep.mubr.bf16.mxu0 %v445
      %542 = vmatmul.mubr.bf16.gmra.mrb[0].mxu0 %v336
      %v543 = vpop.f32.mrb[0].mxu0
      %v544 = vadd.f32 %v234, %v543
      %v545 = vpop.f32.mrb[0].mxu0
      %v546 = vpop.f32.mrb[0].mxu0
      %v547 = vadd.f32 %v234, %v546
      %v548 = vpop.f32.mrb[0].mxu0
      %549 = vmatprep.mubr.bf16.mxu0 %v448
      %550 = vmatmul.mubr.bf16.gmra.mrb[0].mxu0 %v338
      %v551 = vpop.f32.mrb[0].mxu0
      %v552 = vadd.f32 %v234, %v551
      %v553 = vpop.f32.mrb[0].mxu0
      %v554 = vpop.f32.mrb[0].mxu0
      %v555 = vadd.f32 %v234, %v554
      %v556 = vpop.f32.mrb[0].mxu0
      %557 = vmatprep.mubr.bf16.mxu0 %v451
      %558 = vmatmul.mubr.bf16.gmra.mrb[0].mxu0 %v340
      %v559 = vpop.f32.mrb[0].mxu0
      %v560 = vadd.f32 %v234, %v559
      %v561 = vpop.f32.mrb[0].mxu0
      %v562 = vpop.f32.mrb[0].mxu0
      %v563 = vadd.f32 %v234, %v562
      %v564 = vpop.f32.mrb[0].mxu0
      %565 = vmatprep.mubr.bf16.mxu0 %v454
      %566 = vmatmul.mubr.bf16.gmra.mrb[0].mxu0 %v342
      %v567 = vpop.f32.mrb[0].mxu0
      %v568 = vadd.f32 %v234, %v567
      %v569 = vpop.f32.mrb[0].mxu0
      %v570 = vpop.f32.mrb[0].mxu0
      %v571 = vadd.f32 %v234, %v570
      %v572 = vpop.f32.mrb[0].mxu0
      %573 = vmatprep.mubr.bf16.mxu0 %v457
      %574 = vmatmul.mubr.bf16.gmra.mrb[0].mxu0 %v344
      %v575 = vpop.f32.mrb[0].mxu0
      %v576 = vadd.f32 %v234, %v575
      %v577 = vpop.f32.mrb[0].mxu0
      %v578 = vpop.f32.mrb[0].mxu0
      %v579 = vadd.f32 %v234, %v578
      %v580 = vpop.f32.mrb[0].mxu0
      %581 = vmatprep.mubr.bf16.mxu0 %v460
      %582 = vmatmul.mubr.bf16.gmra.mrb[0].mxu0 %v346
      %v583 = vpop.f32.mrb[0].mxu0
      %v584 = vadd.f32 %v234, %v583
      %v585 = vpop.f32.mrb[0].mxu0
      %v586 = vpop.f32.mrb[0].mxu0
      %v587 = vadd.f32 %v234, %v586
      %v588 = vpop.f32.mrb[0].mxu0
      %589 = vmatprep.mubr.bf16.mxu0 %v463
      %590 = vmatmul.mubr.bf16.gmra.mrb[0].mxu0 %v348
      %v591 = vpop.f32.mrb[0].mxu0
      %v592 = vadd.f32 %v234, %v591
      %v593 = vpop.f32.mrb[0].mxu0
      %v594 = vpop.f32.mrb[0].mxu0
      %v595 = vadd.f32 %v234, %v594
      %v596 = vpop.f32.mrb[0].mxu0
      %597 = vmatprep.mubr.bf16.mxu0 %v466
      %598 = vmatmul.mubr.bf16.gmra.mrb[0].mxu0 %v350
      %v599 = vpop.f32.mrb[0].mxu0
      %v600 = vadd.f32 %v234, %v599
      %v601 = vpop.f32.mrb[0].mxu0
      %v602 = vpop.f32.mrb[0].mxu0
      %v603 = vadd.f32 %v234, %v602
      %v604 = vpop.f32.mrb[0].mxu0
      %605 = vmatprep.mubr.bf16.mxu0 %v469
      %606 = vmatmul.mubr.bf16.gmra.mrb[0].mxu0 %v352
      %v607 = vpop.f32.mrb[0].mxu0
      %v608 = vadd.f32 %v234, %v607
      %v609 = vpop.f32.mrb[0].mxu0
      %v610 = vpop.f32.mrb[0].mxu0
      %v611 = vadd.f32 %v234, %v610
      %v612 = vpop.f32.mrb[0].mxu0
      %613 = vmatprep.mubr.bf16.mxu0 %v472
      %614 = vmatmul.mubr.bf16.gmra.mrb[0].mxu0 %v354
      %v615 = vpop.f32.mrb[0].mxu0
      %v616 = vadd.f32 %v234, %v615
      %v617 = vpop.f32.mrb[0].mxu0
      %v618 = vpop.f32.mrb[0].mxu0
      %v619 = vadd.f32 %v234, %v618
      %v620 = vpop.f32.mrb[0].mxu0
      %621 = vmatprep.mubr.bf16.mxu0 %v475
      %622 = vmatmul.mubr.bf16.gmra.mrb[0].mxu0 %v356
      %v623 = vpop.f32.mrb[0].mxu0
      %v624 = vadd.f32 %v234, %v623
      %v625 = vpop.f32.mrb[0].mxu0
      %v626 = vpop.f32.mrb[0].mxu0
      %v627 = vadd.f32 %v234, %v626
      %v628 = vpop.f32.mrb[0].mxu0
      %629 = vmatprep.mubr.bf16.mxu0 %v478
      %630 = vmatmul.mubr.bf16.gmra.mrb[0].mxu0 %v358
      %v631 = vpop.f32.mrb[0].mxu0
      %v632 = vadd.f32 %v234, %v631
      %v633 = vpop.f32.mrb[0].mxu0
      %v634 = vpop.f32.mrb[0].mxu0
      %v635 = vadd.f32 %v234, %v634
      %v636 = vpop.f32.mrb[0].mxu0
      %637 = vmatprep.mubr.bf16.mxu0 %v481
      %638 = vmatmul.mubr.bf16.gmra.mrb[0].mxu0 %v360
      %v639 = vpop.f32.mrb[0].mxu0
      %v640 = vadd.f32 %v234, %v639
      %v641 = vpop.f32.mrb[0].mxu0
      %v642 = vpop.f32.mrb[0].mxu0
      %v643 = vadd.f32 %v234, %v642
      %v644 = vpop.f32.mrb[0].mxu0
      %645 = vmatprep.mubr.bf16.mxu0 %v484
      %646 = vmatmul.mubr.bf16.gmra.mrb[0].mxu0 %v362
      %v647 = vpop.f32.mrb[0].mxu0
      %v648 = vadd.f32 %v234, %v647
      %v649 = vpop.f32.mrb[0].mxu0
      %v650 = vpop.f32.mrb[0].mxu0
      %v651 = vadd.f32 %v234, %v650
      %v652 = vpop.f32.mrb[0].mxu0
      %653 = vdwg.mxu0
      %v654 = vmax.f32 %v528, 0.0
      %v655 = vmax.f32 %v531, 0.0
      %v656 = vmax.f32 %v536, 0.0
      %v657 = vmax.f32 %v539, 0.0
      %v658 = vmax.f32 %v544, 0.0
      %v659 = vmax.f32 %v547, 0.0
      %v660 = vmax.f32 %v552, 0.0
      %v661 = vmax.f32 %v555, 0.0
      %v662 = vmax.f32 %v560, 0.0
      %v663 = vmax.f32 %v563, 0.0
      %v664 = vmax.f32 %v568, 0.0
      %v665 = vmax.f32 %v571, 0.0
      %v666 = vmax.f32 %v576, 0.0
      %v667 = vmax.f32 %v579, 0.0
      %v668 = vmax.f32 %v584, 0.0
      %v669 = vmax.f32 %v587, 0.0
      %v670 = vmax.f32 %v592, 0.0
      %v671 = vmax.f32 %v595, 0.0
      %v672 = vmax.f32 %v600, 0.0
      %v673 = vmax.f32 %v603, 0.0
      %v674 = vmax.f32 %v608, 0.0
      %v675 = vmax.f32 %v611, 0.0
      %v676 = vmax.f32 %v616, 0.0
      %v677 = vmax.f32 %v619, 0.0
      %v678 = vmax.f32 %v624, 0.0
      %v679 = vmax.f32 %v627, 0.0
      %v680 = vmax.f32 %v632, 0.0
      %v681 = vmax.f32 %v635, 0.0
      %v682 = vmax.f32 %v640, 0.0
      %v683 = vmax.f32 %v643, 0.0
      %v684 = vmax.f32 %v648, 0.0
      %v685 = vmax.f32 %v651, 0.0
      %v686 = vpack.c.bf16 %v655, %v654
      %v687 = vpack.c.bf16 %v657, %v656
      %v688 = vpack.c.bf16 %v659, %v658
      %v689 = vpack.c.bf16 %v661, %v660
      %v690 = vpack.c.bf16 %v663, %v662
      %v691 = vpack.c.bf16 %v665, %v664
      %v692 = vpack.c.bf16 %v667, %v666
      %v693 = vpack.c.bf16 %v669, %v668
      %v694 = vpack.c.bf16 %v671, %v670
      %v695 = vpack.c.bf16 %v673, %v672
      %v696 = vpack.c.bf16 %v675, %v674
      %v697 = vpack.c.bf16 %v677, %v676
      %v698 = vpack.c.bf16 %v679, %v678
      %v699 = vpack.c.bf16 %v681, %v680
      %v700 = vpack.c.bf16 %v683, %v682
      %v701 = vpack.c.bf16 %v685, %v684
      %v718 = vunpack.c.l.b16 %v686
      %v719 = vunpack.c.h.b16 %v686
      %v720 = vunpack.c.l.b16 %v687
      %v721 = vunpack.c.h.b16 %v687
      %v722 = vunpack.c.l.b16 %v688
      %v723 = vunpack.c.h.b16 %v688
      %v724 = vunpack.c.l.b16 %v689
      %v725 = vunpack.c.h.b16 %v689
      %v726 = vunpack.c.l.b16 %v690
      %v727 = vunpack.c.h.b16 %v690
      %v728 = vunpack.c.l.b16 %v691
      %v729 = vunpack.c.h.b16 %v691
      %v730 = vunpack.c.l.b16 %v692
      %v731 = vunpack.c.h.b16 %v692
      %v732 = vunpack.c.l.b16 %v693
      %v733 = vunpack.c.h.b16 %v693
      %v734 = vunpack.c.l.b16 %v694
      %v735 = vunpack.c.h.b16 %v694
      %v736 = vunpack.c.l.b16 %v695
      %v737 = vunpack.c.h.b16 %v695
      %v738 = vunpack.c.l.b16 %v696
      %v739 = vunpack.c.h.b16 %v696
      %v740 = vunpack.c.l.b16 %v697
      %v741 = vunpack.c.h.b16 %v697
      %v742 = vunpack.c.l.b16 %v698
      %v743 = vunpack.c.h.b16 %v698
      %v744 = vunpack.c.l.b16 %v699
      %v745 = vunpack.c.h.b16 %v699
      %v746 = vunpack.c.l.b16 %v700
      %v747 = vunpack.c.h.b16 %v700
      %v748 = vunpack.c.l.b16 %v701
      %v749 = vunpack.c.h.b16 %v701
      %v750 = vpack.c.b16 %v718, %v718
      %v751 = vpack.c.b16 %v719, %v719
      %v752 = vpack.c.b16 %v720, %v720
      %v753 = vpack.c.b16 %v721, %v721
      %v754 = vpack.c.b16 %v722, %v722
      %v755 = vpack.c.b16 %v723, %v723
      %v756 = vpack.c.b16 %v724, %v724
      %v757 = vpack.c.b16 %v725, %v725
      %v758 = vpack.c.b16 %v726, %v726
      %v759 = vpack.c.b16 %v727, %v727
      %v760 = vpack.c.b16 %v728, %v728
      %v761 = vpack.c.b16 %v729, %v729
      %v762 = vpack.c.b16 %v730, %v730
      %v763 = vpack.c.b16 %v731, %v731
      %v764 = vpack.c.b16 %v732, %v732
      %v765 = vpack.c.b16 %v733, %v733
      %v766 = vpack.c.b16 %v734, %v734
      %v767 = vpack.c.b16 %v735, %v735
      %v768 = vpack.c.b16 %v736, %v736
      %v769 = vpack.c.b16 %v737, %v737
      %v770 = vpack.c.b16 %v738, %v738
      %v771 = vpack.c.b16 %v739, %v739
      %v772 = vpack.c.b16 %v740, %v740
      %v773 = vpack.c.b16 %v741, %v741
      %v774 = vpack.c.b16 %v742, %v742
      %v775 = vpack.c.b16 %v743, %v743
      %v776 = vpack.c.b16 %v744, %v744
      %v777 = vpack.c.b16 %v745, %v745
      %v778 = vpack.c.b16 %v746, %v746
      %v779 = vpack.c.b16 %v747, %v747
      %v780 = vpack.c.b16 %v748, %v748
      %v781 = vpack.c.b16 %v749, %v749
      %814 = vst [vmem:[%s175] sm:$0xf] %v750
      %815 = vst [vmem:[%s175 + $0x4] sm:$0xf] %v751
      %816 = vst [vmem:[%s175 + $0x8] sm:$0xf] %v752
      %817 = vst [vmem:[%s175 + $0xc] sm:$0xf] %v753
      %818 = vst [vmem:[%s175 + $0x10] sm:$0xf] %v754
      %819 = vst [vmem:[%s175 + $0x14] sm:$0xf] %v755
      %820 = vst [vmem:[%s175 + $0x18] sm:$0xf] %v756
      %821 = vst [vmem:[%s175 + $0x1c] sm:$0xf] %v757
      %822 = vst [vmem:[%s175 + $0x20] sm:$0xf] %v758
      %823 = vst [vmem:[%s175 + $0x24] sm:$0xf] %v759
      %824 = vst [vmem:[%s175 + $0x28] sm:$0xf] %v760
      %825 = vst [vmem:[%s175 + $0x2c] sm:$0xf] %v761
      %826 = vst [vmem:[%s175 + $0x30] sm:$0xf] %v762
      %827 = vst [vmem:[%s175 + $0x34] sm:$0xf] %v763
      %828 = vst [vmem:[%s175 + $0x38] sm:$0xf] %v764
      %829 = vst [vmem:[%s175 + $0x3c] sm:$0xf] %v765
      %830 = vst [vmem:[%s175 + $0x40] sm:$0xf] %v766
      %831 = vst [vmem:[%s175 + $0x44] sm:$0xf] %v767
      %832 = vst [vmem:[%s175 + $0x48] sm:$0xf] %v768
      %833 = vst [vmem:[%s175 + $0x4c] sm:$0xf] %v769
      %834 = vst [vmem:[%s175 + $0x50] sm:$0xf] %v770
      %835 = vst [vmem:[%s175 + $0x54] sm:$0xf] %v771
      %836 = vst [vmem:[%s175 + $0x58] sm:$0xf] %v772
      %837 = vst [vmem:[%s175 + $0x5c] sm:$0xf] %v773
      %838 = vst [vmem:[%s175 + $0x60] sm:$0xf] %v774
      %839 = vst [vmem:[%s175 + $0x64] sm:$0xf] %v775
      %840 = vst [vmem:[%s175 + $0x68] sm:$0xf] %v776
      %841 = vst [vmem:[%s175 + $0x6c] sm:$0xf] %v777
      %842 = vst [vmem:[%s175 + $0x70] sm:$0xf] %v778
      %843 = vst [vmem:[%s175 + $0x74] sm:$0xf] %v779
      %844 = vst [vmem:[%s175 + $0x78] sm:$0xf] %v780
      %845 = vst [vmem:[%s175 + $0x7c] sm:$0xf] %v781
      %s846 = smul.u32 32, %s14
      %p847 = scmp.lt.s32.totalorder %s846, 63
      %s848 = scalar_select %p847, %s846, 63
      %s849 = smul.addr %s848, 4
      %s850 = scalar_lea.vmem %s3, %s849
      // Predicated region
      $region33: #{resnet152fc_forward.19} parent=31 // pred_check
        %p851 = pneg %p100
      $region34: #{resnet152fc_forward.19} parent=31 // pred_check_branch
        %853 = sbr.rel (%p851) target = $region36
      $region35: #{resnet152fc_forward.19} parent=31 // pred_region
        %s854 = smul.u32 32, %s14
      $region36: #{resnet152fc_forward.19} parent=31 // pred_fallthru
        _
    $region32: #{resnet152fc_forward.19} parent=5 // pred_fallthru
      _
    %p855 = scmp.le.s32.totalorder 2, %s9
    // Predicated region
    $region37: #{resnet152fc_forward.19} parent=5 // pred_check
      %p856 = pneg %p855
    $region38: #{resnet152fc_forward.19} parent=5 // pred_check_branch
      %858 = sbr.rel (%p856) target = $region40
    $region39: #{resnet152fc_forward.19} parent=5 // pred_region
      %s859 = ssub.s32 %s9, 2
      // Predicated region
      $region41: #{resnet152fc_forward.19} parent=39 // pred_check
        %p860 = pneg %p106
      $region42: #{resnet152fc_forward.19} parent=39 // pred_check_branch
        %862 = sbr.rel (%p860) target = $region44
      $region43: #{resnet152fc_forward.19} parent=39 // pred_region
        %s863 = smul.u32 32, %s15
        %p864 = scmp.lt.s32.totalorder %s863, 63
        %s865 = scalar_select %p864, %s863, 63
        %s866 = smul.addr %s865, 4
        %s867 = scalar_lea.vmem %s3, %s866
      $region44: #{resnet152fc_forward.19} parent=39 // pred_fallthru
        _
    $region40: #{resnet152fc_forward.19} parent=5 // pred_fallthru
      _
  $region6: #{resnet152fc_forward.19} parent=0 // loop_footer
    %s13 = sadd.s32 1, %s9
  $region7: #{resnet152fc_forward.19} parent=0 // loop_footer_branch
    %8 = sbr.rel target = $region3
  $region8: #{resnet152fc_forward.19} parent=0 // loop_exit
    _

// kernel: resnet152fc_forward.21
$region0: #{resnet152fc_forward.21}
  #allocation0 [shape = 'u32[]', space=smem, size = 0x4, offset = 0x4, fixed_abs, tag = 'smem constant byte address 0x4 - core index']
  #allocation1 [shape = 'u32[144,128]{1,0:T(1,128)}', space=vmem, size = 0x12000, scoped, tag = 'internal scratch']
  %s0 = inlined_call_operand.vmem [shape: bf16[128,128], index: 0, kind: input, shape index: {}]
  %s1 = inlined_call_operand.vmem [shape: bf16[128,128], index: 1, kind: input, shape index: {}]
  %s2 = inlined_call_operand.vmem [shape: f32[1,128], index: 2, kind: input, shape index: {}]
  %s3 = inlined_call_operand.vmem [shape: bf16[128,128], index: 3, kind: output, shape index: {}]
  %s4 = sld [smem:[#allocation0]]
  $region22: #{resnet152fc_forward.21} parent=0
    _
  %s6 = ssub.s32 1, %s4
  %s7 = scalar_select 0, %s6, %s4
  // Predicated region
  $region2: #{resnet152fc_forward.21} parent=0 // pred_check
    _
  $region3: #{resnet152fc_forward.21} parent=0 // pred_check_branch
    %9 = sbr.rel (0) target = $region5
  $region4: #{resnet152fc_forward.21} parent=0 // pred_region
    _
  $region5: #{resnet152fc_forward.21} parent=0 // pred_fallthru
    _
  // Predicated region
  $region6: #{resnet152fc_forward.21} parent=0 // pred_check
    _
  $region7: #{resnet152fc_forward.21} parent=0 // pred_check_branch
    %11 = sbr.rel (0) target = $region9
  $region8: #{resnet152fc_forward.21} parent=0 // pred_region
    _
  $region9: #{resnet152fc_forward.21} parent=0 // pred_fallthru
    _
  // Predicated region
  $region10: #{resnet152fc_forward.21} parent=0 // pred_check
    _
  $region11: #{resnet152fc_forward.21} parent=0 // pred_check_branch
    %13 = sbr.rel (0) target = $region13
  $region12: #{resnet152fc_forward.21} parent=0 // pred_region
    _
  $region13: #{resnet152fc_forward.21} parent=0 // pred_fallthru
    _
  %v15 = vld [vmem:[%s0] sm:$0xf]
  %v16 = vld [vmem:[%s0 + $0x4] sm:$0xf]
  %v17 = vld [vmem:[%s0 + $0x8] sm:$0xf]
  %v18 = vld [vmem:[%s0 + $0xc] sm:$0xf]
  %v19 = vld [vmem:[%s0 + $0x10] sm:$0xf]
  %v20 = vld [vmem:[%s0 + $0x14] sm:$0xf]
  %v21 = vld [vmem:[%s0 + $0x18] sm:$0xf]
  %v22 = vld [vmem:[%s0 + $0x1c] sm:$0xf]
  %v23 = vld [vmem:[%s0 + $0x20] sm:$0xf]
  %v24 = vld [vmem:[%s0 + $0x24] sm:$0xf]
  %v25 = vld [vmem:[%s0 + $0x28] sm:$0xf]
  %v26 = vld [vmem:[%s0 + $0x2c] sm:$0xf]
  %v27 = vld [vmem:[%s0 + $0x30] sm:$0xf]
  %v28 = vld [vmem:[%s0 + $0x34] sm:$0xf]
  %v29 = vld [vmem:[%s0 + $0x38] sm:$0xf]
  %v30 = vld [vmem:[%s0 + $0x3c] sm:$0xf]
  %v31 = vld [vmem:[%s1] sm:$0xf]
  %v32 = vld [vmem:[%s1 + $0x4] sm:$0xf]
  %v33 = vld [vmem:[%s1 + $0x8] sm:$0xf]
  %v34 = vld [vmem:[%s1 + $0xc] sm:$0xf]
  %v35 = vld [vmem:[%s1 + $0x10] sm:$0xf]
  %v36 = vld [vmem:[%s1 + $0x14] sm:$0xf]
  %v37 = vld [vmem:[%s1 + $0x18] sm:$0xf]
  %v38 = vld [vmem:[%s1 + $0x1c] sm:$0xf]
  %v39 = vld [vmem:[%s1 + $0x20] sm:$0xf]
  %v40 = vld [vmem:[%s1 + $0x24] sm:$0xf]
  %v41 = vld [vmem:[%s1 + $0x28] sm:$0xf]
  %v42 = vld [vmem:[%s1 + $0x2c] sm:$0xf]
  %v43 = vld [vmem:[%s1 + $0x30] sm:$0xf]
  %v44 = vld [vmem:[%s1 + $0x34] sm:$0xf]
  %v45 = vld [vmem:[%s1 + $0x38] sm:$0xf]
  %v46 = vld [vmem:[%s1 + $0x3c] sm:$0xf]
  %v47 = vld [vmem:[%s2] sm:$0x1]
  %v49 = vlaneseq
  %v50 = vshrl.u32 %v49, 7
  %v51 = vsub.s32 0, %v50
  %v52 = vrot.slane %v47, %v51
  %v70 = vunpack.c.l.b16 %v15
  %v71 = vunpack.c.l.b16 %v16
  %v72 = vunpack.c.l.b16 %v17
  %v73 = vunpack.c.l.b16 %v18
  %v74 = vunpack.c.l.b16 %v19
  %v75 = vunpack.c.l.b16 %v20
  %v76 = vunpack.c.l.b16 %v21
  %v77 = vunpack.c.l.b16 %v22
  %v78 = vunpack.c.l.b16 %v23
  %v79 = vunpack.c.l.b16 %v24
  %v80 = vunpack.c.l.b16 %v25
  %v81 = vunpack.c.l.b16 %v26
  %v82 = vunpack.c.l.b16 %v27
  %v83 = vunpack.c.l.b16 %v28
  %v84 = vunpack.c.l.b16 %v29
  %v85 = vunpack.c.l.b16 %v30
  %v86 = vpack.c.b16 %v71, %v70
  %v87 = vpack.c.b16 %v73, %v72
  %v88 = vpack.c.b16 %v75, %v74
  %v89 = vpack.c.b16 %v77, %v76
  %v90 = vpack.c.b16 %v79, %v78
  %v91 = vpack.c.b16 %v81, %v80
  %v92 = vpack.c.b16 %v83, %v82
  %v93 = vpack.c.b16 %v85, %v84
  %v118 = vunpack.c.l.b16 %v31
  %v119 = vunpack.c.l.b16 %v32
  %v120 = vunpack.c.l.b16 %v33
  %v121 = vunpack.c.l.b16 %v34
  %v122 = vunpack.c.l.b16 %v35
  %v123 = vunpack.c.l.b16 %v36
  %v124 = vunpack.c.l.b16 %v37
  %v125 = vunpack.c.l.b16 %v38
  %v126 = vunpack.c.l.b16 %v39
  %v127 = vunpack.c.l.b16 %v40
  %v128 = vunpack.c.l.b16 %v41
  %v129 = vunpack.c.l.b16 %v42
  %v130 = vunpack.c.l.b16 %v43
  %v131 = vunpack.c.l.b16 %v44
  %v132 = vunpack.c.l.b16 %v45
  %v133 = vunpack.c.l.b16 %v46
  %v134 = vpack.c.b16 %v119, %v118
  %v135 = vpack.c.b16 %v121, %v120
  %v136 = vpack.c.b16 %v123, %v122
  %v137 = vpack.c.b16 %v125, %v124
  %v138 = vpack.c.b16 %v127, %v126
  %v139 = vpack.c.b16 %v129, %v128
  %v140 = vpack.c.b16 %v131, %v130
  %v141 = vpack.c.b16 %v133, %v132
  %150 = vmatprep.subr.bf16.mxu0 0
  %151 = vmatpush1.bf16.msra.mxu0 %v134
  %152 = vmatprep.subr.bf16.mxu0 0
  %153 = vmatpush1.bf16.msra.mxu0 %v135
  %154 = vmatprep.subr.bf16.mxu0 0
  %155 = vmatpush1.bf16.msra.mxu0 %v136
  %156 = vmatprep.subr.bf16.mxu0 0
  %157 = vmatpush1.bf16.msra.mxu0 %v137
  %158 = vmatprep.subr.bf16.mxu0 0
  %159 = vmatpush1.bf16.msra.mxu0 %v138
  %160 = vmatprep.subr.bf16.mxu0 0
  %161 = vmatpush1.bf16.msra.mxu0 %v139
  %162 = vmatprep.subr.bf16.mxu0 0
  %163 = vmatpush1.bf16.msra.mxu0 %v140
  %164 = vmatprep.subr.bf16.mxu0 0
  %165 = vmatpush1.bf16.msra.mxu0 %v141
  %166 = vmatprep.subr.bf16.mxu0 0
  %167 = vmatpush1.bf16.msra.mxu0 0
  %168 = vmatprep.subr.bf16.mxu0 0
  %169 = vmatpush1.bf16.msra.mxu0 0
  %170 = vmatprep.subr.bf16.mxu0 0
  %171 = vmatpush1.bf16.msra.mxu0 0
  %172 = vmatprep.subr.bf16.mxu0 0
  %173 = vmatpush1.bf16.msra.mxu0 0
  %174 = vmatprep.subr.bf16.mxu0 0
  %175 = vmatpush1.bf16.msra.mxu0 0
  %176 = vmatprep.subr.bf16.mxu0 0
  %177 = vmatpush1.bf16.msra.mxu0 0
  %178 = vmatprep.subr.bf16.mxu0 0
  %179 = vmatpush1.bf16.msra.mxu0 0
  %180 = vmatprep.subr.bf16.mxu0 0
  %181 = vmatpush1.bf16.msra.mxu0 0
  %182 = vmatprep.mubr.bf16.mxu0 0
  %183 = vmatmul.mubr.bf16.gmra.mrb[0].mxu0 %v86
  %v184 = vpop.f32.mrb[0].mxu0
  %v185 = vadd.f32 %v52, %v184
  %v186 = vpop.f32.mrb[0].mxu0
  %v187 = vpop.f32.mrb[0].mxu0
  %v188 = vadd.f32 %v52, %v187
  %v189 = vpop.f32.mrb[0].mxu0
  %190 = vmatprep.mubr.bf16.mxu0 0
  %191 = vmatmul.mubr.bf16.gmra.mrb[0].mxu0 %v87
  %v192 = vpop.f32.mrb[0].mxu0
  %v193 = vadd.f32 %v52, %v192
  %v194 = vpop.f32.mrb[0].mxu0
  %v195 = vpop.f32.mrb[0].mxu0
  %v196 = vadd.f32 %v52, %v195
  %v197 = vpop.f32.mrb[0].mxu0
  %198 = vmatprep.mubr.bf16.mxu0 0
  %199 = vmatmul.mubr.bf16.gmra.mrb[0].mxu0 %v88
  %v200 = vpop.f32.mrb[0].mxu0
  %v201 = vadd.f32 %v52, %v200
  %v202 = vpop.f32.mrb[0].mxu0
  %v203 = vpop.f32.mrb[0].mxu0
  %v204 = vadd.f32 %v52, %v203
  %v205 = vpop.f32.mrb[0].mxu0
  %206 = vmatprep.mubr.bf16.mxu0 0
  %207 = vmatmul.mubr.bf16.gmra.mrb[0].mxu0 %v89
  %v208 = vpop.f32.mrb[0].mxu0
  %v209 = vadd.f32 %v52, %v208
  %v210 = vpop.f32.mrb[0].mxu0
  %v211 = vpop.f32.mrb[0].mxu0
  %v212 = vadd.f32 %v52, %v211
  %v213 = vpop.f32.mrb[0].mxu0
  %214 = vmatprep.mubr.bf16.mxu0 0
  %215 = vmatmul.mubr.bf16.gmra.mrb[0].mxu0 %v90
  %v216 = vpop.f32.mrb[0].mxu0
  %v217 = vadd.f32 %v52, %v216
  %v218 = vpop.f32.mrb[0].mxu0
  %v219 = vpop.f32.mrb[0].mxu0
  %v220 = vadd.f32 %v52, %v219
  %v221 = vpop.f32.mrb[0].mxu0
  %222 = vmatprep.mubr.bf16.mxu0 0
  %223 = vmatmul.mubr.bf16.gmra.mrb[0].mxu0 %v91
  %v224 = vpop.f32.mrb[0].mxu0
  %v225 = vadd.f32 %v52, %v224
  %v226 = vpop.f32.mrb[0].mxu0
  %v227 = vpop.f32.mrb[0].mxu0
  %v228 = vadd.f32 %v52, %v227
  %v229 = vpop.f32.mrb[0].mxu0
  %230 = vmatprep.mubr.bf16.mxu0 0
  %231 = vmatmul.mubr.bf16.gmra.mrb[0].mxu0 %v92
  %v232 = vpop.f32.mrb[0].mxu0
  %v233 = vadd.f32 %v52, %v232
  %v234 = vpop.f32.mrb[0].mxu0
  %v235 = vpop.f32.mrb[0].mxu0
  %v236 = vadd.f32 %v52, %v235
  %v237 = vpop.f32.mrb[0].mxu0
  %238 = vmatprep.mubr.bf16.mxu0 0
  %239 = vmatmul.mubr.bf16.gmra.mrb[0].mxu0 %v93
  %v240 = vpop.f32.mrb[0].mxu0
  %v241 = vadd.f32 %v52, %v240
  %v242 = vpop.f32.mrb[0].mxu0
  %v243 = vpop.f32.mrb[0].mxu0
  %v244 = vadd.f32 %v52, %v243
  %v245 = vpop.f32.mrb[0].mxu0
  %246 = vdwg.mxu0
  %v247 = vmax.f32 %v185, 0.0
  %v248 = vmax.f32 %v188, 0.0
  %v249 = vmax.f32 %v193, 0.0
  %v250 = vmax.f32 %v196, 0.0
  %v251 = vmax.f32 %v201, 0.0
  %v252 = vmax.f32 %v204, 0.0
  %v253 = vmax.f32 %v209, 0.0
  %v254 = vmax.f32 %v212, 0.0
  %v255 = vmax.f32 %v217, 0.0
  %v256 = vmax.f32 %v220, 0.0
  %v257 = vmax.f32 %v225, 0.0
  %v258 = vmax.f32 %v228, 0.0
  %v259 = vmax.f32 %v233, 0.0
  %v260 = vmax.f32 %v236, 0.0
  %v261 = vmax.f32 %v241, 0.0
  %v262 = vmax.f32 %v244, 0.0
  %v263 = vpack.c.bf16 %v248, %v247
  %v264 = vpack.c.bf16 %v250, %v249
  %v265 = vpack.c.bf16 %v252, %v251
  %v266 = vpack.c.bf16 %v254, %v253
  %v267 = vpack.c.bf16 %v256, %v255
  %v268 = vpack.c.bf16 %v258, %v257
  %v269 = vpack.c.bf16 %v260, %v259
  %v270 = vpack.c.bf16 %v262, %v261
  %v279 = vunpack.c.l.b16 %v263
  %v280 = vunpack.c.h.b16 %v263
  %v281 = vunpack.c.l.b16 %v264
  %v282 = vunpack.c.h.b16 %v264
  %v283 = vunpack.c.l.b16 %v265
  %v284 = vunpack.c.h.b16 %v265
  %v285 = vunpack.c.l.b16 %v266
  %v286 = vunpack.c.h.b16 %v266
  %v287 = vunpack.c.l.b16 %v267
  %v288 = vunpack.c.h.b16 %v267
  %v289 = vunpack.c.l.b16 %v268
  %v290 = vunpack.c.h.b16 %v268
  %v291 = vunpack.c.l.b16 %v269
  %v292 = vunpack.c.h.b16 %v269
  %v293 = vunpack.c.l.b16 %v270
  %v294 = vunpack.c.h.b16 %v270
  %v295 = vpack.c.b16 %v279, %v279
  %v296 = vpack.c.b16 %v280, %v280
  %v297 = vpack.c.b16 %v281, %v281
  %v298 = vpack.c.b16 %v282, %v282
  %v299 = vpack.c.b16 %v283, %v283
  %v300 = vpack.c.b16 %v284, %v284
  %v301 = vpack.c.b16 %v285, %v285
  %v302 = vpack.c.b16 %v286, %v286
  %v303 = vpack.c.b16 %v287, %v287
  %v304 = vpack.c.b16 %v288, %v288
  %v305 = vpack.c.b16 %v289, %v289
  %v306 = vpack.c.b16 %v290, %v290
  %v307 = vpack.c.b16 %v291, %v291
  %v308 = vpack.c.b16 %v292, %v292
  %v309 = vpack.c.b16 %v293, %v293
  %v310 = vpack.c.b16 %v294, %v294
  %327 = vst [vmem:[%s3] sm:$0xf] %v295
  %328 = vst [vmem:[%s3 + $0x4] sm:$0xf] %v296
  %329 = vst [vmem:[%s3 + $0x8] sm:$0xf] %v297
  %330 = vst [vmem:[%s3 + $0xc] sm:$0xf] %v298
  %331 = vst [vmem:[%s3 + $0x10] sm:$0xf] %v299
  %332 = vst [vmem:[%s3 + $0x14] sm:$0xf] %v300
  %333 = vst [vmem:[%s3 + $0x18] sm:$0xf] %v301
  %334 = vst [vmem:[%s3 + $0x1c] sm:$0xf] %v302
  %335 = vst [vmem:[%s3 + $0x20] sm:$0xf] %v303
  %336 = vst [vmem:[%s3 + $0x24] sm:$0xf] %v304
  %337 = vst [vmem:[%s3 + $0x28] sm:$0xf] %v305
  %338 = vst [vmem:[%s3 + $0x2c] sm:$0xf] %v306
  %339 = vst [vmem:[%s3 + $0x30] sm:$0xf] %v307
  %340 = vst [vmem:[%s3 + $0x34] sm:$0xf] %v308
  %341 = vst [vmem:[%s3 + $0x38] sm:$0xf] %v309
  %342 = vst [vmem:[%s3 + $0x3c] sm:$0xf] %v310
  // Predicated region
  $region14: #{resnet152fc_forward.21} parent=0 // pred_check
    _
  $region15: #{resnet152fc_forward.21} parent=0 // pred_check_branch
    %344 = sbr.rel (0) target = $region17
  $region16: #{resnet152fc_forward.21} parent=0 // pred_region
    _
  $region17: #{resnet152fc_forward.21} parent=0 // pred_fallthru
    _
  // Predicated region
  $region18: #{resnet152fc_forward.21} parent=0 // pred_check
    _
  $region19: #{resnet152fc_forward.21} parent=0 // pred_check_branch
    %346 = sbr.rel (0) target = $region21
  $region20: #{resnet152fc_forward.21} parent=0 // pred_region
    _
  $region21: #{resnet152fc_forward.21} parent=0 // pred_fallthru
    _

// kernel: resnet152fc_forward.20
$region0: #{resnet152fc_forward.20}
  #allocation0 [shape = 'u32[]', space=smem, size = 0x4, offset = 0x4, fixed_abs, tag = 'smem constant byte address 0x4 - core index']
  #allocation1 [shape = 'u32[144,128]{1,0:T(1,128)}', space=vmem, size = 0x12000, scoped, tag = 'internal scratch']
  %s0 = inlined_call_operand.vmem [shape: bf16[9,128,128], index: 0, kind: input, shape index: {}]
  %s1 = inlined_call_operand.vmem [shape: bf16[128,128], index: 1, kind: output, shape index: {}]
  %s2 = sld [smem:[#allocation0]]
  $region14: #{resnet152fc_forward.20} parent=0
    _
  %s4 = ssub.s32 1, %s2
  %s5 = scalar_select 0, %s4, %s2
  // Predicated region
  $region2: #{resnet152fc_forward.20} parent=0 // pred_check
    _
  $region3: #{resnet152fc_forward.20} parent=0 // pred_check_branch
    %7 = sbr.rel (0) target = $region5
  $region4: #{resnet152fc_forward.20} parent=0 // pred_region
    _
  $region5: #{resnet152fc_forward.20} parent=0 // pred_fallthru
    _
  %v9 = vld [vmem:[%s0] sm:$0xf]
  %v10 = vld [vmem:[%s0 + $0x4] sm:$0xf]
  %v11 = vld [vmem:[%s0 + $0x8] sm:$0xf]
  %v12 = vld [vmem:[%s0 + $0xc] sm:$0xf]
  %v13 = vld [vmem:[%s0 + $0x10] sm:$0xf]
  %v14 = vld [vmem:[%s0 + $0x14] sm:$0xf]
  %v15 = vld [vmem:[%s0 + $0x18] sm:$0xf]
  %v16 = vld [vmem:[%s0 + $0x1c] sm:$0xf]
  %v17 = vld [vmem:[%s0 + $0x20] sm:$0xf]
  %v18 = vld [vmem:[%s0 + $0x24] sm:$0xf]
  %v19 = vld [vmem:[%s0 + $0x28] sm:$0xf]
  %v20 = vld [vmem:[%s0 + $0x2c] sm:$0xf]
  %v21 = vld [vmem:[%s0 + $0x30] sm:$0xf]
  %v22 = vld [vmem:[%s0 + $0x34] sm:$0xf]
  %v23 = vld [vmem:[%s0 + $0x38] sm:$0xf]
  %v24 = vld [vmem:[%s0 + $0x3c] sm:$0xf]
  %v25 = vld [vmem:[%s0 + $0x40] sm:$0xf]
  %v26 = vld [vmem:[%s0 + $0x44] sm:$0xf]
  %v27 = vld [vmem:[%s0 + $0x48] sm:$0xf]
  %v28 = vld [vmem:[%s0 + $0x4c] sm:$0xf]
  %v29 = vld [vmem:[%s0 + $0x50] sm:$0xf]
  %v30 = vld [vmem:[%s0 + $0x54] sm:$0xf]
  %v31 = vld [vmem:[%s0 + $0x58] sm:$0xf]
  %v32 = vld [vmem:[%s0 + $0x5c] sm:$0xf]
  %v33 = vld [vmem:[%s0 + $0x60] sm:$0xf]
  %v34 = vld [vmem:[%s0 + $0x64] sm:$0xf]
  %v35 = vld [vmem:[%s0 + $0x68] sm:$0xf]
  %v36 = vld [vmem:[%s0 + $0x6c] sm:$0xf]
  %v37 = vld [vmem:[%s0 + $0x70] sm:$0xf]
  %v38 = vld [vmem:[%s0 + $0x74] sm:$0xf]
  %v39 = vld [vmem:[%s0 + $0x78] sm:$0xf]
  %v40 = vld [vmem:[%s0 + $0x7c] sm:$0xf]
  %v41 = vld [vmem:[%s0 + $0x80] sm:$0xf]
  %v42 = vld [vmem:[%s0 + $0x84] sm:$0xf]
  %v43 = vld [vmem:[%s0 + $0x88] sm:$0xf]
  %v44 = vld [vmem:[%s0 + $0x8c] sm:$0xf]
  %v45 = vld [vmem:[%s0 + $0x90] sm:$0xf]
  %v46 = vld [vmem:[%s0 + $0x94] sm:$0xf]
  %v47 = vld [vmem:[%s0 + $0x98] sm:$0xf]
  %v48 = vld [vmem:[%s0 + $0x9c] sm:$0xf]
  %v49 = vld [vmem:[%s0 + $0xa0] sm:$0xf]
  %v50 = vld [vmem:[%s0 + $0xa4] sm:$0xf]
  %v51 = vld [vmem:[%s0 + $0xa8] sm:$0xf]
  %v52 = vld [vmem:[%s0 + $0xac] sm:$0xf]
  %v53 = vld [vmem:[%s0 + $0xb0] sm:$0xf]
  %v54 = vld [vmem:[%s0 + $0xb4] sm:$0xf]
  %v55 = vld [vmem:[%s0 + $0xb8] sm:$0xf]
  %v56 = vld [vmem:[%s0 + $0xbc] sm:$0xf]
  %v57 = vld [vmem:[%s0 + $0xc0] sm:$0xf]
  %v58 = vld [vmem:[%s0 + $0xc4] sm:$0xf]
  %v59 = vld [vmem:[%s0 + $0xc8] sm:$0xf]
  %v60 = vld [vmem:[%s0 + $0xcc] sm:$0xf]
  %v61 = vld [vmem:[%s0 + $0xd0] sm:$0xf]
  %v62 = vld [vmem:[%s0 + $0xd4] sm:$0xf]
  %v63 = vld [vmem:[%s0 + $0xd8] sm:$0xf]
  %v64 = vld [vmem:[%s0 + $0xdc] sm:$0xf]
  %v65 = vld [vmem:[%s0 + $0xe0] sm:$0xf]
  %v66 = vld [vmem:[%s0 + $0xe4] sm:$0xf]
  %v67 = vld [vmem:[%s0 + $0xe8] sm:$0xf]
  %v68 = vld [vmem:[%s0 + $0xec] sm:$0xf]
  %v69 = vld [vmem:[%s0 + $0xf0] sm:$0xf]
  %v70 = vld [vmem:[%s0 + $0xf4] sm:$0xf]
  %v71 = vld [vmem:[%s0 + $0xf8] sm:$0xf]
  %v72 = vld [vmem:[%s0 + $0xfc] sm:$0xf]
  %v73 = vld [vmem:[%s0 + $0x100] sm:$0xf]
  %v74 = vld [vmem:[%s0 + $0x104] sm:$0xf]
  %v75 = vld [vmem:[%s0 + $0x108] sm:$0xf]
  %v76 = vld [vmem:[%s0 + $0x10c] sm:$0xf]
  %v77 = vld [vmem:[%s0 + $0x110] sm:$0xf]
  %v78 = vld [vmem:[%s0 + $0x114] sm:$0xf]
  %v79 = vld [vmem:[%s0 + $0x118] sm:$0xf]
  %v80 = vld [vmem:[%s0 + $0x11c] sm:$0xf]
  %v81 = vld [vmem:[%s0 + $0x120] sm:$0xf]
  %v82 = vld [vmem:[%s0 + $0x124] sm:$0xf]
  %v83 = vld [vmem:[%s0 + $0x128] sm:$0xf]
  %v84 = vld [vmem:[%s0 + $0x12c] sm:$0xf]
  %v85 = vld [vmem:[%s0 + $0x130] sm:$0xf]
  %v86 = vld [vmem:[%s0 + $0x134] sm:$0xf]
  %v87 = vld [vmem:[%s0 + $0x138] sm:$0xf]
  %v88 = vld [vmem:[%s0 + $0x13c] sm:$0xf]
  %v89 = vld [vmem:[%s0 + $0x140] sm:$0xf]
  %v90 = vld [vmem:[%s0 + $0x144] sm:$0xf]
  %v91 = vld [vmem:[%s0 + $0x148] sm:$0xf]
  %v92 = vld [vmem:[%s0 + $0x14c] sm:$0xf]
  %v93 = vld [vmem:[%s0 + $0x150] sm:$0xf]
  %v94 = vld [vmem:[%s0 + $0x154] sm:$0xf]
  %v95 = vld [vmem:[%s0 + $0x158] sm:$0xf]
  %v96 = vld [vmem:[%s0 + $0x15c] sm:$0xf]
  %v97 = vld [vmem:[%s0 + $0x160] sm:$0xf]
  %v98 = vld [vmem:[%s0 + $0x164] sm:$0xf]
  %v99 = vld [vmem:[%s0 + $0x168] sm:$0xf]
  %v100 = vld [vmem:[%s0 + $0x16c] sm:$0xf]
  %v101 = vld [vmem:[%s0 + $0x170] sm:$0xf]
  %v102 = vld [vmem:[%s0 + $0x174] sm:$0xf]
  %v103 = vld [vmem:[%s0 + $0x178] sm:$0xf]
  %v104 = vld [vmem:[%s0 + $0x17c] sm:$0xf]
  %v105 = vld [vmem:[%s0 + $0x180] sm:$0xf]
  %v106 = vld [vmem:[%s0 + $0x184] sm:$0xf]
  %v107 = vld [vmem:[%s0 + $0x188] sm:$0xf]
  %v108 = vld [vmem:[%s0 + $0x18c] sm:$0xf]
  %v109 = vld [vmem:[%s0 + $0x190] sm:$0xf]
  %v110 = vld [vmem:[%s0 + $0x194] sm:$0xf]
  %v111 = vld [vmem:[%s0 + $0x198] sm:$0xf]
  %v112 = vld [vmem:[%s0 + $0x19c] sm:$0xf]
  %v113 = vld [vmem:[%s0 + $0x1a0] sm:$0xf]
  %v114 = vld [vmem:[%s0 + $0x1a4] sm:$0xf]
  %v115 = vld [vmem:[%s0 + $0x1a8] sm:$0xf]
  %v116 = vld [vmem:[%s0 + $0x1ac] sm:$0xf]
  %v117 = vld [vmem:[%s0 + $0x1b0] sm:$0xf]
  %v118 = vld [vmem:[%s0 + $0x1b4] sm:$0xf]
  %v119 = vld [vmem:[%s0 + $0x1b8] sm:$0xf]
  %v120 = vld [vmem:[%s0 + $0x1bc] sm:$0xf]
  %v121 = vld [vmem:[%s0 + $0x1c0] sm:$0xf]
  %v122 = vld [vmem:[%s0 + $0x1c4] sm:$0xf]
  %v123 = vld [vmem:[%s0 + $0x1c8] sm:$0xf]
  %v124 = vld [vmem:[%s0 + $0x1cc] sm:$0xf]
  %v125 = vld [vmem:[%s0 + $0x1d0] sm:$0xf]
  %v126 = vld [vmem:[%s0 + $0x1d4] sm:$0xf]
  %v127 = vld [vmem:[%s0 + $0x1d8] sm:$0xf]
  %v128 = vld [vmem:[%s0 + $0x1dc] sm:$0xf]
  %v129 = vld [vmem:[%s0 + $0x1e0] sm:$0xf]
  %v130 = vld [vmem:[%s0 + $0x1e4] sm:$0xf]
  %v131 = vld [vmem:[%s0 + $0x1e8] sm:$0xf]
  %v132 = vld [vmem:[%s0 + $0x1ec] sm:$0xf]
  %v133 = vld [vmem:[%s0 + $0x1f0] sm:$0xf]
  %v134 = vld [vmem:[%s0 + $0x1f4] sm:$0xf]
  %v135 = vld [vmem:[%s0 + $0x1f8] sm:$0xf]
  %v136 = vld [vmem:[%s0 + $0x1fc] sm:$0xf]
  %v137 = vld [vmem:[%s0 + $0x200] sm:$0xf]
  %v138 = vld [vmem:[%s0 + $0x204] sm:$0xf]
  %v139 = vld [vmem:[%s0 + $0x208] sm:$0xf]
  %v140 = vld [vmem:[%s0 + $0x20c] sm:$0xf]
  %v141 = vld [vmem:[%s0 + $0x210] sm:$0xf]
  %v142 = vld [vmem:[%s0 + $0x214] sm:$0xf]
  %v143 = vld [vmem:[%s0 + $0x218] sm:$0xf]
  %v144 = vld [vmem:[%s0 + $0x21c] sm:$0xf]
  %v145 = vld [vmem:[%s0 + $0x220] sm:$0xf]
  %v146 = vld [vmem:[%s0 + $0x224] sm:$0xf]
  %v147 = vld [vmem:[%s0 + $0x228] sm:$0xf]
  %v148 = vld [vmem:[%s0 + $0x22c] sm:$0xf]
  %v149 = vld [vmem:[%s0 + $0x230] sm:$0xf]
  %v150 = vld [vmem:[%s0 + $0x234] sm:$0xf]
  %v151 = vld [vmem:[%s0 + $0x238] sm:$0xf]
  %v152 = vld [vmem:[%s0 + $0x23c] sm:$0xf]
  %vm153 = vcmask 1043456
  %v156 = vsel %vm153, %v9, 4286644096
  %v159 = vsel %vm153, %v25, 4286644096
  %v161 = vmax.bf16 %v156, %v159
  %v163 = vsel %vm153, %v41, 4286644096
  %v165 = vmax.bf16 %v161, %v163
  %v167 = vsel %vm153, %v57, 4286644096
  %v169 = vmax.bf16 %v165, %v167
  %v171 = vsel %vm153, %v73, 4286644096
  %v173 = vmax.bf16 %v169, %v171
  %v175 = vsel %vm153, %v89, 4286644096
  %v177 = vmax.bf16 %v173, %v175
  %v179 = vsel %vm153, %v105, 4286644096
  %v181 = vmax.bf16 %v177, %v179
  %v183 = vsel %vm153, %v121, 4286644096
  %v185 = vmax.bf16 %v181, %v183
  %v187 = vsel %vm153, %v137, 4286644096
  %v189 = vmax.bf16 %v185, %v187
  %v191 = vsel %vm153, %v10, 4286644096
  %v194 = vsel %vm153, %v26, 4286644096
  %v196 = vmax.bf16 %v191, %v194
  %v198 = vsel %vm153, %v42, 4286644096
  %v200 = vmax.bf16 %v196, %v198
  %v202 = vsel %vm153, %v58, 4286644096
  %v204 = vmax.bf16 %v200, %v202
  %v206 = vsel %vm153, %v74, 4286644096
  %v208 = vmax.bf16 %v204, %v206
  %v210 = vsel %vm153, %v90, 4286644096
  %v212 = vmax.bf16 %v208, %v210
  %v214 = vsel %vm153, %v106, 4286644096
  %v216 = vmax.bf16 %v212, %v214
  %v218 = vsel %vm153, %v122, 4286644096
  %v220 = vmax.bf16 %v216, %v218
  %v222 = vsel %vm153, %v138, 4286644096
  %v224 = vmax.bf16 %v220, %v222
  %v226 = vsel %vm153, %v11, 4286644096
  %v229 = vsel %vm153, %v27, 4286644096
  %v231 = vmax.bf16 %v226, %v229
  %v233 = vsel %vm153, %v43, 4286644096
  %v235 = vmax.bf16 %v231, %v233
  %v237 = vsel %vm153, %v59, 4286644096
  %v239 = vmax.bf16 %v235, %v237
  %v241 = vsel %vm153, %v75, 4286644096
  %v243 = vmax.bf16 %v239, %v241
  %v245 = vsel %vm153, %v91, 4286644096
  %v247 = vmax.bf16 %v243, %v245
  %v249 = vsel %vm153, %v107, 4286644096
  %v251 = vmax.bf16 %v247, %v249
  %v253 = vsel %vm153, %v123, 4286644096
  %v255 = vmax.bf16 %v251, %v253
  %v257 = vsel %vm153, %v139, 4286644096
  %v259 = vmax.bf16 %v255, %v257
  %v261 = vsel %vm153, %v12, 4286644096
  %v264 = vsel %vm153, %v28, 4286644096
  %v266 = vmax.bf16 %v261, %v264
  %v268 = vsel %vm153, %v44, 4286644096
  %v270 = vmax.bf16 %v266, %v268
  %v272 = vsel %vm153, %v60, 4286644096
  %v274 = vmax.bf16 %v270, %v272
  %v276 = vsel %vm153, %v76, 4286644096
  %v278 = vmax.bf16 %v274, %v276
  %v280 = vsel %vm153, %v92, 4286644096
  %v282 = vmax.bf16 %v278, %v280
  %v284 = vsel %vm153, %v108, 4286644096
  %v286 = vmax.bf16 %v282, %v284
  %v288 = vsel %vm153, %v124, 4286644096
  %v290 = vmax.bf16 %v286, %v288
  %v292 = vsel %vm153, %v140, 4286644096
  %v294 = vmax.bf16 %v290, %v292
  %v296 = vsel %vm153, %v13, 4286644096
  %v299 = vsel %vm153, %v29, 4286644096
  %v301 = vmax.bf16 %v296, %v299
  %v303 = vsel %vm153, %v45, 4286644096
  %v305 = vmax.bf16 %v301, %v303
  %v307 = vsel %vm153, %v61, 4286644096
  %v309 = vmax.bf16 %v305, %v307
  %v311 = vsel %vm153, %v77, 4286644096
  %v313 = vmax.bf16 %v309, %v311
  %v315 = vsel %vm153, %v93, 4286644096
  %v317 = vmax.bf16 %v313, %v315
  %v319 = vsel %vm153, %v109, 4286644096
  %v321 = vmax.bf16 %v317, %v319
  %v323 = vsel %vm153, %v125, 4286644096
  %v325 = vmax.bf16 %v321, %v323
  %v327 = vsel %vm153, %v141, 4286644096
  %v329 = vmax.bf16 %v325, %v327
  %v331 = vsel %vm153, %v14, 4286644096
  %v334 = vsel %vm153, %v30, 4286644096
  %v336 = vmax.bf16 %v331, %v334
  %v338 = vsel %vm153, %v46, 4286644096
  %v340 = vmax.bf16 %v336, %v338
  %v342 = vsel %vm153, %v62, 4286644096
  %v344 = vmax.bf16 %v340, %v342
  %v346 = vsel %vm153, %v78, 4286644096
  %v348 = vmax.bf16 %v344, %v346
  %v350 = vsel %vm153, %v94, 4286644096
  %v352 = vmax.bf16 %v348, %v350
  %v354 = vsel %vm153, %v110, 4286644096
  %v356 = vmax.bf16 %v352, %v354
  %v358 = vsel %vm153, %v126, 4286644096
  %v360 = vmax.bf16 %v356, %v358
  %v362 = vsel %vm153, %v142, 4286644096
  %v364 = vmax.bf16 %v360, %v362
  %v366 = vsel %vm153, %v15, 4286644096
  %v369 = vsel %vm153, %v31, 4286644096
  %v371 = vmax.bf16 %v366, %v369
  %v373 = vsel %vm153, %v47, 4286644096
  %v375 = vmax.bf16 %v371, %v373
  %v377 = vsel %vm153, %v63, 4286644096
  %v379 = vmax.bf16 %v375, %v377
  %v381 = vsel %vm153, %v79, 4286644096
  %v383 = vmax.bf16 %v379, %v381
  %v385 = vsel %vm153, %v95, 4286644096
  %v387 = vmax.bf16 %v383, %v385
  %v389 = vsel %vm153, %v111, 4286644096
  %v391 = vmax.bf16 %v387, %v389
  %v393 = vsel %vm153, %v127, 4286644096
  %v395 = vmax.bf16 %v391, %v393
  %v397 = vsel %vm153, %v143, 4286644096
  %v399 = vmax.bf16 %v395, %v397
  %v401 = vsel %vm153, %v16, 4286644096
  %v404 = vsel %vm153, %v32, 4286644096
  %v406 = vmax.bf16 %v401, %v404
  %v408 = vsel %vm153, %v48, 4286644096
  %v410 = vmax.bf16 %v406, %v408
  %v412 = vsel %vm153, %v64, 4286644096
  %v414 = vmax.bf16 %v410, %v412
  %v416 = vsel %vm153, %v80, 4286644096
  %v418 = vmax.bf16 %v414, %v416
  %v420 = vsel %vm153, %v96, 4286644096
  %v422 = vmax.bf16 %v418, %v420
  %v424 = vsel %vm153, %v112, 4286644096
  %v426 = vmax.bf16 %v422, %v424
  %v428 = vsel %vm153, %v128, 4286644096
  %v430 = vmax.bf16 %v426, %v428
  %v432 = vsel %vm153, %v144, 4286644096
  %v434 = vmax.bf16 %v430, %v432
  %v436 = vsel %vm153, %v17, 4286644096
  %v439 = vsel %vm153, %v33, 4286644096
  %v441 = vmax.bf16 %v436, %v439
  %v443 = vsel %vm153, %v49, 4286644096
  %v445 = vmax.bf16 %v441, %v443
  %v447 = vsel %vm153, %v65, 4286644096
  %v449 = vmax.bf16 %v445, %v447
  %v451 = vsel %vm153, %v81, 4286644096
  %v453 = vmax.bf16 %v449, %v451
  %v455 = vsel %vm153, %v97, 4286644096
  %v457 = vmax.bf16 %v453, %v455
  %v459 = vsel %vm153, %v113, 4286644096
  %v461 = vmax.bf16 %v457, %v459
  %v463 = vsel %vm153, %v129, 4286644096
  %v465 = vmax.bf16 %v461, %v463
  %v467 = vsel %vm153, %v145, 4286644096
  %v469 = vmax.bf16 %v465, %v467
  %v471 = vsel %vm153, %v18, 4286644096
  %v474 = vsel %vm153, %v34, 4286644096
  %v476 = vmax.bf16 %v471, %v474
  %v478 = vsel %vm153, %v50, 4286644096
  %v480 = vmax.bf16 %v476, %v478
  %v482 = vsel %vm153, %v66, 4286644096
  %v484 = vmax.bf16 %v480, %v482
  %v486 = vsel %vm153, %v82, 4286644096
  %v488 = vmax.bf16 %v484, %v486
  %v490 = vsel %vm153, %v98, 4286644096
  %v492 = vmax.bf16 %v488, %v490
  %v494 = vsel %vm153, %v114, 4286644096
  %v496 = vmax.bf16 %v492, %v494
  %v498 = vsel %vm153, %v130, 4286644096
  %v500 = vmax.bf16 %v496, %v498
  %v502 = vsel %vm153, %v146, 4286644096
  %v504 = vmax.bf16 %v500, %v502
  %v506 = vsel %vm153, %v19, 4286644096
  %v509 = vsel %vm153, %v35, 4286644096
  %v511 = vmax.bf16 %v506, %v509
  %v513 = vsel %vm153, %v51, 4286644096
  %v515 = vmax.bf16 %v511, %v513
  %v517 = vsel %vm153, %v67, 4286644096
  %v519 = vmax.bf16 %v515, %v517
  %v521 = vsel %vm153, %v83, 4286644096
  %v523 = vmax.bf16 %v519, %v521
  %v525 = vsel %vm153, %v99, 4286644096
  %v527 = vmax.bf16 %v523, %v525
  %v529 = vsel %vm153, %v115, 4286644096
  %v531 = vmax.bf16 %v527, %v529
  %v533 = vsel %vm153, %v131, 4286644096
  %v535 = vmax.bf16 %v531, %v533
  %v537 = vsel %vm153, %v147, 4286644096
  %v539 = vmax.bf16 %v535, %v537
  %v541 = vsel %vm153, %v20, 4286644096
  %v544 = vsel %vm153, %v36, 4286644096
  %v546 = vmax.bf16 %v541, %v544
  %v548 = vsel %vm153, %v52, 4286644096
  %v550 = vmax.bf16 %v546, %v548
  %v552 = vsel %vm153, %v68, 4286644096
  %v554 = vmax.bf16 %v550, %v552
  %v556 = vsel %vm153, %v84, 4286644096
  %v558 = vmax.bf16 %v554, %v556
  %v560 = vsel %vm153, %v100, 4286644096
  %v562 = vmax.bf16 %v558, %v560
  %v564 = vsel %vm153, %v116, 4286644096
  %v566 = vmax.bf16 %v562, %v564
  %v568 = vsel %vm153, %v132, 4286644096
  %v570 = vmax.bf16 %v566, %v568
  %v572 = vsel %vm153, %v148, 4286644096
  %v574 = vmax.bf16 %v570, %v572
  %v576 = vsel %vm153, %v21, 4286644096
  %v579 = vsel %vm153, %v37, 4286644096
  %v581 = vmax.bf16 %v576, %v579
  %v583 = vsel %vm153, %v53, 4286644096
  %v585 = vmax.bf16 %v581, %v583
  %v587 = vsel %vm153, %v69, 4286644096
  %v589 = vmax.bf16 %v585, %v587
  %v591 = vsel %vm153, %v85, 4286644096
  %v593 = vmax.bf16 %v589, %v591
  %v595 = vsel %vm153, %v101, 4286644096
  %v597 = vmax.bf16 %v593, %v595
  %v599 = vsel %vm153, %v117, 4286644096
  %v601 = vmax.bf16 %v597, %v599
  %v603 = vsel %vm153, %v133, 4286644096
  %v605 = vmax.bf16 %v601, %v603
  %v607 = vsel %vm153, %v149, 4286644096
  %v609 = vmax.bf16 %v605, %v607
  %v611 = vsel %vm153, %v22, 4286644096
  %v614 = vsel %vm153, %v38, 4286644096
  %v616 = vmax.bf16 %v611, %v614
  %v618 = vsel %vm153, %v54, 4286644096
  %v620 = vmax.bf16 %v616, %v618
  %v622 = vsel %vm153, %v70, 4286644096
  %v624 = vmax.bf16 %v620, %v622
  %v626 = vsel %vm153, %v86, 4286644096
  %v628 = vmax.bf16 %v624, %v626
  %v630 = vsel %vm153, %v102, 4286644096
  %v632 = vmax.bf16 %v628, %v630
  %v634 = vsel %vm153, %v118, 4286644096
  %v636 = vmax.bf16 %v632, %v634
  %v638 = vsel %vm153, %v134, 4286644096
  %v640 = vmax.bf16 %v636, %v638
  %v642 = vsel %vm153, %v150, 4286644096
  %v644 = vmax.bf16 %v640, %v642
  %v646 = vsel %vm153, %v23, 4286644096
  %v649 = vsel %vm153, %v39, 4286644096
  %v651 = vmax.bf16 %v646, %v649
  %v653 = vsel %vm153, %v55, 4286644096
  %v655 = vmax.bf16 %v651, %v653
  %v657 = vsel %vm153, %v71, 4286644096
  %v659 = vmax.bf16 %v655, %v657
  %v661 = vsel %vm153, %v87, 4286644096
  %v663 = vmax.bf16 %v659, %v661
  %v665 = vsel %vm153, %v103, 4286644096
  %v667 = vmax.bf16 %v663, %v665
  %v669 = vsel %vm153, %v119, 4286644096
  %v671 = vmax.bf16 %v667, %v669
  %v673 = vsel %vm153, %v135, 4286644096
  %v675 = vmax.bf16 %v671, %v673
  %v677 = vsel %vm153, %v151, 4286644096
  %v679 = vmax.bf16 %v675, %v677
  %v681 = vsel %vm153, %v24, 4286644096
  %v684 = vsel %vm153, %v40, 4286644096
  %v686 = vmax.bf16 %v681, %v684
  %v688 = vsel %vm153, %v56, 4286644096
  %v690 = vmax.bf16 %v686, %v688
  %v692 = vsel %vm153, %v72, 4286644096
  %v694 = vmax.bf16 %v690, %v692
  %v696 = vsel %vm153, %v88, 4286644096
  %v698 = vmax.bf16 %v694, %v696
  %v700 = vsel %vm153, %v104, 4286644096
  %v702 = vmax.bf16 %v698, %v700
  %v704 = vsel %vm153, %v120, 4286644096
  %v706 = vmax.bf16 %v702, %v704
  %v708 = vsel %vm153, %v136, 4286644096
  %v710 = vmax.bf16 %v706, %v708
  %v712 = vsel %vm153, %v152, 4286644096
  %v714 = vmax.bf16 %v710, %v712
  %715 = vst [vmem:[%s1] sm:$0xf] %v189
  %716 = vst [vmem:[%s1 + $0x4] sm:$0xf] %v224
  %717 = vst [vmem:[%s1 + $0x8] sm:$0xf] %v259
  %718 = vst [vmem:[%s1 + $0xc] sm:$0xf] %v294
  %719 = vst [vmem:[%s1 + $0x10] sm:$0xf] %v329
  %720 = vst [vmem:[%s1 + $0x14] sm:$0xf] %v364
  %721 = vst [vmem:[%s1 + $0x18] sm:$0xf] %v399
  %722 = vst [vmem:[%s1 + $0x1c] sm:$0xf] %v434
  %723 = vst [vmem:[%s1 + $0x20] sm:$0xf] %v469
  %724 = vst [vmem:[%s1 + $0x24] sm:$0xf] %v504
  %725 = vst [vmem:[%s1 + $0x28] sm:$0xf] %v539
  %726 = vst [vmem:[%s1 + $0x2c] sm:$0xf] %v574
  %727 = vst [vmem:[%s1 + $0x30] sm:$0xf] %v609
  %728 = vst [vmem:[%s1 + $0x34] sm:$0xf] %v644
  %729 = vst [vmem:[%s1 + $0x38] sm:$0xf] %v679
  %730 = vst [vmem:[%s1 + $0x3c] sm:$0xf] %v714
  // Predicated region
  $region6: #{resnet152fc_forward.20} parent=0 // pred_check
    _
  $region7: #{resnet152fc_forward.20} parent=0 // pred_check_branch
    %732 = sbr.rel (0) target = $region9
  $region8: #{resnet152fc_forward.20} parent=0 // pred_region
    _
  $region9: #{resnet152fc_forward.20} parent=0 // pred_fallthru
    _
  // Predicated region
  $region10: #{resnet152fc_forward.20} parent=0 // pred_check
    _
  $region11: #{resnet152fc_forward.20} parent=0 // pred_check_branch
    %734 = sbr.rel (0) target = $region13
  $region12: #{resnet152fc_forward.20} parent=0 // pred_region
    _
  $region13: #{resnet152fc_forward.20} parent=0 // pred_fallthru
    _

// kernel: resnet152fc_forward.23
$region0: #{resnet152fc_forward.23}
  #allocation0 [shape = 'u32[]', space=smem, size = 0x4, offset = 0x4, fixed_abs, tag = 'smem constant byte address 0x4 - core index']
  #allocation1 [shape = 'u32[144,128]{1,0:T(1,128)}', space=vmem, size = 0x12000, scoped, tag = 'internal scratch']
  %s0 = inlined_call_operand.vmem [shape: bf16[128,128], index: 0, kind: input, shape index: {}]
  %s1 = inlined_call_operand.vmem [shape: bf16[128,128], index: 1, kind: input, shape index: {}]
  %s2 = inlined_call_operand.vmem [shape: f32[1,128], index: 2, kind: input, shape index: {}]
  %s3 = inlined_call_operand.vmem [shape: bf16[128,128], index: 3, kind: output, shape index: {}]
  %s4 = sld [smem:[#allocation0]]
  $region22: #{resnet152fc_forward.23} parent=0
    _
  %s6 = ssub.s32 1, %s4
  %s7 = scalar_select 0, %s6, %s4
  // Predicated region
  $region2: #{resnet152fc_forward.23} parent=0 // pred_check
    _
  $region3: #{resnet152fc_forward.23} parent=0 // pred_check_branch
    %9 = sbr.rel (0) target = $region5
  $region4: #{resnet152fc_forward.23} parent=0 // pred_region
    _
  $region5: #{resnet152fc_forward.23} parent=0 // pred_fallthru
    _
  // Predicated region
  $region6: #{resnet152fc_forward.23} parent=0 // pred_check
    _
  $region7: #{resnet152fc_forward.23} parent=0 // pred_check_branch
    %11 = sbr.rel (0) target = $region9
  $region8: #{resnet152fc_forward.23} parent=0 // pred_region
    _
  $region9: #{resnet152fc_forward.23} parent=0 // pred_fallthru
    _
  // Predicated region
  $region10: #{resnet152fc_forward.23} parent=0 // pred_check
    _
  $region11: #{resnet152fc_forward.23} parent=0 // pred_check_branch
    %13 = sbr.rel (0) target = $region13
  $region12: #{resnet152fc_forward.23} parent=0 // pred_region
    _
  $region13: #{resnet152fc_forward.23} parent=0 // pred_fallthru
    _
  %v15 = vld [vmem:[%s0] sm:$0xf]
  %v16 = vld [vmem:[%s0 + $0x4] sm:$0xf]
  %v17 = vld [vmem:[%s0 + $0x8] sm:$0xf]
  %v18 = vld [vmem:[%s0 + $0xc] sm:$0xf]
  %v19 = vld [vmem:[%s0 + $0x10] sm:$0xf]
  %v20 = vld [vmem:[%s0 + $0x14] sm:$0xf]
  %v21 = vld [vmem:[%s0 + $0x18] sm:$0xf]
  %v22 = vld [vmem:[%s0 + $0x1c] sm:$0xf]
  %v23 = vld [vmem:[%s0 + $0x20] sm:$0xf]
  %v24 = vld [vmem:[%s0 + $0x24] sm:$0xf]
  %v25 = vld [vmem:[%s0 + $0x28] sm:$0xf]
  %v26 = vld [vmem:[%s0 + $0x2c] sm:$0xf]
  %v27 = vld [vmem:[%s0 + $0x30] sm:$0xf]
  %v28 = vld [vmem:[%s0 + $0x34] sm:$0xf]
  %v29 = vld [vmem:[%s0 + $0x38] sm:$0xf]
  %v30 = vld [vmem:[%s0 + $0x3c] sm:$0xf]
  %v31 = vld [vmem:[%s1] sm:$0xf]
  %v32 = vld [vmem:[%s1 + $0x4] sm:$0xf]
  %v33 = vld [vmem:[%s1 + $0x8] sm:$0xf]
  %v34 = vld [vmem:[%s1 + $0xc] sm:$0xf]
  %v35 = vld [vmem:[%s1 + $0x10] sm:$0xf]
  %v36 = vld [vmem:[%s1 + $0x14] sm:$0xf]
  %v37 = vld [vmem:[%s1 + $0x18] sm:$0xf]
  %v38 = vld [vmem:[%s1 + $0x1c] sm:$0xf]
  %v39 = vld [vmem:[%s1 + $0x20] sm:$0xf]
  %v40 = vld [vmem:[%s1 + $0x24] sm:$0xf]
  %v41 = vld [vmem:[%s1 + $0x28] sm:$0xf]
  %v42 = vld [vmem:[%s1 + $0x2c] sm:$0xf]
  %v43 = vld [vmem:[%s1 + $0x30] sm:$0xf]
  %v44 = vld [vmem:[%s1 + $0x34] sm:$0xf]
  %v45 = vld [vmem:[%s1 + $0x38] sm:$0xf]
  %v46 = vld [vmem:[%s1 + $0x3c] sm:$0xf]
  %v47 = vld [vmem:[%s2] sm:$0x1]
  %v49 = vlaneseq
  %v50 = vshrl.u32 %v49, 7
  %v51 = vsub.s32 0, %v50
  %v52 = vrot.slane %v47, %v51
  %v70 = vunpack.c.l.b16 %v15
  %v71 = vunpack.c.l.b16 %v16
  %v72 = vunpack.c.l.b16 %v17
  %v73 = vunpack.c.l.b16 %v18
  %v74 = vunpack.c.l.b16 %v19
  %v75 = vunpack.c.l.b16 %v20
  %v76 = vunpack.c.l.b16 %v21
  %v77 = vunpack.c.l.b16 %v22
  %v78 = vunpack.c.l.b16 %v23
  %v79 = vunpack.c.l.b16 %v24
  %v80 = vunpack.c.l.b16 %v25
  %v81 = vunpack.c.l.b16 %v26
  %v82 = vunpack.c.l.b16 %v27
  %v83 = vunpack.c.l.b16 %v28
  %v84 = vunpack.c.l.b16 %v29
  %v85 = vunpack.c.l.b16 %v30
  %v86 = vpack.c.b16 %v71, %v70
  %v87 = vpack.c.b16 %v73, %v72
  %v88 = vpack.c.b16 %v75, %v74
  %v89 = vpack.c.b16 %v77, %v76
  %v90 = vpack.c.b16 %v79, %v78
  %v91 = vpack.c.b16 %v81, %v80
  %v92 = vpack.c.b16 %v83, %v82
  %v93 = vpack.c.b16 %v85, %v84
  %v118 = vunpack.c.l.b16 %v31
  %v119 = vunpack.c.l.b16 %v32
  %v120 = vunpack.c.l.b16 %v33
  %v121 = vunpack.c.l.b16 %v34
  %v122 = vunpack.c.l.b16 %v35
  %v123 = vunpack.c.l.b16 %v36
  %v124 = vunpack.c.l.b16 %v37
  %v125 = vunpack.c.l.b16 %v38
  %v126 = vunpack.c.l.b16 %v39
  %v127 = vunpack.c.l.b16 %v40
  %v128 = vunpack.c.l.b16 %v41
  %v129 = vunpack.c.l.b16 %v42
  %v130 = vunpack.c.l.b16 %v43
  %v131 = vunpack.c.l.b16 %v44
  %v132 = vunpack.c.l.b16 %v45
  %v133 = vunpack.c.l.b16 %v46
  %v134 = vpack.c.b16 %v119, %v118
  %v135 = vpack.c.b16 %v121, %v120
  %v136 = vpack.c.b16 %v123, %v122
  %v137 = vpack.c.b16 %v125, %v124
  %v138 = vpack.c.b16 %v127, %v126
  %v139 = vpack.c.b16 %v129, %v128
  %v140 = vpack.c.b16 %v131, %v130
  %v141 = vpack.c.b16 %v133, %v132
  %150 = vmatprep.subr.bf16.mxu0 0
  %151 = vmatpush1.bf16.msra.mxu0 %v134
  %152 = vmatprep.subr.bf16.mxu0 0
  %153 = vmatpush1.bf16.msra.mxu0 %v135
  %154 = vmatprep.subr.bf16.mxu0 0
  %155 = vmatpush1.bf16.msra.mxu0 %v136
  %156 = vmatprep.subr.bf16.mxu0 0
  %157 = vmatpush1.bf16.msra.mxu0 %v137
  %158 = vmatprep.subr.bf16.mxu0 0
  %159 = vmatpush1.bf16.msra.mxu0 %v138
  %160 = vmatprep.subr.bf16.mxu0 0
  %161 = vmatpush1.bf16.msra.mxu0 %v139
  %162 = vmatprep.subr.bf16.mxu0 0
  %163 = vmatpush1.bf16.msra.mxu0 %v140
  %164 = vmatprep.subr.bf16.mxu0 0
  %165 = vmatpush1.bf16.msra.mxu0 %v141
  %166 = vmatprep.subr.bf16.mxu0 0
  %167 = vmatpush1.bf16.msra.mxu0 0
  %168 = vmatprep.subr.bf16.mxu0 0
  %169 = vmatpush1.bf16.msra.mxu0 0
  %170 = vmatprep.subr.bf16.mxu0 0
  %171 = vmatpush1.bf16.msra.mxu0 0
  %172 = vmatprep.subr.bf16.mxu0 0
  %173 = vmatpush1.bf16.msra.mxu0 0
  %174 = vmatprep.subr.bf16.mxu0 0
  %175 = vmatpush1.bf16.msra.mxu0 0
  %176 = vmatprep.subr.bf16.mxu0 0
  %177 = vmatpush1.bf16.msra.mxu0 0
  %178 = vmatprep.subr.bf16.mxu0 0
  %179 = vmatpush1.bf16.msra.mxu0 0
  %180 = vmatprep.subr.bf16.mxu0 0
  %181 = vmatpush1.bf16.msra.mxu0 0
  %182 = vmatprep.mubr.bf16.mxu0 0
  %183 = vmatmul.mubr.bf16.gmra.mrb[0].mxu0 %v86
  %v184 = vpop.f32.mrb[0].mxu0
  %v185 = vadd.f32 %v52, %v184
  %v186 = vpop.f32.mrb[0].mxu0
  %v187 = vpop.f32.mrb[0].mxu0
  %v188 = vadd.f32 %v52, %v187
  %v189 = vpop.f32.mrb[0].mxu0
  %190 = vmatprep.mubr.bf16.mxu0 0
  %191 = vmatmul.mubr.bf16.gmra.mrb[0].mxu0 %v87
  %v192 = vpop.f32.mrb[0].mxu0
  %v193 = vadd.f32 %v52, %v192
  %v194 = vpop.f32.mrb[0].mxu0
  %v195 = vpop.f32.mrb[0].mxu0
  %v196 = vadd.f32 %v52, %v195
  %v197 = vpop.f32.mrb[0].mxu0
  %198 = vmatprep.mubr.bf16.mxu0 0
  %199 = vmatmul.mubr.bf16.gmra.mrb[0].mxu0 %v88
  %v200 = vpop.f32.mrb[0].mxu0
  %v201 = vadd.f32 %v52, %v200
  %v202 = vpop.f32.mrb[0].mxu0
  %v203 = vpop.f32.mrb[0].mxu0
  %v204 = vadd.f32 %v52, %v203
  %v205 = vpop.f32.mrb[0].mxu0
  %206 = vmatprep.mubr.bf16.mxu0 0
  %207 = vmatmul.mubr.bf16.gmra.mrb[0].mxu0 %v89
  %v208 = vpop.f32.mrb[0].mxu0
  %v209 = vadd.f32 %v52, %v208
  %v210 = vpop.f32.mrb[0].mxu0
  %v211 = vpop.f32.mrb[0].mxu0
  %v212 = vadd.f32 %v52, %v211
  %v213 = vpop.f32.mrb[0].mxu0
  %214 = vmatprep.mubr.bf16.mxu0 0
  %215 = vmatmul.mubr.bf16.gmra.mrb[0].mxu0 %v90
  %v216 = vpop.f32.mrb[0].mxu0
  %v217 = vadd.f32 %v52, %v216
  %v218 = vpop.f32.mrb[0].mxu0
  %v219 = vpop.f32.mrb[0].mxu0
  %v220 = vadd.f32 %v52, %v219
  %v221 = vpop.f32.mrb[0].mxu0
  %222 = vmatprep.mubr.bf16.mxu0 0
  %223 = vmatmul.mubr.bf16.gmra.mrb[0].mxu0 %v91
  %v224 = vpop.f32.mrb[0].mxu0
  %v225 = vadd.f32 %v52, %v224
  %v226 = vpop.f32.mrb[0].mxu0
  %v227 = vpop.f32.mrb[0].mxu0
  %v228 = vadd.f32 %v52, %v227
  %v229 = vpop.f32.mrb[0].mxu0
  %230 = vmatprep.mubr.bf16.mxu0 0
  %231 = vmatmul.mubr.bf16.gmra.mrb[0].mxu0 %v92
  %v232 = vpop.f32.mrb[0].mxu0
  %v233 = vadd.f32 %v52, %v232
  %v234 = vpop.f32.mrb[0].mxu0
  %v235 = vpop.f32.mrb[0].mxu0
  %v236 = vadd.f32 %v52, %v235
  %v237 = vpop.f32.mrb[0].mxu0
  %238 = vmatprep.mubr.bf16.mxu0 0
  %239 = vmatmul.mubr.bf16.gmra.mrb[0].mxu0 %v93
  %v240 = vpop.f32.mrb[0].mxu0
  %v241 = vadd.f32 %v52, %v240
  %v242 = vpop.f32.mrb[0].mxu0
  %v243 = vpop.f32.mrb[0].mxu0
  %v244 = vadd.f32 %v52, %v243
  %v245 = vpop.f32.mrb[0].mxu0
  %246 = vdwg.mxu0
  %v247 = vpack.c.bf16 %v188, %v185
  %v248 = vpack.c.bf16 %v196, %v193
  %v249 = vpack.c.bf16 %v204, %v201
  %v250 = vpack.c.bf16 %v212, %v209
  %v251 = vpack.c.bf16 %v220, %v217
  %v252 = vpack.c.bf16 %v228, %v225
  %v253 = vpack.c.bf16 %v236, %v233
  %v254 = vpack.c.bf16 %v244, %v241
  %v263 = vunpack.c.l.b16 %v247
  %v264 = vunpack.c.h.b16 %v247
  %v265 = vunpack.c.l.b16 %v248
  %v266 = vunpack.c.h.b16 %v248
  %v267 = vunpack.c.l.b16 %v249
  %v268 = vunpack.c.h.b16 %v249
  %v269 = vunpack.c.l.b16 %v250
  %v270 = vunpack.c.h.b16 %v250
  %v271 = vunpack.c.l.b16 %v251
  %v272 = vunpack.c.h.b16 %v251
  %v273 = vunpack.c.l.b16 %v252
  %v274 = vunpack.c.h.b16 %v252
  %v275 = vunpack.c.l.b16 %v253
  %v276 = vunpack.c.h.b16 %v253
  %v277 = vunpack.c.l.b16 %v254
  %v278 = vunpack.c.h.b16 %v254
  %v279 = vpack.c.b16 %v263, %v263
  %v280 = vpack.c.b16 %v264, %v264
  %v281 = vpack.c.b16 %v265, %v265
  %v282 = vpack.c.b16 %v266, %v266
  %v283 = vpack.c.b16 %v267, %v267
  %v284 = vpack.c.b16 %v268, %v268
  %v285 = vpack.c.b16 %v269, %v269
  %v286 = vpack.c.b16 %v270, %v270
  %v287 = vpack.c.b16 %v271, %v271
  %v288 = vpack.c.b16 %v272, %v272
  %v289 = vpack.c.b16 %v273, %v273
  %v290 = vpack.c.b16 %v274, %v274
  %v291 = vpack.c.b16 %v275, %v275
  %v292 = vpack.c.b16 %v276, %v276
  %v293 = vpack.c.b16 %v277, %v277
  %v294 = vpack.c.b16 %v278, %v278
  %311 = vst [vmem:[%s3] sm:$0xf] %v279
  %312 = vst [vmem:[%s3 + $0x4] sm:$0xf] %v280
  %313 = vst [vmem:[%s3 + $0x8] sm:$0xf] %v281
  %314 = vst [vmem:[%s3 + $0xc] sm:$0xf] %v282
  %315 = vst [vmem:[%s3 + $0x10] sm:$0xf] %v283
  %316 = vst [vmem:[%s3 + $0x14] sm:$0xf] %v284
  %317 = vst [vmem:[%s3 + $0x18] sm:$0xf] %v285
  %318 = vst [vmem:[%s3 + $0x1c] sm:$0xf] %v286
  %319 = vst [vmem:[%s3 + $0x20] sm:$0xf] %v287
  %320 = vst [vmem:[%s3 + $0x24] sm:$0xf] %v288
  %321 = vst [vmem:[%s3 + $0x28] sm:$0xf] %v289
  %322 = vst [vmem:[%s3 + $0x2c] sm:$0xf] %v290
  %323 = vst [vmem:[%s3 + $0x30] sm:$0xf] %v291
  %324 = vst [vmem:[%s3 + $0x34] sm:$0xf] %v292
  %325 = vst [vmem:[%s3 + $0x38] sm:$0xf] %v293
  %326 = vst [vmem:[%s3 + $0x3c] sm:$0xf] %v294
  // Predicated region
  $region14: #{resnet152fc_forward.23} parent=0 // pred_check
    _
  $region15: #{resnet152fc_forward.23} parent=0 // pred_check_branch
    %328 = sbr.rel (0) target = $region17
  $region16: #{resnet152fc_forward.23} parent=0 // pred_region
    _
  $region17: #{resnet152fc_forward.23} parent=0 // pred_fallthru
    _
  // Predicated region
  $region18: #{resnet152fc_forward.23} parent=0 // pred_check
    _
  $region19: #{resnet152fc_forward.23} parent=0 // pred_check_branch
    %330 = sbr.rel (0) target = $region21
  $region20: #{resnet152fc_forward.23} parent=0 // pred_region
    _
  $region21: #{resnet152fc_forward.23} parent=0 // pred_fallthru
    _

// kernel: resnet152fc_forward.24
$region0: #{resnet152fc_forward.24}
  #allocation0 [shape = 'u32[]', space=smem, size = 0x4, offset = 0x4, fixed_abs, tag = 'smem constant byte address 0x4 - core index']
  #allocation1 [shape = 'u32[144,128]{1,0:T(1,128)}', space=vmem, size = 0x12000, scoped, tag = 'internal scratch']
  %s0 = inlined_call_operand.vmem [shape: bf16[128,128], index: 0, kind: input, shape index: {}]
  %s1 = inlined_call_operand.vmem [shape: bf16[128,128], index: 1, kind: input, shape index: {}]
  %s2 = inlined_call_operand.vmem [shape: f32[1,128], index: 2, kind: input, shape index: {}]
  %s3 = inlined_call_operand.vmem [shape: bf16[128,128], index: 3, kind: input, shape index: {}]
  %s4 = inlined_call_operand.vmem [shape: bf16[128,128], index: 4, kind: output, shape index: {}]
  %s5 = sld [smem:[#allocation0]]
  $region26: #{resnet152fc_forward.24} parent=0
    _
  %s7 = ssub.s32 1, %s5
  %s8 = scalar_select 0, %s7, %s5
  // Predicated region
  $region2: #{resnet152fc_forward.24} parent=0 // pred_check
    _
  $region3: #{resnet152fc_forward.24} parent=0 // pred_check_branch
    %10 = sbr.rel (0) target = $region5
  $region4: #{resnet152fc_forward.24} parent=0 // pred_region
    _
  $region5: #{resnet152fc_forward.24} parent=0 // pred_fallthru
    _
  // Predicated region
  $region6: #{resnet152fc_forward.24} parent=0 // pred_check
    _
  $region7: #{resnet152fc_forward.24} parent=0 // pred_check_branch
    %12 = sbr.rel (0) target = $region9
  $region8: #{resnet152fc_forward.24} parent=0 // pred_region
    _
  $region9: #{resnet152fc_forward.24} parent=0 // pred_fallthru
    _
  // Predicated region
  $region10: #{resnet152fc_forward.24} parent=0 // pred_check
    _
  $region11: #{resnet152fc_forward.24} parent=0 // pred_check_branch
    %14 = sbr.rel (0) target = $region13
  $region12: #{resnet152fc_forward.24} parent=0 // pred_region
    _
  $region13: #{resnet152fc_forward.24} parent=0 // pred_fallthru
    _
  // Predicated region
  $region14: #{resnet152fc_forward.24} parent=0 // pred_check
    _
  $region15: #{resnet152fc_forward.24} parent=0 // pred_check_branch
    %16 = sbr.rel (0) target = $region17
  $region16: #{resnet152fc_forward.24} parent=0 // pred_region
    _
  $region17: #{resnet152fc_forward.24} parent=0 // pred_fallthru
    _
  %v18 = vld [vmem:[%s0] sm:$0xf]
  %v19 = vld [vmem:[%s0 + $0x4] sm:$0xf]
  %v20 = vld [vmem:[%s0 + $0x8] sm:$0xf]
  %v21 = vld [vmem:[%s0 + $0xc] sm:$0xf]
  %v22 = vld [vmem:[%s0 + $0x10] sm:$0xf]
  %v23 = vld [vmem:[%s0 + $0x14] sm:$0xf]
  %v24 = vld [vmem:[%s0 + $0x18] sm:$0xf]
  %v25 = vld [vmem:[%s0 + $0x1c] sm:$0xf]
  %v26 = vld [vmem:[%s0 + $0x20] sm:$0xf]
  %v27 = vld [vmem:[%s0 + $0x24] sm:$0xf]
  %v28 = vld [vmem:[%s0 + $0x28] sm:$0xf]
  %v29 = vld [vmem:[%s0 + $0x2c] sm:$0xf]
  %v30 = vld [vmem:[%s0 + $0x30] sm:$0xf]
  %v31 = vld [vmem:[%s0 + $0x34] sm:$0xf]
  %v32 = vld [vmem:[%s0 + $0x38] sm:$0xf]
  %v33 = vld [vmem:[%s0 + $0x3c] sm:$0xf]
  %v34 = vld [vmem:[%s1] sm:$0xf]
  %v35 = vld [vmem:[%s1 + $0x4] sm:$0xf]
  %v36 = vld [vmem:[%s1 + $0x8] sm:$0xf]
  %v37 = vld [vmem:[%s1 + $0xc] sm:$0xf]
  %v38 = vld [vmem:[%s1 + $0x10] sm:$0xf]
  %v39 = vld [vmem:[%s1 + $0x14] sm:$0xf]
  %v40 = vld [vmem:[%s1 + $0x18] sm:$0xf]
  %v41 = vld [vmem:[%s1 + $0x1c] sm:$0xf]
  %v42 = vld [vmem:[%s1 + $0x20] sm:$0xf]
  %v43 = vld [vmem:[%s1 + $0x24] sm:$0xf]
  %v44 = vld [vmem:[%s1 + $0x28] sm:$0xf]
  %v45 = vld [vmem:[%s1 + $0x2c] sm:$0xf]
  %v46 = vld [vmem:[%s1 + $0x30] sm:$0xf]
  %v47 = vld [vmem:[%s1 + $0x34] sm:$0xf]
  %v48 = vld [vmem:[%s1 + $0x38] sm:$0xf]
  %v49 = vld [vmem:[%s1 + $0x3c] sm:$0xf]
  %v50 = vld [vmem:[%s2] sm:$0x1]
  %v52 = vlaneseq
  %v53 = vshrl.u32 %v52, 7
  %v54 = vsub.s32 0, %v53
  %v55 = vrot.slane %v50, %v54
  %v73 = vunpack.c.l.b16 %v18
  %v74 = vunpack.c.l.b16 %v19
  %v75 = vunpack.c.l.b16 %v20
  %v76 = vunpack.c.l.b16 %v21
  %v77 = vunpack.c.l.b16 %v22
  %v78 = vunpack.c.l.b16 %v23
  %v79 = vunpack.c.l.b16 %v24
  %v80 = vunpack.c.l.b16 %v25
  %v81 = vunpack.c.l.b16 %v26
  %v82 = vunpack.c.l.b16 %v27
  %v83 = vunpack.c.l.b16 %v28
  %v84 = vunpack.c.l.b16 %v29
  %v85 = vunpack.c.l.b16 %v30
  %v86 = vunpack.c.l.b16 %v31
  %v87 = vunpack.c.l.b16 %v32
  %v88 = vunpack.c.l.b16 %v33
  %v89 = vpack.c.b16 %v74, %v73
  %v90 = vpack.c.b16 %v76, %v75
  %v91 = vpack.c.b16 %v78, %v77
  %v92 = vpack.c.b16 %v80, %v79
  %v93 = vpack.c.b16 %v82, %v81
  %v94 = vpack.c.b16 %v84, %v83
  %v95 = vpack.c.b16 %v86, %v85
  %v96 = vpack.c.b16 %v88, %v87
  %v121 = vunpack.c.l.b16 %v34
  %v122 = vunpack.c.l.b16 %v35
  %v123 = vunpack.c.l.b16 %v36
  %v124 = vunpack.c.l.b16 %v37
  %v125 = vunpack.c.l.b16 %v38
  %v126 = vunpack.c.l.b16 %v39
  %v127 = vunpack.c.l.b16 %v40
  %v128 = vunpack.c.l.b16 %v41
  %v129 = vunpack.c.l.b16 %v42
  %v130 = vunpack.c.l.b16 %v43
  %v131 = vunpack.c.l.b16 %v44
  %v132 = vunpack.c.l.b16 %v45
  %v133 = vunpack.c.l.b16 %v46
  %v134 = vunpack.c.l.b16 %v47
  %v135 = vunpack.c.l.b16 %v48
  %v136 = vunpack.c.l.b16 %v49
  %v137 = vpack.c.b16 %v122, %v121
  %v138 = vpack.c.b16 %v124, %v123
  %v139 = vpack.c.b16 %v126, %v125
  %v140 = vpack.c.b16 %v128, %v127
  %v141 = vpack.c.b16 %v130, %v129
  %v142 = vpack.c.b16 %v132, %v131
  %v143 = vpack.c.b16 %v134, %v133
  %v144 = vpack.c.b16 %v136, %v135
  %153 = vmatprep.subr.bf16.mxu0 0
  %154 = vmatpush1.bf16.msra.mxu0 %v137
  %155 = vmatprep.subr.bf16.mxu0 0
  %156 = vmatpush1.bf16.msra.mxu0 %v138
  %157 = vmatprep.subr.bf16.mxu0 0
  %158 = vmatpush1.bf16.msra.mxu0 %v139
  %159 = vmatprep.subr.bf16.mxu0 0
  %160 = vmatpush1.bf16.msra.mxu0 %v140
  %161 = vmatprep.subr.bf16.mxu0 0
  %162 = vmatpush1.bf16.msra.mxu0 %v141
  %163 = vmatprep.subr.bf16.mxu0 0
  %164 = vmatpush1.bf16.msra.mxu0 %v142
  %165 = vmatprep.subr.bf16.mxu0 0
  %166 = vmatpush1.bf16.msra.mxu0 %v143
  %167 = vmatprep.subr.bf16.mxu0 0
  %168 = vmatpush1.bf16.msra.mxu0 %v144
  %169 = vmatprep.subr.bf16.mxu0 0
  %170 = vmatpush1.bf16.msra.mxu0 0
  %171 = vmatprep.subr.bf16.mxu0 0
  %172 = vmatpush1.bf16.msra.mxu0 0
  %173 = vmatprep.subr.bf16.mxu0 0
  %174 = vmatpush1.bf16.msra.mxu0 0
  %175 = vmatprep.subr.bf16.mxu0 0
  %176 = vmatpush1.bf16.msra.mxu0 0
  %177 = vmatprep.subr.bf16.mxu0 0
  %178 = vmatpush1.bf16.msra.mxu0 0
  %179 = vmatprep.subr.bf16.mxu0 0
  %180 = vmatpush1.bf16.msra.mxu0 0
  %181 = vmatprep.subr.bf16.mxu0 0
  %182 = vmatpush1.bf16.msra.mxu0 0
  %183 = vmatprep.subr.bf16.mxu0 0
  %184 = vmatpush1.bf16.msra.mxu0 0
  %185 = vmatprep.mubr.bf16.mxu0 0
  %186 = vmatmul.mubr.bf16.gmra.mrb[0].mxu0 %v89
  %v187 = vpop.f32.mrb[0].mxu0
  %v188 = vadd.f32 %v55, %v187
  %v189 = vpop.f32.mrb[0].mxu0
  %v190 = vpop.f32.mrb[0].mxu0
  %v191 = vadd.f32 %v55, %v190
  %v192 = vpop.f32.mrb[0].mxu0
  %193 = vmatprep.mubr.bf16.mxu0 0
  %194 = vmatmul.mubr.bf16.gmra.mrb[0].mxu0 %v90
  %v195 = vpop.f32.mrb[0].mxu0
  %v196 = vadd.f32 %v55, %v195
  %v197 = vpop.f32.mrb[0].mxu0
  %v198 = vpop.f32.mrb[0].mxu0
  %v199 = vadd.f32 %v55, %v198
  %v200 = vpop.f32.mrb[0].mxu0
  %201 = vmatprep.mubr.bf16.mxu0 0
  %202 = vmatmul.mubr.bf16.gmra.mrb[0].mxu0 %v91
  %v203 = vpop.f32.mrb[0].mxu0
  %v204 = vadd.f32 %v55, %v203
  %v205 = vpop.f32.mrb[0].mxu0
  %v206 = vpop.f32.mrb[0].mxu0
  %v207 = vadd.f32 %v55, %v206
  %v208 = vpop.f32.mrb[0].mxu0
  %209 = vmatprep.mubr.bf16.mxu0 0
  %210 = vmatmul.mubr.bf16.gmra.mrb[0].mxu0 %v92
  %v211 = vpop.f32.mrb[0].mxu0
  %v212 = vadd.f32 %v55, %v211
  %v213 = vpop.f32.mrb[0].mxu0
  %v214 = vpop.f32.mrb[0].mxu0
  %v215 = vadd.f32 %v55, %v214
  %v216 = vpop.f32.mrb[0].mxu0
  %217 = vmatprep.mubr.bf16.mxu0 0
  %218 = vmatmul.mubr.bf16.gmra.mrb[0].mxu0 %v93
  %v219 = vpop.f32.mrb[0].mxu0
  %v220 = vadd.f32 %v55, %v219
  %v221 = vpop.f32.mrb[0].mxu0
  %v222 = vpop.f32.mrb[0].mxu0
  %v223 = vadd.f32 %v55, %v222
  %v224 = vpop.f32.mrb[0].mxu0
  %225 = vmatprep.mubr.bf16.mxu0 0
  %226 = vmatmul.mubr.bf16.gmra.mrb[0].mxu0 %v94
  %v227 = vpop.f32.mrb[0].mxu0
  %v228 = vadd.f32 %v55, %v227
  %v229 = vpop.f32.mrb[0].mxu0
  %v230 = vpop.f32.mrb[0].mxu0
  %v231 = vadd.f32 %v55, %v230
  %v232 = vpop.f32.mrb[0].mxu0
  %233 = vmatprep.mubr.bf16.mxu0 0
  %234 = vmatmul.mubr.bf16.gmra.mrb[0].mxu0 %v95
  %v235 = vpop.f32.mrb[0].mxu0
  %v236 = vadd.f32 %v55, %v235
  %v237 = vpop.f32.mrb[0].mxu0
  %v238 = vpop.f32.mrb[0].mxu0
  %v239 = vadd.f32 %v55, %v238
  %v240 = vpop.f32.mrb[0].mxu0
  %241 = vmatprep.mubr.bf16.mxu0 0
  %242 = vmatmul.mubr.bf16.gmra.mrb[0].mxu0 %v96
  %v243 = vpop.f32.mrb[0].mxu0
  %v244 = vadd.f32 %v55, %v243
  %v245 = vpop.f32.mrb[0].mxu0
  %v246 = vpop.f32.mrb[0].mxu0
  %v247 = vadd.f32 %v55, %v246
  %v248 = vpop.f32.mrb[0].mxu0
  %249 = vdwg.mxu0
  %v250 = vld [vmem:[%s3] sm:$0xf]
  %v251 = vld [vmem:[%s3 + $0x4] sm:$0xf]
  %v252 = vld [vmem:[%s3 + $0x8] sm:$0xf]
  %v253 = vld [vmem:[%s3 + $0xc] sm:$0xf]
  %v254 = vld [vmem:[%s3 + $0x10] sm:$0xf]
  %v255 = vld [vmem:[%s3 + $0x14] sm:$0xf]
  %v256 = vld [vmem:[%s3 + $0x18] sm:$0xf]
  %v257 = vld [vmem:[%s3 + $0x1c] sm:$0xf]
  %v258 = vld [vmem:[%s3 + $0x20] sm:$0xf]
  %v259 = vld [vmem:[%s3 + $0x24] sm:$0xf]
  %v260 = vld [vmem:[%s3 + $0x28] sm:$0xf]
  %v261 = vld [vmem:[%s3 + $0x2c] sm:$0xf]
  %v262 = vld [vmem:[%s3 + $0x30] sm:$0xf]
  %v263 = vld [vmem:[%s3 + $0x34] sm:$0xf]
  %v264 = vld [vmem:[%s3 + $0x38] sm:$0xf]
  %v265 = vld [vmem:[%s3 + $0x3c] sm:$0xf]
  %v266 = vunpack.c.l.bf16 %v250
  %v267 = vunpack.c.l.bf16 %v251
  %v268 = vunpack.c.l.bf16 %v252
  %v269 = vunpack.c.l.bf16 %v253
  %v270 = vunpack.c.l.bf16 %v254
  %v271 = vunpack.c.l.bf16 %v255
  %v272 = vunpack.c.l.bf16 %v256
  %v273 = vunpack.c.l.bf16 %v257
  %v274 = vunpack.c.l.bf16 %v258
  %v275 = vunpack.c.l.bf16 %v259
  %v276 = vunpack.c.l.bf16 %v260
  %v277 = vunpack.c.l.bf16 %v261
  %v278 = vunpack.c.l.bf16 %v262
  %v279 = vunpack.c.l.bf16 %v263
  %v280 = vunpack.c.l.bf16 %v264
  %v281 = vunpack.c.l.bf16 %v265
  %v282 = vadd.f32 %v188, %v266
  %v283 = vadd.f32 %v191, %v267
  %v284 = vadd.f32 %v196, %v268
  %v285 = vadd.f32 %v199, %v269
  %v286 = vadd.f32 %v204, %v270
  %v287 = vadd.f32 %v207, %v271
  %v288 = vadd.f32 %v212, %v272
  %v289 = vadd.f32 %v215, %v273
  %v290 = vadd.f32 %v220, %v274
  %v291 = vadd.f32 %v223, %v275
  %v292 = vadd.f32 %v228, %v276
  %v293 = vadd.f32 %v231, %v277
  %v294 = vadd.f32 %v236, %v278
  %v295 = vadd.f32 %v239, %v279
  %v296 = vadd.f32 %v244, %v280
  %v297 = vadd.f32 %v247, %v281
  %v298 = vmax.f32 %v282, 0.0
  %v299 = vmax.f32 %v283, 0.0
  %v300 = vmax.f32 %v284, 0.0
  %v301 = vmax.f32 %v285, 0.0
  %v302 = vmax.f32 %v286, 0.0
  %v303 = vmax.f32 %v287, 0.0
  %v304 = vmax.f32 %v288, 0.0
  %v305 = vmax.f32 %v289, 0.0
  %v306 = vmax.f32 %v290, 0.0
  %v307 = vmax.f32 %v291, 0.0
  %v308 = vmax.f32 %v292, 0.0
  %v309 = vmax.f32 %v293, 0.0
  %v310 = vmax.f32 %v294, 0.0
  %v311 = vmax.f32 %v295, 0.0
  %v312 = vmax.f32 %v296, 0.0
  %v313 = vmax.f32 %v297, 0.0
  %v314 = vpack.c.bf16 %v299, %v298
  %v315 = vpack.c.bf16 %v301, %v300
  %v316 = vpack.c.bf16 %v303, %v302
  %v317 = vpack.c.bf16 %v305, %v304
  %v318 = vpack.c.bf16 %v307, %v306
  %v319 = vpack.c.bf16 %v309, %v308
  %v320 = vpack.c.bf16 %v311, %v310
  %v321 = vpack.c.bf16 %v313, %v312
  %v330 = vunpack.c.l.b16 %v314
  %v331 = vunpack.c.h.b16 %v314
  %v332 = vunpack.c.l.b16 %v315
  %v333 = vunpack.c.h.b16 %v315
  %v334 = vunpack.c.l.b16 %v316
  %v335 = vunpack.c.h.b16 %v316
  %v336 = vunpack.c.l.b16 %v317
  %v337 = vunpack.c.h.b16 %v317
  %v338 = vunpack.c.l.b16 %v318
  %v339 = vunpack.c.h.b16 %v318
  %v340 = vunpack.c.l.b16 %v319
  %v341 = vunpack.c.h.b16 %v319
  %v342 = vunpack.c.l.b16 %v320
  %v343 = vunpack.c.h.b16 %v320
  %v344 = vunpack.c.l.b16 %v321
  %v345 = vunpack.c.h.b16 %v321
  %v346 = vpack.c.b16 %v330, %v330
  %v347 = vpack.c.b16 %v331, %v331
  %v348 = vpack.c.b16 %v332, %v332
  %v349 = vpack.c.b16 %v333, %v333
  %v350 = vpack.c.b16 %v334, %v334
  %v351 = vpack.c.b16 %v335, %v335
  %v352 = vpack.c.b16 %v336, %v336
  %v353 = vpack.c.b16 %v337, %v337
  %v354 = vpack.c.b16 %v338, %v338
  %v355 = vpack.c.b16 %v339, %v339
  %v356 = vpack.c.b16 %v340, %v340
  %v357 = vpack.c.b16 %v341, %v341
  %v358 = vpack.c.b16 %v342, %v342
  %v359 = vpack.c.b16 %v343, %v343
  %v360 = vpack.c.b16 %v344, %v344
  %v361 = vpack.c.b16 %v345, %v345
  %378 = vst [vmem:[%s4] sm:$0xf] %v346
  %379 = vst [vmem:[%s4 + $0x4] sm:$0xf] %v347
  %380 = vst [vmem:[%s4 + $0x8] sm:$0xf] %v348
  %381 = vst [vmem:[%s4 + $0xc] sm:$0xf] %v349
  %382 = vst [vmem:[%s4 + $0x10] sm:$0xf] %v350
  %383 = vst [vmem:[%s4 + $0x14] sm:$0xf] %v351
  %384 = vst [vmem:[%s4 + $0x18] sm:$0xf] %v352
  %385 = vst [vmem:[%s4 + $0x1c] sm:$0xf] %v353
  %386 = vst [vmem:[%s4 + $0x20] sm:$0xf] %v354
  %387 = vst [vmem:[%s4 + $0x24] sm:$0xf] %v355
  %388 = vst [vmem:[%s4 + $0x28] sm:$0xf] %v356
  %389 = vst [vmem:[%s4 + $0x2c] sm:$0xf] %v357
  %390 = vst [vmem:[%s4 + $0x30] sm:$0xf] %v358
  %391 = vst [vmem:[%s4 + $0x34] sm:$0xf] %v359
  %392 = vst [vmem:[%s4 + $0x38] sm:$0xf] %v360
  %393 = vst [vmem:[%s4 + $0x3c] sm:$0xf] %v361
  // Predicated region
  $region18: #{resnet152fc_forward.24} parent=0 // pred_check
    _
  $region19: #{resnet152fc_forward.24} parent=0 // pred_check_branch
    %395 = sbr.rel (0) target = $region21
  $region20: #{resnet152fc_forward.24} parent=0 // pred_region
    _
  $region21: #{resnet152fc_forward.24} parent=0 // pred_fallthru
    _
  // Predicated region
  $region22: #{resnet152fc_forward.24} parent=0 // pred_check
    _
  $region23: #{resnet152fc_forward.24} parent=0 // pred_check_branch
    %397 = sbr.rel (0) target = $region25
  $region24: #{resnet152fc_forward.24} parent=0 // pred_region
    _
  $region25: #{resnet152fc_forward.24} parent=0 // pred_fallthru
    _

// kernel: resnet152fc_forward.22
$region0: #{resnet152fc_forward.22}
  #allocation0 [shape = 'u32[]', space=smem, size = 0x4, offset = 0x4, fixed_abs, tag = 'smem constant byte address 0x4 - core index']
  #allocation1 [shape = 'u32[144,128]{1,0:T(1,128)}', space=vmem, size = 0x12000, scoped, tag = 'internal scratch']
  %s0 = inlined_call_operand.vmem [shape: bf16[128,1152], index: 0, kind: input, shape index: {}]
  %s1 = inlined_call_operand.vmem [shape: bf16[1152,128], index: 1, kind: input, shape index: {}]
  %s2 = inlined_call_operand.vmem [shape: f32[1,128], index: 2, kind: input, shape index: {}]
  %s3 = inlined_call_operand.vmem [shape: bf16[128,128], index: 3, kind: output, shape index: {}]
  %s4 = sld [smem:[#allocation0]]
  $region22: #{resnet152fc_forward.22} parent=0
    _
  %s6 = ssub.s32 1, %s4
  %s7 = scalar_select 0, %s6, %s4
  // Predicated region
  $region2: #{resnet152fc_forward.22} parent=0 // pred_check
    _
  $region3: #{resnet152fc_forward.22} parent=0 // pred_check_branch
    %9 = sbr.rel (0) target = $region5
  $region4: #{resnet152fc_forward.22} parent=0 // pred_region
    _
  $region5: #{resnet152fc_forward.22} parent=0 // pred_fallthru
    _
  // Predicated region
  $region6: #{resnet152fc_forward.22} parent=0 // pred_check
    _
  $region7: #{resnet152fc_forward.22} parent=0 // pred_check_branch
    %11 = sbr.rel (0) target = $region9
  $region8: #{resnet152fc_forward.22} parent=0 // pred_region
    _
  $region9: #{resnet152fc_forward.22} parent=0 // pred_fallthru
    _
  // Predicated region
  $region10: #{resnet152fc_forward.22} parent=0 // pred_check
    _
  $region11: #{resnet152fc_forward.22} parent=0 // pred_check_branch
    %13 = sbr.rel (0) target = $region13
  $region12: #{resnet152fc_forward.22} parent=0 // pred_region
    _
  $region13: #{resnet152fc_forward.22} parent=0 // pred_fallthru
    _
  %v15 = vld [vmem:[%s0] sm:$0xff]
  %v16 = vld [vmem:[%s0 + $0x8] sm:$0xff]
  %v17 = vld [vmem:[%s0 + $0x10] sm:$0xff]
  %v18 = vld [vmem:[%s0 + $0x18] sm:$0xff]
  %v19 = vld [vmem:[%s0 + $0x20] sm:$0xf]
  %v20 = vld [vmem:[%s0 + $0x24] sm:$0xff]
  %v21 = vld [vmem:[%s0 + $0x2c] sm:$0xff]
  %v22 = vld [vmem:[%s0 + $0x34] sm:$0xff]
  %v23 = vld [vmem:[%s0 + $0x3c] sm:$0xff]
  %v24 = vld [vmem:[%s0 + $0x44] sm:$0xf]
  %v25 = vld [vmem:[%s0 + $0x48] sm:$0xff]
  %v26 = vld [vmem:[%s0 + $0x50] sm:$0xff]
  %v27 = vld [vmem:[%s0 + $0x58] sm:$0xff]
  %v28 = vld [vmem:[%s0 + $0x60] sm:$0xff]
  %v29 = vld [vmem:[%s0 + $0x68] sm:$0xf]
  %v30 = vld [vmem:[%s0 + $0x6c] sm:$0xff]
  %v31 = vld [vmem:[%s0 + $0x74] sm:$0xff]
  %v32 = vld [vmem:[%s0 + $0x7c] sm:$0xff]
  %v33 = vld [vmem:[%s0 + $0x84] sm:$0xff]
  %v34 = vld [vmem:[%s0 + $0x8c] sm:$0xf]
  %v35 = vld [vmem:[%s0 + $0x90] sm:$0xff]
  %v36 = vld [vmem:[%s0 + $0x98] sm:$0xff]
  %v37 = vld [vmem:[%s0 + $0xa0] sm:$0xff]
  %v38 = vld [vmem:[%s0 + $0xa8] sm:$0xff]
  %v39 = vld [vmem:[%s0 + $0xb0] sm:$0xf]
  %v40 = vld [vmem:[%s0 + $0xb4] sm:$0xff]
  %v41 = vld [vmem:[%s0 + $0xbc] sm:$0xff]
  %v42 = vld [vmem:[%s0 + $0xc4] sm:$0xff]
  %v43 = vld [vmem:[%s0 + $0xcc] sm:$0xff]
  %v44 = vld [vmem:[%s0 + $0xd4] sm:$0xf]
  %v45 = vld [vmem:[%s0 + $0xd8] sm:$0xff]
  %v46 = vld [vmem:[%s0 + $0xe0] sm:$0xff]
  %v47 = vld [vmem:[%s0 + $0xe8] sm:$0xff]
  %v48 = vld [vmem:[%s0 + $0xf0] sm:$0xff]
  %v49 = vld [vmem:[%s0 + $0xf8] sm:$0xf]
  %v50 = vld [vmem:[%s0 + $0xfc] sm:$0xff]
  %v51 = vld [vmem:[%s0 + $0x104] sm:$0xff]
  %v52 = vld [vmem:[%s0 + $0x10c] sm:$0xff]
  %v53 = vld [vmem:[%s0 + $0x114] sm:$0xff]
  %v54 = vld [vmem:[%s0 + $0x11c] sm:$0xf]
  %v55 = vld [vmem:[%s0 + $0x120] sm:$0xff]
  %v56 = vld [vmem:[%s0 + $0x128] sm:$0xff]
  %v57 = vld [vmem:[%s0 + $0x130] sm:$0xff]
  %v58 = vld [vmem:[%s0 + $0x138] sm:$0xff]
  %v59 = vld [vmem:[%s0 + $0x140] sm:$0xf]
  %v60 = vld [vmem:[%s0 + $0x144] sm:$0xff]
  %v61 = vld [vmem:[%s0 + $0x14c] sm:$0xff]
  %v62 = vld [vmem:[%s0 + $0x154] sm:$0xff]
  %v63 = vld [vmem:[%s0 + $0x15c] sm:$0xff]
  %v64 = vld [vmem:[%s0 + $0x164] sm:$0xf]
  %v65 = vld [vmem:[%s0 + $0x168] sm:$0xff]
  %v66 = vld [vmem:[%s0 + $0x170] sm:$0xff]
  %v67 = vld [vmem:[%s0 + $0x178] sm:$0xff]
  %v68 = vld [vmem:[%s0 + $0x180] sm:$0xff]
  %v69 = vld [vmem:[%s0 + $0x188] sm:$0xf]
  %v70 = vld [vmem:[%s0 + $0x18c] sm:$0xff]
  %v71 = vld [vmem:[%s0 + $0x194] sm:$0xff]
  %v72 = vld [vmem:[%s0 + $0x19c] sm:$0xff]
  %v73 = vld [vmem:[%s0 + $0x1a4] sm:$0xff]
  %v74 = vld [vmem:[%s0 + $0x1ac] sm:$0xf]
  %v75 = vld [vmem:[%s0 + $0x1b0] sm:$0xff]
  %v76 = vld [vmem:[%s0 + $0x1b8] sm:$0xff]
  %v77 = vld [vmem:[%s0 + $0x1c0] sm:$0xff]
  %v78 = vld [vmem:[%s0 + $0x1c8] sm:$0xff]
  %v79 = vld [vmem:[%s0 + $0x1d0] sm:$0xf]
  %v80 = vld [vmem:[%s0 + $0x1d4] sm:$0xff]
  %v81 = vld [vmem:[%s0 + $0x1dc] sm:$0xff]
  %v82 = vld [vmem:[%s0 + $0x1e4] sm:$0xff]
  %v83 = vld [vmem:[%s0 + $0x1ec] sm:$0xff]
  %v84 = vld [vmem:[%s0 + $0x1f4] sm:$0xf]
  %v85 = vld [vmem:[%s0 + $0x1f8] sm:$0xff]
  %v86 = vld [vmem:[%s0 + $0x200] sm:$0xff]
  %v87 = vld [vmem:[%s0 + $0x208] sm:$0xff]
  %v88 = vld [vmem:[%s0 + $0x210] sm:$0xff]
  %v89 = vld [vmem:[%s0 + $0x218] sm:$0xf]
  %v90 = vld [vmem:[%s0 + $0x21c] sm:$0xff]
  %v91 = vld [vmem:[%s0 + $0x224] sm:$0xff]
  %v92 = vld [vmem:[%s0 + $0x22c] sm:$0xff]
  %v93 = vld [vmem:[%s0 + $0x234] sm:$0xff]
  %v94 = vld [vmem:[%s0 + $0x23c] sm:$0xf]
  %v95 = vld [vmem:[%s1] sm:$0xf]
  %v96 = vld [vmem:[%s1 + $0x4] sm:$0xf]
  %v97 = vld [vmem:[%s1 + $0x8] sm:$0xf]
  %v98 = vld [vmem:[%s1 + $0xc] sm:$0xf]
  %v99 = vld [vmem:[%s1 + $0x10] sm:$0xf]
  %v100 = vld [vmem:[%s1 + $0x14] sm:$0xf]
  %v101 = vld [vmem:[%s1 + $0x18] sm:$0xf]
  %v102 = vld [vmem:[%s1 + $0x1c] sm:$0xf]
  %v103 = vld [vmem:[%s1 + $0x20] sm:$0xf]
  %v104 = vld [vmem:[%s1 + $0x24] sm:$0xf]
  %v105 = vld [vmem:[%s1 + $0x28] sm:$0xf]
  %v106 = vld [vmem:[%s1 + $0x2c] sm:$0xf]
  %v107 = vld [vmem:[%s1 + $0x30] sm:$0xf]
  %v108 = vld [vmem:[%s1 + $0x34] sm:$0xf]
  %v109 = vld [vmem:[%s1 + $0x38] sm:$0xf]
  %v110 = vld [vmem:[%s1 + $0x3c] sm:$0xf]
  %v111 = vld [vmem:[%s1 + $0x40] sm:$0xf]
  %v112 = vld [vmem:[%s1 + $0x44] sm:$0xf]
  %v113 = vld [vmem:[%s1 + $0x48] sm:$0xf]
  %v114 = vld [vmem:[%s1 + $0x4c] sm:$0xf]
  %v115 = vld [vmem:[%s1 + $0x50] sm:$0xf]
  %v116 = vld [vmem:[%s1 + $0x54] sm:$0xf]
  %v117 = vld [vmem:[%s1 + $0x58] sm:$0xf]
  %v118 = vld [vmem:[%s1 + $0x5c] sm:$0xf]
  %v119 = vld [vmem:[%s1 + $0x60] sm:$0xf]
  %v120 = vld [vmem:[%s1 + $0x64] sm:$0xf]
  %v121 = vld [vmem:[%s1 + $0x68] sm:$0xf]
  %v122 = vld [vmem:[%s1 + $0x6c] sm:$0xf]
  %v123 = vld [vmem:[%s1 + $0x70] sm:$0xf]
  %v124 = vld [vmem:[%s1 + $0x74] sm:$0xf]
  %v125 = vld [vmem:[%s1 + $0x78] sm:$0xf]
  %v126 = vld [vmem:[%s1 + $0x7c] sm:$0xf]
  %v127 = vld [vmem:[%s1 + $0x80] sm:$0xf]
  %v128 = vld [vmem:[%s1 + $0x84] sm:$0xf]
  %v129 = vld [vmem:[%s1 + $0x88] sm:$0xf]
  %v130 = vld [vmem:[%s1 + $0x8c] sm:$0xf]
  %v131 = vld [vmem:[%s1 + $0x90] sm:$0xf]
  %v132 = vld [vmem:[%s1 + $0x94] sm:$0xf]
  %v133 = vld [vmem:[%s1 + $0x98] sm:$0xf]
  %v134 = vld [vmem:[%s1 + $0x9c] sm:$0xf]
  %v135 = vld [vmem:[%s1 + $0xa0] sm:$0xf]
  %v136 = vld [vmem:[%s1 + $0xa4] sm:$0xf]
  %v137 = vld [vmem:[%s1 + $0xa8] sm:$0xf]
  %v138 = vld [vmem:[%s1 + $0xac] sm:$0xf]
  %v139 = vld [vmem:[%s1 + $0xb0] sm:$0xf]
  %v140 = vld [vmem:[%s1 + $0xb4] sm:$0xf]
  %v141 = vld [vmem:[%s1 + $0xb8] sm:$0xf]
  %v142 = vld [vmem:[%s1 + $0xbc] sm:$0xf]
  %v143 = vld [vmem:[%s1 + $0xc0] sm:$0xf]
  %v144 = vld [vmem:[%s1 + $0xc4] sm:$0xf]
  %v145 = vld [vmem:[%s1 + $0xc8] sm:$0xf]
  %v146 = vld [vmem:[%s1 + $0xcc] sm:$0xf]
  %v147 = vld [vmem:[%s1 + $0xd0] sm:$0xf]
  %v148 = vld [vmem:[%s1 + $0xd4] sm:$0xf]
  %v149 = vld [vmem:[%s1 + $0xd8] sm:$0xf]
  %v150 = vld [vmem:[%s1 + $0xdc] sm:$0xf]
  %v151 = vld [vmem:[%s1 + $0xe0] sm:$0xf]
  %v152 = vld [vmem:[%s1 + $0xe4] sm:$0xf]
  %v153 = vld [vmem:[%s1 + $0xe8] sm:$0xf]
  %v154 = vld [vmem:[%s1 + $0xec] sm:$0xf]
  %v155 = vld [vmem:[%s1 + $0xf0] sm:$0xf]
  %v156 = vld [vmem:[%s1 + $0xf4] sm:$0xf]
  %v157 = vld [vmem:[%s1 + $0xf8] sm:$0xf]
  %v158 = vld [vmem:[%s1 + $0xfc] sm:$0xf]
  %v159 = vld [vmem:[%s1 + $0x100] sm:$0xf]
  %v160 = vld [vmem:[%s1 + $0x104] sm:$0xf]
  %v161 = vld [vmem:[%s1 + $0x108] sm:$0xf]
  %v162 = vld [vmem:[%s1 + $0x10c] sm:$0xf]
  %v163 = vld [vmem:[%s1 + $0x110] sm:$0xf]
  %v164 = vld [vmem:[%s1 + $0x114] sm:$0xf]
  %v165 = vld [vmem:[%s1 + $0x118] sm:$0xf]
  %v166 = vld [vmem:[%s1 + $0x11c] sm:$0xf]
  %v167 = vld [vmem:[%s1 + $0x120] sm:$0xf]
  %v168 = vld [vmem:[%s1 + $0x124] sm:$0xf]
  %v169 = vld [vmem:[%s1 + $0x128] sm:$0xf]
  %v170 = vld [vmem:[%s1 + $0x12c] sm:$0xf]
  %v171 = vld [vmem:[%s1 + $0x130] sm:$0xf]
  %v172 = vld [vmem:[%s1 + $0x134] sm:$0xf]
  %v173 = vld [vmem:[%s1 + $0x138] sm:$0xf]
  %v174 = vld [vmem:[%s1 + $0x13c] sm:$0xf]
  %v175 = vld [vmem:[%s1 + $0x140] sm:$0xf]
  %v176 = vld [vmem:[%s1 + $0x144] sm:$0xf]
  %v177 = vld [vmem:[%s1 + $0x148] sm:$0xf]
  %v178 = vld [vmem:[%s1 + $0x14c] sm:$0xf]
  %v179 = vld [vmem:[%s1 + $0x150] sm:$0xf]
  %v180 = vld [vmem:[%s1 + $0x154] sm:$0xf]
  %v181 = vld [vmem:[%s1 + $0x158] sm:$0xf]
  %v182 = vld [vmem:[%s1 + $0x15c] sm:$0xf]
  %v183 = vld [vmem:[%s1 + $0x160] sm:$0xf]
  %v184 = vld [vmem:[%s1 + $0x164] sm:$0xf]
  %v185 = vld [vmem:[%s1 + $0x168] sm:$0xf]
  %v186 = vld [vmem:[%s1 + $0x16c] sm:$0xf]
  %v187 = vld [vmem:[%s1 + $0x170] sm:$0xf]
  %v188 = vld [vmem:[%s1 + $0x174] sm:$0xf]
  %v189 = vld [vmem:[%s1 + $0x178] sm:$0xf]
  %v190 = vld [vmem:[%s1 + $0x17c] sm:$0xf]
  %v191 = vld [vmem:[%s1 + $0x180] sm:$0xf]
  %v192 = vld [vmem:[%s1 + $0x184] sm:$0xf]
  %v193 = vld [vmem:[%s1 + $0x188] sm:$0xf]
  %v194 = vld [vmem:[%s1 + $0x18c] sm:$0xf]
  %v195 = vld [vmem:[%s1 + $0x190] sm:$0xf]
  %v196 = vld [vmem:[%s1 + $0x194] sm:$0xf]
  %v197 = vld [vmem:[%s1 + $0x198] sm:$0xf]
  %v198 = vld [vmem:[%s1 + $0x19c] sm:$0xf]
  %v199 = vld [vmem:[%s1 + $0x1a0] sm:$0xf]
  %v200 = vld [vmem:[%s1 + $0x1a4] sm:$0xf]
  %v201 = vld [vmem:[%s1 + $0x1a8] sm:$0xf]
  %v202 = vld [vmem:[%s1 + $0x1ac] sm:$0xf]
  %v203 = vld [vmem:[%s1 + $0x1b0] sm:$0xf]
  %v204 = vld [vmem:[%s1 + $0x1b4] sm:$0xf]
  %v205 = vld [vmem:[%s1 + $0x1b8] sm:$0xf]
  %v206 = vld [vmem:[%s1 + $0x1bc] sm:$0xf]
  %v207 = vld [vmem:[%s1 + $0x1c0] sm:$0xf]
  %v208 = vld [vmem:[%s1 + $0x1c4] sm:$0xf]
  %v209 = vld [vmem:[%s1 + $0x1c8] sm:$0xf]
  %v210 = vld [vmem:[%s1 + $0x1cc] sm:$0xf]
  %v211 = vld [vmem:[%s1 + $0x1d0] sm:$0xf]
  %v212 = vld [vmem:[%s1 + $0x1d4] sm:$0xf]
  %v213 = vld [vmem:[%s1 + $0x1d8] sm:$0xf]
  %v214 = vld [vmem:[%s1 + $0x1dc] sm:$0xf]
  %v215 = vld [vmem:[%s1 + $0x1e0] sm:$0xf]
  %v216 = vld [vmem:[%s1 + $0x1e4] sm:$0xf]
  %v217 = vld [vmem:[%s1 + $0x1e8] sm:$0xf]
  %v218 = vld [vmem:[%s1 + $0x1ec] sm:$0xf]
  %v219 = vld [vmem:[%s1 + $0x1f0] sm:$0xf]
  %v220 = vld [vmem:[%s1 + $0x1f4] sm:$0xf]
  %v221 = vld [vmem:[%s1 + $0x1f8] sm:$0xf]
  %v222 = vld [vmem:[%s1 + $0x1fc] sm:$0xf]
  %v223 = vld [vmem:[%s1 + $0x200] sm:$0xf]
  %v224 = vld [vmem:[%s1 + $0x204] sm:$0xf]
  %v225 = vld [vmem:[%s1 + $0x208] sm:$0xf]
  %v226 = vld [vmem:[%s1 + $0x20c] sm:$0xf]
  %v227 = vld [vmem:[%s1 + $0x210] sm:$0xf]
  %v228 = vld [vmem:[%s1 + $0x214] sm:$0xf]
  %v229 = vld [vmem:[%s1 + $0x218] sm:$0xf]
  %v230 = vld [vmem:[%s1 + $0x21c] sm:$0xf]
  %v231 = vld [vmem:[%s1 + $0x220] sm:$0xf]
  %v232 = vld [vmem:[%s1 + $0x224] sm:$0xf]
  %v233 = vld [vmem:[%s1 + $0x228] sm:$0xf]
  %v234 = vld [vmem:[%s1 + $0x22c] sm:$0xf]
  %v235 = vld [vmem:[%s1 + $0x230] sm:$0xf]
  %v236 = vld [vmem:[%s1 + $0x234] sm:$0xf]
  %v237 = vld [vmem:[%s1 + $0x238] sm:$0xf]
  %v238 = vld [vmem:[%s1 + $0x23c] sm:$0xf]
  %v239 = vld [vmem:[%s2] sm:$0x1]
  %v241 = vlaneseq
  %v242 = vshrl.u32 %v241, 7
  %v243 = vsub.s32 0, %v242
  %v244 = vrot.slane %v239, %v243
  %v326 = vunpack.c.l.b16 %v15
  %v327 = vunpack.c.h.b16 %v15
  %v328 = vunpack.c.l.b16 %v16
  %v329 = vunpack.c.h.b16 %v16
  %v330 = vunpack.c.l.b16 %v17
  %v331 = vunpack.c.h.b16 %v17
  %v332 = vunpack.c.l.b16 %v18
  %v333 = vunpack.c.h.b16 %v18
  %v334 = vunpack.c.l.b16 %v19
  %v335 = vunpack.c.l.b16 %v20
  %v336 = vunpack.c.h.b16 %v20
  %v337 = vunpack.c.l.b16 %v21
  %v338 = vunpack.c.h.b16 %v21
  %v339 = vunpack.c.l.b16 %v22
  %v340 = vunpack.c.h.b16 %v22
  %v341 = vunpack.c.l.b16 %v23
  %v342 = vunpack.c.h.b16 %v23
  %v343 = vunpack.c.l.b16 %v24
  %v344 = vunpack.c.l.b16 %v25
  %v345 = vunpack.c.h.b16 %v25
  %v346 = vunpack.c.l.b16 %v26
  %v347 = vunpack.c.h.b16 %v26
  %v348 = vunpack.c.l.b16 %v27
  %v349 = vunpack.c.h.b16 %v27
  %v350 = vunpack.c.l.b16 %v28
  %v351 = vunpack.c.h.b16 %v28
  %v352 = vunpack.c.l.b16 %v29
  %v353 = vunpack.c.l.b16 %v30
  %v354 = vunpack.c.h.b16 %v30
  %v355 = vunpack.c.l.b16 %v31
  %v356 = vunpack.c.h.b16 %v31
  %v357 = vunpack.c.l.b16 %v32
  %v358 = vunpack.c.h.b16 %v32
  %v359 = vunpack.c.l.b16 %v33
  %v360 = vunpack.c.h.b16 %v33
  %v361 = vunpack.c.l.b16 %v34
  %v362 = vunpack.c.l.b16 %v35
  %v363 = vunpack.c.h.b16 %v35
  %v364 = vunpack.c.l.b16 %v36
  %v365 = vunpack.c.h.b16 %v36
  %v366 = vunpack.c.l.b16 %v37
  %v367 = vunpack.c.h.b16 %v37
  %v368 = vunpack.c.l.b16 %v38
  %v369 = vunpack.c.h.b16 %v38
  %v370 = vunpack.c.l.b16 %v39
  %v371 = vunpack.c.l.b16 %v40
  %v372 = vunpack.c.h.b16 %v40
  %v373 = vunpack.c.l.b16 %v41
  %v374 = vunpack.c.h.b16 %v41
  %v375 = vunpack.c.l.b16 %v42
  %v376 = vunpack.c.h.b16 %v42
  %v377 = vunpack.c.l.b16 %v43
  %v378 = vunpack.c.h.b16 %v43
  %v379 = vunpack.c.l.b16 %v44
  %v380 = vunpack.c.l.b16 %v45
  %v381 = vunpack.c.h.b16 %v45
  %v382 = vunpack.c.l.b16 %v46
  %v383 = vunpack.c.h.b16 %v46
  %v384 = vunpack.c.l.b16 %v47
  %v385 = vunpack.c.h.b16 %v47
  %v386 = vunpack.c.l.b16 %v48
  %v387 = vunpack.c.h.b16 %v48
  %v388 = vunpack.c.l.b16 %v49
  %v389 = vunpack.c.l.b16 %v50
  %v390 = vunpack.c.h.b16 %v50
  %v391 = vunpack.c.l.b16 %v51
  %v392 = vunpack.c.h.b16 %v51
  %v393 = vunpack.c.l.b16 %v52
  %v394 = vunpack.c.h.b16 %v52
  %v395 = vunpack.c.l.b16 %v53
  %v396 = vunpack.c.h.b16 %v53
  %v397 = vunpack.c.l.b16 %v54
  %v398 = vunpack.c.l.b16 %v55
  %v399 = vunpack.c.h.b16 %v55
  %v400 = vunpack.c.l.b16 %v56
  %v401 = vunpack.c.h.b16 %v56
  %v402 = vunpack.c.l.b16 %v57
  %v403 = vunpack.c.h.b16 %v57
  %v404 = vunpack.c.l.b16 %v58
  %v405 = vunpack.c.h.b16 %v58
  %v406 = vunpack.c.l.b16 %v59
  %v407 = vunpack.c.l.b16 %v60
  %v408 = vunpack.c.h.b16 %v60
  %v409 = vunpack.c.l.b16 %v61
  %v410 = vunpack.c.h.b16 %v61
  %v411 = vunpack.c.l.b16 %v62
  %v412 = vunpack.c.h.b16 %v62
  %v413 = vunpack.c.l.b16 %v63
  %v414 = vunpack.c.h.b16 %v63
  %v415 = vunpack.c.l.b16 %v64
  %v416 = vunpack.c.l.b16 %v65
  %v417 = vunpack.c.h.b16 %v65
  %v418 = vunpack.c.l.b16 %v66
  %v419 = vunpack.c.h.b16 %v66
  %v420 = vunpack.c.l.b16 %v67
  %v421 = vunpack.c.h.b16 %v67
  %v422 = vunpack.c.l.b16 %v68
  %v423 = vunpack.c.h.b16 %v68
  %v424 = vunpack.c.l.b16 %v69
  %v425 = vunpack.c.l.b16 %v70
  %v426 = vunpack.c.h.b16 %v70
  %v427 = vunpack.c.l.b16 %v71
  %v428 = vunpack.c.h.b16 %v71
  %v429 = vunpack.c.l.b16 %v72
  %v430 = vunpack.c.h.b16 %v72
  %v431 = vunpack.c.l.b16 %v73
  %v432 = vunpack.c.h.b16 %v73
  %v433 = vunpack.c.l.b16 %v74
  %v434 = vunpack.c.l.b16 %v75
  %v435 = vunpack.c.h.b16 %v75
  %v436 = vunpack.c.l.b16 %v76
  %v437 = vunpack.c.h.b16 %v76
  %v438 = vunpack.c.l.b16 %v77
  %v439 = vunpack.c.h.b16 %v77
  %v440 = vunpack.c.l.b16 %v78
  %v441 = vunpack.c.h.b16 %v78
  %v442 = vunpack.c.l.b16 %v79
  %v443 = vunpack.c.l.b16 %v80
  %v444 = vunpack.c.h.b16 %v80
  %v445 = vunpack.c.l.b16 %v81
  %v446 = vunpack.c.h.b16 %v81
  %v447 = vunpack.c.l.b16 %v82
  %v448 = vunpack.c.h.b16 %v82
  %v449 = vunpack.c.l.b16 %v83
  %v450 = vunpack.c.h.b16 %v83
  %v451 = vunpack.c.l.b16 %v84
  %v452 = vunpack.c.l.b16 %v85
  %v453 = vunpack.c.h.b16 %v85
  %v454 = vunpack.c.l.b16 %v86
  %v455 = vunpack.c.h.b16 %v86
  %v456 = vunpack.c.l.b16 %v87
  %v457 = vunpack.c.h.b16 %v87
  %v458 = vunpack.c.l.b16 %v88
  %v459 = vunpack.c.h.b16 %v88
  %v460 = vunpack.c.l.b16 %v89
  %v461 = vunpack.c.l.b16 %v90
  %v462 = vunpack.c.h.b16 %v90
  %v463 = vunpack.c.l.b16 %v91
  %v464 = vunpack.c.h.b16 %v91
  %v465 = vunpack.c.l.b16 %v92
  %v466 = vunpack.c.h.b16 %v92
  %v467 = vunpack.c.l.b16 %v93
  %v468 = vunpack.c.h.b16 %v93
  %v469 = vunpack.c.l.b16 %v94
  %v470 = vpack.c.b16 %v335, %v326
  %v471 = vpack.c.b16 %v336, %v327
  %v472 = vpack.c.b16 %v337, %v328
  %v473 = vpack.c.b16 %v338, %v329
  %v474 = vpack.c.b16 %v339, %v330
  %v475 = vpack.c.b16 %v340, %v331
  %v476 = vpack.c.b16 %v341, %v332
  %v477 = vpack.c.b16 %v342, %v333
  %v478 = vpack.c.b16 %v343, %v334
  %v479 = vpack.c.b16 %v353, %v344
  %v480 = vpack.c.b16 %v354, %v345
  %v481 = vpack.c.b16 %v355, %v346
  %v482 = vpack.c.b16 %v356, %v347
  %v483 = vpack.c.b16 %v357, %v348
  %v484 = vpack.c.b16 %v358, %v349
  %v485 = vpack.c.b16 %v359, %v350
  %v486 = vpack.c.b16 %v360, %v351
  %v487 = vpack.c.b16 %v361, %v352
  %v488 = vpack.c.b16 %v371, %v362
  %v489 = vpack.c.b16 %v372, %v363
  %v490 = vpack.c.b16 %v373, %v364
  %v491 = vpack.c.b16 %v374, %v365
  %v492 = vpack.c.b16 %v375, %v366
  %v493 = vpack.c.b16 %v376, %v367
  %v494 = vpack.c.b16 %v377, %v368
  %v495 = vpack.c.b16 %v378, %v369
  %v496 = vpack.c.b16 %v379, %v370
  %v497 = vpack.c.b16 %v389, %v380
  %v498 = vpack.c.b16 %v390, %v381
  %v499 = vpack.c.b16 %v391, %v382
  %v500 = vpack.c.b16 %v392, %v383
  %v501 = vpack.c.b16 %v393, %v384
  %v502 = vpack.c.b16 %v394, %v385
  %v503 = vpack.c.b16 %v395, %v386
  %v504 = vpack.c.b16 %v396, %v387
  %v505 = vpack.c.b16 %v397, %v388
  %v506 = vpack.c.b16 %v407, %v398
  %v507 = vpack.c.b16 %v408, %v399
  %v508 = vpack.c.b16 %v409, %v400
  %v509 = vpack.c.b16 %v410, %v401
  %v510 = vpack.c.b16 %v411, %v402
  %v511 = vpack.c.b16 %v412, %v403
  %v512 = vpack.c.b16 %v413, %v404
  %v513 = vpack.c.b16 %v414, %v405
  %v514 = vpack.c.b16 %v415, %v406
  %v515 = vpack.c.b16 %v425, %v416
  %v516 = vpack.c.b16 %v426, %v417
  %v517 = vpack.c.b16 %v427, %v418
  %v518 = vpack.c.b16 %v428, %v419
  %v519 = vpack.c.b16 %v429, %v420
  %v520 = vpack.c.b16 %v430, %v421
  %v521 = vpack.c.b16 %v431, %v422
  %v522 = vpack.c.b16 %v432, %v423
  %v523 = vpack.c.b16 %v433, %v424
  %v524 = vpack.c.b16 %v443, %v434
  %v525 = vpack.c.b16 %v444, %v435
  %v526 = vpack.c.b16 %v445, %v436
  %v527 = vpack.c.b16 %v446, %v437
  %v528 = vpack.c.b16 %v447, %v438
  %v529 = vpack.c.b16 %v448, %v439
  %v530 = vpack.c.b16 %v449, %v440
  %v531 = vpack.c.b16 %v450, %v441
  %v532 = vpack.c.b16 %v451, %v442
  %v533 = vpack.c.b16 %v461, %v452
  %v534 = vpack.c.b16 %v462, %v453
  %v535 = vpack.c.b16 %v463, %v454
  %v536 = vpack.c.b16 %v464, %v455
  %v537 = vpack.c.b16 %v465, %v456
  %v538 = vpack.c.b16 %v466, %v457
  %v539 = vpack.c.b16 %v467, %v458
  %v540 = vpack.c.b16 %v468, %v459
  %v541 = vpack.c.b16 %v469, %v460
  %v758 = vunpack.c.l.b16 %v95
  %v759 = vunpack.c.l.b16 %v96
  %v760 = vunpack.c.l.b16 %v97
  %v761 = vunpack.c.l.b16 %v98
  %v762 = vunpack.c.l.b16 %v99
  %v763 = vunpack.c.l.b16 %v100
  %v764 = vunpack.c.l.b16 %v101
  %v765 = vunpack.c.l.b16 %v102
  %v766 = vunpack.c.l.b16 %v103
  %v767 = vunpack.c.l.b16 %v104
  %v768 = vunpack.c.l.b16 %v105
  %v769 = vunpack.c.l.b16 %v106
  %v770 = vunpack.c.l.b16 %v107
  %v771 = vunpack.c.l.b16 %v108
  %v772 = vunpack.c.l.b16 %v109
  %v773 = vunpack.c.l.b16 %v110
  %v774 = vunpack.c.l.b16 %v111
  %v775 = vunpack.c.l.b16 %v112
  %v776 = vunpack.c.l.b16 %v113
  %v777 = vunpack.c.l.b16 %v114
  %v778 = vunpack.c.l.b16 %v115
  %v779 = vunpack.c.l.b16 %v116
  %v780 = vunpack.c.l.b16 %v117
  %v781 = vunpack.c.l.b16 %v118
  %v782 = vunpack.c.l.b16 %v119
  %v783 = vunpack.c.l.b16 %v120
  %v784 = vunpack.c.l.b16 %v121
  %v785 = vunpack.c.l.b16 %v122
  %v786 = vunpack.c.l.b16 %v123
  %v787 = vunpack.c.l.b16 %v124
  %v788 = vunpack.c.l.b16 %v125
  %v789 = vunpack.c.l.b16 %v126
  %v790 = vunpack.c.l.b16 %v127
  %v791 = vunpack.c.l.b16 %v128
  %v792 = vunpack.c.l.b16 %v129
  %v793 = vunpack.c.l.b16 %v130
  %v794 = vunpack.c.l.b16 %v131
  %v795 = vunpack.c.l.b16 %v132
  %v796 = vunpack.c.l.b16 %v133
  %v797 = vunpack.c.l.b16 %v134
  %v798 = vunpack.c.l.b16 %v135
  %v799 = vunpack.c.l.b16 %v136
  %v800 = vunpack.c.l.b16 %v137
  %v801 = vunpack.c.l.b16 %v138
  %v802 = vunpack.c.l.b16 %v139
  %v803 = vunpack.c.l.b16 %v140
  %v804 = vunpack.c.l.b16 %v141
  %v805 = vunpack.c.l.b16 %v142
  %v806 = vunpack.c.l.b16 %v143
  %v807 = vunpack.c.l.b16 %v144
  %v808 = vunpack.c.l.b16 %v145
  %v809 = vunpack.c.l.b16 %v146
  %v810 = vunpack.c.l.b16 %v147
  %v811 = vunpack.c.l.b16 %v148
  %v812 = vunpack.c.l.b16 %v149
  %v813 = vunpack.c.l.b16 %v150
  %v814 = vunpack.c.l.b16 %v151
  %v815 = vunpack.c.l.b16 %v152
  %v816 = vunpack.c.l.b16 %v153
  %v817 = vunpack.c.l.b16 %v154
  %v818 = vunpack.c.l.b16 %v155
  %v819 = vunpack.c.l.b16 %v156
  %v820 = vunpack.c.l.b16 %v157
  %v821 = vunpack.c.l.b16 %v158
  %v822 = vunpack.c.l.b16 %v159
  %v823 = vunpack.c.l.b16 %v160
  %v824 = vunpack.c.l.b16 %v161
  %v825 = vunpack.c.l.b16 %v162
  %v826 = vunpack.c.l.b16 %v163
  %v827 = vunpack.c.l.b16 %v164
  %v828 = vunpack.c.l.b16 %v165
  %v829 = vunpack.c.l.b16 %v166
  %v830 = vunpack.c.l.b16 %v167
  %v831 = vunpack.c.l.b16 %v168
  %v832 = vunpack.c.l.b16 %v169
  %v833 = vunpack.c.l.b16 %v170
  %v834 = vunpack.c.l.b16 %v171
  %v835 = vunpack.c.l.b16 %v172
  %v836 = vunpack.c.l.b16 %v173
  %v837 = vunpack.c.l.b16 %v174
  %v838 = vunpack.c.l.b16 %v175
  %v839 = vunpack.c.l.b16 %v176
  %v840 = vunpack.c.l.b16 %v177
  %v841 = vunpack.c.l.b16 %v178
  %v842 = vunpack.c.l.b16 %v179
  %v843 = vunpack.c.l.b16 %v180
  %v844 = vunpack.c.l.b16 %v181
  %v845 = vunpack.c.l.b16 %v182
  %v846 = vunpack.c.l.b16 %v183
  %v847 = vunpack.c.l.b16 %v184
  %v848 = vunpack.c.l.b16 %v185
  %v849 = vunpack.c.l.b16 %v186
  %v850 = vunpack.c.l.b16 %v187
  %v851 = vunpack.c.l.b16 %v188
  %v852 = vunpack.c.l.b16 %v189
  %v853 = vunpack.c.l.b16 %v190
  %v854 = vunpack.c.l.b16 %v191
  %v855 = vunpack.c.l.b16 %v192
  %v856 = vunpack.c.l.b16 %v193
  %v857 = vunpack.c.l.b16 %v194
  %v858 = vunpack.c.l.b16 %v195
  %v859 = vunpack.c.l.b16 %v196
  %v860 = vunpack.c.l.b16 %v197
  %v861 = vunpack.c.l.b16 %v198
  %v862 = vunpack.c.l.b16 %v199
  %v863 = vunpack.c.l.b16 %v200
  %v864 = vunpack.c.l.b16 %v201
  %v865 = vunpack.c.l.b16 %v202
  %v866 = vunpack.c.l.b16 %v203
  %v867 = vunpack.c.l.b16 %v204
  %v868 = vunpack.c.l.b16 %v205
  %v869 = vunpack.c.l.b16 %v206
  %v870 = vunpack.c.l.b16 %v207
  %v871 = vunpack.c.l.b16 %v208
  %v872 = vunpack.c.l.b16 %v209
  %v873 = vunpack.c.l.b16 %v210
  %v874 = vunpack.c.l.b16 %v211
  %v875 = vunpack.c.l.b16 %v212
  %v876 = vunpack.c.l.b16 %v213
  %v877 = vunpack.c.l.b16 %v214
  %v878 = vunpack.c.l.b16 %v215
  %v879 = vunpack.c.l.b16 %v216
  %v880 = vunpack.c.l.b16 %v217
  %v881 = vunpack.c.l.b16 %v218
  %v882 = vunpack.c.l.b16 %v219
  %v883 = vunpack.c.l.b16 %v220
  %v884 = vunpack.c.l.b16 %v221
  %v885 = vunpack.c.l.b16 %v222
  %v886 = vunpack.c.l.b16 %v223
  %v887 = vunpack.c.l.b16 %v224
  %v888 = vunpack.c.l.b16 %v225
  %v889 = vunpack.c.l.b16 %v226
  %v890 = vunpack.c.l.b16 %v227
  %v891 = vunpack.c.l.b16 %v228
  %v892 = vunpack.c.l.b16 %v229
  %v893 = vunpack.c.l.b16 %v230
  %v894 = vunpack.c.l.b16 %v231
  %v895 = vunpack.c.l.b16 %v232
  %v896 = vunpack.c.l.b16 %v233
  %v897 = vunpack.c.l.b16 %v234
  %v898 = vunpack.c.l.b16 %v235
  %v899 = vunpack.c.l.b16 %v236
  %v900 = vunpack.c.l.b16 %v237
  %v901 = vunpack.c.l.b16 %v238
  %v902 = vpack.c.b16 %v759, %v758
  %v903 = vpack.c.b16 %v761, %v760
  %v904 = vpack.c.b16 %v763, %v762
  %v905 = vpack.c.b16 %v765, %v764
  %v906 = vpack.c.b16 %v767, %v766
  %v907 = vpack.c.b16 %v769, %v768
  %v908 = vpack.c.b16 %v771, %v770
  %v909 = vpack.c.b16 %v773, %v772
  %v910 = vpack.c.b16 %v775, %v774
  %v911 = vpack.c.b16 %v777, %v776
  %v912 = vpack.c.b16 %v779, %v778
  %v913 = vpack.c.b16 %v781, %v780
  %v914 = vpack.c.b16 %v783, %v782
  %v915 = vpack.c.b16 %v785, %v784
  %v916 = vpack.c.b16 %v787, %v786
  %v917 = vpack.c.b16 %v789, %v788
  %v918 = vpack.c.b16 %v791, %v790
  %v919 = vpack.c.b16 %v793, %v792
  %v920 = vpack.c.b16 %v795, %v794
  %v921 = vpack.c.b16 %v797, %v796
  %v922 = vpack.c.b16 %v799, %v798
  %v923 = vpack.c.b16 %v801, %v800
  %v924 = vpack.c.b16 %v803, %v802
  %v925 = vpack.c.b16 %v805, %v804
  %v926 = vpack.c.b16 %v807, %v806
  %v927 = vpack.c.b16 %v809, %v808
  %v928 = vpack.c.b16 %v811, %v810
  %v929 = vpack.c.b16 %v813, %v812
  %v930 = vpack.c.b16 %v815, %v814
  %v931 = vpack.c.b16 %v817, %v816
  %v932 = vpack.c.b16 %v819, %v818
  %v933 = vpack.c.b16 %v821, %v820
  %v934 = vpack.c.b16 %v823, %v822
  %v935 = vpack.c.b16 %v825, %v824
  %v936 = vpack.c.b16 %v827, %v826
  %v937 = vpack.c.b16 %v829, %v828
  %v938 = vpack.c.b16 %v831, %v830
  %v939 = vpack.c.b16 %v833, %v832
  %v940 = vpack.c.b16 %v835, %v834
  %v941 = vpack.c.b16 %v837, %v836
  %v942 = vpack.c.b16 %v839, %v838
  %v943 = vpack.c.b16 %v841, %v840
  %v944 = vpack.c.b16 %v843, %v842
  %v945 = vpack.c.b16 %v845, %v844
  %v946 = vpack.c.b16 %v847, %v846
  %v947 = vpack.c.b16 %v849, %v848
  %v948 = vpack.c.b16 %v851, %v850
  %v949 = vpack.c.b16 %v853, %v852
  %v950 = vpack.c.b16 %v855, %v854
  %v951 = vpack.c.b16 %v857, %v856
  %v952 = vpack.c.b16 %v859, %v858
  %v953 = vpack.c.b16 %v861, %v860
  %v954 = vpack.c.b16 %v863, %v862
  %v955 = vpack.c.b16 %v865, %v864
  %v956 = vpack.c.b16 %v867, %v866
  %v957 = vpack.c.b16 %v869, %v868
  %v958 = vpack.c.b16 %v871, %v870
  %v959 = vpack.c.b16 %v873, %v872
  %v960 = vpack.c.b16 %v875, %v874
  %v961 = vpack.c.b16 %v877, %v876
  %v962 = vpack.c.b16 %v879, %v878
  %v963 = vpack.c.b16 %v881, %v880
  %v964 = vpack.c.b16 %v883, %v882
  %v965 = vpack.c.b16 %v885, %v884
  %v966 = vpack.c.b16 %v887, %v886
  %v967 = vpack.c.b16 %v889, %v888
  %v968 = vpack.c.b16 %v891, %v890
  %v969 = vpack.c.b16 %v893, %v892
  %v970 = vpack.c.b16 %v895, %v894
  %v971 = vpack.c.b16 %v897, %v896
  %v972 = vpack.c.b16 %v899, %v898
  %v973 = vpack.c.b16 %v901, %v900
  %1046 = vmatprep.subr.bf16.mxu0 0
  %1047 = vmatpush1.bf16.msra.mxu0 %v902
  %1048 = vmatprep.subr.bf16.mxu0 0
  %1049 = vmatpush1.bf16.msra.mxu0 %v903
  %1050 = vmatprep.subr.bf16.mxu0 0
  %1051 = vmatpush1.bf16.msra.mxu0 %v904
  %1052 = vmatprep.subr.bf16.mxu0 0
  %1053 = vmatpush1.bf16.msra.mxu0 %v905
  %1054 = vmatprep.subr.bf16.mxu0 0
  %1055 = vmatpush1.bf16.msra.mxu0 %v906
  %1056 = vmatprep.subr.bf16.mxu0 0
  %1057 = vmatpush1.bf16.msra.mxu0 %v907
  %1058 = vmatprep.subr.bf16.mxu0 0
  %1059 = vmatpush1.bf16.msra.mxu0 %v908
  %1060 = vmatprep.subr.bf16.mxu0 0
  %1061 = vmatpush1.bf16.msra.mxu0 %v909
  %1062 = vmatprep.subr.bf16.mxu0 0
  %1063 = vmatpush1.bf16.msra.mxu0 %v910
  %1064 = vmatprep.subr.bf16.mxu0 0
  %1065 = vmatpush1.bf16.msra.mxu0 %v911
  %1066 = vmatprep.subr.bf16.mxu0 0
  %1067 = vmatpush1.bf16.msra.mxu0 %v912
  %1068 = vmatprep.subr.bf16.mxu0 0
  %1069 = vmatpush1.bf16.msra.mxu0 %v913
  %1070 = vmatprep.subr.bf16.mxu0 0
  %1071 = vmatpush1.bf16.msra.mxu0 %v914
  %1072 = vmatprep.subr.bf16.mxu0 0
  %1073 = vmatpush1.bf16.msra.mxu0 %v915
  %1074 = vmatprep.subr.bf16.mxu0 0
  %1075 = vmatpush1.bf16.msra.mxu0 %v916
  %1076 = vmatprep.subr.bf16.mxu0 0
  %1077 = vmatpush1.bf16.msra.mxu0 %v917
  %1078 = vmatprep.mubr.bf16.mxu0 %v471
  %1079 = vmatmul.mubr.bf16.gmra.mrb[0].mxu0 %v470
  %v1080 = vpop.f32.mrb[0].mxu0
  %v1081 = vadd.f32 %v244, %v1080
  %v1082 = vpop.f32.mrb[0].mxu0
  %v1083 = vpop.f32.mrb[0].mxu0
  %v1084 = vadd.f32 %v244, %v1083
  %v1085 = vpop.f32.mrb[0].mxu0
  %1086 = vmatprep.mubr.bf16.mxu0 %v480
  %1087 = vmatmul.mubr.bf16.gmra.mrb[0].mxu0 %v479
  %v1088 = vpop.f32.mrb[0].mxu0
  %v1089 = vadd.f32 %v244, %v1088
  %v1090 = vpop.f32.mrb[0].mxu0
  %v1091 = vpop.f32.mrb[0].mxu0
  %v1092 = vadd.f32 %v244, %v1091
  %v1093 = vpop.f32.mrb[0].mxu0
  %1094 = vmatprep.mubr.bf16.mxu0 %v489
  %1095 = vmatmul.mubr.bf16.gmra.mrb[0].mxu0 %v488
  %v1096 = vpop.f32.mrb[0].mxu0
  %v1097 = vadd.f32 %v244, %v1096
  %v1098 = vpop.f32.mrb[0].mxu0
  %v1099 = vpop.f32.mrb[0].mxu0
  %v1100 = vadd.f32 %v244, %v1099
  %v1101 = vpop.f32.mrb[0].mxu0
  %1102 = vmatprep.mubr.bf16.mxu0 %v498
  %1103 = vmatmul.mubr.bf16.gmra.mrb[0].mxu0 %v497
  %v1104 = vpop.f32.mrb[0].mxu0
  %v1105 = vadd.f32 %v244, %v1104
  %v1106 = vpop.f32.mrb[0].mxu0
  %v1107 = vpop.f32.mrb[0].mxu0
  %v1108 = vadd.f32 %v244, %v1107
  %v1109 = vpop.f32.mrb[0].mxu0
  %1110 = vmatprep.mubr.bf16.mxu0 %v507
  %1111 = vmatmul.mubr.bf16.gmra.mrb[0].mxu0 %v506
  %v1112 = vpop.f32.mrb[0].mxu0
  %v1113 = vadd.f32 %v244, %v1112
  %v1114 = vpop.f32.mrb[0].mxu0
  %v1115 = vpop.f32.mrb[0].mxu0
  %v1116 = vadd.f32 %v244, %v1115
  %v1117 = vpop.f32.mrb[0].mxu0
  %1118 = vmatprep.mubr.bf16.mxu0 %v516
  %1119 = vmatmul.mubr.bf16.gmra.mrb[0].mxu0 %v515
  %v1120 = vpop.f32.mrb[0].mxu0
  %v1121 = vadd.f32 %v244, %v1120
  %v1122 = vpop.f32.mrb[0].mxu0
  %v1123 = vpop.f32.mrb[0].mxu0
  %v1124 = vadd.f32 %v244, %v1123
  %v1125 = vpop.f32.mrb[0].mxu0
  %1126 = vmatprep.mubr.bf16.mxu0 %v525
  %1127 = vmatmul.mubr.bf16.gmra.mrb[0].mxu0 %v524
  %v1128 = vpop.f32.mrb[0].mxu0
  %v1129 = vadd.f32 %v244, %v1128
  %v1130 = vpop.f32.mrb[0].mxu0
  %v1131 = vpop.f32.mrb[0].mxu0
  %v1132 = vadd.f32 %v244, %v1131
  %v1133 = vpop.f32.mrb[0].mxu0
  %1134 = vmatprep.mubr.bf16.mxu0 %v534
  %1135 = vmatmul.mubr.bf16.gmra.mrb[0].mxu0 %v533
  %v1136 = vpop.f32.mrb[0].mxu0
  %v1137 = vadd.f32 %v244, %v1136
  %v1138 = vpop.f32.mrb[0].mxu0
  %v1139 = vpop.f32.mrb[0].mxu0
  %v1140 = vadd.f32 %v244, %v1139
  %v1141 = vpop.f32.mrb[0].mxu0
  %1142 = vdwg.mxu0
  %1143 = vmatprep.subr.bf16.mxu0 0
  %1144 = vmatpush1.bf16.msra.mxu0 %v918
  %1145 = vmatprep.subr.bf16.mxu0 0
  %1146 = vmatpush1.bf16.msra.mxu0 %v919
  %1147 = vmatprep.subr.bf16.mxu0 0
  %1148 = vmatpush1.bf16.msra.mxu0 %v920
  %1149 = vmatprep.subr.bf16.mxu0 0
  %1150 = vmatpush1.bf16.msra.mxu0 %v921
  %1151 = vmatprep.subr.bf16.mxu0 0
  %1152 = vmatpush1.bf16.msra.mxu0 %v922
  %1153 = vmatprep.subr.bf16.mxu0 0
  %1154 = vmatpush1.bf16.msra.mxu0 %v923
  %1155 = vmatprep.subr.bf16.mxu0 0
  %1156 = vmatpush1.bf16.msra.mxu0 %v924
  %1157 = vmatprep.subr.bf16.mxu0 0
  %1158 = vmatpush1.bf16.msra.mxu0 %v925
  %1159 = vmatprep.subr.bf16.mxu0 0
  %1160 = vmatpush1.bf16.msra.mxu0 %v926
  %1161 = vmatprep.subr.bf16.mxu0 0
  %1162 = vmatpush1.bf16.msra.mxu0 %v927
  %1163 = vmatprep.subr.bf16.mxu0 0
  %1164 = vmatpush1.bf16.msra.mxu0 %v928
  %1165 = vmatprep.subr.bf16.mxu0 0
  %1166 = vmatpush1.bf16.msra.mxu0 %v929
  %1167 = vmatprep.subr.bf16.mxu0 0
  %1168 = vmatpush1.bf16.msra.mxu0 %v930
  %1169 = vmatprep.subr.bf16.mxu0 0
  %1170 = vmatpush1.bf16.msra.mxu0 %v931
  %1171 = vmatprep.subr.bf16.mxu0 0
  %1172 = vmatpush1.bf16.msra.mxu0 %v932
  %1173 = vmatprep.subr.bf16.mxu0 0
  %1174 = vmatpush1.bf16.msra.mxu0 %v933
  %1175 = vmatprep.mubr.bf16.mxu0 %v473
  %1176 = vmatmul.mubr.bf16.gmra.mrb[0].mxu0 %v472
  %v1177 = vpop.f32.mrb[0].mxu0
  %v1178 = vadd.f32 %v1081, %v1177
  %v1179 = vpop.f32.mrb[0].mxu0
  %v1180 = vpop.f32.mrb[0].mxu0
  %v1181 = vadd.f32 %v1084, %v1180
  %v1182 = vpop.f32.mrb[0].mxu0
  %1183 = vmatprep.mubr.bf16.mxu0 %v482
  %1184 = vmatmul.mubr.bf16.gmra.mrb[0].mxu0 %v481
  %v1185 = vpop.f32.mrb[0].mxu0
  %v1186 = vadd.f32 %v1089, %v1185
  %v1187 = vpop.f32.mrb[0].mxu0
  %v1188 = vpop.f32.mrb[0].mxu0
  %v1189 = vadd.f32 %v1092, %v1188
  %v1190 = vpop.f32.mrb[0].mxu0
  %1191 = vmatprep.mubr.bf16.mxu0 %v491
  %1192 = vmatmul.mubr.bf16.gmra.mrb[0].mxu0 %v490
  %v1193 = vpop.f32.mrb[0].mxu0
  %v1194 = vadd.f32 %v1097, %v1193
  %v1195 = vpop.f32.mrb[0].mxu0
  %v1196 = vpop.f32.mrb[0].mxu0
  %v1197 = vadd.f32 %v1100, %v1196
  %v1198 = vpop.f32.mrb[0].mxu0
  %1199 = vmatprep.mubr.bf16.mxu0 %v500
  %1200 = vmatmul.mubr.bf16.gmra.mrb[0].mxu0 %v499
  %v1201 = vpop.f32.mrb[0].mxu0
  %v1202 = vadd.f32 %v1105, %v1201
  %v1203 = vpop.f32.mrb[0].mxu0
  %v1204 = vpop.f32.mrb[0].mxu0
  %v1205 = vadd.f32 %v1108, %v1204
  %v1206 = vpop.f32.mrb[0].mxu0
  %1207 = vmatprep.mubr.bf16.mxu0 %v509
  %1208 = vmatmul.mubr.bf16.gmra.mrb[0].mxu0 %v508
  %v1209 = vpop.f32.mrb[0].mxu0
  %v1210 = vadd.f32 %v1113, %v1209
  %v1211 = vpop.f32.mrb[0].mxu0
  %v1212 = vpop.f32.mrb[0].mxu0
  %v1213 = vadd.f32 %v1116, %v1212
  %v1214 = vpop.f32.mrb[0].mxu0
  %1215 = vmatprep.mubr.bf16.mxu0 %v518
  %1216 = vmatmul.mubr.bf16.gmra.mrb[0].mxu0 %v517
  %v1217 = vpop.f32.mrb[0].mxu0
  %v1218 = vadd.f32 %v1121, %v1217
  %v1219 = vpop.f32.mrb[0].mxu0
  %v1220 = vpop.f32.mrb[0].mxu0
  %v1221 = vadd.f32 %v1124, %v1220
  %v1222 = vpop.f32.mrb[0].mxu0
  %1223 = vmatprep.mubr.bf16.mxu0 %v527
  %1224 = vmatmul.mubr.bf16.gmra.mrb[0].mxu0 %v526
  %v1225 = vpop.f32.mrb[0].mxu0
  %v1226 = vadd.f32 %v1129, %v1225
  %v1227 = vpop.f32.mrb[0].mxu0
  %v1228 = vpop.f32.mrb[0].mxu0
  %v1229 = vadd.f32 %v1132, %v1228
  %v1230 = vpop.f32.mrb[0].mxu0
  %1231 = vmatprep.mubr.bf16.mxu0 %v536
  %1232 = vmatmul.mubr.bf16.gmra.mrb[0].mxu0 %v535
  %v1233 = vpop.f32.mrb[0].mxu0
  %v1234 = vadd.f32 %v1137, %v1233
  %v1235 = vpop.f32.mrb[0].mxu0
  %v1236 = vpop.f32.mrb[0].mxu0
  %v1237 = vadd.f32 %v1140, %v1236
  %v1238 = vpop.f32.mrb[0].mxu0
  %1239 = vdwg.mxu0
  %1240 = vmatprep.subr.bf16.mxu0 0
  %1241 = vmatpush1.bf16.msra.mxu0 %v934
  %1242 = vmatprep.subr.bf16.mxu0 0
  %1243 = vmatpush1.bf16.msra.mxu0 %v935
  %1244 = vmatprep.subr.bf16.mxu0 0
  %1245 = vmatpush1.bf16.msra.mxu0 %v936
  %1246 = vmatprep.subr.bf16.mxu0 0
  %1247 = vmatpush1.bf16.msra.mxu0 %v937
  %1248 = vmatprep.subr.bf16.mxu0 0
  %1249 = vmatpush1.bf16.msra.mxu0 %v938
  %1250 = vmatprep.subr.bf16.mxu0 0
  %1251 = vmatpush1.bf16.msra.mxu0 %v939
  %1252 = vmatprep.subr.bf16.mxu0 0
  %1253 = vmatpush1.bf16.msra.mxu0 %v940
  %1254 = vmatprep.subr.bf16.mxu0 0
  %1255 = vmatpush1.bf16.msra.mxu0 %v941
  %1256 = vmatprep.subr.bf16.mxu0 0
  %1257 = vmatpush1.bf16.msra.mxu0 %v942
  %1258 = vmatprep.subr.bf16.mxu0 0
  %1259 = vmatpush1.bf16.msra.mxu0 %v943
  %1260 = vmatprep.subr.bf16.mxu0 0
  %1261 = vmatpush1.bf16.msra.mxu0 %v944
  %1262 = vmatprep.subr.bf16.mxu0 0
  %1263 = vmatpush1.bf16.msra.mxu0 %v945
  %1264 = vmatprep.subr.bf16.mxu0 0
  %1265 = vmatpush1.bf16.msra.mxu0 %v946
  %1266 = vmatprep.subr.bf16.mxu0 0
  %1267 = vmatpush1.bf16.msra.mxu0 %v947
  %1268 = vmatprep.subr.bf16.mxu0 0
  %1269 = vmatpush1.bf16.msra.mxu0 %v948
  %1270 = vmatprep.subr.bf16.mxu0 0
  %1271 = vmatpush1.bf16.msra.mxu0 %v949
  %1272 = vmatprep.mubr.bf16.mxu0 %v475
  %1273 = vmatmul.mubr.bf16.gmra.mrb[0].mxu0 %v474
  %v1274 = vpop.f32.mrb[0].mxu0
  %v1275 = vadd.f32 %v1178, %v1274
  %v1276 = vpop.f32.mrb[0].mxu0
  %v1277 = vpop.f32.mrb[0].mxu0
  %v1278 = vadd.f32 %v1181, %v1277
  %v1279 = vpop.f32.mrb[0].mxu0
  %1280 = vmatprep.mubr.bf16.mxu0 %v484
  %1281 = vmatmul.mubr.bf16.gmra.mrb[0].mxu0 %v483
  %v1282 = vpop.f32.mrb[0].mxu0
  %v1283 = vadd.f32 %v1186, %v1282
  %v1284 = vpop.f32.mrb[0].mxu0
  %v1285 = vpop.f32.mrb[0].mxu0
  %v1286 = vadd.f32 %v1189, %v1285
  %v1287 = vpop.f32.mrb[0].mxu0
  %1288 = vmatprep.mubr.bf16.mxu0 %v493
  %1289 = vmatmul.mubr.bf16.gmra.mrb[0].mxu0 %v492
  %v1290 = vpop.f32.mrb[0].mxu0
  %v1291 = vadd.f32 %v1194, %v1290
  %v1292 = vpop.f32.mrb[0].mxu0
  %v1293 = vpop.f32.mrb[0].mxu0
  %v1294 = vadd.f32 %v1197, %v1293
  %v1295 = vpop.f32.mrb[0].mxu0
  %1296 = vmatprep.mubr.bf16.mxu0 %v502
  %1297 = vmatmul.mubr.bf16.gmra.mrb[0].mxu0 %v501
  %v1298 = vpop.f32.mrb[0].mxu0
  %v1299 = vadd.f32 %v1202, %v1298
  %v1300 = vpop.f32.mrb[0].mxu0
  %v1301 = vpop.f32.mrb[0].mxu0
  %v1302 = vadd.f32 %v1205, %v1301
  %v1303 = vpop.f32.mrb[0].mxu0
  %1304 = vmatprep.mubr.bf16.mxu0 %v511
  %1305 = vmatmul.mubr.bf16.gmra.mrb[0].mxu0 %v510
  %v1306 = vpop.f32.mrb[0].mxu0
  %v1307 = vadd.f32 %v1210, %v1306
  %v1308 = vpop.f32.mrb[0].mxu0
  %v1309 = vpop.f32.mrb[0].mxu0
  %v1310 = vadd.f32 %v1213, %v1309
  %v1311 = vpop.f32.mrb[0].mxu0
  %1312 = vmatprep.mubr.bf16.mxu0 %v520
  %1313 = vmatmul.mubr.bf16.gmra.mrb[0].mxu0 %v519
  %v1314 = vpop.f32.mrb[0].mxu0
  %v1315 = vadd.f32 %v1218, %v1314
  %v1316 = vpop.f32.mrb[0].mxu0
  %v1317 = vpop.f32.mrb[0].mxu0
  %v1318 = vadd.f32 %v1221, %v1317
  %v1319 = vpop.f32.mrb[0].mxu0
  %1320 = vmatprep.mubr.bf16.mxu0 %v529
  %1321 = vmatmul.mubr.bf16.gmra.mrb[0].mxu0 %v528
  %v1322 = vpop.f32.mrb[0].mxu0
  %v1323 = vadd.f32 %v1226, %v1322
  %v1324 = vpop.f32.mrb[0].mxu0
  %v1325 = vpop.f32.mrb[0].mxu0
  %v1326 = vadd.f32 %v1229, %v1325
  %v1327 = vpop.f32.mrb[0].mxu0
  %1328 = vmatprep.mubr.bf16.mxu0 %v538
  %1329 = vmatmul.mubr.bf16.gmra.mrb[0].mxu0 %v537
  %v1330 = vpop.f32.mrb[0].mxu0
  %v1331 = vadd.f32 %v1234, %v1330
  %v1332 = vpop.f32.mrb[0].mxu0
  %v1333 = vpop.f32.mrb[0].mxu0
  %v1334 = vadd.f32 %v1237, %v1333
  %v1335 = vpop.f32.mrb[0].mxu0
  %1336 = vdwg.mxu0
  %1337 = vmatprep.subr.bf16.mxu0 0
  %1338 = vmatpush1.bf16.msra.mxu0 %v950
  %1339 = vmatprep.subr.bf16.mxu0 0
  %1340 = vmatpush1.bf16.msra.mxu0 %v951
  %1341 = vmatprep.subr.bf16.mxu0 0
  %1342 = vmatpush1.bf16.msra.mxu0 %v952
  %1343 = vmatprep.subr.bf16.mxu0 0
  %1344 = vmatpush1.bf16.msra.mxu0 %v953
  %1345 = vmatprep.subr.bf16.mxu0 0
  %1346 = vmatpush1.bf16.msra.mxu0 %v954
  %1347 = vmatprep.subr.bf16.mxu0 0
  %1348 = vmatpush1.bf16.msra.mxu0 %v955
  %1349 = vmatprep.subr.bf16.mxu0 0
  %1350 = vmatpush1.bf16.msra.mxu0 %v956
  %1351 = vmatprep.subr.bf16.mxu0 0
  %1352 = vmatpush1.bf16.msra.mxu0 %v957
  %1353 = vmatprep.subr.bf16.mxu0 0
  %1354 = vmatpush1.bf16.msra.mxu0 %v958
  %1355 = vmatprep.subr.bf16.mxu0 0
  %1356 = vmatpush1.bf16.msra.mxu0 %v959
  %1357 = vmatprep.subr.bf16.mxu0 0
  %1358 = vmatpush1.bf16.msra.mxu0 %v960
  %1359 = vmatprep.subr.bf16.mxu0 0
  %1360 = vmatpush1.bf16.msra.mxu0 %v961
  %1361 = vmatprep.subr.bf16.mxu0 0
  %1362 = vmatpush1.bf16.msra.mxu0 %v962
  %1363 = vmatprep.subr.bf16.mxu0 0
  %1364 = vmatpush1.bf16.msra.mxu0 %v963
  %1365 = vmatprep.subr.bf16.mxu0 0
  %1366 = vmatpush1.bf16.msra.mxu0 %v964
  %1367 = vmatprep.subr.bf16.mxu0 0
  %1368 = vmatpush1.bf16.msra.mxu0 %v965
  %1369 = vmatprep.mubr.bf16.mxu0 %v477
  %1370 = vmatmul.mubr.bf16.gmra.mrb[0].mxu0 %v476
  %v1371 = vpop.f32.mrb[0].mxu0
  %v1372 = vadd.f32 %v1275, %v1371
  %v1373 = vpop.f32.mrb[0].mxu0
  %v1374 = vpop.f32.mrb[0].mxu0
  %v1375 = vadd.f32 %v1278, %v1374
  %v1376 = vpop.f32.mrb[0].mxu0
  %1377 = vmatprep.mubr.bf16.mxu0 %v486
  %1378 = vmatmul.mubr.bf16.gmra.mrb[0].mxu0 %v485
  %v1379 = vpop.f32.mrb[0].mxu0
  %v1380 = vadd.f32 %v1283, %v1379
  %v1381 = vpop.f32.mrb[0].mxu0
  %v1382 = vpop.f32.mrb[0].mxu0
  %v1383 = vadd.f32 %v1286, %v1382
  %v1384 = vpop.f32.mrb[0].mxu0
  %1385 = vmatprep.mubr.bf16.mxu0 %v495
  %1386 = vmatmul.mubr.bf16.gmra.mrb[0].mxu0 %v494
  %v1387 = vpop.f32.mrb[0].mxu0
  %v1388 = vadd.f32 %v1291, %v1387
  %v1389 = vpop.f32.mrb[0].mxu0
  %v1390 = vpop.f32.mrb[0].mxu0
  %v1391 = vadd.f32 %v1294, %v1390
  %v1392 = vpop.f32.mrb[0].mxu0
  %1393 = vmatprep.mubr.bf16.mxu0 %v504
  %1394 = vmatmul.mubr.bf16.gmra.mrb[0].mxu0 %v503
  %v1395 = vpop.f32.mrb[0].mxu0
  %v1396 = vadd.f32 %v1299, %v1395
  %v1397 = vpop.f32.mrb[0].mxu0
  %v1398 = vpop.f32.mrb[0].mxu0
  %v1399 = vadd.f32 %v1302, %v1398
  %v1400 = vpop.f32.mrb[0].mxu0
  %1401 = vmatprep.mubr.bf16.mxu0 %v513
  %1402 = vmatmul.mubr.bf16.gmra.mrb[0].mxu0 %v512
  %v1403 = vpop.f32.mrb[0].mxu0
  %v1404 = vadd.f32 %v1307, %v1403
  %v1405 = vpop.f32.mrb[0].mxu0
  %v1406 = vpop.f32.mrb[0].mxu0
  %v1407 = vadd.f32 %v1310, %v1406
  %v1408 = vpop.f32.mrb[0].mxu0
  %1409 = vmatprep.mubr.bf16.mxu0 %v522
  %1410 = vmatmul.mubr.bf16.gmra.mrb[0].mxu0 %v521
  %v1411 = vpop.f32.mrb[0].mxu0
  %v1412 = vadd.f32 %v1315, %v1411
  %v1413 = vpop.f32.mrb[0].mxu0
  %v1414 = vpop.f32.mrb[0].mxu0
  %v1415 = vadd.f32 %v1318, %v1414
  %v1416 = vpop.f32.mrb[0].mxu0
  %1417 = vmatprep.mubr.bf16.mxu0 %v531
  %1418 = vmatmul.mubr.bf16.gmra.mrb[0].mxu0 %v530
  %v1419 = vpop.f32.mrb[0].mxu0
  %v1420 = vadd.f32 %v1323, %v1419
  %v1421 = vpop.f32.mrb[0].mxu0
  %v1422 = vpop.f32.mrb[0].mxu0
  %v1423 = vadd.f32 %v1326, %v1422
  %v1424 = vpop.f32.mrb[0].mxu0
  %1425 = vmatprep.mubr.bf16.mxu0 %v540
  %1426 = vmatmul.mubr.bf16.gmra.mrb[0].mxu0 %v539
  %v1427 = vpop.f32.mrb[0].mxu0
  %v1428 = vadd.f32 %v1331, %v1427
  %v1429 = vpop.f32.mrb[0].mxu0
  %v1430 = vpop.f32.mrb[0].mxu0
  %v1431 = vadd.f32 %v1334, %v1430
  %v1432 = vpop.f32.mrb[0].mxu0
  %1433 = vdwg.mxu0
  %1434 = vmatprep.subr.bf16.mxu0 0
  %1435 = vmatpush1.bf16.msra.mxu0 %v966
  %1436 = vmatprep.subr.bf16.mxu0 0
  %1437 = vmatpush1.bf16.msra.mxu0 %v967
  %1438 = vmatprep.subr.bf16.mxu0 0
  %1439 = vmatpush1.bf16.msra.mxu0 %v968
  %1440 = vmatprep.subr.bf16.mxu0 0
  %1441 = vmatpush1.bf16.msra.mxu0 %v969
  %1442 = vmatprep.subr.bf16.mxu0 0
  %1443 = vmatpush1.bf16.msra.mxu0 %v970
  %1444 = vmatprep.subr.bf16.mxu0 0
  %1445 = vmatpush1.bf16.msra.mxu0 %v971
  %1446 = vmatprep.subr.bf16.mxu0 0
  %1447 = vmatpush1.bf16.msra.mxu0 %v972
  %1448 = vmatprep.subr.bf16.mxu0 0
  %1449 = vmatpush1.bf16.msra.mxu0 %v973
  %1450 = vmatprep.subr.bf16.mxu0 0
  %1451 = vmatpush1.bf16.msra.mxu0 0
  %1452 = vmatprep.subr.bf16.mxu0 0
  %1453 = vmatpush1.bf16.msra.mxu0 0
  %1454 = vmatprep.subr.bf16.mxu0 0
  %1455 = vmatpush1.bf16.msra.mxu0 0
  %1456 = vmatprep.subr.bf16.mxu0 0
  %1457 = vmatpush1.bf16.msra.mxu0 0
  %1458 = vmatprep.subr.bf16.mxu0 0
  %1459 = vmatpush1.bf16.msra.mxu0 0
  %1460 = vmatprep.subr.bf16.mxu0 0
  %1461 = vmatpush1.bf16.msra.mxu0 0
  %1462 = vmatprep.subr.bf16.mxu0 0
  %1463 = vmatpush1.bf16.msra.mxu0 0
  %1464 = vmatprep.subr.bf16.mxu0 0
  %1465 = vmatpush1.bf16.msra.mxu0 0
  %1466 = vmatprep.mubr.bf16.mxu0 0
  %1467 = vmatmul.mubr.bf16.gmra.mrb[0].mxu0 %v478
  %v1468 = vpop.f32.mrb[0].mxu0
  %v1469 = vadd.f32 %v1372, %v1468
  %v1470 = vpop.f32.mrb[0].mxu0
  %v1471 = vpop.f32.mrb[0].mxu0
  %v1472 = vadd.f32 %v1375, %v1471
  %v1473 = vpop.f32.mrb[0].mxu0
  %1474 = vmatprep.mubr.bf16.mxu0 0
  %1475 = vmatmul.mubr.bf16.gmra.mrb[0].mxu0 %v487
  %v1476 = vpop.f32.mrb[0].mxu0
  %v1477 = vadd.f32 %v1380, %v1476
  %v1478 = vpop.f32.mrb[0].mxu0
  %v1479 = vpop.f32.mrb[0].mxu0
  %v1480 = vadd.f32 %v1383, %v1479
  %v1481 = vpop.f32.mrb[0].mxu0
  %1482 = vmatprep.mubr.bf16.mxu0 0
  %1483 = vmatmul.mubr.bf16.gmra.mrb[0].mxu0 %v496
  %v1484 = vpop.f32.mrb[0].mxu0
  %v1485 = vadd.f32 %v1388, %v1484
  %v1486 = vpop.f32.mrb[0].mxu0
  %v1487 = vpop.f32.mrb[0].mxu0
  %v1488 = vadd.f32 %v1391, %v1487
  %v1489 = vpop.f32.mrb[0].mxu0
  %1490 = vmatprep.mubr.bf16.mxu0 0
  %1491 = vmatmul.mubr.bf16.gmra.mrb[0].mxu0 %v505
  %v1492 = vpop.f32.mrb[0].mxu0
  %v1493 = vadd.f32 %v1396, %v1492
  %v1494 = vpop.f32.mrb[0].mxu0
  %v1495 = vpop.f32.mrb[0].mxu0
  %v1496 = vadd.f32 %v1399, %v1495
  %v1497 = vpop.f32.mrb[0].mxu0
  %1498 = vmatprep.mubr.bf16.mxu0 0
  %1499 = vmatmul.mubr.bf16.gmra.mrb[0].mxu0 %v514
  %v1500 = vpop.f32.mrb[0].mxu0
  %v1501 = vadd.f32 %v1404, %v1500
  %v1502 = vpop.f32.mrb[0].mxu0
  %v1503 = vpop.f32.mrb[0].mxu0
  %v1504 = vadd.f32 %v1407, %v1503
  %v1505 = vpop.f32.mrb[0].mxu0
  %1506 = vmatprep.mubr.bf16.mxu0 0
  %1507 = vmatmul.mubr.bf16.gmra.mrb[0].mxu0 %v523
  %v1508 = vpop.f32.mrb[0].mxu0
  %v1509 = vadd.f32 %v1412, %v1508
  %v1510 = vpop.f32.mrb[0].mxu0
  %v1511 = vpop.f32.mrb[0].mxu0
  %v1512 = vadd.f32 %v1415, %v1511
  %v1513 = vpop.f32.mrb[0].mxu0
  %1514 = vmatprep.mubr.bf16.mxu0 0
  %1515 = vmatmul.mubr.bf16.gmra.mrb[0].mxu0 %v532
  %v1516 = vpop.f32.mrb[0].mxu0
  %v1517 = vadd.f32 %v1420, %v1516
  %v1518 = vpop.f32.mrb[0].mxu0
  %v1519 = vpop.f32.mrb[0].mxu0
  %v1520 = vadd.f32 %v1423, %v1519
  %v1521 = vpop.f32.mrb[0].mxu0
  %1522 = vmatprep.mubr.bf16.mxu0 0
  %1523 = vmatmul.mubr.bf16.gmra.mrb[0].mxu0 %v541
  %v1524 = vpop.f32.mrb[0].mxu0
  %v1525 = vadd.f32 %v1428, %v1524
  %v1526 = vpop.f32.mrb[0].mxu0
  %v1527 = vpop.f32.mrb[0].mxu0
  %v1528 = vadd.f32 %v1431, %v1527
  %v1529 = vpop.f32.mrb[0].mxu0
  %1530 = vdwg.mxu0
  %v1531 = vmax.f32 %v1469, 0.0
  %v1532 = vmax.f32 %v1472, 0.0
  %v1533 = vmax.f32 %v1477, 0.0
  %v1534 = vmax.f32 %v1480, 0.0
  %v1535 = vmax.f32 %v1485, 0.0
  %v1536 = vmax.f32 %v1488, 0.0
  %v1537 = vmax.f32 %v1493, 0.0
  %v1538 = vmax.f32 %v1496, 0.0
  %v1539 = vmax.f32 %v1501, 0.0
  %v1540 = vmax.f32 %v1504, 0.0
  %v1541 = vmax.f32 %v1509, 0.0
  %v1542 = vmax.f32 %v1512, 0.0
  %v1543 = vmax.f32 %v1517, 0.0
  %v1544 = vmax.f32 %v1520, 0.0
  %v1545 = vmax.f32 %v1525, 0.0
  %v1546 = vmax.f32 %v1528, 0.0
  %v1547 = vpack.c.bf16 %v1532, %v1531
  %v1548 = vpack.c.bf16 %v1534, %v1533
  %v1549 = vpack.c.bf16 %v1536, %v1535
  %v1550 = vpack.c.bf16 %v1538, %v1537
  %v1551 = vpack.c.bf16 %v1540, %v1539
  %v1552 = vpack.c.bf16 %v1542, %v1541
  %v1553 = vpack.c.bf16 %v1544, %v1543
  %v1554 = vpack.c.bf16 %v1546, %v1545
  %v1563 = vunpack.c.l.b16 %v1547
  %v1564 = vunpack.c.h.b16 %v1547
  %v1565 = vunpack.c.l.b16 %v1548
  %v1566 = vunpack.c.h.b16 %v1548
  %v1567 = vunpack.c.l.b16 %v1549
  %v1568 = vunpack.c.h.b16 %v1549
  %v1569 = vunpack.c.l.b16 %v1550
  %v1570 = vunpack.c.h.b16 %v1550
  %v1571 = vunpack.c.l.b16 %v1551
  %v1572 = vunpack.c.h.b16 %v1551
  %v1573 = vunpack.c.l.b16 %v1552
  %v1574 = vunpack.c.h.b16 %v1552
  %v1575 = vunpack.c.l.b16 %v1553
  %v1576 = vunpack.c.h.b16 %v1553
  %v1577 = vunpack.c.l.b16 %v1554
  %v1578 = vunpack.c.h.b16 %v1554
  %v1579 = vpack.c.b16 %v1563, %v1563
  %v1580 = vpack.c.b16 %v1564, %v1564
  %v1581 = vpack.c.b16 %v1565, %v1565
  %v1582 = vpack.c.b16 %v1566, %v1566
  %v1583 = vpack.c.b16 %v1567, %v1567
  %v1584 = vpack.c.b16 %v1568, %v1568
  %v1585 = vpack.c.b16 %v1569, %v1569
  %v1586 = vpack.c.b16 %v1570, %v1570
  %v1587 = vpack.c.b16 %v1571, %v1571
  %v1588 = vpack.c.b16 %v1572, %v1572
  %v1589 = vpack.c.b16 %v1573, %v1573
  %v1590 = vpack.c.b16 %v1574, %v1574
  %v1591 = vpack.c.b16 %v1575, %v1575
  %v1592 = vpack.c.b16 %v1576, %v1576
  %v1593 = vpack.c.b16 %v1577, %v1577
  %v1594 = vpack.c.b16 %v1578, %v1578
  %1611 = vst [vmem:[%s3] sm:$0xf] %v1579
  %1612 = vst [vmem:[%s3 + $0x4] sm:$0xf] %v1580
  %1613 = vst [vmem:[%s3 + $0x8] sm:$0xf] %v1581
  %1614 = vst [vmem:[%s3 + $0xc] sm:$0xf] %v1582
  %1615 = vst [vmem:[%s3 + $0x10] sm:$0xf] %v1583
  %1616 = vst [vmem:[%s3 + $0x14] sm:$0xf] %v1584
  %1617 = vst [vmem:[%s3 + $0x18] sm:$0xf] %v1585
  %1618 = vst [vmem:[%s3 + $0x1c] sm:$0xf] %v1586
  %1619 = vst [vmem:[%s3 + $0x20] sm:$0xf] %v1587
  %1620 = vst [vmem:[%s3 + $0x24] sm:$0xf] %v1588
  %1621 = vst [vmem:[%s3 + $0x28] sm:$0xf] %v1589
  %1622 = vst [vmem:[%s3 + $0x2c] sm:$0xf] %v1590
  %1623 = vst [vmem:[%s3 + $0x30] sm:$0xf] %v1591
  %1624 = vst [vmem:[%s3 + $0x34] sm:$0xf] %v1592
  %1625 = vst [vmem:[%s3 + $0x38] sm:$0xf] %v1593
  %1626 = vst [vmem:[%s3 + $0x3c] sm:$0xf] %v1594
  // Predicated region
  $region14: #{resnet152fc_forward.22} parent=0 // pred_check
    _
  $region15: #{resnet152fc_forward.22} parent=0 // pred_check_branch
    %1628 = sbr.rel (0) target = $region17
  $region16: #{resnet152fc_forward.22} parent=0 // pred_region
    _
  $region17: #{resnet152fc_forward.22} parent=0 // pred_fallthru
    _
  // Predicated region
  $region18: #{resnet152fc_forward.22} parent=0 // pred_check
    _
  $region19: #{resnet152fc_forward.22} parent=0 // pred_check_branch
    %1630 = sbr.rel (0) target = $region21
  $region20: #{resnet152fc_forward.22} parent=0 // pred_region
    _
  $region21: #{resnet152fc_forward.22} parent=0 // pred_fallthru
    _

// kernel: resnet152fc_forward.27
$region0: #{resnet152fc_forward.27}
  #allocation0 [shape = 'u32[]', space=smem, size = 0x4, offset = 0x4, fixed_abs, tag = 'smem constant byte address 0x4 - core index']
  #allocation1 [shape = 'u32[144,128]{1,0:T(1,128)}', space=vmem, size = 0x12000, scoped, tag = 'internal scratch']
  %s0 = inlined_call_operand.vmem [shape: bf16[32,128], index: 0, kind: input, shape index: {}]
  %s1 = inlined_call_operand.vmem [shape: bf16[128,128], index: 1, kind: input, shape index: {}]
  %s2 = inlined_call_operand.vmem [shape: f32[1,128], index: 2, kind: input, shape index: {}]
  %s3 = inlined_call_operand.vmem [shape: bf16[32,128], index: 3, kind: output, shape index: {}]
  %s4 = sld [smem:[#allocation0]]
  $region22: #{resnet152fc_forward.27} parent=0
    _
  %s6 = ssub.s32 1, %s4
  %s7 = scalar_select 0, %s6, %s4
  // Predicated region
  $region2: #{resnet152fc_forward.27} parent=0 // pred_check
    _
  $region3: #{resnet152fc_forward.27} parent=0 // pred_check_branch
    %9 = sbr.rel (0) target = $region5
  $region4: #{resnet152fc_forward.27} parent=0 // pred_region
    _
  $region5: #{resnet152fc_forward.27} parent=0 // pred_fallthru
    _
  // Predicated region
  $region6: #{resnet152fc_forward.27} parent=0 // pred_check
    _
  $region7: #{resnet152fc_forward.27} parent=0 // pred_check_branch
    %11 = sbr.rel (0) target = $region9
  $region8: #{resnet152fc_forward.27} parent=0 // pred_region
    _
  $region9: #{resnet152fc_forward.27} parent=0 // pred_fallthru
    _
  // Predicated region
  $region10: #{resnet152fc_forward.27} parent=0 // pred_check
    _
  $region11: #{resnet152fc_forward.27} parent=0 // pred_check_branch
    %13 = sbr.rel (0) target = $region13
  $region12: #{resnet152fc_forward.27} parent=0 // pred_region
    _
  $region13: #{resnet152fc_forward.27} parent=0 // pred_fallthru
    _
  %v15 = vld [vmem:[%s0] sm:$0xf]
  %v16 = vld [vmem:[%s0 + $0x4] sm:$0xf]
  %v17 = vld [vmem:[%s0 + $0x8] sm:$0xf]
  %v18 = vld [vmem:[%s0 + $0xc] sm:$0xf]
  %v19 = vld [vmem:[%s1] sm:$0xf]
  %v20 = vld [vmem:[%s1 + $0x4] sm:$0xf]
  %v21 = vld [vmem:[%s1 + $0x8] sm:$0xf]
  %v22 = vld [vmem:[%s1 + $0xc] sm:$0xf]
  %v23 = vld [vmem:[%s1 + $0x10] sm:$0xf]
  %v24 = vld [vmem:[%s1 + $0x14] sm:$0xf]
  %v25 = vld [vmem:[%s1 + $0x18] sm:$0xf]
  %v26 = vld [vmem:[%s1 + $0x1c] sm:$0xf]
  %v27 = vld [vmem:[%s1 + $0x20] sm:$0xf]
  %v28 = vld [vmem:[%s1 + $0x24] sm:$0xf]
  %v29 = vld [vmem:[%s1 + $0x28] sm:$0xf]
  %v30 = vld [vmem:[%s1 + $0x2c] sm:$0xf]
  %v31 = vld [vmem:[%s1 + $0x30] sm:$0xf]
  %v32 = vld [vmem:[%s1 + $0x34] sm:$0xf]
  %v33 = vld [vmem:[%s1 + $0x38] sm:$0xf]
  %v34 = vld [vmem:[%s1 + $0x3c] sm:$0xf]
  %v35 = vld [vmem:[%s2] sm:$0x1]
  %v37 = vlaneseq
  %v38 = vshrl.u32 %v37, 7
  %v39 = vsub.s32 0, %v38
  %v40 = vrot.slane %v35, %v39
  %v46 = vunpack.c.l.b16 %v15
  %v47 = vunpack.c.l.b16 %v16
  %v48 = vunpack.c.l.b16 %v17
  %v49 = vunpack.c.l.b16 %v18
  %v50 = vpack.c.b16 %v47, %v46
  %v51 = vpack.c.b16 %v49, %v48
  %v70 = vunpack.c.l.b16 %v19
  %v71 = vunpack.c.l.b16 %v20
  %v72 = vunpack.c.l.b16 %v21
  %v73 = vunpack.c.l.b16 %v22
  %v74 = vunpack.c.l.b16 %v23
  %v75 = vunpack.c.l.b16 %v24
  %v76 = vunpack.c.l.b16 %v25
  %v77 = vunpack.c.l.b16 %v26
  %v78 = vunpack.c.l.b16 %v27
  %v79 = vunpack.c.l.b16 %v28
  %v80 = vunpack.c.l.b16 %v29
  %v81 = vunpack.c.l.b16 %v30
  %v82 = vunpack.c.l.b16 %v31
  %v83 = vunpack.c.l.b16 %v32
  %v84 = vunpack.c.l.b16 %v33
  %v85 = vunpack.c.l.b16 %v34
  %v86 = vpack.c.b16 %v71, %v70
  %v87 = vpack.c.b16 %v73, %v72
  %v88 = vpack.c.b16 %v75, %v74
  %v89 = vpack.c.b16 %v77, %v76
  %v90 = vpack.c.b16 %v79, %v78
  %v91 = vpack.c.b16 %v81, %v80
  %v92 = vpack.c.b16 %v83, %v82
  %v93 = vpack.c.b16 %v85, %v84
  %102 = vmatprep.subr.bf16.mxu0 0
  %103 = vmatpush1.bf16.msra.mxu0 %v86
  %104 = vmatprep.subr.bf16.mxu0 0
  %105 = vmatpush1.bf16.msra.mxu0 %v87
  %106 = vmatprep.subr.bf16.mxu0 0
  %107 = vmatpush1.bf16.msra.mxu0 %v88
  %108 = vmatprep.subr.bf16.mxu0 0
  %109 = vmatpush1.bf16.msra.mxu0 %v89
  %110 = vmatprep.subr.bf16.mxu0 0
  %111 = vmatpush1.bf16.msra.mxu0 %v90
  %112 = vmatprep.subr.bf16.mxu0 0
  %113 = vmatpush1.bf16.msra.mxu0 %v91
  %114 = vmatprep.subr.bf16.mxu0 0
  %115 = vmatpush1.bf16.msra.mxu0 %v92
  %116 = vmatprep.subr.bf16.mxu0 0
  %117 = vmatpush1.bf16.msra.mxu0 %v93
  %118 = vmatprep.subr.bf16.mxu0 0
  %119 = vmatpush1.bf16.msra.mxu0 0
  %120 = vmatprep.subr.bf16.mxu0 0
  %121 = vmatpush1.bf16.msra.mxu0 0
  %122 = vmatprep.subr.bf16.mxu0 0
  %123 = vmatpush1.bf16.msra.mxu0 0
  %124 = vmatprep.subr.bf16.mxu0 0
  %125 = vmatpush1.bf16.msra.mxu0 0
  %126 = vmatprep.subr.bf16.mxu0 0
  %127 = vmatpush1.bf16.msra.mxu0 0
  %128 = vmatprep.subr.bf16.mxu0 0
  %129 = vmatpush1.bf16.msra.mxu0 0
  %130 = vmatprep.subr.bf16.mxu0 0
  %131 = vmatpush1.bf16.msra.mxu0 0
  %132 = vmatprep.subr.bf16.mxu0 0
  %133 = vmatpush1.bf16.msra.mxu0 0
  %134 = vmatprep.mubr.bf16.mxu0 0
  %135 = vmatmul.mubr.bf16.gmra.mrb[0].mxu0 %v50
  %v136 = vpop.f32.mrb[0].mxu0
  %v137 = vadd.f32 %v40, %v136
  %v138 = vpop.f32.mrb[0].mxu0
  %v139 = vpop.f32.mrb[0].mxu0
  %v140 = vadd.f32 %v40, %v139
  %v141 = vpop.f32.mrb[0].mxu0
  %142 = vmatprep.mubr.bf16.mxu0 0
  %143 = vmatmul.mubr.bf16.gmra.mrb[0].mxu0 %v51
  %v144 = vpop.f32.mrb[0].mxu0
  %v145 = vadd.f32 %v40, %v144
  %v146 = vpop.f32.mrb[0].mxu0
  %v147 = vpop.f32.mrb[0].mxu0
  %v148 = vadd.f32 %v40, %v147
  %v149 = vpop.f32.mrb[0].mxu0
  %150 = vdwg.mxu0
  %v151 = vpack.c.bf16 %v140, %v137
  %v152 = vpack.c.bf16 %v148, %v145
  %v155 = vunpack.c.l.b16 %v151
  %v156 = vunpack.c.h.b16 %v151
  %v157 = vunpack.c.l.b16 %v152
  %v158 = vunpack.c.h.b16 %v152
  %v159 = vpack.c.b16 %v155, %v155
  %v160 = vpack.c.b16 %v156, %v156
  %v161 = vpack.c.b16 %v157, %v157
  %v162 = vpack.c.b16 %v158, %v158
  %167 = vst [vmem:[%s3] sm:$0xf] %v159
  %168 = vst [vmem:[%s3 + $0x4] sm:$0xf] %v160
  %169 = vst [vmem:[%s3 + $0x8] sm:$0xf] %v161
  %170 = vst [vmem:[%s3 + $0xc] sm:$0xf] %v162
  // Predicated region
  $region14: #{resnet152fc_forward.27} parent=0 // pred_check
    _
  $region15: #{resnet152fc_forward.27} parent=0 // pred_check_branch
    %172 = sbr.rel (0) target = $region17
  $region16: #{resnet152fc_forward.27} parent=0 // pred_region
    _
  $region17: #{resnet152fc_forward.27} parent=0 // pred_fallthru
    _
  // Predicated region
  $region18: #{resnet152fc_forward.27} parent=0 // pred_check
    _
  $region19: #{resnet152fc_forward.27} parent=0 // pred_check_branch
    %174 = sbr.rel (0) target = $region21
  $region20: #{resnet152fc_forward.27} parent=0 // pred_region
    _
  $region21: #{resnet152fc_forward.27} parent=0 // pred_fallthru
    _

// kernel: resnet152fc_forward.28
$region0: #{resnet152fc_forward.28}
  #allocation0 [shape = 'u32[]', space=smem, size = 0x4, offset = 0x4, fixed_abs, tag = 'smem constant byte address 0x4 - core index']
  #allocation1 [shape = 'u32[144,128]{1,0:T(1,128)}', space=vmem, size = 0x12000, scoped, tag = 'internal scratch']
  %s0 = inlined_call_operand.vmem [shape: bf16[32,128], index: 0, kind: input, shape index: {}]
  %s1 = inlined_call_operand.vmem [shape: bf16[128,128], index: 1, kind: input, shape index: {}]
  %s2 = inlined_call_operand.vmem [shape: f32[1,128], index: 2, kind: input, shape index: {}]
  %s3 = inlined_call_operand.vmem [shape: bf16[32,128], index: 3, kind: input, shape index: {}]
  %s4 = inlined_call_operand.vmem [shape: bf16[32,128], index: 4, kind: output, shape index: {}]
  %s5 = sld [smem:[#allocation0]]
  $region26: #{resnet152fc_forward.28} parent=0
    _
  %s7 = ssub.s32 1, %s5
  %s8 = scalar_select 0, %s7, %s5
  // Predicated region
  $region2: #{resnet152fc_forward.28} parent=0 // pred_check
    _
  $region3: #{resnet152fc_forward.28} parent=0 // pred_check_branch
    %10 = sbr.rel (0) target = $region5
  $region4: #{resnet152fc_forward.28} parent=0 // pred_region
    _
  $region5: #{resnet152fc_forward.28} parent=0 // pred_fallthru
    _
  // Predicated region
  $region6: #{resnet152fc_forward.28} parent=0 // pred_check
    _
  $region7: #{resnet152fc_forward.28} parent=0 // pred_check_branch
    %12 = sbr.rel (0) target = $region9
  $region8: #{resnet152fc_forward.28} parent=0 // pred_region
    _
  $region9: #{resnet152fc_forward.28} parent=0 // pred_fallthru
    _
  // Predicated region
  $region10: #{resnet152fc_forward.28} parent=0 // pred_check
    _
  $region11: #{resnet152fc_forward.28} parent=0 // pred_check_branch
    %14 = sbr.rel (0) target = $region13
  $region12: #{resnet152fc_forward.28} parent=0 // pred_region
    _
  $region13: #{resnet152fc_forward.28} parent=0 // pred_fallthru
    _
  // Predicated region
  $region14: #{resnet152fc_forward.28} parent=0 // pred_check
    _
  $region15: #{resnet152fc_forward.28} parent=0 // pred_check_branch
    %16 = sbr.rel (0) target = $region17
  $region16: #{resnet152fc_forward.28} parent=0 // pred_region
    _
  $region17: #{resnet152fc_forward.28} parent=0 // pred_fallthru
    _
  %v18 = vld [vmem:[%s0] sm:$0xf]
  %v19 = vld [vmem:[%s0 + $0x4] sm:$0xf]
  %v20 = vld [vmem:[%s0 + $0x8] sm:$0xf]
  %v21 = vld [vmem:[%s0 + $0xc] sm:$0xf]
  %v22 = vld [vmem:[%s1] sm:$0xf]
  %v23 = vld [vmem:[%s1 + $0x4] sm:$0xf]
  %v24 = vld [vmem:[%s1 + $0x8] sm:$0xf]
  %v25 = vld [vmem:[%s1 + $0xc] sm:$0xf]
  %v26 = vld [vmem:[%s1 + $0x10] sm:$0xf]
  %v27 = vld [vmem:[%s1 + $0x14] sm:$0xf]
  %v28 = vld [vmem:[%s1 + $0x18] sm:$0xf]
  %v29 = vld [vmem:[%s1 + $0x1c] sm:$0xf]
  %v30 = vld [vmem:[%s1 + $0x20] sm:$0xf]
  %v31 = vld [vmem:[%s1 + $0x24] sm:$0xf]
  %v32 = vld [vmem:[%s1 + $0x28] sm:$0xf]
  %v33 = vld [vmem:[%s1 + $0x2c] sm:$0xf]
  %v34 = vld [vmem:[%s1 + $0x30] sm:$0xf]
  %v35 = vld [vmem:[%s1 + $0x34] sm:$0xf]
  %v36 = vld [vmem:[%s1 + $0x38] sm:$0xf]
  %v37 = vld [vmem:[%s1 + $0x3c] sm:$0xf]
  %v38 = vld [vmem:[%s2] sm:$0x1]
  %v40 = vlaneseq
  %v41 = vshrl.u32 %v40, 7
  %v42 = vsub.s32 0, %v41
  %v43 = vrot.slane %v38, %v42
  %v49 = vunpack.c.l.b16 %v18
  %v50 = vunpack.c.l.b16 %v19
  %v51 = vunpack.c.l.b16 %v20
  %v52 = vunpack.c.l.b16 %v21
  %v53 = vpack.c.b16 %v50, %v49
  %v54 = vpack.c.b16 %v52, %v51
  %v73 = vunpack.c.l.b16 %v22
  %v74 = vunpack.c.l.b16 %v23
  %v75 = vunpack.c.l.b16 %v24
  %v76 = vunpack.c.l.b16 %v25
  %v77 = vunpack.c.l.b16 %v26
  %v78 = vunpack.c.l.b16 %v27
  %v79 = vunpack.c.l.b16 %v28
  %v80 = vunpack.c.l.b16 %v29
  %v81 = vunpack.c.l.b16 %v30
  %v82 = vunpack.c.l.b16 %v31
  %v83 = vunpack.c.l.b16 %v32
  %v84 = vunpack.c.l.b16 %v33
  %v85 = vunpack.c.l.b16 %v34
  %v86 = vunpack.c.l.b16 %v35
  %v87 = vunpack.c.l.b16 %v36
  %v88 = vunpack.c.l.b16 %v37
  %v89 = vpack.c.b16 %v74, %v73
  %v90 = vpack.c.b16 %v76, %v75
  %v91 = vpack.c.b16 %v78, %v77
  %v92 = vpack.c.b16 %v80, %v79
  %v93 = vpack.c.b16 %v82, %v81
  %v94 = vpack.c.b16 %v84, %v83
  %v95 = vpack.c.b16 %v86, %v85
  %v96 = vpack.c.b16 %v88, %v87
  %105 = vmatprep.subr.bf16.mxu0 0
  %106 = vmatpush1.bf16.msra.mxu0 %v89
  %107 = vmatprep.subr.bf16.mxu0 0
  %108 = vmatpush1.bf16.msra.mxu0 %v90
  %109 = vmatprep.subr.bf16.mxu0 0
  %110 = vmatpush1.bf16.msra.mxu0 %v91
  %111 = vmatprep.subr.bf16.mxu0 0
  %112 = vmatpush1.bf16.msra.mxu0 %v92
  %113 = vmatprep.subr.bf16.mxu0 0
  %114 = vmatpush1.bf16.msra.mxu0 %v93
  %115 = vmatprep.subr.bf16.mxu0 0
  %116 = vmatpush1.bf16.msra.mxu0 %v94
  %117 = vmatprep.subr.bf16.mxu0 0
  %118 = vmatpush1.bf16.msra.mxu0 %v95
  %119 = vmatprep.subr.bf16.mxu0 0
  %120 = vmatpush1.bf16.msra.mxu0 %v96
  %121 = vmatprep.subr.bf16.mxu0 0
  %122 = vmatpush1.bf16.msra.mxu0 0
  %123 = vmatprep.subr.bf16.mxu0 0
  %124 = vmatpush1.bf16.msra.mxu0 0
  %125 = vmatprep.subr.bf16.mxu0 0
  %126 = vmatpush1.bf16.msra.mxu0 0
  %127 = vmatprep.subr.bf16.mxu0 0
  %128 = vmatpush1.bf16.msra.mxu0 0
  %129 = vmatprep.subr.bf16.mxu0 0
  %130 = vmatpush1.bf16.msra.mxu0 0
  %131 = vmatprep.subr.bf16.mxu0 0
  %132 = vmatpush1.bf16.msra.mxu0 0
  %133 = vmatprep.subr.bf16.mxu0 0
  %134 = vmatpush1.bf16.msra.mxu0 0
  %135 = vmatprep.subr.bf16.mxu0 0
  %136 = vmatpush1.bf16.msra.mxu0 0
  %137 = vmatprep.mubr.bf16.mxu0 0
  %138 = vmatmul.mubr.bf16.gmra.mrb[0].mxu0 %v53
  %v139 = vpop.f32.mrb[0].mxu0
  %v140 = vadd.f32 %v43, %v139
  %v141 = vpop.f32.mrb[0].mxu0
  %v142 = vpop.f32.mrb[0].mxu0
  %v143 = vadd.f32 %v43, %v142
  %v144 = vpop.f32.mrb[0].mxu0
  %145 = vmatprep.mubr.bf16.mxu0 0
  %146 = vmatmul.mubr.bf16.gmra.mrb[0].mxu0 %v54
  %v147 = vpop.f32.mrb[0].mxu0
  %v148 = vadd.f32 %v43, %v147
  %v149 = vpop.f32.mrb[0].mxu0
  %v150 = vpop.f32.mrb[0].mxu0
  %v151 = vadd.f32 %v43, %v150
  %v152 = vpop.f32.mrb[0].mxu0
  %153 = vdwg.mxu0
  %v154 = vld [vmem:[%s3] sm:$0xf]
  %v155 = vld [vmem:[%s3 + $0x4] sm:$0xf]
  %v156 = vld [vmem:[%s3 + $0x8] sm:$0xf]
  %v157 = vld [vmem:[%s3 + $0xc] sm:$0xf]
  %v158 = vunpack.c.l.bf16 %v154
  %v159 = vunpack.c.l.bf16 %v155
  %v160 = vunpack.c.l.bf16 %v156
  %v161 = vunpack.c.l.bf16 %v157
  %v162 = vadd.f32 %v140, %v158
  %v163 = vadd.f32 %v143, %v159
  %v164 = vadd.f32 %v148, %v160
  %v165 = vadd.f32 %v151, %v161
  %v166 = vmax.f32 %v162, 0.0
  %v167 = vmax.f32 %v163, 0.0
  %v168 = vmax.f32 %v164, 0.0
  %v169 = vmax.f32 %v165, 0.0
  %v170 = vpack.c.bf16 %v167, %v166
  %v171 = vpack.c.bf16 %v169, %v168
  %v174 = vunpack.c.l.b16 %v170
  %v175 = vunpack.c.h.b16 %v170
  %v176 = vunpack.c.l.b16 %v171
  %v177 = vunpack.c.h.b16 %v171
  %v178 = vpack.c.b16 %v174, %v174
  %v179 = vpack.c.b16 %v175, %v175
  %v180 = vpack.c.b16 %v176, %v176
  %v181 = vpack.c.b16 %v177, %v177
  %186 = vst [vmem:[%s4] sm:$0xf] %v178
  %187 = vst [vmem:[%s4 + $0x4] sm:$0xf] %v179
  %188 = vst [vmem:[%s4 + $0x8] sm:$0xf] %v180
  %189 = vst [vmem:[%s4 + $0xc] sm:$0xf] %v181
  // Predicated region
  $region18: #{resnet152fc_forward.28} parent=0 // pred_check
    _
  $region19: #{resnet152fc_forward.28} parent=0 // pred_check_branch
    %191 = sbr.rel (0) target = $region21
  $region20: #{resnet152fc_forward.28} parent=0 // pred_region
    _
  $region21: #{resnet152fc_forward.28} parent=0 // pred_fallthru
    _
  // Predicated region
  $region22: #{resnet152fc_forward.28} parent=0 // pred_check
    _
  $region23: #{resnet152fc_forward.28} parent=0 // pred_check_branch
    %193 = sbr.rel (0) target = $region25
  $region24: #{resnet152fc_forward.28} parent=0 // pred_region
    _
  $region25: #{resnet152fc_forward.28} parent=0 // pred_fallthru
    _

// kernel: resnet152fc_forward.26
$region0: #{resnet152fc_forward.26}
  #allocation0 [shape = 'u32[]', space=smem, size = 0x4, offset = 0x4, fixed_abs, tag = 'smem constant byte address 0x4 - core index']
  #allocation1 [shape = 'u32[144,128]{1,0:T(1,128)}', space=vmem, size = 0x12000, scoped, tag = 'internal scratch']
  %s0 = inlined_call_operand.vmem [shape: bf16[32,1152], index: 0, kind: input, shape index: {}]
  %s1 = inlined_call_operand.vmem [shape: bf16[1152,128], index: 1, kind: input, shape index: {}]
  %s2 = inlined_call_operand.vmem [shape: f32[1,128], index: 2, kind: input, shape index: {}]
  %s3 = inlined_call_operand.vmem [shape: bf16[32,128], index: 3, kind: output, shape index: {}]
  %s4 = sld [smem:[#allocation0]]
  $region22: #{resnet152fc_forward.26} parent=0
    _
  %s6 = ssub.s32 1, %s4
  %s7 = scalar_select 0, %s6, %s4
  // Predicated region
  $region2: #{resnet152fc_forward.26} parent=0 // pred_check
    _
  $region3: #{resnet152fc_forward.26} parent=0 // pred_check_branch
    %9 = sbr.rel (0) target = $region5
  $region4: #{resnet152fc_forward.26} parent=0 // pred_region
    _
  $region5: #{resnet152fc_forward.26} parent=0 // pred_fallthru
    _
  // Predicated region
  $region6: #{resnet152fc_forward.26} parent=0 // pred_check
    _
  $region7: #{resnet152fc_forward.26} parent=0 // pred_check_branch
    %11 = sbr.rel (0) target = $region9
  $region8: #{resnet152fc_forward.26} parent=0 // pred_region
    _
  $region9: #{resnet152fc_forward.26} parent=0 // pred_fallthru
    _
  // Predicated region
  $region10: #{resnet152fc_forward.26} parent=0 // pred_check
    _
  $region11: #{resnet152fc_forward.26} parent=0 // pred_check_branch
    %13 = sbr.rel (0) target = $region13
  $region12: #{resnet152fc_forward.26} parent=0 // pred_region
    _
  $region13: #{resnet152fc_forward.26} parent=0 // pred_fallthru
    _
  %v15 = vld [vmem:[%s0] sm:$0xff]
  %v16 = vld [vmem:[%s0 + $0x8] sm:$0xff]
  %v17 = vld [vmem:[%s0 + $0x10] sm:$0xff]
  %v18 = vld [vmem:[%s0 + $0x18] sm:$0xff]
  %v19 = vld [vmem:[%s0 + $0x20] sm:$0xf]
  %v20 = vld [vmem:[%s0 + $0x24] sm:$0xff]
  %v21 = vld [vmem:[%s0 + $0x2c] sm:$0xff]
  %v22 = vld [vmem:[%s0 + $0x34] sm:$0xff]
  %v23 = vld [vmem:[%s0 + $0x3c] sm:$0xff]
  %v24 = vld [vmem:[%s0 + $0x44] sm:$0xf]
  %v25 = vld [vmem:[%s0 + $0x48] sm:$0xff]
  %v26 = vld [vmem:[%s0 + $0x50] sm:$0xff]
  %v27 = vld [vmem:[%s0 + $0x58] sm:$0xff]
  %v28 = vld [vmem:[%s0 + $0x60] sm:$0xff]
  %v29 = vld [vmem:[%s0 + $0x68] sm:$0xf]
  %v30 = vld [vmem:[%s0 + $0x6c] sm:$0xff]
  %v31 = vld [vmem:[%s0 + $0x74] sm:$0xff]
  %v32 = vld [vmem:[%s0 + $0x7c] sm:$0xff]
  %v33 = vld [vmem:[%s0 + $0x84] sm:$0xff]
  %v34 = vld [vmem:[%s0 + $0x8c] sm:$0xf]
  %v35 = vld [vmem:[%s1] sm:$0xf]
  %v36 = vld [vmem:[%s1 + $0x4] sm:$0xf]
  %v37 = vld [vmem:[%s1 + $0x8] sm:$0xf]
  %v38 = vld [vmem:[%s1 + $0xc] sm:$0xf]
  %v39 = vld [vmem:[%s1 + $0x10] sm:$0xf]
  %v40 = vld [vmem:[%s1 + $0x14] sm:$0xf]
  %v41 = vld [vmem:[%s1 + $0x18] sm:$0xf]
  %v42 = vld [vmem:[%s1 + $0x1c] sm:$0xf]
  %v43 = vld [vmem:[%s1 + $0x20] sm:$0xf]
  %v44 = vld [vmem:[%s1 + $0x24] sm:$0xf]
  %v45 = vld [vmem:[%s1 + $0x28] sm:$0xf]
  %v46 = vld [vmem:[%s1 + $0x2c] sm:$0xf]
  %v47 = vld [vmem:[%s1 + $0x30] sm:$0xf]
  %v48 = vld [vmem:[%s1 + $0x34] sm:$0xf]
  %v49 = vld [vmem:[%s1 + $0x38] sm:$0xf]
  %v50 = vld [vmem:[%s1 + $0x3c] sm:$0xf]
  %v51 = vld [vmem:[%s1 + $0x40] sm:$0xf]
  %v52 = vld [vmem:[%s1 + $0x44] sm:$0xf]
  %v53 = vld [vmem:[%s1 + $0x48] sm:$0xf]
  %v54 = vld [vmem:[%s1 + $0x4c] sm:$0xf]
  %v55 = vld [vmem:[%s1 + $0x50] sm:$0xf]
  %v56 = vld [vmem:[%s1 + $0x54] sm:$0xf]
  %v57 = vld [vmem:[%s1 + $0x58] sm:$0xf]
  %v58 = vld [vmem:[%s1 + $0x5c] sm:$0xf]
  %v59 = vld [vmem:[%s1 + $0x60] sm:$0xf]
  %v60 = vld [vmem:[%s1 + $0x64] sm:$0xf]
  %v61 = vld [vmem:[%s1 + $0x68] sm:$0xf]
  %v62 = vld [vmem:[%s1 + $0x6c] sm:$0xf]
  %v63 = vld [vmem:[%s1 + $0x70] sm:$0xf]
  %v64 = vld [vmem:[%s1 + $0x74] sm:$0xf]
  %v65 = vld [vmem:[%s1 + $0x78] sm:$0xf]
  %v66 = vld [vmem:[%s1 + $0x7c] sm:$0xf]
  %v67 = vld [vmem:[%s1 + $0x80] sm:$0xf]
  %v68 = vld [vmem:[%s1 + $0x84] sm:$0xf]
  %v69 = vld [vmem:[%s1 + $0x88] sm:$0xf]
  %v70 = vld [vmem:[%s1 + $0x8c] sm:$0xf]
  %v71 = vld [vmem:[%s1 + $0x90] sm:$0xf]
  %v72 = vld [vmem:[%s1 + $0x94] sm:$0xf]
  %v73 = vld [vmem:[%s1 + $0x98] sm:$0xf]
  %v74 = vld [vmem:[%s1 + $0x9c] sm:$0xf]
  %v75 = vld [vmem:[%s1 + $0xa0] sm:$0xf]
  %v76 = vld [vmem:[%s1 + $0xa4] sm:$0xf]
  %v77 = vld [vmem:[%s1 + $0xa8] sm:$0xf]
  %v78 = vld [vmem:[%s1 + $0xac] sm:$0xf]
  %v79 = vld [vmem:[%s1 + $0xb0] sm:$0xf]
  %v80 = vld [vmem:[%s1 + $0xb4] sm:$0xf]
  %v81 = vld [vmem:[%s1 + $0xb8] sm:$0xf]
  %v82 = vld [vmem:[%s1 + $0xbc] sm:$0xf]
  %v83 = vld [vmem:[%s1 + $0xc0] sm:$0xf]
  %v84 = vld [vmem:[%s1 + $0xc4] sm:$0xf]
  %v85 = vld [vmem:[%s1 + $0xc8] sm:$0xf]
  %v86 = vld [vmem:[%s1 + $0xcc] sm:$0xf]
  %v87 = vld [vmem:[%s1 + $0xd0] sm:$0xf]
  %v88 = vld [vmem:[%s1 + $0xd4] sm:$0xf]
  %v89 = vld [vmem:[%s1 + $0xd8] sm:$0xf]
  %v90 = vld [vmem:[%s1 + $0xdc] sm:$0xf]
  %v91 = vld [vmem:[%s1 + $0xe0] sm:$0xf]
  %v92 = vld [vmem:[%s1 + $0xe4] sm:$0xf]
  %v93 = vld [vmem:[%s1 + $0xe8] sm:$0xf]
  %v94 = vld [vmem:[%s1 + $0xec] sm:$0xf]
  %v95 = vld [vmem:[%s1 + $0xf0] sm:$0xf]
  %v96 = vld [vmem:[%s1 + $0xf4] sm:$0xf]
  %v97 = vld [vmem:[%s1 + $0xf8] sm:$0xf]
  %v98 = vld [vmem:[%s1 + $0xfc] sm:$0xf]
  %v99 = vld [vmem:[%s1 + $0x100] sm:$0xf]
  %v100 = vld [vmem:[%s1 + $0x104] sm:$0xf]
  %v101 = vld [vmem:[%s1 + $0x108] sm:$0xf]
  %v102 = vld [vmem:[%s1 + $0x10c] sm:$0xf]
  %v103 = vld [vmem:[%s1 + $0x110] sm:$0xf]
  %v104 = vld [vmem:[%s1 + $0x114] sm:$0xf]
  %v105 = vld [vmem:[%s1 + $0x118] sm:$0xf]
  %v106 = vld [vmem:[%s1 + $0x11c] sm:$0xf]
  %v107 = vld [vmem:[%s1 + $0x120] sm:$0xf]
  %v108 = vld [vmem:[%s1 + $0x124] sm:$0xf]
  %v109 = vld [vmem:[%s1 + $0x128] sm:$0xf]
  %v110 = vld [vmem:[%s1 + $0x12c] sm:$0xf]
  %v111 = vld [vmem:[%s1 + $0x130] sm:$0xf]
  %v112 = vld [vmem:[%s1 + $0x134] sm:$0xf]
  %v113 = vld [vmem:[%s1 + $0x138] sm:$0xf]
  %v114 = vld [vmem:[%s1 + $0x13c] sm:$0xf]
  %v115 = vld [vmem:[%s1 + $0x140] sm:$0xf]
  %v116 = vld [vmem:[%s1 + $0x144] sm:$0xf]
  %v117 = vld [vmem:[%s1 + $0x148] sm:$0xf]
  %v118 = vld [vmem:[%s1 + $0x14c] sm:$0xf]
  %v119 = vld [vmem:[%s1 + $0x150] sm:$0xf]
  %v120 = vld [vmem:[%s1 + $0x154] sm:$0xf]
  %v121 = vld [vmem:[%s1 + $0x158] sm:$0xf]
  %v122 = vld [vmem:[%s1 + $0x15c] sm:$0xf]
  %v123 = vld [vmem:[%s1 + $0x160] sm:$0xf]
  %v124 = vld [vmem:[%s1 + $0x164] sm:$0xf]
  %v125 = vld [vmem:[%s1 + $0x168] sm:$0xf]
  %v126 = vld [vmem:[%s1 + $0x16c] sm:$0xf]
  %v127 = vld [vmem:[%s1 + $0x170] sm:$0xf]
  %v128 = vld [vmem:[%s1 + $0x174] sm:$0xf]
  %v129 = vld [vmem:[%s1 + $0x178] sm:$0xf]
  %v130 = vld [vmem:[%s1 + $0x17c] sm:$0xf]
  %v131 = vld [vmem:[%s1 + $0x180] sm:$0xf]
  %v132 = vld [vmem:[%s1 + $0x184] sm:$0xf]
  %v133 = vld [vmem:[%s1 + $0x188] sm:$0xf]
  %v134 = vld [vmem:[%s1 + $0x18c] sm:$0xf]
  %v135 = vld [vmem:[%s1 + $0x190] sm:$0xf]
  %v136 = vld [vmem:[%s1 + $0x194] sm:$0xf]
  %v137 = vld [vmem:[%s1 + $0x198] sm:$0xf]
  %v138 = vld [vmem:[%s1 + $0x19c] sm:$0xf]
  %v139 = vld [vmem:[%s1 + $0x1a0] sm:$0xf]
  %v140 = vld [vmem:[%s1 + $0x1a4] sm:$0xf]
  %v141 = vld [vmem:[%s1 + $0x1a8] sm:$0xf]
  %v142 = vld [vmem:[%s1 + $0x1ac] sm:$0xf]
  %v143 = vld [vmem:[%s1 + $0x1b0] sm:$0xf]
  %v144 = vld [vmem:[%s1 + $0x1b4] sm:$0xf]
  %v145 = vld [vmem:[%s1 + $0x1b8] sm:$0xf]
  %v146 = vld [vmem:[%s1 + $0x1bc] sm:$0xf]
  %v147 = vld [vmem:[%s1 + $0x1c0] sm:$0xf]
  %v148 = vld [vmem:[%s1 + $0x1c4] sm:$0xf]
  %v149 = vld [vmem:[%s1 + $0x1c8] sm:$0xf]
  %v150 = vld [vmem:[%s1 + $0x1cc] sm:$0xf]
  %v151 = vld [vmem:[%s1 + $0x1d0] sm:$0xf]
  %v152 = vld [vmem:[%s1 + $0x1d4] sm:$0xf]
  %v153 = vld [vmem:[%s1 + $0x1d8] sm:$0xf]
  %v154 = vld [vmem:[%s1 + $0x1dc] sm:$0xf]
  %v155 = vld [vmem:[%s1 + $0x1e0] sm:$0xf]
  %v156 = vld [vmem:[%s1 + $0x1e4] sm:$0xf]
  %v157 = vld [vmem:[%s1 + $0x1e8] sm:$0xf]
  %v158 = vld [vmem:[%s1 + $0x1ec] sm:$0xf]
  %v159 = vld [vmem:[%s1 + $0x1f0] sm:$0xf]
  %v160 = vld [vmem:[%s1 + $0x1f4] sm:$0xf]
  %v161 = vld [vmem:[%s1 + $0x1f8] sm:$0xf]
  %v162 = vld [vmem:[%s1 + $0x1fc] sm:$0xf]
  %v163 = vld [vmem:[%s1 + $0x200] sm:$0xf]
  %v164 = vld [vmem:[%s1 + $0x204] sm:$0xf]
  %v165 = vld [vmem:[%s1 + $0x208] sm:$0xf]
  %v166 = vld [vmem:[%s1 + $0x20c] sm:$0xf]
  %v167 = vld [vmem:[%s1 + $0x210] sm:$0xf]
  %v168 = vld [vmem:[%s1 + $0x214] sm:$0xf]
  %v169 = vld [vmem:[%s1 + $0x218] sm:$0xf]
  %v170 = vld [vmem:[%s1 + $0x21c] sm:$0xf]
  %v171 = vld [vmem:[%s1 + $0x220] sm:$0xf]
  %v172 = vld [vmem:[%s1 + $0x224] sm:$0xf]
  %v173 = vld [vmem:[%s1 + $0x228] sm:$0xf]
  %v174 = vld [vmem:[%s1 + $0x22c] sm:$0xf]
  %v175 = vld [vmem:[%s1 + $0x230] sm:$0xf]
  %v176 = vld [vmem:[%s1 + $0x234] sm:$0xf]
  %v177 = vld [vmem:[%s1 + $0x238] sm:$0xf]
  %v178 = vld [vmem:[%s1 + $0x23c] sm:$0xf]
  %v179 = vld [vmem:[%s2] sm:$0x1]
  %v181 = vlaneseq
  %v182 = vshrl.u32 %v181, 7
  %v183 = vsub.s32 0, %v182
  %v184 = vrot.slane %v179, %v183
  %v206 = vunpack.c.l.b16 %v15
  %v207 = vunpack.c.h.b16 %v15
  %v208 = vunpack.c.l.b16 %v16
  %v209 = vunpack.c.h.b16 %v16
  %v210 = vunpack.c.l.b16 %v17
  %v211 = vunpack.c.h.b16 %v17
  %v212 = vunpack.c.l.b16 %v18
  %v213 = vunpack.c.h.b16 %v18
  %v214 = vunpack.c.l.b16 %v19
  %v215 = vunpack.c.l.b16 %v20
  %v216 = vunpack.c.h.b16 %v20
  %v217 = vunpack.c.l.b16 %v21
  %v218 = vunpack.c.h.b16 %v21
  %v219 = vunpack.c.l.b16 %v22
  %v220 = vunpack.c.h.b16 %v22
  %v221 = vunpack.c.l.b16 %v23
  %v222 = vunpack.c.h.b16 %v23
  %v223 = vunpack.c.l.b16 %v24
  %v224 = vunpack.c.l.b16 %v25
  %v225 = vunpack.c.h.b16 %v25
  %v226 = vunpack.c.l.b16 %v26
  %v227 = vunpack.c.h.b16 %v26
  %v228 = vunpack.c.l.b16 %v27
  %v229 = vunpack.c.h.b16 %v27
  %v230 = vunpack.c.l.b16 %v28
  %v231 = vunpack.c.h.b16 %v28
  %v232 = vunpack.c.l.b16 %v29
  %v233 = vunpack.c.l.b16 %v30
  %v234 = vunpack.c.h.b16 %v30
  %v235 = vunpack.c.l.b16 %v31
  %v236 = vunpack.c.h.b16 %v31
  %v237 = vunpack.c.l.b16 %v32
  %v238 = vunpack.c.h.b16 %v32
  %v239 = vunpack.c.l.b16 %v33
  %v240 = vunpack.c.h.b16 %v33
  %v241 = vunpack.c.l.b16 %v34
  %v242 = vpack.c.b16 %v215, %v206
  %v243 = vpack.c.b16 %v216, %v207
  %v244 = vpack.c.b16 %v217, %v208
  %v245 = vpack.c.b16 %v218, %v209
  %v246 = vpack.c.b16 %v219, %v210
  %v247 = vpack.c.b16 %v220, %v211
  %v248 = vpack.c.b16 %v221, %v212
  %v249 = vpack.c.b16 %v222, %v213
  %v250 = vpack.c.b16 %v223, %v214
  %v251 = vpack.c.b16 %v233, %v224
  %v252 = vpack.c.b16 %v234, %v225
  %v253 = vpack.c.b16 %v235, %v226
  %v254 = vpack.c.b16 %v236, %v227
  %v255 = vpack.c.b16 %v237, %v228
  %v256 = vpack.c.b16 %v238, %v229
  %v257 = vpack.c.b16 %v239, %v230
  %v258 = vpack.c.b16 %v240, %v231
  %v259 = vpack.c.b16 %v241, %v232
  %v422 = vunpack.c.l.b16 %v35
  %v423 = vunpack.c.l.b16 %v36
  %v424 = vunpack.c.l.b16 %v37
  %v425 = vunpack.c.l.b16 %v38
  %v426 = vunpack.c.l.b16 %v39
  %v427 = vunpack.c.l.b16 %v40
  %v428 = vunpack.c.l.b16 %v41
  %v429 = vunpack.c.l.b16 %v42
  %v430 = vunpack.c.l.b16 %v43
  %v431 = vunpack.c.l.b16 %v44
  %v432 = vunpack.c.l.b16 %v45
  %v433 = vunpack.c.l.b16 %v46
  %v434 = vunpack.c.l.b16 %v47
  %v435 = vunpack.c.l.b16 %v48
  %v436 = vunpack.c.l.b16 %v49
  %v437 = vunpack.c.l.b16 %v50
  %v438 = vunpack.c.l.b16 %v51
  %v439 = vunpack.c.l.b16 %v52
  %v440 = vunpack.c.l.b16 %v53
  %v441 = vunpack.c.l.b16 %v54
  %v442 = vunpack.c.l.b16 %v55
  %v443 = vunpack.c.l.b16 %v56
  %v444 = vunpack.c.l.b16 %v57
  %v445 = vunpack.c.l.b16 %v58
  %v446 = vunpack.c.l.b16 %v59
  %v447 = vunpack.c.l.b16 %v60
  %v448 = vunpack.c.l.b16 %v61
  %v449 = vunpack.c.l.b16 %v62
  %v450 = vunpack.c.l.b16 %v63
  %v451 = vunpack.c.l.b16 %v64
  %v452 = vunpack.c.l.b16 %v65
  %v453 = vunpack.c.l.b16 %v66
  %v454 = vunpack.c.l.b16 %v67
  %v455 = vunpack.c.l.b16 %v68
  %v456 = vunpack.c.l.b16 %v69
  %v457 = vunpack.c.l.b16 %v70
  %v458 = vunpack.c.l.b16 %v71
  %v459 = vunpack.c.l.b16 %v72
  %v460 = vunpack.c.l.b16 %v73
  %v461 = vunpack.c.l.b16 %v74
  %v462 = vunpack.c.l.b16 %v75
  %v463 = vunpack.c.l.b16 %v76
  %v464 = vunpack.c.l.b16 %v77
  %v465 = vunpack.c.l.b16 %v78
  %v466 = vunpack.c.l.b16 %v79
  %v467 = vunpack.c.l.b16 %v80
  %v468 = vunpack.c.l.b16 %v81
  %v469 = vunpack.c.l.b16 %v82
  %v470 = vunpack.c.l.b16 %v83
  %v471 = vunpack.c.l.b16 %v84
  %v472 = vunpack.c.l.b16 %v85
  %v473 = vunpack.c.l.b16 %v86
  %v474 = vunpack.c.l.b16 %v87
  %v475 = vunpack.c.l.b16 %v88
  %v476 = vunpack.c.l.b16 %v89
  %v477 = vunpack.c.l.b16 %v90
  %v478 = vunpack.c.l.b16 %v91
  %v479 = vunpack.c.l.b16 %v92
  %v480 = vunpack.c.l.b16 %v93
  %v481 = vunpack.c.l.b16 %v94
  %v482 = vunpack.c.l.b16 %v95
  %v483 = vunpack.c.l.b16 %v96
  %v484 = vunpack.c.l.b16 %v97
  %v485 = vunpack.c.l.b16 %v98
  %v486 = vunpack.c.l.b16 %v99
  %v487 = vunpack.c.l.b16 %v100
  %v488 = vunpack.c.l.b16 %v101
  %v489 = vunpack.c.l.b16 %v102
  %v490 = vunpack.c.l.b16 %v103
  %v491 = vunpack.c.l.b16 %v104
  %v492 = vunpack.c.l.b16 %v105
  %v493 = vunpack.c.l.b16 %v106
  %v494 = vunpack.c.l.b16 %v107
  %v495 = vunpack.c.l.b16 %v108
  %v496 = vunpack.c.l.b16 %v109
  %v497 = vunpack.c.l.b16 %v110
  %v498 = vunpack.c.l.b16 %v111
  %v499 = vunpack.c.l.b16 %v112
  %v500 = vunpack.c.l.b16 %v113
  %v501 = vunpack.c.l.b16 %v114
  %v502 = vunpack.c.l.b16 %v115
  %v503 = vunpack.c.l.b16 %v116
  %v504 = vunpack.c.l.b16 %v117
  %v505 = vunpack.c.l.b16 %v118
  %v506 = vunpack.c.l.b16 %v119
  %v507 = vunpack.c.l.b16 %v120
  %v508 = vunpack.c.l.b16 %v121
  %v509 = vunpack.c.l.b16 %v122
  %v510 = vunpack.c.l.b16 %v123
  %v511 = vunpack.c.l.b16 %v124
  %v512 = vunpack.c.l.b16 %v125
  %v513 = vunpack.c.l.b16 %v126
  %v514 = vunpack.c.l.b16 %v127
  %v515 = vunpack.c.l.b16 %v128
  %v516 = vunpack.c.l.b16 %v129
  %v517 = vunpack.c.l.b16 %v130
  %v518 = vunpack.c.l.b16 %v131
  %v519 = vunpack.c.l.b16 %v132
  %v520 = vunpack.c.l.b16 %v133
  %v521 = vunpack.c.l.b16 %v134
  %v522 = vunpack.c.l.b16 %v135
  %v523 = vunpack.c.l.b16 %v136
  %v524 = vunpack.c.l.b16 %v137
  %v525 = vunpack.c.l.b16 %v138
  %v526 = vunpack.c.l.b16 %v139
  %v527 = vunpack.c.l.b16 %v140
  %v528 = vunpack.c.l.b16 %v141
  %v529 = vunpack.c.l.b16 %v142
  %v530 = vunpack.c.l.b16 %v143
  %v531 = vunpack.c.l.b16 %v144
  %v532 = vunpack.c.l.b16 %v145
  %v533 = vunpack.c.l.b16 %v146
  %v534 = vunpack.c.l.b16 %v147
  %v535 = vunpack.c.l.b16 %v148
  %v536 = vunpack.c.l.b16 %v149
  %v537 = vunpack.c.l.b16 %v150
  %v538 = vunpack.c.l.b16 %v151
  %v539 = vunpack.c.l.b16 %v152
  %v540 = vunpack.c.l.b16 %v153
  %v541 = vunpack.c.l.b16 %v154
  %v542 = vunpack.c.l.b16 %v155
  %v543 = vunpack.c.l.b16 %v156
  %v544 = vunpack.c.l.b16 %v157
  %v545 = vunpack.c.l.b16 %v158
  %v546 = vunpack.c.l.b16 %v159
  %v547 = vunpack.c.l.b16 %v160
  %v548 = vunpack.c.l.b16 %v161
  %v549 = vunpack.c.l.b16 %v162
  %v550 = vunpack.c.l.b16 %v163
  %v551 = vunpack.c.l.b16 %v164
  %v552 = vunpack.c.l.b16 %v165
  %v553 = vunpack.c.l.b16 %v166
  %v554 = vunpack.c.l.b16 %v167
  %v555 = vunpack.c.l.b16 %v168
  %v556 = vunpack.c.l.b16 %v169
  %v557 = vunpack.c.l.b16 %v170
  %v558 = vunpack.c.l.b16 %v171
  %v559 = vunpack.c.l.b16 %v172
  %v560 = vunpack.c.l.b16 %v173
  %v561 = vunpack.c.l.b16 %v174
  %v562 = vunpack.c.l.b16 %v175
  %v563 = vunpack.c.l.b16 %v176
  %v564 = vunpack.c.l.b16 %v177
  %v565 = vunpack.c.l.b16 %v178
  %v566 = vpack.c.b16 %v423, %v422
  %v567 = vpack.c.b16 %v425, %v424
  %v568 = vpack.c.b16 %v427, %v426
  %v569 = vpack.c.b16 %v429, %v428
  %v570 = vpack.c.b16 %v431, %v430
  %v571 = vpack.c.b16 %v433, %v432
  %v572 = vpack.c.b16 %v435, %v434
  %v573 = vpack.c.b16 %v437, %v436
  %v574 = vpack.c.b16 %v439, %v438
  %v575 = vpack.c.b16 %v441, %v440
  %v576 = vpack.c.b16 %v443, %v442
  %v577 = vpack.c.b16 %v445, %v444
  %v578 = vpack.c.b16 %v447, %v446
  %v579 = vpack.c.b16 %v449, %v448
  %v580 = vpack.c.b16 %v451, %v450
  %v581 = vpack.c.b16 %v453, %v452
  %v582 = vpack.c.b16 %v455, %v454
  %v583 = vpack.c.b16 %v457, %v456
  %v584 = vpack.c.b16 %v459, %v458
  %v585 = vpack.c.b16 %v461, %v460
  %v586 = vpack.c.b16 %v463, %v462
  %v587 = vpack.c.b16 %v465, %v464
  %v588 = vpack.c.b16 %v467, %v466
  %v589 = vpack.c.b16 %v469, %v468
  %v590 = vpack.c.b16 %v471, %v470
  %v591 = vpack.c.b16 %v473, %v472
  %v592 = vpack.c.b16 %v475, %v474
  %v593 = vpack.c.b16 %v477, %v476
  %v594 = vpack.c.b16 %v479, %v478
  %v595 = vpack.c.b16 %v481, %v480
  %v596 = vpack.c.b16 %v483, %v482
  %v597 = vpack.c.b16 %v485, %v484
  %v598 = vpack.c.b16 %v487, %v486
  %v599 = vpack.c.b16 %v489, %v488
  %v600 = vpack.c.b16 %v491, %v490
  %v601 = vpack.c.b16 %v493, %v492
  %v602 = vpack.c.b16 %v495, %v494
  %v603 = vpack.c.b16 %v497, %v496
  %v604 = vpack.c.b16 %v499, %v498
  %v605 = vpack.c.b16 %v501, %v500
  %v606 = vpack.c.b16 %v503, %v502
  %v607 = vpack.c.b16 %v505, %v504
  %v608 = vpack.c.b16 %v507, %v506
  %v609 = vpack.c.b16 %v509, %v508
  %v610 = vpack.c.b16 %v511, %v510
  %v611 = vpack.c.b16 %v513, %v512
  %v612 = vpack.c.b16 %v515, %v514
  %v613 = vpack.c.b16 %v517, %v516
  %v614 = vpack.c.b16 %v519, %v518
  %v615 = vpack.c.b16 %v521, %v520
  %v616 = vpack.c.b16 %v523, %v522
  %v617 = vpack.c.b16 %v525, %v524
  %v618 = vpack.c.b16 %v527, %v526
  %v619 = vpack.c.b16 %v529, %v528
  %v620 = vpack.c.b16 %v531, %v530
  %v621 = vpack.c.b16 %v533, %v532
  %v622 = vpack.c.b16 %v535, %v534
  %v623 = vpack.c.b16 %v537, %v536
  %v624 = vpack.c.b16 %v539, %v538
  %v625 = vpack.c.b16 %v541, %v540
  %v626 = vpack.c.b16 %v543, %v542
  %v627 = vpack.c.b16 %v545, %v544
  %v628 = vpack.c.b16 %v547, %v546
  %v629 = vpack.c.b16 %v549, %v548
  %v630 = vpack.c.b16 %v551, %v550
  %v631 = vpack.c.b16 %v553, %v552
  %v632 = vpack.c.b16 %v555, %v554
  %v633 = vpack.c.b16 %v557, %v556
  %v634 = vpack.c.b16 %v559, %v558
  %v635 = vpack.c.b16 %v561, %v560
  %v636 = vpack.c.b16 %v563, %v562
  %v637 = vpack.c.b16 %v565, %v564
  %710 = vmatprep.subr.bf16.mxu0 0
  %711 = vmatpush1.bf16.msra.mxu0 %v566
  %712 = vmatprep.subr.bf16.mxu0 0
  %713 = vmatpush1.bf16.msra.mxu0 %v567
  %714 = vmatprep.subr.bf16.mxu0 0
  %715 = vmatpush1.bf16.msra.mxu0 %v568
  %716 = vmatprep.subr.bf16.mxu0 0
  %717 = vmatpush1.bf16.msra.mxu0 %v569
  %718 = vmatprep.subr.bf16.mxu0 0
  %719 = vmatpush1.bf16.msra.mxu0 %v570
  %720 = vmatprep.subr.bf16.mxu0 0
  %721 = vmatpush1.bf16.msra.mxu0 %v571
  %722 = vmatprep.subr.bf16.mxu0 0
  %723 = vmatpush1.bf16.msra.mxu0 %v572
  %724 = vmatprep.subr.bf16.mxu0 0
  %725 = vmatpush1.bf16.msra.mxu0 %v573
  %726 = vmatprep.subr.bf16.mxu0 0
  %727 = vmatpush1.bf16.msra.mxu0 %v574
  %728 = vmatprep.subr.bf16.mxu0 0
  %729 = vmatpush1.bf16.msra.mxu0 %v575
  %730 = vmatprep.subr.bf16.mxu0 0
  %731 = vmatpush1.bf16.msra.mxu0 %v576
  %732 = vmatprep.subr.bf16.mxu0 0
  %733 = vmatpush1.bf16.msra.mxu0 %v577
  %734 = vmatprep.subr.bf16.mxu0 0
  %735 = vmatpush1.bf16.msra.mxu0 %v578
  %736 = vmatprep.subr.bf16.mxu0 0
  %737 = vmatpush1.bf16.msra.mxu0 %v579
  %738 = vmatprep.subr.bf16.mxu0 0
  %739 = vmatpush1.bf16.msra.mxu0 %v580
  %740 = vmatprep.subr.bf16.mxu0 0
  %741 = vmatpush1.bf16.msra.mxu0 %v581
  %742 = vmatprep.mubr.bf16.mxu0 %v243
  %743 = vmatmul.mubr.bf16.gmra.mrb[0].mxu0 %v242
  %v744 = vpop.f32.mrb[0].mxu0
  %v745 = vadd.f32 %v184, %v744
  %v746 = vpop.f32.mrb[0].mxu0
  %v747 = vpop.f32.mrb[0].mxu0
  %v748 = vadd.f32 %v184, %v747
  %v749 = vpop.f32.mrb[0].mxu0
  %750 = vmatprep.mubr.bf16.mxu0 %v252
  %751 = vmatmul.mubr.bf16.gmra.mrb[0].mxu0 %v251
  %v752 = vpop.f32.mrb[0].mxu0
  %v753 = vadd.f32 %v184, %v752
  %v754 = vpop.f32.mrb[0].mxu0
  %v755 = vpop.f32.mrb[0].mxu0
  %v756 = vadd.f32 %v184, %v755
  %v757 = vpop.f32.mrb[0].mxu0
  %758 = vdwg.mxu0
  %759 = vmatprep.subr.bf16.mxu0 0
  %760 = vmatpush1.bf16.msra.mxu0 %v582
  %761 = vmatprep.subr.bf16.mxu0 0
  %762 = vmatpush1.bf16.msra.mxu0 %v583
  %763 = vmatprep.subr.bf16.mxu0 0
  %764 = vmatpush1.bf16.msra.mxu0 %v584
  %765 = vmatprep.subr.bf16.mxu0 0
  %766 = vmatpush1.bf16.msra.mxu0 %v585
  %767 = vmatprep.subr.bf16.mxu0 0
  %768 = vmatpush1.bf16.msra.mxu0 %v586
  %769 = vmatprep.subr.bf16.mxu0 0
  %770 = vmatpush1.bf16.msra.mxu0 %v587
  %771 = vmatprep.subr.bf16.mxu0 0
  %772 = vmatpush1.bf16.msra.mxu0 %v588
  %773 = vmatprep.subr.bf16.mxu0 0
  %774 = vmatpush1.bf16.msra.mxu0 %v589
  %775 = vmatprep.subr.bf16.mxu0 0
  %776 = vmatpush1.bf16.msra.mxu0 %v590
  %777 = vmatprep.subr.bf16.mxu0 0
  %778 = vmatpush1.bf16.msra.mxu0 %v591
  %779 = vmatprep.subr.bf16.mxu0 0
  %780 = vmatpush1.bf16.msra.mxu0 %v592
  %781 = vmatprep.subr.bf16.mxu0 0
  %782 = vmatpush1.bf16.msra.mxu0 %v593
  %783 = vmatprep.subr.bf16.mxu0 0
  %784 = vmatpush1.bf16.msra.mxu0 %v594
  %785 = vmatprep.subr.bf16.mxu0 0
  %786 = vmatpush1.bf16.msra.mxu0 %v595
  %787 = vmatprep.subr.bf16.mxu0 0
  %788 = vmatpush1.bf16.msra.mxu0 %v596
  %789 = vmatprep.subr.bf16.mxu0 0
  %790 = vmatpush1.bf16.msra.mxu0 %v597
  %791 = vmatprep.mubr.bf16.mxu0 %v245
  %792 = vmatmul.mubr.bf16.gmra.mrb[0].mxu0 %v244
  %v793 = vpop.f32.mrb[0].mxu0
  %v794 = vadd.f32 %v745, %v793
  %v795 = vpop.f32.mrb[0].mxu0
  %v796 = vpop.f32.mrb[0].mxu0
  %v797 = vadd.f32 %v748, %v796
  %v798 = vpop.f32.mrb[0].mxu0
  %799 = vmatprep.mubr.bf16.mxu0 %v254
  %800 = vmatmul.mubr.bf16.gmra.mrb[0].mxu0 %v253
  %v801 = vpop.f32.mrb[0].mxu0
  %v802 = vadd.f32 %v753, %v801
  %v803 = vpop.f32.mrb[0].mxu0
  %v804 = vpop.f32.mrb[0].mxu0
  %v805 = vadd.f32 %v756, %v804
  %v806 = vpop.f32.mrb[0].mxu0
  %807 = vdwg.mxu0
  %808 = vmatprep.subr.bf16.mxu0 0
  %809 = vmatpush1.bf16.msra.mxu0 %v598
  %810 = vmatprep.subr.bf16.mxu0 0
  %811 = vmatpush1.bf16.msra.mxu0 %v599
  %812 = vmatprep.subr.bf16.mxu0 0
  %813 = vmatpush1.bf16.msra.mxu0 %v600
  %814 = vmatprep.subr.bf16.mxu0 0
  %815 = vmatpush1.bf16.msra.mxu0 %v601
  %816 = vmatprep.subr.bf16.mxu0 0
  %817 = vmatpush1.bf16.msra.mxu0 %v602
  %818 = vmatprep.subr.bf16.mxu0 0
  %819 = vmatpush1.bf16.msra.mxu0 %v603
  %820 = vmatprep.subr.bf16.mxu0 0
  %821 = vmatpush1.bf16.msra.mxu0 %v604
  %822 = vmatprep.subr.bf16.mxu0 0
  %823 = vmatpush1.bf16.msra.mxu0 %v605
  %824 = vmatprep.subr.bf16.mxu0 0
  %825 = vmatpush1.bf16.msra.mxu0 %v606
  %826 = vmatprep.subr.bf16.mxu0 0
  %827 = vmatpush1.bf16.msra.mxu0 %v607
  %828 = vmatprep.subr.bf16.mxu0 0
  %829 = vmatpush1.bf16.msra.mxu0 %v608
  %830 = vmatprep.subr.bf16.mxu0 0
  %831 = vmatpush1.bf16.msra.mxu0 %v609
  %832 = vmatprep.subr.bf16.mxu0 0
  %833 = vmatpush1.bf16.msra.mxu0 %v610
  %834 = vmatprep.subr.bf16.mxu0 0
  %835 = vmatpush1.bf16.msra.mxu0 %v611
  %836 = vmatprep.subr.bf16.mxu0 0
  %837 = vmatpush1.bf16.msra.mxu0 %v612
  %838 = vmatprep.subr.bf16.mxu0 0
  %839 = vmatpush1.bf16.msra.mxu0 %v613
  %840 = vmatprep.mubr.bf16.mxu0 %v247
  %841 = vmatmul.mubr.bf16.gmra.mrb[0].mxu0 %v246
  %v842 = vpop.f32.mrb[0].mxu0
  %v843 = vadd.f32 %v794, %v842
  %v844 = vpop.f32.mrb[0].mxu0
  %v845 = vpop.f32.mrb[0].mxu0
  %v846 = vadd.f32 %v797, %v845
  %v847 = vpop.f32.mrb[0].mxu0
  %848 = vmatprep.mubr.bf16.mxu0 %v256
  %849 = vmatmul.mubr.bf16.gmra.mrb[0].mxu0 %v255
  %v850 = vpop.f32.mrb[0].mxu0
  %v851 = vadd.f32 %v802, %v850
  %v852 = vpop.f32.mrb[0].mxu0
  %v853 = vpop.f32.mrb[0].mxu0
  %v854 = vadd.f32 %v805, %v853
  %v855 = vpop.f32.mrb[0].mxu0
  %856 = vdwg.mxu0
  %857 = vmatprep.subr.bf16.mxu0 0
  %858 = vmatpush1.bf16.msra.mxu0 %v614
  %859 = vmatprep.subr.bf16.mxu0 0
  %860 = vmatpush1.bf16.msra.mxu0 %v615
  %861 = vmatprep.subr.bf16.mxu0 0
  %862 = vmatpush1.bf16.msra.mxu0 %v616
  %863 = vmatprep.subr.bf16.mxu0 0
  %864 = vmatpush1.bf16.msra.mxu0 %v617
  %865 = vmatprep.subr.bf16.mxu0 0
  %866 = vmatpush1.bf16.msra.mxu0 %v618
  %867 = vmatprep.subr.bf16.mxu0 0
  %868 = vmatpush1.bf16.msra.mxu0 %v619
  %869 = vmatprep.subr.bf16.mxu0 0
  %870 = vmatpush1.bf16.msra.mxu0 %v620
  %871 = vmatprep.subr.bf16.mxu0 0
  %872 = vmatpush1.bf16.msra.mxu0 %v621
  %873 = vmatprep.subr.bf16.mxu0 0
  %874 = vmatpush1.bf16.msra.mxu0 %v622
  %875 = vmatprep.subr.bf16.mxu0 0
  %876 = vmatpush1.bf16.msra.mxu0 %v623
  %877 = vmatprep.subr.bf16.mxu0 0
  %878 = vmatpush1.bf16.msra.mxu0 %v624
  %879 = vmatprep.subr.bf16.mxu0 0
  %880 = vmatpush1.bf16.msra.mxu0 %v625
  %881 = vmatprep.subr.bf16.mxu0 0
  %882 = vmatpush1.bf16.msra.mxu0 %v626
  %883 = vmatprep.subr.bf16.mxu0 0
  %884 = vmatpush1.bf16.msra.mxu0 %v627
  %885 = vmatprep.subr.bf16.mxu0 0
  %886 = vmatpush1.bf16.msra.mxu0 %v628
  %887 = vmatprep.subr.bf16.mxu0 0
  %888 = vmatpush1.bf16.msra.mxu0 %v629
  %889 = vmatprep.mubr.bf16.mxu0 %v249
  %890 = vmatmul.mubr.bf16.gmra.mrb[0].mxu0 %v248
  %v891 = vpop.f32.mrb[0].mxu0
  %v892 = vadd.f32 %v843, %v891
  %v893 = vpop.f32.mrb[0].mxu0
  %v894 = vpop.f32.mrb[0].mxu0
  %v895 = vadd.f32 %v846, %v894
  %v896 = vpop.f32.mrb[0].mxu0
  %897 = vmatprep.mubr.bf16.mxu0 %v258
  %898 = vmatmul.mubr.bf16.gmra.mrb[0].mxu0 %v257
  %v899 = vpop.f32.mrb[0].mxu0
  %v900 = vadd.f32 %v851, %v899
  %v901 = vpop.f32.mrb[0].mxu0
  %v902 = vpop.f32.mrb[0].mxu0
  %v903 = vadd.f32 %v854, %v902
  %v904 = vpop.f32.mrb[0].mxu0
  %905 = vdwg.mxu0
  %906 = vmatprep.subr.bf16.mxu0 0
  %907 = vmatpush1.bf16.msra.mxu0 %v630
  %908 = vmatprep.subr.bf16.mxu0 0
  %909 = vmatpush1.bf16.msra.mxu0 %v631
  %910 = vmatprep.subr.bf16.mxu0 0
  %911 = vmatpush1.bf16.msra.mxu0 %v632
  %912 = vmatprep.subr.bf16.mxu0 0
  %913 = vmatpush1.bf16.msra.mxu0 %v633
  %914 = vmatprep.subr.bf16.mxu0 0
  %915 = vmatpush1.bf16.msra.mxu0 %v634
  %916 = vmatprep.subr.bf16.mxu0 0
  %917 = vmatpush1.bf16.msra.mxu0 %v635
  %918 = vmatprep.subr.bf16.mxu0 0
  %919 = vmatpush1.bf16.msra.mxu0 %v636
  %920 = vmatprep.subr.bf16.mxu0 0
  %921 = vmatpush1.bf16.msra.mxu0 %v637
  %922 = vmatprep.subr.bf16.mxu0 0
  %923 = vmatpush1.bf16.msra.mxu0 0
  %924 = vmatprep.subr.bf16.mxu0 0
  %925 = vmatpush1.bf16.msra.mxu0 0
  %926 = vmatprep.subr.bf16.mxu0 0
  %927 = vmatpush1.bf16.msra.mxu0 0
  %928 = vmatprep.subr.bf16.mxu0 0
  %929 = vmatpush1.bf16.msra.mxu0 0
  %930 = vmatprep.subr.bf16.mxu0 0
  %931 = vmatpush1.bf16.msra.mxu0 0
  %932 = vmatprep.subr.bf16.mxu0 0
  %933 = vmatpush1.bf16.msra.mxu0 0
  %934 = vmatprep.subr.bf16.mxu0 0
  %935 = vmatpush1.bf16.msra.mxu0 0
  %936 = vmatprep.subr.bf16.mxu0 0
  %937 = vmatpush1.bf16.msra.mxu0 0
  %938 = vmatprep.mubr.bf16.mxu0 0
  %939 = vmatmul.mubr.bf16.gmra.mrb[0].mxu0 %v250
  %v940 = vpop.f32.mrb[0].mxu0
  %v941 = vadd.f32 %v892, %v940
  %v942 = vpop.f32.mrb[0].mxu0
  %v943 = vpop.f32.mrb[0].mxu0
  %v944 = vadd.f32 %v895, %v943
  %v945 = vpop.f32.mrb[0].mxu0
  %946 = vmatprep.mubr.bf16.mxu0 0
  %947 = vmatmul.mubr.bf16.gmra.mrb[0].mxu0 %v259
  %v948 = vpop.f32.mrb[0].mxu0
  %v949 = vadd.f32 %v900, %v948
  %v950 = vpop.f32.mrb[0].mxu0
  %v951 = vpop.f32.mrb[0].mxu0
  %v952 = vadd.f32 %v903, %v951
  %v953 = vpop.f32.mrb[0].mxu0
  %954 = vdwg.mxu0
  %v955 = vmax.f32 %v941, 0.0
  %v956 = vmax.f32 %v944, 0.0
  %v957 = vmax.f32 %v949, 0.0
  %v958 = vmax.f32 %v952, 0.0
  %v959 = vpack.c.bf16 %v956, %v955
  %v960 = vpack.c.bf16 %v958, %v957
  %v963 = vunpack.c.l.b16 %v959
  %v964 = vunpack.c.h.b16 %v959
  %v965 = vunpack.c.l.b16 %v960
  %v966 = vunpack.c.h.b16 %v960
  %v967 = vpack.c.b16 %v963, %v963
  %v968 = vpack.c.b16 %v964, %v964
  %v969 = vpack.c.b16 %v965, %v965
  %v970 = vpack.c.b16 %v966, %v966
  %975 = vst [vmem:[%s3] sm:$0xf] %v967
  %976 = vst [vmem:[%s3 + $0x4] sm:$0xf] %v968
  %977 = vst [vmem:[%s3 + $0x8] sm:$0xf] %v969
  %978 = vst [vmem:[%s3 + $0xc] sm:$0xf] %v970
  // Predicated region
  $region14: #{resnet152fc_forward.26} parent=0 // pred_check
    _
  $region15: #{resnet152fc_forward.26} parent=0 // pred_check_branch
    %980 = sbr.rel (0) target = $region17
  $region16: #{resnet152fc_forward.26} parent=0 // pred_region
    _
  $region17: #{resnet152fc_forward.26} parent=0 // pred_fallthru
    _
  // Predicated region
  $region18: #{resnet152fc_forward.26} parent=0 // pred_check
    _
  $region19: #{resnet152fc_forward.26} parent=0 // pred_check_branch
    %982 = sbr.rel (0) target = $region21
  $region20: #{resnet152fc_forward.26} parent=0 // pred_region
    _
  $region21: #{resnet152fc_forward.26} parent=0 // pred_fallthru
    _

// kernel: closed_call.79
$region0: #{closed_call.79}
  #allocation0 [shape = 'u32[]', space=smem, size = 0x4, offset = 0x4, fixed_abs, tag = 'smem constant byte address 0x4 - core index']
  #allocation1 [shape = 'u32[144,128]{1,0:T(1,128)}', space=vmem, size = 0x12000, scoped, tag = 'internal scratch']
  %s0 = inlined_call_operand.vmem [shape: bf16[32,128], index: 0, kind: input, shape index: {}]
  %s1 = inlined_call_operand.vmem [shape: bf16[128,128], index: 1, kind: input, shape index: {}]
  %s2 = inlined_call_operand.vmem [shape: f32[1,128], index: 2, kind: input, shape index: {}]
  %s3 = inlined_call_operand.vmem [shape: bf16[32,128], index: 3, kind: output, shape index: {}]
  %s4 = sld [smem:[#allocation0]]
  $region22: #{closed_call.79} parent=0
    _
  %s6 = ssub.s32 1, %s4
  %s7 = scalar_select 0, %s6, %s4
  // Predicated region
  $region2: #{closed_call.79} parent=0 // pred_check
    _
  $region3: #{closed_call.79} parent=0 // pred_check_branch
    %9 = sbr.rel (0) target = $region5
  $region4: #{closed_call.79} parent=0 // pred_region
    _
  $region5: #{closed_call.79} parent=0 // pred_fallthru
    _
  // Predicated region
  $region6: #{closed_call.79} parent=0 // pred_check
    _
  $region7: #{closed_call.79} parent=0 // pred_check_branch
    %11 = sbr.rel (0) target = $region9
  $region8: #{closed_call.79} parent=0 // pred_region
    _
  $region9: #{closed_call.79} parent=0 // pred_fallthru
    _
  // Predicated region
  $region10: #{closed_call.79} parent=0 // pred_check
    _
  $region11: #{closed_call.79} parent=0 // pred_check_branch
    %13 = sbr.rel (0) target = $region13
  $region12: #{closed_call.79} parent=0 // pred_region
    _
  $region13: #{closed_call.79} parent=0 // pred_fallthru
    _
  %v15 = vld [vmem:[%s0] sm:$0xf]
  %v16 = vld [vmem:[%s0 + $0x4] sm:$0xf]
  %v17 = vld [vmem:[%s0 + $0x8] sm:$0xf]
  %v18 = vld [vmem:[%s0 + $0xc] sm:$0xf]
  %v19 = vld [vmem:[%s1] sm:$0xf]
  %v20 = vld [vmem:[%s1 + $0x4] sm:$0xf]
  %v21 = vld [vmem:[%s1 + $0x8] sm:$0xf]
  %v22 = vld [vmem:[%s1 + $0xc] sm:$0xf]
  %v23 = vld [vmem:[%s1 + $0x10] sm:$0xf]
  %v24 = vld [vmem:[%s1 + $0x14] sm:$0xf]
  %v25 = vld [vmem:[%s1 + $0x18] sm:$0xf]
  %v26 = vld [vmem:[%s1 + $0x1c] sm:$0xf]
  %v27 = vld [vmem:[%s1 + $0x20] sm:$0xf]
  %v28 = vld [vmem:[%s1 + $0x24] sm:$0xf]
  %v29 = vld [vmem:[%s1 + $0x28] sm:$0xf]
  %v30 = vld [vmem:[%s1 + $0x2c] sm:$0xf]
  %v31 = vld [vmem:[%s1 + $0x30] sm:$0xf]
  %v32 = vld [vmem:[%s1 + $0x34] sm:$0xf]
  %v33 = vld [vmem:[%s1 + $0x38] sm:$0xf]
  %v34 = vld [vmem:[%s1 + $0x3c] sm:$0xf]
  %v35 = vld [vmem:[%s2] sm:$0x1]
  %v37 = vlaneseq
  %v38 = vshrl.u32 %v37, 7
  %v39 = vsub.s32 0, %v38
  %v40 = vrot.slane %v35, %v39
  %v46 = vunpack.c.l.b16 %v15
  %v47 = vunpack.c.l.b16 %v16
  %v48 = vunpack.c.l.b16 %v17
  %v49 = vunpack.c.l.b16 %v18
  %v50 = vpack.c.b16 %v47, %v46
  %v51 = vpack.c.b16 %v49, %v48
  %v70 = vunpack.c.l.b16 %v19
  %v71 = vunpack.c.l.b16 %v20
  %v72 = vunpack.c.l.b16 %v21
  %v73 = vunpack.c.l.b16 %v22
  %v74 = vunpack.c.l.b16 %v23
  %v75 = vunpack.c.l.b16 %v24
  %v76 = vunpack.c.l.b16 %v25
  %v77 = vunpack.c.l.b16 %v26
  %v78 = vunpack.c.l.b16 %v27
  %v79 = vunpack.c.l.b16 %v28
  %v80 = vunpack.c.l.b16 %v29
  %v81 = vunpack.c.l.b16 %v30
  %v82 = vunpack.c.l.b16 %v31
  %v83 = vunpack.c.l.b16 %v32
  %v84 = vunpack.c.l.b16 %v33
  %v85 = vunpack.c.l.b16 %v34
  %v86 = vpack.c.b16 %v71, %v70
  %v87 = vpack.c.b16 %v73, %v72
  %v88 = vpack.c.b16 %v75, %v74
  %v89 = vpack.c.b16 %v77, %v76
  %v90 = vpack.c.b16 %v79, %v78
  %v91 = vpack.c.b16 %v81, %v80
  %v92 = vpack.c.b16 %v83, %v82
  %v93 = vpack.c.b16 %v85, %v84
  %102 = vmatprep.subr.bf16.mxu0 0
  %103 = vmatpush1.bf16.msra.mxu0 %v86
  %104 = vmatprep.subr.bf16.mxu0 0
  %105 = vmatpush1.bf16.msra.mxu0 %v87
  %106 = vmatprep.subr.bf16.mxu0 0
  %107 = vmatpush1.bf16.msra.mxu0 %v88
  %108 = vmatprep.subr.bf16.mxu0 0
  %109 = vmatpush1.bf16.msra.mxu0 %v89
  %110 = vmatprep.subr.bf16.mxu0 0
  %111 = vmatpush1.bf16.msra.mxu0 %v90
  %112 = vmatprep.subr.bf16.mxu0 0
  %113 = vmatpush1.bf16.msra.mxu0 %v91
  %114 = vmatprep.subr.bf16.mxu0 0
  %115 = vmatpush1.bf16.msra.mxu0 %v92
  %116 = vmatprep.subr.bf16.mxu0 0
  %117 = vmatpush1.bf16.msra.mxu0 %v93
  %118 = vmatprep.subr.bf16.mxu0 0
  %119 = vmatpush1.bf16.msra.mxu0 0
  %120 = vmatprep.subr.bf16.mxu0 0
  %121 = vmatpush1.bf16.msra.mxu0 0
  %122 = vmatprep.subr.bf16.mxu0 0
  %123 = vmatpush1.bf16.msra.mxu0 0
  %124 = vmatprep.subr.bf16.mxu0 0
  %125 = vmatpush1.bf16.msra.mxu0 0
  %126 = vmatprep.subr.bf16.mxu0 0
  %127 = vmatpush1.bf16.msra.mxu0 0
  %128 = vmatprep.subr.bf16.mxu0 0
  %129 = vmatpush1.bf16.msra.mxu0 0
  %130 = vmatprep.subr.bf16.mxu0 0
  %131 = vmatpush1.bf16.msra.mxu0 0
  %132 = vmatprep.subr.bf16.mxu0 0
  %133 = vmatpush1.bf16.msra.mxu0 0
  %134 = vmatprep.mubr.bf16.mxu0 0
  %135 = vmatmul.mubr.bf16.gmra.mrb[0].mxu0 %v50
  %v136 = vpop.f32.mrb[0].mxu0
  %v137 = vadd.f32 %v40, %v136
  %v138 = vpop.f32.mrb[0].mxu0
  %v139 = vpop.f32.mrb[0].mxu0
  %v140 = vadd.f32 %v40, %v139
  %v141 = vpop.f32.mrb[0].mxu0
  %142 = vmatprep.mubr.bf16.mxu0 0
  %143 = vmatmul.mubr.bf16.gmra.mrb[0].mxu0 %v51
  %v144 = vpop.f32.mrb[0].mxu0
  %v145 = vadd.f32 %v40, %v144
  %v146 = vpop.f32.mrb[0].mxu0
  %v147 = vpop.f32.mrb[0].mxu0
  %v148 = vadd.f32 %v40, %v147
  %v149 = vpop.f32.mrb[0].mxu0
  %150 = vdwg.mxu0
  %v151 = vmax.f32 %v137, 0.0
  %v152 = vmax.f32 %v140, 0.0
  %v153 = vmax.f32 %v145, 0.0
  %v154 = vmax.f32 %v148, 0.0
  %v155 = vpack.c.bf16 %v152, %v151
  %v156 = vpack.c.bf16 %v154, %v153
  %v159 = vunpack.c.l.b16 %v155
  %v160 = vunpack.c.h.b16 %v155
  %v161 = vunpack.c.l.b16 %v156
  %v162 = vunpack.c.h.b16 %v156
  %v163 = vpack.c.b16 %v159, %v159
  %v164 = vpack.c.b16 %v160, %v160
  %v165 = vpack.c.b16 %v161, %v161
  %v166 = vpack.c.b16 %v162, %v162
  %171 = vst [vmem:[%s3] sm:$0xf] %v163
  %172 = vst [vmem:[%s3 + $0x4] sm:$0xf] %v164
  %173 = vst [vmem:[%s3 + $0x8] sm:$0xf] %v165
  %174 = vst [vmem:[%s3 + $0xc] sm:$0xf] %v166
  // Predicated region
  $region14: #{closed_call.79} parent=0 // pred_check
    _
  $region15: #{closed_call.79} parent=0 // pred_check_branch
    %176 = sbr.rel (0) target = $region17
  $region16: #{closed_call.79} parent=0 // pred_region
    _
  $region17: #{closed_call.79} parent=0 // pred_fallthru
    _
  // Predicated region
  $region18: #{closed_call.79} parent=0 // pred_check
    _
  $region19: #{closed_call.79} parent=0 // pred_check_branch
    %178 = sbr.rel (0) target = $region21
  $region20: #{closed_call.79} parent=0 // pred_region
    _
  $region21: #{closed_call.79} parent=0 // pred_fallthru
    _

// kernel: resnet152fc_forward.31
$region0: #{resnet152fc_forward.31}
  #allocation0 [shape = 'u32[]', space=smem, size = 0x4, offset = 0x4, fixed_abs, tag = 'smem constant byte address 0x4 - core index']
  #allocation1 [shape = 'u32[144,128]{1,0:T(1,128)}', space=vmem, size = 0x12000, scoped, tag = 'internal scratch']
  %s0 = inlined_call_operand.vmem [shape: bf16[8,128], index: 0, kind: input, shape index: {}]
  %s1 = inlined_call_operand.vmem [shape: bf16[128,128], index: 1, kind: input, shape index: {}]
  %s2 = inlined_call_operand.vmem [shape: f32[1,128], index: 2, kind: input, shape index: {}]
  %s3 = inlined_call_operand.vmem [shape: bf16[8,128], index: 3, kind: output, shape index: {}]
  %s4 = sld [smem:[#allocation0]]
  $region22: #{resnet152fc_forward.31} parent=0
    _
  %s6 = ssub.s32 1, %s4
  %s7 = scalar_select 0, %s6, %s4
  // Predicated region
  $region2: #{resnet152fc_forward.31} parent=0 // pred_check
    _
  $region3: #{resnet152fc_forward.31} parent=0 // pred_check_branch
    %9 = sbr.rel (0) target = $region5
  $region4: #{resnet152fc_forward.31} parent=0 // pred_region
    _
  $region5: #{resnet152fc_forward.31} parent=0 // pred_fallthru
    _
  // Predicated region
  $region6: #{resnet152fc_forward.31} parent=0 // pred_check
    _
  $region7: #{resnet152fc_forward.31} parent=0 // pred_check_branch
    %11 = sbr.rel (0) target = $region9
  $region8: #{resnet152fc_forward.31} parent=0 // pred_region
    _
  $region9: #{resnet152fc_forward.31} parent=0 // pred_fallthru
    _
  // Predicated region
  $region10: #{resnet152fc_forward.31} parent=0 // pred_check
    _
  $region11: #{resnet152fc_forward.31} parent=0 // pred_check_branch
    %13 = sbr.rel (0) target = $region13
  $region12: #{resnet152fc_forward.31} parent=0 // pred_region
    _
  $region13: #{resnet152fc_forward.31} parent=0 // pred_fallthru
    _
  %v15 = vld [vmem:[%s0] sm:$0xf]
  %v16 = vld [vmem:[%s1] sm:$0xf]
  %v17 = vld [vmem:[%s1 + $0x4] sm:$0xf]
  %v18 = vld [vmem:[%s1 + $0x8] sm:$0xf]
  %v19 = vld [vmem:[%s1 + $0xc] sm:$0xf]
  %v20 = vld [vmem:[%s1 + $0x10] sm:$0xf]
  %v21 = vld [vmem:[%s1 + $0x14] sm:$0xf]
  %v22 = vld [vmem:[%s1 + $0x18] sm:$0xf]
  %v23 = vld [vmem:[%s1 + $0x1c] sm:$0xf]
  %v24 = vld [vmem:[%s1 + $0x20] sm:$0xf]
  %v25 = vld [vmem:[%s1 + $0x24] sm:$0xf]
  %v26 = vld [vmem:[%s1 + $0x28] sm:$0xf]
  %v27 = vld [vmem:[%s1 + $0x2c] sm:$0xf]
  %v28 = vld [vmem:[%s1 + $0x30] sm:$0xf]
  %v29 = vld [vmem:[%s1 + $0x34] sm:$0xf]
  %v30 = vld [vmem:[%s1 + $0x38] sm:$0xf]
  %v31 = vld [vmem:[%s1 + $0x3c] sm:$0xf]
  %v32 = vld [vmem:[%s2] sm:$0x1]
  %v34 = vlaneseq
  %v35 = vshrl.u32 %v34, 7
  %v36 = vsub.s32 0, %v35
  %v37 = vrot.slane %v32, %v36
  %v55 = vunpack.c.l.b16 %v16
  %v56 = vunpack.c.l.b16 %v17
  %v57 = vunpack.c.l.b16 %v18
  %v58 = vunpack.c.l.b16 %v19
  %v59 = vunpack.c.l.b16 %v20
  %v60 = vunpack.c.l.b16 %v21
  %v61 = vunpack.c.l.b16 %v22
  %v62 = vunpack.c.l.b16 %v23
  %v63 = vunpack.c.l.b16 %v24
  %v64 = vunpack.c.l.b16 %v25
  %v65 = vunpack.c.l.b16 %v26
  %v66 = vunpack.c.l.b16 %v27
  %v67 = vunpack.c.l.b16 %v28
  %v68 = vunpack.c.l.b16 %v29
  %v69 = vunpack.c.l.b16 %v30
  %v70 = vunpack.c.l.b16 %v31
  %v71 = vpack.c.b16 %v56, %v55
  %v72 = vpack.c.b16 %v58, %v57
  %v73 = vpack.c.b16 %v60, %v59
  %v74 = vpack.c.b16 %v62, %v61
  %v75 = vpack.c.b16 %v64, %v63
  %v76 = vpack.c.b16 %v66, %v65
  %v77 = vpack.c.b16 %v68, %v67
  %v78 = vpack.c.b16 %v70, %v69
  %87 = vmatprep.subr.bf16.mxu0 0
  %88 = vmatpush1.bf16.msra.mxu0 %v71
  %89 = vmatprep.subr.bf16.mxu0 0
  %90 = vmatpush1.bf16.msra.mxu0 %v72
  %91 = vmatprep.subr.bf16.mxu0 0
  %92 = vmatpush1.bf16.msra.mxu0 %v73
  %93 = vmatprep.subr.bf16.mxu0 0
  %94 = vmatpush1.bf16.msra.mxu0 %v74
  %95 = vmatprep.subr.bf16.mxu0 0
  %96 = vmatpush1.bf16.msra.mxu0 %v75
  %97 = vmatprep.subr.bf16.mxu0 0
  %98 = vmatpush1.bf16.msra.mxu0 %v76
  %99 = vmatprep.subr.bf16.mxu0 0
  %100 = vmatpush1.bf16.msra.mxu0 %v77
  %101 = vmatprep.subr.bf16.mxu0 0
  %102 = vmatpush1.bf16.msra.mxu0 %v78
  %103 = vmatprep.subr.bf16.mxu0 0
  %104 = vmatpush1.bf16.msra.mxu0 0
  %105 = vmatprep.subr.bf16.mxu0 0
  %106 = vmatpush1.bf16.msra.mxu0 0
  %107 = vmatprep.subr.bf16.mxu0 0
  %108 = vmatpush1.bf16.msra.mxu0 0
  %109 = vmatprep.subr.bf16.mxu0 0
  %110 = vmatpush1.bf16.msra.mxu0 0
  %111 = vmatprep.subr.bf16.mxu0 0
  %112 = vmatpush1.bf16.msra.mxu0 0
  %113 = vmatprep.subr.bf16.mxu0 0
  %114 = vmatpush1.bf16.msra.mxu0 0
  %115 = vmatprep.subr.bf16.mxu0 0
  %116 = vmatpush1.bf16.msra.mxu0 0
  %117 = vmatprep.subr.bf16.mxu0 0
  %118 = vmatpush1.bf16.msra.mxu0 0
  %119 = vmatprep.mubr.bf16.mxu0 0
  %120 = vmatmul.mubr.bf16.gmra.mrb[0].mxu0 %v15
  %v121 = vpop.f32.mrb[0].mxu0
  %v122 = vadd.f32 %v37, %v121
  %v123 = vpop.f32.mrb[0].mxu0
  %v124 = vpop.f32.mrb[0].mxu0
  %v125 = vpop.f32.mrb[0].mxu0
  %126 = vdwg.mxu0
  %v127 = vpack.c.bf16 %v122, %v122
  %128 = vst [vmem:[%s3] sm:$0xf] %v127
  // Predicated region
  $region14: #{resnet152fc_forward.31} parent=0 // pred_check
    _
  $region15: #{resnet152fc_forward.31} parent=0 // pred_check_branch
    %130 = sbr.rel (0) target = $region17
  $region16: #{resnet152fc_forward.31} parent=0 // pred_region
    _
  $region17: #{resnet152fc_forward.31} parent=0 // pred_fallthru
    _
  // Predicated region
  $region18: #{resnet152fc_forward.31} parent=0 // pred_check
    _
  $region19: #{resnet152fc_forward.31} parent=0 // pred_check_branch
    %132 = sbr.rel (0) target = $region21
  $region20: #{resnet152fc_forward.31} parent=0 // pred_region
    _
  $region21: #{resnet152fc_forward.31} parent=0 // pred_fallthru
    _

// kernel: resnet152fc_forward.32
$region0: #{resnet152fc_forward.32}
  #allocation0 [shape = 'u32[]', space=smem, size = 0x4, offset = 0x4, fixed_abs, tag = 'smem constant byte address 0x4 - core index']
  #allocation1 [shape = 'u32[144,128]{1,0:T(1,128)}', space=vmem, size = 0x12000, scoped, tag = 'internal scratch']
  %s0 = inlined_call_operand.vmem [shape: bf16[8,128], index: 0, kind: input, shape index: {}]
  %s1 = inlined_call_operand.vmem [shape: bf16[128,128], index: 1, kind: input, shape index: {}]
  %s2 = inlined_call_operand.vmem [shape: f32[1,128], index: 2, kind: input, shape index: {}]
  %s3 = inlined_call_operand.vmem [shape: bf16[8,128], index: 3, kind: input, shape index: {}]
  %s4 = inlined_call_operand.vmem [shape: bf16[8,128], index: 4, kind: output, shape index: {}]
  %s5 = sld [smem:[#allocation0]]
  $region26: #{resnet152fc_forward.32} parent=0
    _
  %s7 = ssub.s32 1, %s5
  %s8 = scalar_select 0, %s7, %s5
  // Predicated region
  $region2: #{resnet152fc_forward.32} parent=0 // pred_check
    _
  $region3: #{resnet152fc_forward.32} parent=0 // pred_check_branch
    %10 = sbr.rel (0) target = $region5
  $region4: #{resnet152fc_forward.32} parent=0 // pred_region
    _
  $region5: #{resnet152fc_forward.32} parent=0 // pred_fallthru
    _
  // Predicated region
  $region6: #{resnet152fc_forward.32} parent=0 // pred_check
    _
  $region7: #{resnet152fc_forward.32} parent=0 // pred_check_branch
    %12 = sbr.rel (0) target = $region9
  $region8: #{resnet152fc_forward.32} parent=0 // pred_region
    _
  $region9: #{resnet152fc_forward.32} parent=0 // pred_fallthru
    _
  // Predicated region
  $region10: #{resnet152fc_forward.32} parent=0 // pred_check
    _
  $region11: #{resnet152fc_forward.32} parent=0 // pred_check_branch
    %14 = sbr.rel (0) target = $region13
  $region12: #{resnet152fc_forward.32} parent=0 // pred_region
    _
  $region13: #{resnet152fc_forward.32} parent=0 // pred_fallthru
    _
  // Predicated region
  $region14: #{resnet152fc_forward.32} parent=0 // pred_check
    _
  $region15: #{resnet152fc_forward.32} parent=0 // pred_check_branch
    %16 = sbr.rel (0) target = $region17
  $region16: #{resnet152fc_forward.32} parent=0 // pred_region
    _
  $region17: #{resnet152fc_forward.32} parent=0 // pred_fallthru
    _
  %v18 = vld [vmem:[%s0] sm:$0xf]
  %v19 = vld [vmem:[%s1] sm:$0xf]
  %v20 = vld [vmem:[%s1 + $0x4] sm:$0xf]
  %v21 = vld [vmem:[%s1 + $0x8] sm:$0xf]
  %v22 = vld [vmem:[%s1 + $0xc] sm:$0xf]
  %v23 = vld [vmem:[%s1 + $0x10] sm:$0xf]
  %v24 = vld [vmem:[%s1 + $0x14] sm:$0xf]
  %v25 = vld [vmem:[%s1 + $0x18] sm:$0xf]
  %v26 = vld [vmem:[%s1 + $0x1c] sm:$0xf]
  %v27 = vld [vmem:[%s1 + $0x20] sm:$0xf]
  %v28 = vld [vmem:[%s1 + $0x24] sm:$0xf]
  %v29 = vld [vmem:[%s1 + $0x28] sm:$0xf]
  %v30 = vld [vmem:[%s1 + $0x2c] sm:$0xf]
  %v31 = vld [vmem:[%s1 + $0x30] sm:$0xf]
  %v32 = vld [vmem:[%s1 + $0x34] sm:$0xf]
  %v33 = vld [vmem:[%s1 + $0x38] sm:$0xf]
  %v34 = vld [vmem:[%s1 + $0x3c] sm:$0xf]
  %v35 = vld [vmem:[%s2] sm:$0x1]
  %v37 = vlaneseq
  %v38 = vshrl.u32 %v37, 7
  %v39 = vsub.s32 0, %v38
  %v40 = vrot.slane %v35, %v39
  %v58 = vunpack.c.l.b16 %v19
  %v59 = vunpack.c.l.b16 %v20
  %v60 = vunpack.c.l.b16 %v21
  %v61 = vunpack.c.l.b16 %v22
  %v62 = vunpack.c.l.b16 %v23
  %v63 = vunpack.c.l.b16 %v24
  %v64 = vunpack.c.l.b16 %v25
  %v65 = vunpack.c.l.b16 %v26
  %v66 = vunpack.c.l.b16 %v27
  %v67 = vunpack.c.l.b16 %v28
  %v68 = vunpack.c.l.b16 %v29
  %v69 = vunpack.c.l.b16 %v30
  %v70 = vunpack.c.l.b16 %v31
  %v71 = vunpack.c.l.b16 %v32
  %v72 = vunpack.c.l.b16 %v33
  %v73 = vunpack.c.l.b16 %v34
  %v74 = vpack.c.b16 %v59, %v58
  %v75 = vpack.c.b16 %v61, %v60
  %v76 = vpack.c.b16 %v63, %v62
  %v77 = vpack.c.b16 %v65, %v64
  %v78 = vpack.c.b16 %v67, %v66
  %v79 = vpack.c.b16 %v69, %v68
  %v80 = vpack.c.b16 %v71, %v70
  %v81 = vpack.c.b16 %v73, %v72
  %90 = vmatprep.subr.bf16.mxu0 0
  %91 = vmatpush1.bf16.msra.mxu0 %v74
  %92 = vmatprep.subr.bf16.mxu0 0
  %93 = vmatpush1.bf16.msra.mxu0 %v75
  %94 = vmatprep.subr.bf16.mxu0 0
  %95 = vmatpush1.bf16.msra.mxu0 %v76
  %96 = vmatprep.subr.bf16.mxu0 0
  %97 = vmatpush1.bf16.msra.mxu0 %v77
  %98 = vmatprep.subr.bf16.mxu0 0
  %99 = vmatpush1.bf16.msra.mxu0 %v78
  %100 = vmatprep.subr.bf16.mxu0 0
  %101 = vmatpush1.bf16.msra.mxu0 %v79
  %102 = vmatprep.subr.bf16.mxu0 0
  %103 = vmatpush1.bf16.msra.mxu0 %v80
  %104 = vmatprep.subr.bf16.mxu0 0
  %105 = vmatpush1.bf16.msra.mxu0 %v81
  %106 = vmatprep.subr.bf16.mxu0 0
  %107 = vmatpush1.bf16.msra.mxu0 0
  %108 = vmatprep.subr.bf16.mxu0 0
  %109 = vmatpush1.bf16.msra.mxu0 0
  %110 = vmatprep.subr.bf16.mxu0 0
  %111 = vmatpush1.bf16.msra.mxu0 0
  %112 = vmatprep.subr.bf16.mxu0 0
  %113 = vmatpush1.bf16.msra.mxu0 0
  %114 = vmatprep.subr.bf16.mxu0 0
  %115 = vmatpush1.bf16.msra.mxu0 0
  %116 = vmatprep.subr.bf16.mxu0 0
  %117 = vmatpush1.bf16.msra.mxu0 0
  %118 = vmatprep.subr.bf16.mxu0 0
  %119 = vmatpush1.bf16.msra.mxu0 0
  %120 = vmatprep.subr.bf16.mxu0 0
  %121 = vmatpush1.bf16.msra.mxu0 0
  %122 = vmatprep.mubr.bf16.mxu0 0
  %123 = vmatmul.mubr.bf16.gmra.mrb[0].mxu0 %v18
  %v124 = vpop.f32.mrb[0].mxu0
  %v125 = vadd.f32 %v40, %v124
  %v126 = vpop.f32.mrb[0].mxu0
  %v127 = vpop.f32.mrb[0].mxu0
  %v128 = vpop.f32.mrb[0].mxu0
  %129 = vdwg.mxu0
  %v130 = vld [vmem:[%s3] sm:$0xf]
  %v131 = vunpack.c.l.bf16 %v130
  %v132 = vadd.f32 %v125, %v131
  %v133 = vmax.f32 %v132, 0.0
  %v134 = vpack.c.bf16 %v133, %v133
  %135 = vst [vmem:[%s4] sm:$0xf] %v134
  // Predicated region
  $region18: #{resnet152fc_forward.32} parent=0 // pred_check
    _
  $region19: #{resnet152fc_forward.32} parent=0 // pred_check_branch
    %137 = sbr.rel (0) target = $region21
  $region20: #{resnet152fc_forward.32} parent=0 // pred_region
    _
  $region21: #{resnet152fc_forward.32} parent=0 // pred_fallthru
    _
  // Predicated region
  $region22: #{resnet152fc_forward.32} parent=0 // pred_check
    _
  $region23: #{resnet152fc_forward.32} parent=0 // pred_check_branch
    %139 = sbr.rel (0) target = $region25
  $region24: #{resnet152fc_forward.32} parent=0 // pred_region
    _
  $region25: #{resnet152fc_forward.32} parent=0 // pred_fallthru
    _

// kernel: resnet152fc_forward.30
$region0: #{resnet152fc_forward.30}
  #allocation0 [shape = 'u32[]', space=smem, size = 0x4, offset = 0x4, fixed_abs, tag = 'smem constant byte address 0x4 - core index']
  #allocation1 [shape = 'u32[144,128]{1,0:T(1,128)}', space=vmem, size = 0x12000, scoped, tag = 'internal scratch']
  %s0 = inlined_call_operand.vmem [shape: bf16[8,1152], index: 0, kind: input, shape index: {}]
  %s1 = inlined_call_operand.vmem [shape: bf16[1152,128], index: 1, kind: input, shape index: {}]
  %s2 = inlined_call_operand.vmem [shape: f32[1,128], index: 2, kind: input, shape index: {}]
  %s3 = inlined_call_operand.vmem [shape: bf16[8,128], index: 3, kind: output, shape index: {}]
  %s4 = sld [smem:[#allocation0]]
  $region22: #{resnet152fc_forward.30} parent=0
    _
  %s6 = ssub.s32 1, %s4
  %s7 = scalar_select 0, %s6, %s4
  // Predicated region
  $region2: #{resnet152fc_forward.30} parent=0 // pred_check
    _
  $region3: #{resnet152fc_forward.30} parent=0 // pred_check_branch
    %9 = sbr.rel (0) target = $region5
  $region4: #{resnet152fc_forward.30} parent=0 // pred_region
    _
  $region5: #{resnet152fc_forward.30} parent=0 // pred_fallthru
    _
  // Predicated region
  $region6: #{resnet152fc_forward.30} parent=0 // pred_check
    _
  $region7: #{resnet152fc_forward.30} parent=0 // pred_check_branch
    %11 = sbr.rel (0) target = $region9
  $region8: #{resnet152fc_forward.30} parent=0 // pred_region
    _
  $region9: #{resnet152fc_forward.30} parent=0 // pred_fallthru
    _
  // Predicated region
  $region10: #{resnet152fc_forward.30} parent=0 // pred_check
    _
  $region11: #{resnet152fc_forward.30} parent=0 // pred_check_branch
    %13 = sbr.rel (0) target = $region13
  $region12: #{resnet152fc_forward.30} parent=0 // pred_region
    _
  $region13: #{resnet152fc_forward.30} parent=0 // pred_fallthru
    _
  %v15 = vld [vmem:[%s0] sm:$0xff]
  %v16 = vld [vmem:[%s0 + $0x8] sm:$0xff]
  %v17 = vld [vmem:[%s0 + $0x10] sm:$0xff]
  %v18 = vld [vmem:[%s0 + $0x18] sm:$0xff]
  %v19 = vld [vmem:[%s0 + $0x20] sm:$0xf]
  %v20 = vld [vmem:[%s1] sm:$0xf]
  %v21 = vld [vmem:[%s1 + $0x4] sm:$0xf]
  %v22 = vld [vmem:[%s1 + $0x8] sm:$0xf]
  %v23 = vld [vmem:[%s1 + $0xc] sm:$0xf]
  %v24 = vld [vmem:[%s1 + $0x10] sm:$0xf]
  %v25 = vld [vmem:[%s1 + $0x14] sm:$0xf]
  %v26 = vld [vmem:[%s1 + $0x18] sm:$0xf]
  %v27 = vld [vmem:[%s1 + $0x1c] sm:$0xf]
  %v28 = vld [vmem:[%s1 + $0x20] sm:$0xf]
  %v29 = vld [vmem:[%s1 + $0x24] sm:$0xf]
  %v30 = vld [vmem:[%s1 + $0x28] sm:$0xf]
  %v31 = vld [vmem:[%s1 + $0x2c] sm:$0xf]
  %v32 = vld [vmem:[%s1 + $0x30] sm:$0xf]
  %v33 = vld [vmem:[%s1 + $0x34] sm:$0xf]
  %v34 = vld [vmem:[%s1 + $0x38] sm:$0xf]
  %v35 = vld [vmem:[%s1 + $0x3c] sm:$0xf]
  %v36 = vld [vmem:[%s1 + $0x40] sm:$0xf]
  %v37 = vld [vmem:[%s1 + $0x44] sm:$0xf]
  %v38 = vld [vmem:[%s1 + $0x48] sm:$0xf]
  %v39 = vld [vmem:[%s1 + $0x4c] sm:$0xf]
  %v40 = vld [vmem:[%s1 + $0x50] sm:$0xf]
  %v41 = vld [vmem:[%s1 + $0x54] sm:$0xf]
  %v42 = vld [vmem:[%s1 + $0x58] sm:$0xf]
  %v43 = vld [vmem:[%s1 + $0x5c] sm:$0xf]
  %v44 = vld [vmem:[%s1 + $0x60] sm:$0xf]
  %v45 = vld [vmem:[%s1 + $0x64] sm:$0xf]
  %v46 = vld [vmem:[%s1 + $0x68] sm:$0xf]
  %v47 = vld [vmem:[%s1 + $0x6c] sm:$0xf]
  %v48 = vld [vmem:[%s1 + $0x70] sm:$0xf]
  %v49 = vld [vmem:[%s1 + $0x74] sm:$0xf]
  %v50 = vld [vmem:[%s1 + $0x78] sm:$0xf]
  %v51 = vld [vmem:[%s1 + $0x7c] sm:$0xf]
  %v52 = vld [vmem:[%s1 + $0x80] sm:$0xf]
  %v53 = vld [vmem:[%s1 + $0x84] sm:$0xf]
  %v54 = vld [vmem:[%s1 + $0x88] sm:$0xf]
  %v55 = vld [vmem:[%s1 + $0x8c] sm:$0xf]
  %v56 = vld [vmem:[%s1 + $0x90] sm:$0xf]
  %v57 = vld [vmem:[%s1 + $0x94] sm:$0xf]
  %v58 = vld [vmem:[%s1 + $0x98] sm:$0xf]
  %v59 = vld [vmem:[%s1 + $0x9c] sm:$0xf]
  %v60 = vld [vmem:[%s1 + $0xa0] sm:$0xf]
  %v61 = vld [vmem:[%s1 + $0xa4] sm:$0xf]
  %v62 = vld [vmem:[%s1 + $0xa8] sm:$0xf]
  %v63 = vld [vmem:[%s1 + $0xac] sm:$0xf]
  %v64 = vld [vmem:[%s1 + $0xb0] sm:$0xf]
  %v65 = vld [vmem:[%s1 + $0xb4] sm:$0xf]
  %v66 = vld [vmem:[%s1 + $0xb8] sm:$0xf]
  %v67 = vld [vmem:[%s1 + $0xbc] sm:$0xf]
  %v68 = vld [vmem:[%s1 + $0xc0] sm:$0xf]
  %v69 = vld [vmem:[%s1 + $0xc4] sm:$0xf]
  %v70 = vld [vmem:[%s1 + $0xc8] sm:$0xf]
  %v71 = vld [vmem:[%s1 + $0xcc] sm:$0xf]
  %v72 = vld [vmem:[%s1 + $0xd0] sm:$0xf]
  %v73 = vld [vmem:[%s1 + $0xd4] sm:$0xf]
  %v74 = vld [vmem:[%s1 + $0xd8] sm:$0xf]
  %v75 = vld [vmem:[%s1 + $0xdc] sm:$0xf]
  %v76 = vld [vmem:[%s1 + $0xe0] sm:$0xf]
  %v77 = vld [vmem:[%s1 + $0xe4] sm:$0xf]
  %v78 = vld [vmem:[%s1 + $0xe8] sm:$0xf]
  %v79 = vld [vmem:[%s1 + $0xec] sm:$0xf]
  %v80 = vld [vmem:[%s1 + $0xf0] sm:$0xf]
  %v81 = vld [vmem:[%s1 + $0xf4] sm:$0xf]
  %v82 = vld [vmem:[%s1 + $0xf8] sm:$0xf]
  %v83 = vld [vmem:[%s1 + $0xfc] sm:$0xf]
  %v84 = vld [vmem:[%s1 + $0x100] sm:$0xf]
  %v85 = vld [vmem:[%s1 + $0x104] sm:$0xf]
  %v86 = vld [vmem:[%s1 + $0x108] sm:$0xf]
  %v87 = vld [vmem:[%s1 + $0x10c] sm:$0xf]
  %v88 = vld [vmem:[%s1 + $0x110] sm:$0xf]
  %v89 = vld [vmem:[%s1 + $0x114] sm:$0xf]
  %v90 = vld [vmem:[%s1 + $0x118] sm:$0xf]
  %v91 = vld [vmem:[%s1 + $0x11c] sm:$0xf]
  %v92 = vld [vmem:[%s1 + $0x120] sm:$0xf]
  %v93 = vld [vmem:[%s1 + $0x124] sm:$0xf]
  %v94 = vld [vmem:[%s1 + $0x128] sm:$0xf]
  %v95 = vld [vmem:[%s1 + $0x12c] sm:$0xf]
  %v96 = vld [vmem:[%s1 + $0x130] sm:$0xf]
  %v97 = vld [vmem:[%s1 + $0x134] sm:$0xf]
  %v98 = vld [vmem:[%s1 + $0x138] sm:$0xf]
  %v99 = vld [vmem:[%s1 + $0x13c] sm:$0xf]
  %v100 = vld [vmem:[%s1 + $0x140] sm:$0xf]
  %v101 = vld [vmem:[%s1 + $0x144] sm:$0xf]
  %v102 = vld [vmem:[%s1 + $0x148] sm:$0xf]
  %v103 = vld [vmem:[%s1 + $0x14c] sm:$0xf]
  %v104 = vld [vmem:[%s1 + $0x150] sm:$0xf]
  %v105 = vld [vmem:[%s1 + $0x154] sm:$0xf]
  %v106 = vld [vmem:[%s1 + $0x158] sm:$0xf]
  %v107 = vld [vmem:[%s1 + $0x15c] sm:$0xf]
  %v108 = vld [vmem:[%s1 + $0x160] sm:$0xf]
  %v109 = vld [vmem:[%s1 + $0x164] sm:$0xf]
  %v110 = vld [vmem:[%s1 + $0x168] sm:$0xf]
  %v111 = vld [vmem:[%s1 + $0x16c] sm:$0xf]
  %v112 = vld [vmem:[%s1 + $0x170] sm:$0xf]
  %v113 = vld [vmem:[%s1 + $0x174] sm:$0xf]
  %v114 = vld [vmem:[%s1 + $0x178] sm:$0xf]
  %v115 = vld [vmem:[%s1 + $0x17c] sm:$0xf]
  %v116 = vld [vmem:[%s1 + $0x180] sm:$0xf]
  %v117 = vld [vmem:[%s1 + $0x184] sm:$0xf]
  %v118 = vld [vmem:[%s1 + $0x188] sm:$0xf]
  %v119 = vld [vmem:[%s1 + $0x18c] sm:$0xf]
  %v120 = vld [vmem:[%s1 + $0x190] sm:$0xf]
  %v121 = vld [vmem:[%s1 + $0x194] sm:$0xf]
  %v122 = vld [vmem:[%s1 + $0x198] sm:$0xf]
  %v123 = vld [vmem:[%s1 + $0x19c] sm:$0xf]
  %v124 = vld [vmem:[%s1 + $0x1a0] sm:$0xf]
  %v125 = vld [vmem:[%s1 + $0x1a4] sm:$0xf]
  %v126 = vld [vmem:[%s1 + $0x1a8] sm:$0xf]
  %v127 = vld [vmem:[%s1 + $0x1ac] sm:$0xf]
  %v128 = vld [vmem:[%s1 + $0x1b0] sm:$0xf]
  %v129 = vld [vmem:[%s1 + $0x1b4] sm:$0xf]
  %v130 = vld [vmem:[%s1 + $0x1b8] sm:$0xf]
  %v131 = vld [vmem:[%s1 + $0x1bc] sm:$0xf]
  %v132 = vld [vmem:[%s1 + $0x1c0] sm:$0xf]
  %v133 = vld [vmem:[%s1 + $0x1c4] sm:$0xf]
  %v134 = vld [vmem:[%s1 + $0x1c8] sm:$0xf]
  %v135 = vld [vmem:[%s1 + $0x1cc] sm:$0xf]
  %v136 = vld [vmem:[%s1 + $0x1d0] sm:$0xf]
  %v137 = vld [vmem:[%s1 + $0x1d4] sm:$0xf]
  %v138 = vld [vmem:[%s1 + $0x1d8] sm:$0xf]
  %v139 = vld [vmem:[%s1 + $0x1dc] sm:$0xf]
  %v140 = vld [vmem:[%s1 + $0x1e0] sm:$0xf]
  %v141 = vld [vmem:[%s1 + $0x1e4] sm:$0xf]
  %v142 = vld [vmem:[%s1 + $0x1e8] sm:$0xf]
  %v143 = vld [vmem:[%s1 + $0x1ec] sm:$0xf]
  %v144 = vld [vmem:[%s1 + $0x1f0] sm:$0xf]
  %v145 = vld [vmem:[%s1 + $0x1f4] sm:$0xf]
  %v146 = vld [vmem:[%s1 + $0x1f8] sm:$0xf]
  %v147 = vld [vmem:[%s1 + $0x1fc] sm:$0xf]
  %v148 = vld [vmem:[%s1 + $0x200] sm:$0xf]
  %v149 = vld [vmem:[%s1 + $0x204] sm:$0xf]
  %v150 = vld [vmem:[%s1 + $0x208] sm:$0xf]
  %v151 = vld [vmem:[%s1 + $0x20c] sm:$0xf]
  %v152 = vld [vmem:[%s1 + $0x210] sm:$0xf]
  %v153 = vld [vmem:[%s1 + $0x214] sm:$0xf]
  %v154 = vld [vmem:[%s1 + $0x218] sm:$0xf]
  %v155 = vld [vmem:[%s1 + $0x21c] sm:$0xf]
  %v156 = vld [vmem:[%s1 + $0x220] sm:$0xf]
  %v157 = vld [vmem:[%s1 + $0x224] sm:$0xf]
  %v158 = vld [vmem:[%s1 + $0x228] sm:$0xf]
  %v159 = vld [vmem:[%s1 + $0x22c] sm:$0xf]
  %v160 = vld [vmem:[%s1 + $0x230] sm:$0xf]
  %v161 = vld [vmem:[%s1 + $0x234] sm:$0xf]
  %v162 = vld [vmem:[%s1 + $0x238] sm:$0xf]
  %v163 = vld [vmem:[%s1 + $0x23c] sm:$0xf]
  %v164 = vld [vmem:[%s2] sm:$0x1]
  %v166 = vlaneseq
  %v167 = vshrl.u32 %v166, 7
  %v168 = vsub.s32 0, %v167
  %v169 = vrot.slane %v164, %v168
  %v176 = vunpack.c.l.b16 %v15
  %v177 = vunpack.c.h.b16 %v15
  %v178 = vunpack.c.l.b16 %v16
  %v179 = vunpack.c.h.b16 %v16
  %v180 = vunpack.c.l.b16 %v17
  %v181 = vunpack.c.h.b16 %v17
  %v182 = vunpack.c.l.b16 %v18
  %v183 = vunpack.c.h.b16 %v18
  %v184 = vunpack.c.l.b16 %v19
  %v185 = vpack.c.b16 %v176, %v176
  %v186 = vpack.c.b16 %v177, %v177
  %v187 = vpack.c.b16 %v178, %v178
  %v188 = vpack.c.b16 %v179, %v179
  %v189 = vpack.c.b16 %v180, %v180
  %v190 = vpack.c.b16 %v181, %v181
  %v191 = vpack.c.b16 %v182, %v182
  %v192 = vpack.c.b16 %v183, %v183
  %v193 = vpack.c.b16 %v184, %v184
  %v347 = vunpack.c.l.b16 %v20
  %v348 = vunpack.c.l.b16 %v21
  %v349 = vunpack.c.l.b16 %v22
  %v350 = vunpack.c.l.b16 %v23
  %v351 = vunpack.c.l.b16 %v24
  %v352 = vunpack.c.l.b16 %v25
  %v353 = vunpack.c.l.b16 %v26
  %v354 = vunpack.c.l.b16 %v27
  %v355 = vunpack.c.l.b16 %v28
  %v356 = vunpack.c.l.b16 %v29
  %v357 = vunpack.c.l.b16 %v30
  %v358 = vunpack.c.l.b16 %v31
  %v359 = vunpack.c.l.b16 %v32
  %v360 = vunpack.c.l.b16 %v33
  %v361 = vunpack.c.l.b16 %v34
  %v362 = vunpack.c.l.b16 %v35
  %v363 = vunpack.c.l.b16 %v36
  %v364 = vunpack.c.l.b16 %v37
  %v365 = vunpack.c.l.b16 %v38
  %v366 = vunpack.c.l.b16 %v39
  %v367 = vunpack.c.l.b16 %v40
  %v368 = vunpack.c.l.b16 %v41
  %v369 = vunpack.c.l.b16 %v42
  %v370 = vunpack.c.l.b16 %v43
  %v371 = vunpack.c.l.b16 %v44
  %v372 = vunpack.c.l.b16 %v45
  %v373 = vunpack.c.l.b16 %v46
  %v374 = vunpack.c.l.b16 %v47
  %v375 = vunpack.c.l.b16 %v48
  %v376 = vunpack.c.l.b16 %v49
  %v377 = vunpack.c.l.b16 %v50
  %v378 = vunpack.c.l.b16 %v51
  %v379 = vunpack.c.l.b16 %v52
  %v380 = vunpack.c.l.b16 %v53
  %v381 = vunpack.c.l.b16 %v54
  %v382 = vunpack.c.l.b16 %v55
  %v383 = vunpack.c.l.b16 %v56
  %v384 = vunpack.c.l.b16 %v57
  %v385 = vunpack.c.l.b16 %v58
  %v386 = vunpack.c.l.b16 %v59
  %v387 = vunpack.c.l.b16 %v60
  %v388 = vunpack.c.l.b16 %v61
  %v389 = vunpack.c.l.b16 %v62
  %v390 = vunpack.c.l.b16 %v63
  %v391 = vunpack.c.l.b16 %v64
  %v392 = vunpack.c.l.b16 %v65
  %v393 = vunpack.c.l.b16 %v66
  %v394 = vunpack.c.l.b16 %v67
  %v395 = vunpack.c.l.b16 %v68
  %v396 = vunpack.c.l.b16 %v69
  %v397 = vunpack.c.l.b16 %v70
  %v398 = vunpack.c.l.b16 %v71
  %v399 = vunpack.c.l.b16 %v72
  %v400 = vunpack.c.l.b16 %v73
  %v401 = vunpack.c.l.b16 %v74
  %v402 = vunpack.c.l.b16 %v75
  %v403 = vunpack.c.l.b16 %v76
  %v404 = vunpack.c.l.b16 %v77
  %v405 = vunpack.c.l.b16 %v78
  %v406 = vunpack.c.l.b16 %v79
  %v407 = vunpack.c.l.b16 %v80
  %v408 = vunpack.c.l.b16 %v81
  %v409 = vunpack.c.l.b16 %v82
  %v410 = vunpack.c.l.b16 %v83
  %v411 = vunpack.c.l.b16 %v84
  %v412 = vunpack.c.l.b16 %v85
  %v413 = vunpack.c.l.b16 %v86
  %v414 = vunpack.c.l.b16 %v87
  %v415 = vunpack.c.l.b16 %v88
  %v416 = vunpack.c.l.b16 %v89
  %v417 = vunpack.c.l.b16 %v90
  %v418 = vunpack.c.l.b16 %v91
  %v419 = vunpack.c.l.b16 %v92
  %v420 = vunpack.c.l.b16 %v93
  %v421 = vunpack.c.l.b16 %v94
  %v422 = vunpack.c.l.b16 %v95
  %v423 = vunpack.c.l.b16 %v96
  %v424 = vunpack.c.l.b16 %v97
  %v425 = vunpack.c.l.b16 %v98
  %v426 = vunpack.c.l.b16 %v99
  %v427 = vunpack.c.l.b16 %v100
  %v428 = vunpack.c.l.b16 %v101
  %v429 = vunpack.c.l.b16 %v102
  %v430 = vunpack.c.l.b16 %v103
  %v431 = vunpack.c.l.b16 %v104
  %v432 = vunpack.c.l.b16 %v105
  %v433 = vunpack.c.l.b16 %v106
  %v434 = vunpack.c.l.b16 %v107
  %v435 = vunpack.c.l.b16 %v108
  %v436 = vunpack.c.l.b16 %v109
  %v437 = vunpack.c.l.b16 %v110
  %v438 = vunpack.c.l.b16 %v111
  %v439 = vunpack.c.l.b16 %v112
  %v440 = vunpack.c.l.b16 %v113
  %v441 = vunpack.c.l.b16 %v114
  %v442 = vunpack.c.l.b16 %v115
  %v443 = vunpack.c.l.b16 %v116
  %v444 = vunpack.c.l.b16 %v117
  %v445 = vunpack.c.l.b16 %v118
  %v446 = vunpack.c.l.b16 %v119
  %v447 = vunpack.c.l.b16 %v120
  %v448 = vunpack.c.l.b16 %v121
  %v449 = vunpack.c.l.b16 %v122
  %v450 = vunpack.c.l.b16 %v123
  %v451 = vunpack.c.l.b16 %v124
  %v452 = vunpack.c.l.b16 %v125
  %v453 = vunpack.c.l.b16 %v126
  %v454 = vunpack.c.l.b16 %v127
  %v455 = vunpack.c.l.b16 %v128
  %v456 = vunpack.c.l.b16 %v129
  %v457 = vunpack.c.l.b16 %v130
  %v458 = vunpack.c.l.b16 %v131
  %v459 = vunpack.c.l.b16 %v132
  %v460 = vunpack.c.l.b16 %v133
  %v461 = vunpack.c.l.b16 %v134
  %v462 = vunpack.c.l.b16 %v135
  %v463 = vunpack.c.l.b16 %v136
  %v464 = vunpack.c.l.b16 %v137
  %v465 = vunpack.c.l.b16 %v138
  %v466 = vunpack.c.l.b16 %v139
  %v467 = vunpack.c.l.b16 %v140
  %v468 = vunpack.c.l.b16 %v141
  %v469 = vunpack.c.l.b16 %v142
  %v470 = vunpack.c.l.b16 %v143
  %v471 = vunpack.c.l.b16 %v144
  %v472 = vunpack.c.l.b16 %v145
  %v473 = vunpack.c.l.b16 %v146
  %v474 = vunpack.c.l.b16 %v147
  %v475 = vunpack.c.l.b16 %v148
  %v476 = vunpack.c.l.b16 %v149
  %v477 = vunpack.c.l.b16 %v150
  %v478 = vunpack.c.l.b16 %v151
  %v479 = vunpack.c.l.b16 %v152
  %v480 = vunpack.c.l.b16 %v153
  %v481 = vunpack.c.l.b16 %v154
  %v482 = vunpack.c.l.b16 %v155
  %v483 = vunpack.c.l.b16 %v156
  %v484 = vunpack.c.l.b16 %v157
  %v485 = vunpack.c.l.b16 %v158
  %v486 = vunpack.c.l.b16 %v159
  %v487 = vunpack.c.l.b16 %v160
  %v488 = vunpack.c.l.b16 %v161
  %v489 = vunpack.c.l.b16 %v162
  %v490 = vunpack.c.l.b16 %v163
  %v491 = vpack.c.b16 %v348, %v347
  %v492 = vpack.c.b16 %v350, %v349
  %v493 = vpack.c.b16 %v352, %v351
  %v494 = vpack.c.b16 %v354, %v353
  %v495 = vpack.c.b16 %v356, %v355
  %v496 = vpack.c.b16 %v358, %v357
  %v497 = vpack.c.b16 %v360, %v359
  %v498 = vpack.c.b16 %v362, %v361
  %v499 = vpack.c.b16 %v364, %v363
  %v500 = vpack.c.b16 %v366, %v365
  %v501 = vpack.c.b16 %v368, %v367
  %v502 = vpack.c.b16 %v370, %v369
  %v503 = vpack.c.b16 %v372, %v371
  %v504 = vpack.c.b16 %v374, %v373
  %v505 = vpack.c.b16 %v376, %v375
  %v506 = vpack.c.b16 %v378, %v377
  %v507 = vpack.c.b16 %v380, %v379
  %v508 = vpack.c.b16 %v382, %v381
  %v509 = vpack.c.b16 %v384, %v383
  %v510 = vpack.c.b16 %v386, %v385
  %v511 = vpack.c.b16 %v388, %v387
  %v512 = vpack.c.b16 %v390, %v389
  %v513 = vpack.c.b16 %v392, %v391
  %v514 = vpack.c.b16 %v394, %v393
  %v515 = vpack.c.b16 %v396, %v395
  %v516 = vpack.c.b16 %v398, %v397
  %v517 = vpack.c.b16 %v400, %v399
  %v518 = vpack.c.b16 %v402, %v401
  %v519 = vpack.c.b16 %v404, %v403
  %v520 = vpack.c.b16 %v406, %v405
  %v521 = vpack.c.b16 %v408, %v407
  %v522 = vpack.c.b16 %v410, %v409
  %v523 = vpack.c.b16 %v412, %v411
  %v524 = vpack.c.b16 %v414, %v413
  %v525 = vpack.c.b16 %v416, %v415
  %v526 = vpack.c.b16 %v418, %v417
  %v527 = vpack.c.b16 %v420, %v419
  %v528 = vpack.c.b16 %v422, %v421
  %v529 = vpack.c.b16 %v424, %v423
  %v530 = vpack.c.b16 %v426, %v425
  %v531 = vpack.c.b16 %v428, %v427
  %v532 = vpack.c.b16 %v430, %v429
  %v533 = vpack.c.b16 %v432, %v431
  %v534 = vpack.c.b16 %v434, %v433
  %v535 = vpack.c.b16 %v436, %v435
  %v536 = vpack.c.b16 %v438, %v437
  %v537 = vpack.c.b16 %v440, %v439
  %v538 = vpack.c.b16 %v442, %v441
  %v539 = vpack.c.b16 %v444, %v443
  %v540 = vpack.c.b16 %v446, %v445
  %v541 = vpack.c.b16 %v448, %v447
  %v542 = vpack.c.b16 %v450, %v449
  %v543 = vpack.c.b16 %v452, %v451
  %v544 = vpack.c.b16 %v454, %v453
  %v545 = vpack.c.b16 %v456, %v455
  %v546 = vpack.c.b16 %v458, %v457
  %v547 = vpack.c.b16 %v460, %v459
  %v548 = vpack.c.b16 %v462, %v461
  %v549 = vpack.c.b16 %v464, %v463
  %v550 = vpack.c.b16 %v466, %v465
  %v551 = vpack.c.b16 %v468, %v467
  %v552 = vpack.c.b16 %v470, %v469
  %v553 = vpack.c.b16 %v472, %v471
  %v554 = vpack.c.b16 %v474, %v473
  %v555 = vpack.c.b16 %v476, %v475
  %v556 = vpack.c.b16 %v478, %v477
  %v557 = vpack.c.b16 %v480, %v479
  %v558 = vpack.c.b16 %v482, %v481
  %v559 = vpack.c.b16 %v484, %v483
  %v560 = vpack.c.b16 %v486, %v485
  %v561 = vpack.c.b16 %v488, %v487
  %v562 = vpack.c.b16 %v490, %v489
  %635 = vmatprep.subr.bf16.mxu0 0
  %636 = vmatpush1.bf16.msra.mxu0 %v491
  %637 = vmatprep.subr.bf16.mxu0 0
  %638 = vmatpush1.bf16.msra.mxu0 %v492
  %639 = vmatprep.subr.bf16.mxu0 0
  %640 = vmatpush1.bf16.msra.mxu0 %v493
  %641 = vmatprep.subr.bf16.mxu0 0
  %642 = vmatpush1.bf16.msra.mxu0 %v494
  %643 = vmatprep.subr.bf16.mxu0 0
  %644 = vmatpush1.bf16.msra.mxu0 %v495
  %645 = vmatprep.subr.bf16.mxu0 0
  %646 = vmatpush1.bf16.msra.mxu0 %v496
  %647 = vmatprep.subr.bf16.mxu0 0
  %648 = vmatpush1.bf16.msra.mxu0 %v497
  %649 = vmatprep.subr.bf16.mxu0 0
  %650 = vmatpush1.bf16.msra.mxu0 %v498
  %651 = vmatprep.subr.bf16.mxu0 0
  %652 = vmatpush1.bf16.msra.mxu0 %v499
  %653 = vmatprep.subr.bf16.mxu0 0
  %654 = vmatpush1.bf16.msra.mxu0 %v500
  %655 = vmatprep.subr.bf16.mxu0 0
  %656 = vmatpush1.bf16.msra.mxu0 %v501
  %657 = vmatprep.subr.bf16.mxu0 0
  %658 = vmatpush1.bf16.msra.mxu0 %v502
  %659 = vmatprep.subr.bf16.mxu0 0
  %660 = vmatpush1.bf16.msra.mxu0 %v503
  %661 = vmatprep.subr.bf16.mxu0 0
  %662 = vmatpush1.bf16.msra.mxu0 %v504
  %663 = vmatprep.subr.bf16.mxu0 0
  %664 = vmatpush1.bf16.msra.mxu0 %v505
  %665 = vmatprep.subr.bf16.mxu0 0
  %666 = vmatpush1.bf16.msra.mxu0 %v506
  %667 = vmatprep.mubr.bf16.mxu0 %v186
  %668 = vmatmul.mubr.bf16.gmra.mrb[0].mxu0 %v185
  %v669 = vpop.f32.mrb[0].mxu0
  %v670 = vadd.f32 %v169, %v669
  %v671 = vpop.f32.mrb[0].mxu0
  %v672 = vpop.f32.mrb[0].mxu0
  %v673 = vpop.f32.mrb[0].mxu0
  %674 = vdwg.mxu0
  %675 = vmatprep.subr.bf16.mxu0 0
  %676 = vmatpush1.bf16.msra.mxu0 %v507
  %677 = vmatprep.subr.bf16.mxu0 0
  %678 = vmatpush1.bf16.msra.mxu0 %v508
  %679 = vmatprep.subr.bf16.mxu0 0
  %680 = vmatpush1.bf16.msra.mxu0 %v509
  %681 = vmatprep.subr.bf16.mxu0 0
  %682 = vmatpush1.bf16.msra.mxu0 %v510
  %683 = vmatprep.subr.bf16.mxu0 0
  %684 = vmatpush1.bf16.msra.mxu0 %v511
  %685 = vmatprep.subr.bf16.mxu0 0
  %686 = vmatpush1.bf16.msra.mxu0 %v512
  %687 = vmatprep.subr.bf16.mxu0 0
  %688 = vmatpush1.bf16.msra.mxu0 %v513
  %689 = vmatprep.subr.bf16.mxu0 0
  %690 = vmatpush1.bf16.msra.mxu0 %v514
  %691 = vmatprep.subr.bf16.mxu0 0
  %692 = vmatpush1.bf16.msra.mxu0 %v515
  %693 = vmatprep.subr.bf16.mxu0 0
  %694 = vmatpush1.bf16.msra.mxu0 %v516
  %695 = vmatprep.subr.bf16.mxu0 0
  %696 = vmatpush1.bf16.msra.mxu0 %v517
  %697 = vmatprep.subr.bf16.mxu0 0
  %698 = vmatpush1.bf16.msra.mxu0 %v518
  %699 = vmatprep.subr.bf16.mxu0 0
  %700 = vmatpush1.bf16.msra.mxu0 %v519
  %701 = vmatprep.subr.bf16.mxu0 0
  %702 = vmatpush1.bf16.msra.mxu0 %v520
  %703 = vmatprep.subr.bf16.mxu0 0
  %704 = vmatpush1.bf16.msra.mxu0 %v521
  %705 = vmatprep.subr.bf16.mxu0 0
  %706 = vmatpush1.bf16.msra.mxu0 %v522
  %707 = vmatprep.mubr.bf16.mxu0 %v188
  %708 = vmatmul.mubr.bf16.gmra.mrb[0].mxu0 %v187
  %v709 = vpop.f32.mrb[0].mxu0
  %v710 = vadd.f32 %v670, %v709
  %v711 = vpop.f32.mrb[0].mxu0
  %v712 = vpop.f32.mrb[0].mxu0
  %v713 = vpop.f32.mrb[0].mxu0
  %714 = vdwg.mxu0
  %715 = vmatprep.subr.bf16.mxu0 0
  %716 = vmatpush1.bf16.msra.mxu0 %v523
  %717 = vmatprep.subr.bf16.mxu0 0
  %718 = vmatpush1.bf16.msra.mxu0 %v524
  %719 = vmatprep.subr.bf16.mxu0 0
  %720 = vmatpush1.bf16.msra.mxu0 %v525
  %721 = vmatprep.subr.bf16.mxu0 0
  %722 = vmatpush1.bf16.msra.mxu0 %v526
  %723 = vmatprep.subr.bf16.mxu0 0
  %724 = vmatpush1.bf16.msra.mxu0 %v527
  %725 = vmatprep.subr.bf16.mxu0 0
  %726 = vmatpush1.bf16.msra.mxu0 %v528
  %727 = vmatprep.subr.bf16.mxu0 0
  %728 = vmatpush1.bf16.msra.mxu0 %v529
  %729 = vmatprep.subr.bf16.mxu0 0
  %730 = vmatpush1.bf16.msra.mxu0 %v530
  %731 = vmatprep.subr.bf16.mxu0 0
  %732 = vmatpush1.bf16.msra.mxu0 %v531
  %733 = vmatprep.subr.bf16.mxu0 0
  %734 = vmatpush1.bf16.msra.mxu0 %v532
  %735 = vmatprep.subr.bf16.mxu0 0
  %736 = vmatpush1.bf16.msra.mxu0 %v533
  %737 = vmatprep.subr.bf16.mxu0 0
  %738 = vmatpush1.bf16.msra.mxu0 %v534
  %739 = vmatprep.subr.bf16.mxu0 0
  %740 = vmatpush1.bf16.msra.mxu0 %v535
  %741 = vmatprep.subr.bf16.mxu0 0
  %742 = vmatpush1.bf16.msra.mxu0 %v536
  %743 = vmatprep.subr.bf16.mxu0 0
  %744 = vmatpush1.bf16.msra.mxu0 %v537
  %745 = vmatprep.subr.bf16.mxu0 0
  %746 = vmatpush1.bf16.msra.mxu0 %v538
  %747 = vmatprep.mubr.bf16.mxu0 %v190
  %748 = vmatmul.mubr.bf16.gmra.mrb[0].mxu0 %v189
  %v749 = vpop.f32.mrb[0].mxu0
  %v750 = vadd.f32 %v710, %v749
  %v751 = vpop.f32.mrb[0].mxu0
  %v752 = vpop.f32.mrb[0].mxu0
  %v753 = vpop.f32.mrb[0].mxu0
  %754 = vdwg.mxu0
  %755 = vmatprep.subr.bf16.mxu0 0
  %756 = vmatpush1.bf16.msra.mxu0 %v539
  %757 = vmatprep.subr.bf16.mxu0 0
  %758 = vmatpush1.bf16.msra.mxu0 %v540
  %759 = vmatprep.subr.bf16.mxu0 0
  %760 = vmatpush1.bf16.msra.mxu0 %v541
  %761 = vmatprep.subr.bf16.mxu0 0
  %762 = vmatpush1.bf16.msra.mxu0 %v542
  %763 = vmatprep.subr.bf16.mxu0 0
  %764 = vmatpush1.bf16.msra.mxu0 %v543
  %765 = vmatprep.subr.bf16.mxu0 0
  %766 = vmatpush1.bf16.msra.mxu0 %v544
  %767 = vmatprep.subr.bf16.mxu0 0
  %768 = vmatpush1.bf16.msra.mxu0 %v545
  %769 = vmatprep.subr.bf16.mxu0 0
  %770 = vmatpush1.bf16.msra.mxu0 %v546
  %771 = vmatprep.subr.bf16.mxu0 0
  %772 = vmatpush1.bf16.msra.mxu0 %v547
  %773 = vmatprep.subr.bf16.mxu0 0
  %774 = vmatpush1.bf16.msra.mxu0 %v548
  %775 = vmatprep.subr.bf16.mxu0 0
  %776 = vmatpush1.bf16.msra.mxu0 %v549
  %777 = vmatprep.subr.bf16.mxu0 0
  %778 = vmatpush1.bf16.msra.mxu0 %v550
  %779 = vmatprep.subr.bf16.mxu0 0
  %780 = vmatpush1.bf16.msra.mxu0 %v551
  %781 = vmatprep.subr.bf16.mxu0 0
  %782 = vmatpush1.bf16.msra.mxu0 %v552
  %783 = vmatprep.subr.bf16.mxu0 0
  %784 = vmatpush1.bf16.msra.mxu0 %v553
  %785 = vmatprep.subr.bf16.mxu0 0
  %786 = vmatpush1.bf16.msra.mxu0 %v554
  %787 = vmatprep.mubr.bf16.mxu0 %v192
  %788 = vmatmul.mubr.bf16.gmra.mrb[0].mxu0 %v191
  %v789 = vpop.f32.mrb[0].mxu0
  %v790 = vadd.f32 %v750, %v789
  %v791 = vpop.f32.mrb[0].mxu0
  %v792 = vpop.f32.mrb[0].mxu0
  %v793 = vpop.f32.mrb[0].mxu0
  %794 = vdwg.mxu0
  %795 = vmatprep.subr.bf16.mxu0 0
  %796 = vmatpush1.bf16.msra.mxu0 %v555
  %797 = vmatprep.subr.bf16.mxu0 0
  %798 = vmatpush1.bf16.msra.mxu0 %v556
  %799 = vmatprep.subr.bf16.mxu0 0
  %800 = vmatpush1.bf16.msra.mxu0 %v557
  %801 = vmatprep.subr.bf16.mxu0 0
  %802 = vmatpush1.bf16.msra.mxu0 %v558
  %803 = vmatprep.subr.bf16.mxu0 0
  %804 = vmatpush1.bf16.msra.mxu0 %v559
  %805 = vmatprep.subr.bf16.mxu0 0
  %806 = vmatpush1.bf16.msra.mxu0 %v560
  %807 = vmatprep.subr.bf16.mxu0 0
  %808 = vmatpush1.bf16.msra.mxu0 %v561
  %809 = vmatprep.subr.bf16.mxu0 0
  %810 = vmatpush1.bf16.msra.mxu0 %v562
  %811 = vmatprep.subr.bf16.mxu0 0
  %812 = vmatpush1.bf16.msra.mxu0 0
  %813 = vmatprep.subr.bf16.mxu0 0
  %814 = vmatpush1.bf16.msra.mxu0 0
  %815 = vmatprep.subr.bf16.mxu0 0
  %816 = vmatpush1.bf16.msra.mxu0 0
  %817 = vmatprep.subr.bf16.mxu0 0
  %818 = vmatpush1.bf16.msra.mxu0 0
  %819 = vmatprep.subr.bf16.mxu0 0
  %820 = vmatpush1.bf16.msra.mxu0 0
  %821 = vmatprep.subr.bf16.mxu0 0
  %822 = vmatpush1.bf16.msra.mxu0 0
  %823 = vmatprep.subr.bf16.mxu0 0
  %824 = vmatpush1.bf16.msra.mxu0 0
  %825 = vmatprep.subr.bf16.mxu0 0
  %826 = vmatpush1.bf16.msra.mxu0 0
  %827 = vmatprep.mubr.bf16.mxu0 0
  %828 = vmatmul.mubr.bf16.gmra.mrb[0].mxu0 %v193
  %v829 = vpop.f32.mrb[0].mxu0
  %v830 = vadd.f32 %v790, %v829
  %v831 = vpop.f32.mrb[0].mxu0
  %v832 = vpop.f32.mrb[0].mxu0
  %v833 = vpop.f32.mrb[0].mxu0
  %834 = vdwg.mxu0
  %v835 = vmax.f32 %v830, 0.0
  %v836 = vpack.c.bf16 %v835, %v835
  %837 = vst [vmem:[%s3] sm:$0xf] %v836
  // Predicated region
  $region14: #{resnet152fc_forward.30} parent=0 // pred_check
    _
  $region15: #{resnet152fc_forward.30} parent=0 // pred_check_branch
    %839 = sbr.rel (0) target = $region17
  $region16: #{resnet152fc_forward.30} parent=0 // pred_region
    _
  $region17: #{resnet152fc_forward.30} parent=0 // pred_fallthru
    _
  // Predicated region
  $region18: #{resnet152fc_forward.30} parent=0 // pred_check
    _
  $region19: #{resnet152fc_forward.30} parent=0 // pred_check_branch
    %841 = sbr.rel (0) target = $region21
  $region20: #{resnet152fc_forward.30} parent=0 // pred_region
    _
  $region21: #{resnet152fc_forward.30} parent=0 // pred_fallthru
    _

// kernel: closed_call.82
$region0: #{closed_call.82}
  #allocation0 [shape = 'u32[]', space=smem, size = 0x4, offset = 0x4, fixed_abs, tag = 'smem constant byte address 0x4 - core index']
  #allocation1 [shape = 'u32[144,128]{1,0:T(1,128)}', space=vmem, size = 0x12000, scoped, tag = 'internal scratch']
  %s0 = inlined_call_operand.vmem [shape: bf16[8,128], index: 0, kind: input, shape index: {}]
  %s1 = inlined_call_operand.vmem [shape: bf16[128,128], index: 1, kind: input, shape index: {}]
  %s2 = inlined_call_operand.vmem [shape: f32[1,128], index: 2, kind: input, shape index: {}]
  %s3 = inlined_call_operand.vmem [shape: bf16[8,128], index: 3, kind: output, shape index: {}]
  %s4 = sld [smem:[#allocation0]]
  $region22: #{closed_call.82} parent=0
    _
  %s6 = ssub.s32 1, %s4
  %s7 = scalar_select 0, %s6, %s4
  // Predicated region
  $region2: #{closed_call.82} parent=0 // pred_check
    _
  $region3: #{closed_call.82} parent=0 // pred_check_branch
    %9 = sbr.rel (0) target = $region5
  $region4: #{closed_call.82} parent=0 // pred_region
    _
  $region5: #{closed_call.82} parent=0 // pred_fallthru
    _
  // Predicated region
  $region6: #{closed_call.82} parent=0 // pred_check
    _
  $region7: #{closed_call.82} parent=0 // pred_check_branch
    %11 = sbr.rel (0) target = $region9
  $region8: #{closed_call.82} parent=0 // pred_region
    _
  $region9: #{closed_call.82} parent=0 // pred_fallthru
    _
  // Predicated region
  $region10: #{closed_call.82} parent=0 // pred_check
    _
  $region11: #{closed_call.82} parent=0 // pred_check_branch
    %13 = sbr.rel (0) target = $region13
  $region12: #{closed_call.82} parent=0 // pred_region
    _
  $region13: #{closed_call.82} parent=0 // pred_fallthru
    _
  %v15 = vld [vmem:[%s0] sm:$0xf]
  %v16 = vld [vmem:[%s1] sm:$0xf]
  %v17 = vld [vmem:[%s1 + $0x4] sm:$0xf]
  %v18 = vld [vmem:[%s1 + $0x8] sm:$0xf]
  %v19 = vld [vmem:[%s1 + $0xc] sm:$0xf]
  %v20 = vld [vmem:[%s1 + $0x10] sm:$0xf]
  %v21 = vld [vmem:[%s1 + $0x14] sm:$0xf]
  %v22 = vld [vmem:[%s1 + $0x18] sm:$0xf]
  %v23 = vld [vmem:[%s1 + $0x1c] sm:$0xf]
  %v24 = vld [vmem:[%s1 + $0x20] sm:$0xf]
  %v25 = vld [vmem:[%s1 + $0x24] sm:$0xf]
  %v26 = vld [vmem:[%s1 + $0x28] sm:$0xf]
  %v27 = vld [vmem:[%s1 + $0x2c] sm:$0xf]
  %v28 = vld [vmem:[%s1 + $0x30] sm:$0xf]
  %v29 = vld [vmem:[%s1 + $0x34] sm:$0xf]
  %v30 = vld [vmem:[%s1 + $0x38] sm:$0xf]
  %v31 = vld [vmem:[%s1 + $0x3c] sm:$0xf]
  %v32 = vld [vmem:[%s2] sm:$0x1]
  %v34 = vlaneseq
  %v35 = vshrl.u32 %v34, 7
  %v36 = vsub.s32 0, %v35
  %v37 = vrot.slane %v32, %v36
  %v55 = vunpack.c.l.b16 %v16
  %v56 = vunpack.c.l.b16 %v17
  %v57 = vunpack.c.l.b16 %v18
  %v58 = vunpack.c.l.b16 %v19
  %v59 = vunpack.c.l.b16 %v20
  %v60 = vunpack.c.l.b16 %v21
  %v61 = vunpack.c.l.b16 %v22
  %v62 = vunpack.c.l.b16 %v23
  %v63 = vunpack.c.l.b16 %v24
  %v64 = vunpack.c.l.b16 %v25
  %v65 = vunpack.c.l.b16 %v26
  %v66 = vunpack.c.l.b16 %v27
  %v67 = vunpack.c.l.b16 %v28
  %v68 = vunpack.c.l.b16 %v29
  %v69 = vunpack.c.l.b16 %v30
  %v70 = vunpack.c.l.b16 %v31
  %v71 = vpack.c.b16 %v56, %v55
  %v72 = vpack.c.b16 %v58, %v57
  %v73 = vpack.c.b16 %v60, %v59
  %v74 = vpack.c.b16 %v62, %v61
  %v75 = vpack.c.b16 %v64, %v63
  %v76 = vpack.c.b16 %v66, %v65
  %v77 = vpack.c.b16 %v68, %v67
  %v78 = vpack.c.b16 %v70, %v69
  %87 = vmatprep.subr.bf16.mxu0 0
  %88 = vmatpush1.bf16.msra.mxu0 %v71
  %89 = vmatprep.subr.bf16.mxu0 0
  %90 = vmatpush1.bf16.msra.mxu0 %v72
  %91 = vmatprep.subr.bf16.mxu0 0
  %92 = vmatpush1.bf16.msra.mxu0 %v73
  %93 = vmatprep.subr.bf16.mxu0 0
  %94 = vmatpush1.bf16.msra.mxu0 %v74
  %95 = vmatprep.subr.bf16.mxu0 0
  %96 = vmatpush1.bf16.msra.mxu0 %v75
  %97 = vmatprep.subr.bf16.mxu0 0
  %98 = vmatpush1.bf16.msra.mxu0 %v76
  %99 = vmatprep.subr.bf16.mxu0 0
  %100 = vmatpush1.bf16.msra.mxu0 %v77
  %101 = vmatprep.subr.bf16.mxu0 0
  %102 = vmatpush1.bf16.msra.mxu0 %v78
  %103 = vmatprep.subr.bf16.mxu0 0
  %104 = vmatpush1.bf16.msra.mxu0 0
  %105 = vmatprep.subr.bf16.mxu0 0
  %106 = vmatpush1.bf16.msra.mxu0 0
  %107 = vmatprep.subr.bf16.mxu0 0
  %108 = vmatpush1.bf16.msra.mxu0 0
  %109 = vmatprep.subr.bf16.mxu0 0
  %110 = vmatpush1.bf16.msra.mxu0 0
  %111 = vmatprep.subr.bf16.mxu0 0
  %112 = vmatpush1.bf16.msra.mxu0 0
  %113 = vmatprep.subr.bf16.mxu0 0
  %114 = vmatpush1.bf16.msra.mxu0 0
  %115 = vmatprep.subr.bf16.mxu0 0
  %116 = vmatpush1.bf16.msra.mxu0 0
  %117 = vmatprep.subr.bf16.mxu0 0
  %118 = vmatpush1.bf16.msra.mxu0 0
  %119 = vmatprep.mubr.bf16.mxu0 0
  %120 = vmatmul.mubr.bf16.gmra.mrb[0].mxu0 %v15
  %v121 = vpop.f32.mrb[0].mxu0
  %v122 = vadd.f32 %v37, %v121
  %v123 = vpop.f32.mrb[0].mxu0
  %v124 = vpop.f32.mrb[0].mxu0
  %v125 = vpop.f32.mrb[0].mxu0
  %126 = vdwg.mxu0
  %v127 = vmax.f32 %v122, 0.0
  %v128 = vpack.c.bf16 %v127, %v127
  %129 = vst [vmem:[%s3] sm:$0xf] %v128
  // Predicated region
  $region14: #{closed_call.82} parent=0 // pred_check
    _
  $region15: #{closed_call.82} parent=0 // pred_check_branch
    %131 = sbr.rel (0) target = $region17
  $region16: #{closed_call.82} parent=0 // pred_region
    _
  $region17: #{closed_call.82} parent=0 // pred_fallthru
    _
  // Predicated region
  $region18: #{closed_call.82} parent=0 // pred_check
    _
  $region19: #{closed_call.82} parent=0 // pred_check_branch
    %133 = sbr.rel (0) target = $region21
  $region20: #{closed_call.82} parent=0 // pred_region
    _
  $region21: #{closed_call.82} parent=0 // pred_fallthru
    _

// kernel: resnet152fc_forward.35
$region0: #{resnet152fc_forward.35}
  #allocation0 [shape = 'u32[]', space=smem, size = 0x4, offset = 0x4, fixed_abs, tag = 'smem constant byte address 0x4 - core index']
  #allocation1 [shape = 'u32[144,128]{1,0:T(1,128)}', space=vmem, size = 0x12000, scoped, tag = 'internal scratch']
  %s0 = inlined_call_operand.vmem [shape: bf16[2,128], index: 0, kind: input, shape index: {}]
  %s1 = inlined_call_operand.vmem [shape: bf16[128,256], index: 1, kind: input, shape index: {}]
  %s2 = inlined_call_operand.vmem [shape: f32[1,256], index: 2, kind: input, shape index: {}]
  %s3 = inlined_call_operand.vmem [shape: bf16[2,256], index: 3, kind: output, shape index: {}]
  %s4 = sld [smem:[#allocation0]]
  $region22: #{resnet152fc_forward.35} parent=0
    _
  %s6 = ssub.s32 1, %s4
  %s7 = scalar_select 0, %s6, %s4
  // Predicated region
  $region2: #{resnet152fc_forward.35} parent=0 // pred_check
    _
  $region3: #{resnet152fc_forward.35} parent=0 // pred_check_branch
    %9 = sbr.rel (0) target = $region5
  $region4: #{resnet152fc_forward.35} parent=0 // pred_region
    _
  $region5: #{resnet152fc_forward.35} parent=0 // pred_fallthru
    _
  // Predicated region
  $region6: #{resnet152fc_forward.35} parent=0 // pred_check
    _
  $region7: #{resnet152fc_forward.35} parent=0 // pred_check_branch
    %11 = sbr.rel (0) target = $region9
  $region8: #{resnet152fc_forward.35} parent=0 // pred_region
    _
  $region9: #{resnet152fc_forward.35} parent=0 // pred_fallthru
    _
  // Predicated region
  $region10: #{resnet152fc_forward.35} parent=0 // pred_check
    _
  $region11: #{resnet152fc_forward.35} parent=0 // pred_check_branch
    %13 = sbr.rel (0) target = $region13
  $region12: #{resnet152fc_forward.35} parent=0 // pred_region
    _
  $region13: #{resnet152fc_forward.35} parent=0 // pred_fallthru
    _
  %v15 = vld [vmem:[%s0] sm:$0x1]
  %v16 = vld [vmem:[%s1] sm:$0xff]
  %v17 = vld [vmem:[%s1 + $0x8] sm:$0xff]
  %v18 = vld [vmem:[%s1 + $0x10] sm:$0xff]
  %v19 = vld [vmem:[%s1 + $0x18] sm:$0xff]
  %v20 = vld [vmem:[%s1 + $0x20] sm:$0xff]
  %v21 = vld [vmem:[%s1 + $0x28] sm:$0xff]
  %v22 = vld [vmem:[%s1 + $0x30] sm:$0xff]
  %v23 = vld [vmem:[%s1 + $0x38] sm:$0xff]
  %v24 = vld [vmem:[%s1 + $0x40] sm:$0xff]
  %v25 = vld [vmem:[%s1 + $0x48] sm:$0xff]
  %v26 = vld [vmem:[%s1 + $0x50] sm:$0xff]
  %v27 = vld [vmem:[%s1 + $0x58] sm:$0xff]
  %v28 = vld [vmem:[%s1 + $0x60] sm:$0xff]
  %v29 = vld [vmem:[%s1 + $0x68] sm:$0xff]
  %v30 = vld [vmem:[%s1 + $0x70] sm:$0xff]
  %v31 = vld [vmem:[%s1 + $0x78] sm:$0xff]
  %v32 = vld [vmem:[%s2] sm:$0x3]
  %v34 = vlaneseq
  %v35 = vshrl.u32 %v34, 7
  %v36 = vsub.s32 0, %v35
  %v37 = vrot.slane %v32, %v36
  %v38 = vlaneseq
  %v39 = vshrl.u32 %v38, 7
  %v40 = vsub.s32 1, %v39
  %v41 = vrot.slane %v32, %v40
  %v60 = vunpack.c.l.b16 %v16
  %v61 = vunpack.c.h.b16 %v16
  %v62 = vunpack.c.l.b16 %v17
  %v63 = vunpack.c.h.b16 %v17
  %v64 = vunpack.c.l.b16 %v18
  %v65 = vunpack.c.h.b16 %v18
  %v66 = vunpack.c.l.b16 %v19
  %v67 = vunpack.c.h.b16 %v19
  %v68 = vunpack.c.l.b16 %v20
  %v69 = vunpack.c.h.b16 %v20
  %v70 = vunpack.c.l.b16 %v21
  %v71 = vunpack.c.h.b16 %v21
  %v72 = vunpack.c.l.b16 %v22
  %v73 = vunpack.c.h.b16 %v22
  %v74 = vunpack.c.l.b16 %v23
  %v75 = vunpack.c.h.b16 %v23
  %v76 = vunpack.c.l.b16 %v24
  %v77 = vunpack.c.h.b16 %v24
  %v78 = vunpack.c.l.b16 %v25
  %v79 = vunpack.c.h.b16 %v25
  %v80 = vunpack.c.l.b16 %v26
  %v81 = vunpack.c.h.b16 %v26
  %v82 = vunpack.c.l.b16 %v27
  %v83 = vunpack.c.h.b16 %v27
  %v84 = vunpack.c.l.b16 %v28
  %v85 = vunpack.c.h.b16 %v28
  %v86 = vunpack.c.l.b16 %v29
  %v87 = vunpack.c.h.b16 %v29
  %v88 = vunpack.c.l.b16 %v30
  %v89 = vunpack.c.h.b16 %v30
  %v90 = vunpack.c.l.b16 %v31
  %v91 = vunpack.c.h.b16 %v31
  %v92 = vpack.c.b16 %v62, %v60
  %v93 = vpack.c.b16 %v63, %v61
  %v94 = vpack.c.b16 %v66, %v64
  %v95 = vpack.c.b16 %v67, %v65
  %v96 = vpack.c.b16 %v70, %v68
  %v97 = vpack.c.b16 %v71, %v69
  %v98 = vpack.c.b16 %v74, %v72
  %v99 = vpack.c.b16 %v75, %v73
  %v100 = vpack.c.b16 %v78, %v76
  %v101 = vpack.c.b16 %v79, %v77
  %v102 = vpack.c.b16 %v82, %v80
  %v103 = vpack.c.b16 %v83, %v81
  %v104 = vpack.c.b16 %v86, %v84
  %v105 = vpack.c.b16 %v87, %v85
  %v106 = vpack.c.b16 %v90, %v88
  %v107 = vpack.c.b16 %v91, %v89
  %124 = vmatprep.subr.bf16.mxu0 %v93
  %125 = vmatpush1.bf16.msra.mxu0 %v92
  %126 = vmatprep.subr.bf16.mxu0 %v95
  %127 = vmatpush1.bf16.msra.mxu0 %v94
  %128 = vmatprep.subr.bf16.mxu0 %v97
  %129 = vmatpush1.bf16.msra.mxu0 %v96
  %130 = vmatprep.subr.bf16.mxu0 %v99
  %131 = vmatpush1.bf16.msra.mxu0 %v98
  %132 = vmatprep.subr.bf16.mxu0 %v101
  %133 = vmatpush1.bf16.msra.mxu0 %v100
  %134 = vmatprep.subr.bf16.mxu0 %v103
  %135 = vmatpush1.bf16.msra.mxu0 %v102
  %136 = vmatprep.subr.bf16.mxu0 %v105
  %137 = vmatpush1.bf16.msra.mxu0 %v104
  %138 = vmatprep.subr.bf16.mxu0 %v107
  %139 = vmatpush1.bf16.msra.mxu0 %v106
  %140 = vmatprep.subr.bf16.mxu0 0
  %141 = vmatpush1.bf16.msra.mxu0 0
  %142 = vmatprep.subr.bf16.mxu0 0
  %143 = vmatpush1.bf16.msra.mxu0 0
  %144 = vmatprep.subr.bf16.mxu0 0
  %145 = vmatpush1.bf16.msra.mxu0 0
  %146 = vmatprep.subr.bf16.mxu0 0
  %147 = vmatpush1.bf16.msra.mxu0 0
  %148 = vmatprep.subr.bf16.mxu0 0
  %149 = vmatpush1.bf16.msra.mxu0 0
  %150 = vmatprep.subr.bf16.mxu0 0
  %151 = vmatpush1.bf16.msra.mxu0 0
  %152 = vmatprep.subr.bf16.mxu0 0
  %153 = vmatpush1.bf16.msra.mxu0 0
  %154 = vmatprep.subr.bf16.mxu0 0
  %155 = vmatpush1.bf16.msra.mxu0 0
  %156 = vmatprep.mubr.bf16.mxu0 0
  %157 = vmatmul.mubr.bf16.gmra.mrb[0].mxu0 %v15
  %v158 = vpop.f32.mrb[0].mxu0
  %v159 = vadd.f32 %v37, %v158
  %v160 = vpop.f32.mrb[0].mxu0
  %v161 = vadd.f32 %v41, %v160
  %v162 = vpop.f32.mrb[0].mxu0
  %v163 = vpop.f32.mrb[0].mxu0
  %164 = vdwg.mxu0
  %v165 = vpack.c.bf16 %v159, %v159
  %v166 = vpack.c.bf16 %v161, %v161
  %v169 = vcombine.low %v165, %v166
  %v171 = vunpack.c.l.s4 1966171168
  %v172 = vunpack.c.0.s8 %v171
  %v173 = vlaneseq
  %v174 = vshrl.u32 %v173, 7
  %v175 = vsub.s32 %v172, %v174
  %v176 = vrot.slane %v169, %v175
  %v178 = vunpack.c.l.s4 1966171168
  %v179 = vunpack.c.0.s8 %v178
  %v180 = vlaneseq
  %v181 = vshrl.u32 %v180, 7
  %v182 = vsub.s32 %v179, %v181
  %v183 = vrot.slane %v176, %v182
  %185 = vst [vmem:[%s3] sm:$0x3] %v183
  // Predicated region
  $region14: #{resnet152fc_forward.35} parent=0 // pred_check
    _
  $region15: #{resnet152fc_forward.35} parent=0 // pred_check_branch
    %187 = sbr.rel (0) target = $region17
  $region16: #{resnet152fc_forward.35} parent=0 // pred_region
    _
  $region17: #{resnet152fc_forward.35} parent=0 // pred_fallthru
    _
  // Predicated region
  $region18: #{resnet152fc_forward.35} parent=0 // pred_check
    _
  $region19: #{resnet152fc_forward.35} parent=0 // pred_check_branch
    %189 = sbr.rel (0) target = $region21
  $region20: #{resnet152fc_forward.35} parent=0 // pred_region
    _
  $region21: #{resnet152fc_forward.35} parent=0 // pred_fallthru
    _

// kernel: resnet152fc_forward.36
$region0: #{resnet152fc_forward.36}
  #allocation0 [shape = 'u32[]', space=smem, size = 0x4, offset = 0x4, fixed_abs, tag = 'smem constant byte address 0x4 - core index']
  #allocation1 [shape = 'u32[144,128]{1,0:T(1,128)}', space=vmem, size = 0x12000, scoped, tag = 'internal scratch']
  %s0 = inlined_call_operand.vmem [shape: bf16[2,128], index: 0, kind: input, shape index: {}]
  %s1 = inlined_call_operand.vmem [shape: bf16[128,256], index: 1, kind: input, shape index: {}]
  %s2 = inlined_call_operand.vmem [shape: f32[1,256], index: 2, kind: input, shape index: {}]
  %s3 = inlined_call_operand.vmem [shape: bf16[2,256], index: 3, kind: input, shape index: {}]
  %s4 = inlined_call_operand.vmem [shape: bf16[2,256], index: 4, kind: output, shape index: {}]
  %s5 = sld [smem:[#allocation0]]
  $region26: #{resnet152fc_forward.36} parent=0
    _
  %s7 = ssub.s32 1, %s5
  %s8 = scalar_select 0, %s7, %s5
  // Predicated region
  $region2: #{resnet152fc_forward.36} parent=0 // pred_check
    _
  $region3: #{resnet152fc_forward.36} parent=0 // pred_check_branch
    %10 = sbr.rel (0) target = $region5
  $region4: #{resnet152fc_forward.36} parent=0 // pred_region
    _
  $region5: #{resnet152fc_forward.36} parent=0 // pred_fallthru
    _
  // Predicated region
  $region6: #{resnet152fc_forward.36} parent=0 // pred_check
    _
  $region7: #{resnet152fc_forward.36} parent=0 // pred_check_branch
    %12 = sbr.rel (0) target = $region9
  $region8: #{resnet152fc_forward.36} parent=0 // pred_region
    _
  $region9: #{resnet152fc_forward.36} parent=0 // pred_fallthru
    _
  // Predicated region
  $region10: #{resnet152fc_forward.36} parent=0 // pred_check
    _
  $region11: #{resnet152fc_forward.36} parent=0 // pred_check_branch
    %14 = sbr.rel (0) target = $region13
  $region12: #{resnet152fc_forward.36} parent=0 // pred_region
    _
  $region13: #{resnet152fc_forward.36} parent=0 // pred_fallthru
    _
  // Predicated region
  $region14: #{resnet152fc_forward.36} parent=0 // pred_check
    _
  $region15: #{resnet152fc_forward.36} parent=0 // pred_check_branch
    %16 = sbr.rel (0) target = $region17
  $region16: #{resnet152fc_forward.36} parent=0 // pred_region
    _
  $region17: #{resnet152fc_forward.36} parent=0 // pred_fallthru
    _
  %v18 = vld [vmem:[%s0] sm:$0x1]
  %v19 = vld [vmem:[%s1] sm:$0xff]
  %v20 = vld [vmem:[%s1 + $0x8] sm:$0xff]
  %v21 = vld [vmem:[%s1 + $0x10] sm:$0xff]
  %v22 = vld [vmem:[%s1 + $0x18] sm:$0xff]
  %v23 = vld [vmem:[%s1 + $0x20] sm:$0xff]
  %v24 = vld [vmem:[%s1 + $0x28] sm:$0xff]
  %v25 = vld [vmem:[%s1 + $0x30] sm:$0xff]
  %v26 = vld [vmem:[%s1 + $0x38] sm:$0xff]
  %v27 = vld [vmem:[%s1 + $0x40] sm:$0xff]
  %v28 = vld [vmem:[%s1 + $0x48] sm:$0xff]
  %v29 = vld [vmem:[%s1 + $0x50] sm:$0xff]
  %v30 = vld [vmem:[%s1 + $0x58] sm:$0xff]
  %v31 = vld [vmem:[%s1 + $0x60] sm:$0xff]
  %v32 = vld [vmem:[%s1 + $0x68] sm:$0xff]
  %v33 = vld [vmem:[%s1 + $0x70] sm:$0xff]
  %v34 = vld [vmem:[%s1 + $0x78] sm:$0xff]
  %v35 = vld [vmem:[%s2] sm:$0x3]
  %v37 = vlaneseq
  %v38 = vshrl.u32 %v37, 7
  %v39 = vsub.s32 0, %v38
  %v40 = vrot.slane %v35, %v39
  %v41 = vlaneseq
  %v42 = vshrl.u32 %v41, 7
  %v43 = vsub.s32 1, %v42
  %v44 = vrot.slane %v35, %v43
  %v63 = vunpack.c.l.b16 %v19
  %v64 = vunpack.c.h.b16 %v19
  %v65 = vunpack.c.l.b16 %v20
  %v66 = vunpack.c.h.b16 %v20
  %v67 = vunpack.c.l.b16 %v21
  %v68 = vunpack.c.h.b16 %v21
  %v69 = vunpack.c.l.b16 %v22
  %v70 = vunpack.c.h.b16 %v22
  %v71 = vunpack.c.l.b16 %v23
  %v72 = vunpack.c.h.b16 %v23
  %v73 = vunpack.c.l.b16 %v24
  %v74 = vunpack.c.h.b16 %v24
  %v75 = vunpack.c.l.b16 %v25
  %v76 = vunpack.c.h.b16 %v25
  %v77 = vunpack.c.l.b16 %v26
  %v78 = vunpack.c.h.b16 %v26
  %v79 = vunpack.c.l.b16 %v27
  %v80 = vunpack.c.h.b16 %v27
  %v81 = vunpack.c.l.b16 %v28
  %v82 = vunpack.c.h.b16 %v28
  %v83 = vunpack.c.l.b16 %v29
  %v84 = vunpack.c.h.b16 %v29
  %v85 = vunpack.c.l.b16 %v30
  %v86 = vunpack.c.h.b16 %v30
  %v87 = vunpack.c.l.b16 %v31
  %v88 = vunpack.c.h.b16 %v31
  %v89 = vunpack.c.l.b16 %v32
  %v90 = vunpack.c.h.b16 %v32
  %v91 = vunpack.c.l.b16 %v33
  %v92 = vunpack.c.h.b16 %v33
  %v93 = vunpack.c.l.b16 %v34
  %v94 = vunpack.c.h.b16 %v34
  %v95 = vpack.c.b16 %v65, %v63
  %v96 = vpack.c.b16 %v66, %v64
  %v97 = vpack.c.b16 %v69, %v67
  %v98 = vpack.c.b16 %v70, %v68
  %v99 = vpack.c.b16 %v73, %v71
  %v100 = vpack.c.b16 %v74, %v72
  %v101 = vpack.c.b16 %v77, %v75
  %v102 = vpack.c.b16 %v78, %v76
  %v103 = vpack.c.b16 %v81, %v79
  %v104 = vpack.c.b16 %v82, %v80
  %v105 = vpack.c.b16 %v85, %v83
  %v106 = vpack.c.b16 %v86, %v84
  %v107 = vpack.c.b16 %v89, %v87
  %v108 = vpack.c.b16 %v90, %v88
  %v109 = vpack.c.b16 %v93, %v91
  %v110 = vpack.c.b16 %v94, %v92
  %127 = vmatprep.subr.bf16.mxu0 %v96
  %128 = vmatpush1.bf16.msra.mxu0 %v95
  %129 = vmatprep.subr.bf16.mxu0 %v98
  %130 = vmatpush1.bf16.msra.mxu0 %v97
  %131 = vmatprep.subr.bf16.mxu0 %v100
  %132 = vmatpush1.bf16.msra.mxu0 %v99
  %133 = vmatprep.subr.bf16.mxu0 %v102
  %134 = vmatpush1.bf16.msra.mxu0 %v101
  %135 = vmatprep.subr.bf16.mxu0 %v104
  %136 = vmatpush1.bf16.msra.mxu0 %v103
  %137 = vmatprep.subr.bf16.mxu0 %v106
  %138 = vmatpush1.bf16.msra.mxu0 %v105
  %139 = vmatprep.subr.bf16.mxu0 %v108
  %140 = vmatpush1.bf16.msra.mxu0 %v107
  %141 = vmatprep.subr.bf16.mxu0 %v110
  %142 = vmatpush1.bf16.msra.mxu0 %v109
  %143 = vmatprep.subr.bf16.mxu0 0
  %144 = vmatpush1.bf16.msra.mxu0 0
  %145 = vmatprep.subr.bf16.mxu0 0
  %146 = vmatpush1.bf16.msra.mxu0 0
  %147 = vmatprep.subr.bf16.mxu0 0
  %148 = vmatpush1.bf16.msra.mxu0 0
  %149 = vmatprep.subr.bf16.mxu0 0
  %150 = vmatpush1.bf16.msra.mxu0 0
  %151 = vmatprep.subr.bf16.mxu0 0
  %152 = vmatpush1.bf16.msra.mxu0 0
  %153 = vmatprep.subr.bf16.mxu0 0
  %154 = vmatpush1.bf16.msra.mxu0 0
  %155 = vmatprep.subr.bf16.mxu0 0
  %156 = vmatpush1.bf16.msra.mxu0 0
  %157 = vmatprep.subr.bf16.mxu0 0
  %158 = vmatpush1.bf16.msra.mxu0 0
  %159 = vmatprep.mubr.bf16.mxu0 0
  %160 = vmatmul.mubr.bf16.gmra.mrb[0].mxu0 %v18
  %v161 = vpop.f32.mrb[0].mxu0
  %v162 = vadd.f32 %v40, %v161
  %v163 = vpop.f32.mrb[0].mxu0
  %v164 = vadd.f32 %v44, %v163
  %v165 = vpop.f32.mrb[0].mxu0
  %v166 = vpop.f32.mrb[0].mxu0
  %167 = vdwg.mxu0
  %v168 = vld [vmem:[%s3] sm:$0x3]
  %v169 = vunpack.c.l.bf16 %v168
  %v172 = vunpack.c.l.s4 1983009808
  %v173 = vunpack.c.0.s8 %v172
  %v174 = vlaneseq
  %v175 = vshrl.u32 %v174, 7
  %v176 = vsub.s32 %v173, %v175
  %v177 = vrot.slane %v169, %v176
  %v178 = vcombine.high %v177, %v177
  %v181 = vadd.f32 %v162, %v177
  %v182 = vadd.f32 %v164, %v178
  %v183 = vmax.f32 %v181, 0.0
  %v184 = vmax.f32 %v182, 0.0
  %v185 = vpack.c.bf16 %v183, %v183
  %v186 = vpack.c.bf16 %v184, %v184
  %v189 = vcombine.low %v185, %v186
  %v191 = vunpack.c.l.s4 1966171168
  %v192 = vunpack.c.0.s8 %v191
  %v193 = vlaneseq
  %v194 = vshrl.u32 %v193, 7
  %v195 = vsub.s32 %v192, %v194
  %v196 = vrot.slane %v189, %v195
  %v198 = vunpack.c.l.s4 1966171168
  %v199 = vunpack.c.0.s8 %v198
  %v200 = vlaneseq
  %v201 = vshrl.u32 %v200, 7
  %v202 = vsub.s32 %v199, %v201
  %v203 = vrot.slane %v196, %v202
  %205 = vst [vmem:[%s4] sm:$0x3] %v203
  // Predicated region
  $region18: #{resnet152fc_forward.36} parent=0 // pred_check
    _
  $region19: #{resnet152fc_forward.36} parent=0 // pred_check_branch
    %207 = sbr.rel (0) target = $region21
  $region20: #{resnet152fc_forward.36} parent=0 // pred_region
    _
  $region21: #{resnet152fc_forward.36} parent=0 // pred_fallthru
    _
  // Predicated region
  $region22: #{resnet152fc_forward.36} parent=0 // pred_check
    _
  $region23: #{resnet152fc_forward.36} parent=0 // pred_check_branch
    %209 = sbr.rel (0) target = $region25
  $region24: #{resnet152fc_forward.36} parent=0 // pred_region
    _
  $region25: #{resnet152fc_forward.36} parent=0 // pred_fallthru
    _

// kernel: closed_call.85
$region0: #{closed_call.85}
  #allocation0 [shape = 'u32[]', space=smem, size = 0x4, offset = 0x4, fixed_abs, tag = 'smem constant byte address 0x4 - core index']
  #allocation1 [shape = 'u32[144,128]{1,0:T(1,128)}', space=vmem, size = 0x12000, scoped, tag = 'internal scratch']
  %s0 = inlined_call_operand.vmem [shape: bf16[2,256], index: 0, kind: input, shape index: {}]
  %s1 = inlined_call_operand.vmem [shape: bf16[256,128], index: 1, kind: input, shape index: {}]
  %s2 = inlined_call_operand.vmem [shape: f32[1,128], index: 2, kind: input, shape index: {}]
  %s3 = inlined_call_operand.vmem [shape: bf16[2,128], index: 3, kind: output, shape index: {}]
  %s4 = sld [smem:[#allocation0]]
  $region22: #{closed_call.85} parent=0
    _
  %s6 = ssub.s32 1, %s4
  %s7 = scalar_select 0, %s6, %s4
  // Predicated region
  $region2: #{closed_call.85} parent=0 // pred_check
    _
  $region3: #{closed_call.85} parent=0 // pred_check_branch
    %9 = sbr.rel (0) target = $region5
  $region4: #{closed_call.85} parent=0 // pred_region
    _
  $region5: #{closed_call.85} parent=0 // pred_fallthru
    _
  // Predicated region
  $region6: #{closed_call.85} parent=0 // pred_check
    _
  $region7: #{closed_call.85} parent=0 // pred_check_branch
    %11 = sbr.rel (0) target = $region9
  $region8: #{closed_call.85} parent=0 // pred_region
    _
  $region9: #{closed_call.85} parent=0 // pred_fallthru
    _
  // Predicated region
  $region10: #{closed_call.85} parent=0 // pred_check
    _
  $region11: #{closed_call.85} parent=0 // pred_check_branch
    %13 = sbr.rel (0) target = $region13
  $region12: #{closed_call.85} parent=0 // pred_region
    _
  $region13: #{closed_call.85} parent=0 // pred_fallthru
    _
  %v15 = vld [vmem:[%s0] sm:$0x3]
  %v16 = vld [vmem:[%s1] sm:$0xf]
  %v17 = vld [vmem:[%s1 + $0x4] sm:$0xf]
  %v18 = vld [vmem:[%s1 + $0x8] sm:$0xf]
  %v19 = vld [vmem:[%s1 + $0xc] sm:$0xf]
  %v20 = vld [vmem:[%s1 + $0x10] sm:$0xf]
  %v21 = vld [vmem:[%s1 + $0x14] sm:$0xf]
  %v22 = vld [vmem:[%s1 + $0x18] sm:$0xf]
  %v23 = vld [vmem:[%s1 + $0x1c] sm:$0xf]
  %v24 = vld [vmem:[%s1 + $0x20] sm:$0xf]
  %v25 = vld [vmem:[%s1 + $0x24] sm:$0xf]
  %v26 = vld [vmem:[%s1 + $0x28] sm:$0xf]
  %v27 = vld [vmem:[%s1 + $0x2c] sm:$0xf]
  %v28 = vld [vmem:[%s1 + $0x30] sm:$0xf]
  %v29 = vld [vmem:[%s1 + $0x34] sm:$0xf]
  %v30 = vld [vmem:[%s1 + $0x38] sm:$0xf]
  %v31 = vld [vmem:[%s1 + $0x3c] sm:$0xf]
  %v32 = vld [vmem:[%s1 + $0x40] sm:$0xf]
  %v33 = vld [vmem:[%s1 + $0x44] sm:$0xf]
  %v34 = vld [vmem:[%s1 + $0x48] sm:$0xf]
  %v35 = vld [vmem:[%s1 + $0x4c] sm:$0xf]
  %v36 = vld [vmem:[%s1 + $0x50] sm:$0xf]
  %v37 = vld [vmem:[%s1 + $0x54] sm:$0xf]
  %v38 = vld [vmem:[%s1 + $0x58] sm:$0xf]
  %v39 = vld [vmem:[%s1 + $0x5c] sm:$0xf]
  %v40 = vld [vmem:[%s1 + $0x60] sm:$0xf]
  %v41 = vld [vmem:[%s1 + $0x64] sm:$0xf]
  %v42 = vld [vmem:[%s1 + $0x68] sm:$0xf]
  %v43 = vld [vmem:[%s1 + $0x6c] sm:$0xf]
  %v44 = vld [vmem:[%s1 + $0x70] sm:$0xf]
  %v45 = vld [vmem:[%s1 + $0x74] sm:$0xf]
  %v46 = vld [vmem:[%s1 + $0x78] sm:$0xf]
  %v47 = vld [vmem:[%s1 + $0x7c] sm:$0xf]
  %v48 = vld [vmem:[%s2] sm:$0x1]
  %v50 = vlaneseq
  %v51 = vshrl.u32 %v50, 7
  %v52 = vsub.s32 0, %v51
  %v53 = vrot.slane %v48, %v52
  %v57 = vunpack.c.l.s4 1966171168
  %v58 = vunpack.c.0.s8 %v57
  %v59 = vlaneseq
  %v60 = vshrl.u32 %v59, 7
  %v61 = vsub.s32 %v58, %v60
  %v62 = vrot.slane %v15, %v61
  %v63 = vcombine.high %v62, %v62
  %v65 = vunpack.c.l.s4 1966171168
  %v66 = vunpack.c.0.s8 %v65
  %v67 = vlaneseq
  %v68 = vshrl.u32 %v67, 7
  %v69 = vsub.s32 %v66, %v68
  %v70 = vrot.slane %v62, %v69
  %v72 = vunpack.c.l.s4 1966171168
  %v73 = vunpack.c.0.s8 %v72
  %v74 = vlaneseq
  %v75 = vshrl.u32 %v74, 7
  %v76 = vsub.s32 %v73, %v75
  %v77 = vrot.slane %v63, %v76
  %v112 = vunpack.c.l.b16 %v16
  %v113 = vunpack.c.l.b16 %v17
  %v114 = vunpack.c.l.b16 %v18
  %v115 = vunpack.c.l.b16 %v19
  %v116 = vunpack.c.l.b16 %v20
  %v117 = vunpack.c.l.b16 %v21
  %v118 = vunpack.c.l.b16 %v22
  %v119 = vunpack.c.l.b16 %v23
  %v120 = vunpack.c.l.b16 %v24
  %v121 = vunpack.c.l.b16 %v25
  %v122 = vunpack.c.l.b16 %v26
  %v123 = vunpack.c.l.b16 %v27
  %v124 = vunpack.c.l.b16 %v28
  %v125 = vunpack.c.l.b16 %v29
  %v126 = vunpack.c.l.b16 %v30
  %v127 = vunpack.c.l.b16 %v31
  %v128 = vunpack.c.l.b16 %v32
  %v129 = vunpack.c.l.b16 %v33
  %v130 = vunpack.c.l.b16 %v34
  %v131 = vunpack.c.l.b16 %v35
  %v132 = vunpack.c.l.b16 %v36
  %v133 = vunpack.c.l.b16 %v37
  %v134 = vunpack.c.l.b16 %v38
  %v135 = vunpack.c.l.b16 %v39
  %v136 = vunpack.c.l.b16 %v40
  %v137 = vunpack.c.l.b16 %v41
  %v138 = vunpack.c.l.b16 %v42
  %v139 = vunpack.c.l.b16 %v43
  %v140 = vunpack.c.l.b16 %v44
  %v141 = vunpack.c.l.b16 %v45
  %v142 = vunpack.c.l.b16 %v46
  %v143 = vunpack.c.l.b16 %v47
  %v144 = vpack.c.b16 %v113, %v112
  %v145 = vpack.c.b16 %v115, %v114
  %v146 = vpack.c.b16 %v117, %v116
  %v147 = vpack.c.b16 %v119, %v118
  %v148 = vpack.c.b16 %v121, %v120
  %v149 = vpack.c.b16 %v123, %v122
  %v150 = vpack.c.b16 %v125, %v124
  %v151 = vpack.c.b16 %v127, %v126
  %v152 = vpack.c.b16 %v129, %v128
  %v153 = vpack.c.b16 %v131, %v130
  %v154 = vpack.c.b16 %v133, %v132
  %v155 = vpack.c.b16 %v135, %v134
  %v156 = vpack.c.b16 %v137, %v136
  %v157 = vpack.c.b16 %v139, %v138
  %v158 = vpack.c.b16 %v141, %v140
  %v159 = vpack.c.b16 %v143, %v142
  %176 = vmatprep.subr.bf16.mxu0 0
  %177 = vmatpush1.bf16.msra.mxu0 %v144
  %178 = vmatprep.subr.bf16.mxu0 0
  %179 = vmatpush1.bf16.msra.mxu0 %v145
  %180 = vmatprep.subr.bf16.mxu0 0
  %181 = vmatpush1.bf16.msra.mxu0 %v146
  %182 = vmatprep.subr.bf16.mxu0 0
  %183 = vmatpush1.bf16.msra.mxu0 %v147
  %184 = vmatprep.subr.bf16.mxu0 0
  %185 = vmatpush1.bf16.msra.mxu0 %v148
  %186 = vmatprep.subr.bf16.mxu0 0
  %187 = vmatpush1.bf16.msra.mxu0 %v149
  %188 = vmatprep.subr.bf16.mxu0 0
  %189 = vmatpush1.bf16.msra.mxu0 %v150
  %190 = vmatprep.subr.bf16.mxu0 0
  %191 = vmatpush1.bf16.msra.mxu0 %v151
  %192 = vmatprep.subr.bf16.mxu0 0
  %193 = vmatpush1.bf16.msra.mxu0 %v152
  %194 = vmatprep.subr.bf16.mxu0 0
  %195 = vmatpush1.bf16.msra.mxu0 %v153
  %196 = vmatprep.subr.bf16.mxu0 0
  %197 = vmatpush1.bf16.msra.mxu0 %v154
  %198 = vmatprep.subr.bf16.mxu0 0
  %199 = vmatpush1.bf16.msra.mxu0 %v155
  %200 = vmatprep.subr.bf16.mxu0 0
  %201 = vmatpush1.bf16.msra.mxu0 %v156
  %202 = vmatprep.subr.bf16.mxu0 0
  %203 = vmatpush1.bf16.msra.mxu0 %v157
  %204 = vmatprep.subr.bf16.mxu0 0
  %205 = vmatpush1.bf16.msra.mxu0 %v158
  %206 = vmatprep.subr.bf16.mxu0 0
  %207 = vmatpush1.bf16.msra.mxu0 %v159
  %208 = vmatprep.mubr.bf16.mxu0 %v77
  %209 = vmatmul.mubr.bf16.gmra.mrb[0].mxu0 %v70
  %v210 = vpop.f32.mrb[0].mxu0
  %v211 = vadd.f32 %v53, %v210
  %v212 = vpop.f32.mrb[0].mxu0
  %v213 = vpop.f32.mrb[0].mxu0
  %v214 = vpop.f32.mrb[0].mxu0
  %215 = vdwg.mxu0
  %v216 = vmax.f32 %v211, 0.0
  %v217 = vpack.c.bf16 %v216, %v216
  %218 = vst [vmem:[%s3] sm:$0x1] %v217
  // Predicated region
  $region14: #{closed_call.85} parent=0 // pred_check
    _
  $region15: #{closed_call.85} parent=0 // pred_check_branch
    %220 = sbr.rel (0) target = $region17
  $region16: #{closed_call.85} parent=0 // pred_region
    _
  $region17: #{closed_call.85} parent=0 // pred_fallthru
    _
  // Predicated region
  $region18: #{closed_call.85} parent=0 // pred_check
    _
  $region19: #{closed_call.85} parent=0 // pred_check_branch
    %222 = sbr.rel (0) target = $region21
  $region20: #{closed_call.85} parent=0 // pred_region
    _
  $region21: #{closed_call.85} parent=0 // pred_fallthru
    _

// kernel: resnet152fc_forward.34
$region0: #{resnet152fc_forward.34}
  #allocation0 [shape = 'u32[]', space=smem, size = 0x4, offset = 0x4, fixed_abs, tag = 'smem constant byte address 0x4 - core index']
  #allocation1 [shape = 'u32[144,128]{1,0:T(1,128)}', space=vmem, size = 0x12000, scoped, tag = 'internal scratch']
  %s0 = inlined_call_operand.vmem [shape: bf16[2,1152], index: 0, kind: input, shape index: {}]
  %s1 = inlined_call_operand.vmem [shape: bf16[1152,128], index: 1, kind: input, shape index: {}]
  %s2 = inlined_call_operand.vmem [shape: f32[1,128], index: 2, kind: input, shape index: {}]
  %s3 = inlined_call_operand.vmem [shape: bf16[2,128], index: 3, kind: output, shape index: {}]
  %s4 = sld [smem:[#allocation0]]
  $region22: #{resnet152fc_forward.34} parent=0
    _
  %s6 = ssub.s32 1, %s4
  %s7 = scalar_select 0, %s6, %s4
  // Predicated region
  $region2: #{resnet152fc_forward.34} parent=0 // pred_check
    _
  $region3: #{resnet152fc_forward.34} parent=0 // pred_check_branch
    %9 = sbr.rel (0) target = $region5
  $region4: #{resnet152fc_forward.34} parent=0 // pred_region
    _
  $region5: #{resnet152fc_forward.34} parent=0 // pred_fallthru
    _
  // Predicated region
  $region6: #{resnet152fc_forward.34} parent=0 // pred_check
    _
  $region7: #{resnet152fc_forward.34} parent=0 // pred_check_branch
    %11 = sbr.rel (0) target = $region9
  $region8: #{resnet152fc_forward.34} parent=0 // pred_region
    _
  $region9: #{resnet152fc_forward.34} parent=0 // pred_fallthru
    _
  // Predicated region
  $region10: #{resnet152fc_forward.34} parent=0 // pred_check
    _
  $region11: #{resnet152fc_forward.34} parent=0 // pred_check_branch
    %13 = sbr.rel (0) target = $region13
  $region12: #{resnet152fc_forward.34} parent=0 // pred_region
    _
  $region13: #{resnet152fc_forward.34} parent=0 // pred_fallthru
    _
  %v15 = vld [vmem:[%s0] sm:$0xff]
  %v16 = vld [vmem:[%s0 + $0x8] sm:$0x1]
  %v17 = vld [vmem:[%s1] sm:$0xf]
  %v18 = vld [vmem:[%s1 + $0x4] sm:$0xf]
  %v19 = vld [vmem:[%s1 + $0x8] sm:$0xf]
  %v20 = vld [vmem:[%s1 + $0xc] sm:$0xf]
  %v21 = vld [vmem:[%s1 + $0x10] sm:$0xf]
  %v22 = vld [vmem:[%s1 + $0x14] sm:$0xf]
  %v23 = vld [vmem:[%s1 + $0x18] sm:$0xf]
  %v24 = vld [vmem:[%s1 + $0x1c] sm:$0xf]
  %v25 = vld [vmem:[%s1 + $0x20] sm:$0xf]
  %v26 = vld [vmem:[%s1 + $0x24] sm:$0xf]
  %v27 = vld [vmem:[%s1 + $0x28] sm:$0xf]
  %v28 = vld [vmem:[%s1 + $0x2c] sm:$0xf]
  %v29 = vld [vmem:[%s1 + $0x30] sm:$0xf]
  %v30 = vld [vmem:[%s1 + $0x34] sm:$0xf]
  %v31 = vld [vmem:[%s1 + $0x38] sm:$0xf]
  %v32 = vld [vmem:[%s1 + $0x3c] sm:$0xf]
  %v33 = vld [vmem:[%s1 + $0x40] sm:$0xf]
  %v34 = vld [vmem:[%s1 + $0x44] sm:$0xf]
  %v35 = vld [vmem:[%s1 + $0x48] sm:$0xf]
  %v36 = vld [vmem:[%s1 + $0x4c] sm:$0xf]
  %v37 = vld [vmem:[%s1 + $0x50] sm:$0xf]
  %v38 = vld [vmem:[%s1 + $0x54] sm:$0xf]
  %v39 = vld [vmem:[%s1 + $0x58] sm:$0xf]
  %v40 = vld [vmem:[%s1 + $0x5c] sm:$0xf]
  %v41 = vld [vmem:[%s1 + $0x60] sm:$0xf]
  %v42 = vld [vmem:[%s1 + $0x64] sm:$0xf]
  %v43 = vld [vmem:[%s1 + $0x68] sm:$0xf]
  %v44 = vld [vmem:[%s1 + $0x6c] sm:$0xf]
  %v45 = vld [vmem:[%s1 + $0x70] sm:$0xf]
  %v46 = vld [vmem:[%s1 + $0x74] sm:$0xf]
  %v47 = vld [vmem:[%s1 + $0x78] sm:$0xf]
  %v48 = vld [vmem:[%s1 + $0x7c] sm:$0xf]
  %v49 = vld [vmem:[%s1 + $0x80] sm:$0xf]
  %v50 = vld [vmem:[%s1 + $0x84] sm:$0xf]
  %v51 = vld [vmem:[%s1 + $0x88] sm:$0xf]
  %v52 = vld [vmem:[%s1 + $0x8c] sm:$0xf]
  %v53 = vld [vmem:[%s1 + $0x90] sm:$0xf]
  %v54 = vld [vmem:[%s1 + $0x94] sm:$0xf]
  %v55 = vld [vmem:[%s1 + $0x98] sm:$0xf]
  %v56 = vld [vmem:[%s1 + $0x9c] sm:$0xf]
  %v57 = vld [vmem:[%s1 + $0xa0] sm:$0xf]
  %v58 = vld [vmem:[%s1 + $0xa4] sm:$0xf]
  %v59 = vld [vmem:[%s1 + $0xa8] sm:$0xf]
  %v60 = vld [vmem:[%s1 + $0xac] sm:$0xf]
  %v61 = vld [vmem:[%s1 + $0xb0] sm:$0xf]
  %v62 = vld [vmem:[%s1 + $0xb4] sm:$0xf]
  %v63 = vld [vmem:[%s1 + $0xb8] sm:$0xf]
  %v64 = vld [vmem:[%s1 + $0xbc] sm:$0xf]
  %v65 = vld [vmem:[%s1 + $0xc0] sm:$0xf]
  %v66 = vld [vmem:[%s1 + $0xc4] sm:$0xf]
  %v67 = vld [vmem:[%s1 + $0xc8] sm:$0xf]
  %v68 = vld [vmem:[%s1 + $0xcc] sm:$0xf]
  %v69 = vld [vmem:[%s1 + $0xd0] sm:$0xf]
  %v70 = vld [vmem:[%s1 + $0xd4] sm:$0xf]
  %v71 = vld [vmem:[%s1 + $0xd8] sm:$0xf]
  %v72 = vld [vmem:[%s1 + $0xdc] sm:$0xf]
  %v73 = vld [vmem:[%s1 + $0xe0] sm:$0xf]
  %v74 = vld [vmem:[%s1 + $0xe4] sm:$0xf]
  %v75 = vld [vmem:[%s1 + $0xe8] sm:$0xf]
  %v76 = vld [vmem:[%s1 + $0xec] sm:$0xf]
  %v77 = vld [vmem:[%s1 + $0xf0] sm:$0xf]
  %v78 = vld [vmem:[%s1 + $0xf4] sm:$0xf]
  %v79 = vld [vmem:[%s1 + $0xf8] sm:$0xf]
  %v80 = vld [vmem:[%s1 + $0xfc] sm:$0xf]
  %v81 = vld [vmem:[%s1 + $0x100] sm:$0xf]
  %v82 = vld [vmem:[%s1 + $0x104] sm:$0xf]
  %v83 = vld [vmem:[%s1 + $0x108] sm:$0xf]
  %v84 = vld [vmem:[%s1 + $0x10c] sm:$0xf]
  %v85 = vld [vmem:[%s1 + $0x110] sm:$0xf]
  %v86 = vld [vmem:[%s1 + $0x114] sm:$0xf]
  %v87 = vld [vmem:[%s1 + $0x118] sm:$0xf]
  %v88 = vld [vmem:[%s1 + $0x11c] sm:$0xf]
  %v89 = vld [vmem:[%s1 + $0x120] sm:$0xf]
  %v90 = vld [vmem:[%s1 + $0x124] sm:$0xf]
  %v91 = vld [vmem:[%s1 + $0x128] sm:$0xf]
  %v92 = vld [vmem:[%s1 + $0x12c] sm:$0xf]
  %v93 = vld [vmem:[%s1 + $0x130] sm:$0xf]
  %v94 = vld [vmem:[%s1 + $0x134] sm:$0xf]
  %v95 = vld [vmem:[%s1 + $0x138] sm:$0xf]
  %v96 = vld [vmem:[%s1 + $0x13c] sm:$0xf]
  %v97 = vld [vmem:[%s1 + $0x140] sm:$0xf]
  %v98 = vld [vmem:[%s1 + $0x144] sm:$0xf]
  %v99 = vld [vmem:[%s1 + $0x148] sm:$0xf]
  %v100 = vld [vmem:[%s1 + $0x14c] sm:$0xf]
  %v101 = vld [vmem:[%s1 + $0x150] sm:$0xf]
  %v102 = vld [vmem:[%s1 + $0x154] sm:$0xf]
  %v103 = vld [vmem:[%s1 + $0x158] sm:$0xf]
  %v104 = vld [vmem:[%s1 + $0x15c] sm:$0xf]
  %v105 = vld [vmem:[%s1 + $0x160] sm:$0xf]
  %v106 = vld [vmem:[%s1 + $0x164] sm:$0xf]
  %v107 = vld [vmem:[%s1 + $0x168] sm:$0xf]
  %v108 = vld [vmem:[%s1 + $0x16c] sm:$0xf]
  %v109 = vld [vmem:[%s1 + $0x170] sm:$0xf]
  %v110 = vld [vmem:[%s1 + $0x174] sm:$0xf]
  %v111 = vld [vmem:[%s1 + $0x178] sm:$0xf]
  %v112 = vld [vmem:[%s1 + $0x17c] sm:$0xf]
  %v113 = vld [vmem:[%s1 + $0x180] sm:$0xf]
  %v114 = vld [vmem:[%s1 + $0x184] sm:$0xf]
  %v115 = vld [vmem:[%s1 + $0x188] sm:$0xf]
  %v116 = vld [vmem:[%s1 + $0x18c] sm:$0xf]
  %v117 = vld [vmem:[%s1 + $0x190] sm:$0xf]
  %v118 = vld [vmem:[%s1 + $0x194] sm:$0xf]
  %v119 = vld [vmem:[%s1 + $0x198] sm:$0xf]
  %v120 = vld [vmem:[%s1 + $0x19c] sm:$0xf]
  %v121 = vld [vmem:[%s1 + $0x1a0] sm:$0xf]
  %v122 = vld [vmem:[%s1 + $0x1a4] sm:$0xf]
  %v123 = vld [vmem:[%s1 + $0x1a8] sm:$0xf]
  %v124 = vld [vmem:[%s1 + $0x1ac] sm:$0xf]
  %v125 = vld [vmem:[%s1 + $0x1b0] sm:$0xf]
  %v126 = vld [vmem:[%s1 + $0x1b4] sm:$0xf]
  %v127 = vld [vmem:[%s1 + $0x1b8] sm:$0xf]
  %v128 = vld [vmem:[%s1 + $0x1bc] sm:$0xf]
  %v129 = vld [vmem:[%s1 + $0x1c0] sm:$0xf]
  %v130 = vld [vmem:[%s1 + $0x1c4] sm:$0xf]
  %v131 = vld [vmem:[%s1 + $0x1c8] sm:$0xf]
  %v132 = vld [vmem:[%s1 + $0x1cc] sm:$0xf]
  %v133 = vld [vmem:[%s1 + $0x1d0] sm:$0xf]
  %v134 = vld [vmem:[%s1 + $0x1d4] sm:$0xf]
  %v135 = vld [vmem:[%s1 + $0x1d8] sm:$0xf]
  %v136 = vld [vmem:[%s1 + $0x1dc] sm:$0xf]
  %v137 = vld [vmem:[%s1 + $0x1e0] sm:$0xf]
  %v138 = vld [vmem:[%s1 + $0x1e4] sm:$0xf]
  %v139 = vld [vmem:[%s1 + $0x1e8] sm:$0xf]
  %v140 = vld [vmem:[%s1 + $0x1ec] sm:$0xf]
  %v141 = vld [vmem:[%s1 + $0x1f0] sm:$0xf]
  %v142 = vld [vmem:[%s1 + $0x1f4] sm:$0xf]
  %v143 = vld [vmem:[%s1 + $0x1f8] sm:$0xf]
  %v144 = vld [vmem:[%s1 + $0x1fc] sm:$0xf]
  %v145 = vld [vmem:[%s1 + $0x200] sm:$0xf]
  %v146 = vld [vmem:[%s1 + $0x204] sm:$0xf]
  %v147 = vld [vmem:[%s1 + $0x208] sm:$0xf]
  %v148 = vld [vmem:[%s1 + $0x20c] sm:$0xf]
  %v149 = vld [vmem:[%s1 + $0x210] sm:$0xf]
  %v150 = vld [vmem:[%s1 + $0x214] sm:$0xf]
  %v151 = vld [vmem:[%s1 + $0x218] sm:$0xf]
  %v152 = vld [vmem:[%s1 + $0x21c] sm:$0xf]
  %v153 = vld [vmem:[%s1 + $0x220] sm:$0xf]
  %v154 = vld [vmem:[%s1 + $0x224] sm:$0xf]
  %v155 = vld [vmem:[%s1 + $0x228] sm:$0xf]
  %v156 = vld [vmem:[%s1 + $0x22c] sm:$0xf]
  %v157 = vld [vmem:[%s1 + $0x230] sm:$0xf]
  %v158 = vld [vmem:[%s1 + $0x234] sm:$0xf]
  %v159 = vld [vmem:[%s1 + $0x238] sm:$0xf]
  %v160 = vld [vmem:[%s1 + $0x23c] sm:$0xf]
  %v161 = vld [vmem:[%s2] sm:$0x1]
  %v163 = vlaneseq
  %v164 = vshrl.u32 %v163, 7
  %v165 = vsub.s32 0, %v164
  %v166 = vrot.slane %v161, %v165
  %v170 = vcombine.high %v15, %v15
  %v172 = vunpack.c.l.s4 1966171168
  %v173 = vunpack.c.0.s8 %v172
  %v174 = vlaneseq
  %v175 = vshrl.u32 %v174, 7
  %v176 = vsub.s32 %v173, %v175
  %v177 = vrot.slane %v15, %v176
  %v179 = vunpack.c.l.s4 1966171168
  %v180 = vunpack.c.0.s8 %v179
  %v181 = vlaneseq
  %v182 = vshrl.u32 %v181, 7
  %v183 = vsub.s32 %v180, %v182
  %v184 = vrot.slane %v170, %v183
  %v185 = vcombine.high %v177, %v177
  %v186 = vcombine.high %v184, %v184
  %v188 = vunpack.c.l.s4 1966171168
  %v189 = vunpack.c.0.s8 %v188
  %v190 = vlaneseq
  %v191 = vshrl.u32 %v190, 7
  %v192 = vsub.s32 %v189, %v191
  %v193 = vrot.slane %v177, %v192
  %v195 = vunpack.c.l.s4 1966171168
  %v196 = vunpack.c.0.s8 %v195
  %v197 = vlaneseq
  %v198 = vshrl.u32 %v197, 7
  %v199 = vsub.s32 %v196, %v198
  %v200 = vrot.slane %v184, %v199
  %v202 = vunpack.c.l.s4 1966171168
  %v203 = vunpack.c.0.s8 %v202
  %v204 = vlaneseq
  %v205 = vshrl.u32 %v204, 7
  %v206 = vsub.s32 %v203, %v205
  %v207 = vrot.slane %v185, %v206
  %v209 = vunpack.c.l.s4 1966171168
  %v210 = vunpack.c.0.s8 %v209
  %v211 = vlaneseq
  %v212 = vshrl.u32 %v211, 7
  %v213 = vsub.s32 %v210, %v212
  %v214 = vrot.slane %v186, %v213
  %v215 = vcombine.high %v193, %v193
  %v216 = vcombine.high %v200, %v200
  %v217 = vcombine.high %v207, %v207
  %v218 = vcombine.high %v214, %v214
  %v220 = vunpack.c.l.s4 1966171168
  %v221 = vunpack.c.0.s8 %v220
  %v222 = vlaneseq
  %v223 = vshrl.u32 %v222, 7
  %v224 = vsub.s32 %v221, %v223
  %v225 = vrot.slane %v16, %v224
  %v227 = vunpack.c.l.s4 1966171168
  %v228 = vunpack.c.0.s8 %v227
  %v229 = vlaneseq
  %v230 = vshrl.u32 %v229, 7
  %v231 = vsub.s32 %v228, %v230
  %v232 = vrot.slane %v225, %v231
  %v386 = vunpack.c.l.b16 %v17
  %v387 = vunpack.c.l.b16 %v18
  %v388 = vunpack.c.l.b16 %v19
  %v389 = vunpack.c.l.b16 %v20
  %v390 = vunpack.c.l.b16 %v21
  %v391 = vunpack.c.l.b16 %v22
  %v392 = vunpack.c.l.b16 %v23
  %v393 = vunpack.c.l.b16 %v24
  %v394 = vunpack.c.l.b16 %v25
  %v395 = vunpack.c.l.b16 %v26
  %v396 = vunpack.c.l.b16 %v27
  %v397 = vunpack.c.l.b16 %v28
  %v398 = vunpack.c.l.b16 %v29
  %v399 = vunpack.c.l.b16 %v30
  %v400 = vunpack.c.l.b16 %v31
  %v401 = vunpack.c.l.b16 %v32
  %v402 = vunpack.c.l.b16 %v33
  %v403 = vunpack.c.l.b16 %v34
  %v404 = vunpack.c.l.b16 %v35
  %v405 = vunpack.c.l.b16 %v36
  %v406 = vunpack.c.l.b16 %v37
  %v407 = vunpack.c.l.b16 %v38
  %v408 = vunpack.c.l.b16 %v39
  %v409 = vunpack.c.l.b16 %v40
  %v410 = vunpack.c.l.b16 %v41
  %v411 = vunpack.c.l.b16 %v42
  %v412 = vunpack.c.l.b16 %v43
  %v413 = vunpack.c.l.b16 %v44
  %v414 = vunpack.c.l.b16 %v45
  %v415 = vunpack.c.l.b16 %v46
  %v416 = vunpack.c.l.b16 %v47
  %v417 = vunpack.c.l.b16 %v48
  %v418 = vunpack.c.l.b16 %v49
  %v419 = vunpack.c.l.b16 %v50
  %v420 = vunpack.c.l.b16 %v51
  %v421 = vunpack.c.l.b16 %v52
  %v422 = vunpack.c.l.b16 %v53
  %v423 = vunpack.c.l.b16 %v54
  %v424 = vunpack.c.l.b16 %v55
  %v425 = vunpack.c.l.b16 %v56
  %v426 = vunpack.c.l.b16 %v57
  %v427 = vunpack.c.l.b16 %v58
  %v428 = vunpack.c.l.b16 %v59
  %v429 = vunpack.c.l.b16 %v60
  %v430 = vunpack.c.l.b16 %v61
  %v431 = vunpack.c.l.b16 %v62
  %v432 = vunpack.c.l.b16 %v63
  %v433 = vunpack.c.l.b16 %v64
  %v434 = vunpack.c.l.b16 %v65
  %v435 = vunpack.c.l.b16 %v66
  %v436 = vunpack.c.l.b16 %v67
  %v437 = vunpack.c.l.b16 %v68
  %v438 = vunpack.c.l.b16 %v69
  %v439 = vunpack.c.l.b16 %v70
  %v440 = vunpack.c.l.b16 %v71
  %v441 = vunpack.c.l.b16 %v72
  %v442 = vunpack.c.l.b16 %v73
  %v443 = vunpack.c.l.b16 %v74
  %v444 = vunpack.c.l.b16 %v75
  %v445 = vunpack.c.l.b16 %v76
  %v446 = vunpack.c.l.b16 %v77
  %v447 = vunpack.c.l.b16 %v78
  %v448 = vunpack.c.l.b16 %v79
  %v449 = vunpack.c.l.b16 %v80
  %v450 = vunpack.c.l.b16 %v81
  %v451 = vunpack.c.l.b16 %v82
  %v452 = vunpack.c.l.b16 %v83
  %v453 = vunpack.c.l.b16 %v84
  %v454 = vunpack.c.l.b16 %v85
  %v455 = vunpack.c.l.b16 %v86
  %v456 = vunpack.c.l.b16 %v87
  %v457 = vunpack.c.l.b16 %v88
  %v458 = vunpack.c.l.b16 %v89
  %v459 = vunpack.c.l.b16 %v90
  %v460 = vunpack.c.l.b16 %v91
  %v461 = vunpack.c.l.b16 %v92
  %v462 = vunpack.c.l.b16 %v93
  %v463 = vunpack.c.l.b16 %v94
  %v464 = vunpack.c.l.b16 %v95
  %v465 = vunpack.c.l.b16 %v96
  %v466 = vunpack.c.l.b16 %v97
  %v467 = vunpack.c.l.b16 %v98
  %v468 = vunpack.c.l.b16 %v99
  %v469 = vunpack.c.l.b16 %v100
  %v470 = vunpack.c.l.b16 %v101
  %v471 = vunpack.c.l.b16 %v102
  %v472 = vunpack.c.l.b16 %v103
  %v473 = vunpack.c.l.b16 %v104
  %v474 = vunpack.c.l.b16 %v105
  %v475 = vunpack.c.l.b16 %v106
  %v476 = vunpack.c.l.b16 %v107
  %v477 = vunpack.c.l.b16 %v108
  %v478 = vunpack.c.l.b16 %v109
  %v479 = vunpack.c.l.b16 %v110
  %v480 = vunpack.c.l.b16 %v111
  %v481 = vunpack.c.l.b16 %v112
  %v482 = vunpack.c.l.b16 %v113
  %v483 = vunpack.c.l.b16 %v114
  %v484 = vunpack.c.l.b16 %v115
  %v485 = vunpack.c.l.b16 %v116
  %v486 = vunpack.c.l.b16 %v117
  %v487 = vunpack.c.l.b16 %v118
  %v488 = vunpack.c.l.b16 %v119
  %v489 = vunpack.c.l.b16 %v120
  %v490 = vunpack.c.l.b16 %v121
  %v491 = vunpack.c.l.b16 %v122
  %v492 = vunpack.c.l.b16 %v123
  %v493 = vunpack.c.l.b16 %v124
  %v494 = vunpack.c.l.b16 %v125
  %v495 = vunpack.c.l.b16 %v126
  %v496 = vunpack.c.l.b16 %v127
  %v497 = vunpack.c.l.b16 %v128
  %v498 = vunpack.c.l.b16 %v129
  %v499 = vunpack.c.l.b16 %v130
  %v500 = vunpack.c.l.b16 %v131
  %v501 = vunpack.c.l.b16 %v132
  %v502 = vunpack.c.l.b16 %v133
  %v503 = vunpack.c.l.b16 %v134
  %v504 = vunpack.c.l.b16 %v135
  %v505 = vunpack.c.l.b16 %v136
  %v506 = vunpack.c.l.b16 %v137
  %v507 = vunpack.c.l.b16 %v138
  %v508 = vunpack.c.l.b16 %v139
  %v509 = vunpack.c.l.b16 %v140
  %v510 = vunpack.c.l.b16 %v141
  %v511 = vunpack.c.l.b16 %v142
  %v512 = vunpack.c.l.b16 %v143
  %v513 = vunpack.c.l.b16 %v144
  %v514 = vunpack.c.l.b16 %v145
  %v515 = vunpack.c.l.b16 %v146
  %v516 = vunpack.c.l.b16 %v147
  %v517 = vunpack.c.l.b16 %v148
  %v518 = vunpack.c.l.b16 %v149
  %v519 = vunpack.c.l.b16 %v150
  %v520 = vunpack.c.l.b16 %v151
  %v521 = vunpack.c.l.b16 %v152
  %v522 = vunpack.c.l.b16 %v153
  %v523 = vunpack.c.l.b16 %v154
  %v524 = vunpack.c.l.b16 %v155
  %v525 = vunpack.c.l.b16 %v156
  %v526 = vunpack.c.l.b16 %v157
  %v527 = vunpack.c.l.b16 %v158
  %v528 = vunpack.c.l.b16 %v159
  %v529 = vunpack.c.l.b16 %v160
  %v530 = vpack.c.b16 %v387, %v386
  %v531 = vpack.c.b16 %v389, %v388
  %v532 = vpack.c.b16 %v391, %v390
  %v533 = vpack.c.b16 %v393, %v392
  %v534 = vpack.c.b16 %v395, %v394
  %v535 = vpack.c.b16 %v397, %v396
  %v536 = vpack.c.b16 %v399, %v398
  %v537 = vpack.c.b16 %v401, %v400
  %v538 = vpack.c.b16 %v403, %v402
  %v539 = vpack.c.b16 %v405, %v404
  %v540 = vpack.c.b16 %v407, %v406
  %v541 = vpack.c.b16 %v409, %v408
  %v542 = vpack.c.b16 %v411, %v410
  %v543 = vpack.c.b16 %v413, %v412
  %v544 = vpack.c.b16 %v415, %v414
  %v545 = vpack.c.b16 %v417, %v416
  %v546 = vpack.c.b16 %v419, %v418
  %v547 = vpack.c.b16 %v421, %v420
  %v548 = vpack.c.b16 %v423, %v422
  %v549 = vpack.c.b16 %v425, %v424
  %v550 = vpack.c.b16 %v427, %v426
  %v551 = vpack.c.b16 %v429, %v428
  %v552 = vpack.c.b16 %v431, %v430
  %v553 = vpack.c.b16 %v433, %v432
  %v554 = vpack.c.b16 %v435, %v434
  %v555 = vpack.c.b16 %v437, %v436
  %v556 = vpack.c.b16 %v439, %v438
  %v557 = vpack.c.b16 %v441, %v440
  %v558 = vpack.c.b16 %v443, %v442
  %v559 = vpack.c.b16 %v445, %v444
  %v560 = vpack.c.b16 %v447, %v446
  %v561 = vpack.c.b16 %v449, %v448
  %v562 = vpack.c.b16 %v451, %v450
  %v563 = vpack.c.b16 %v453, %v452
  %v564 = vpack.c.b16 %v455, %v454
  %v565 = vpack.c.b16 %v457, %v456
  %v566 = vpack.c.b16 %v459, %v458
  %v567 = vpack.c.b16 %v461, %v460
  %v568 = vpack.c.b16 %v463, %v462
  %v569 = vpack.c.b16 %v465, %v464
  %v570 = vpack.c.b16 %v467, %v466
  %v571 = vpack.c.b16 %v469, %v468
  %v572 = vpack.c.b16 %v471, %v470
  %v573 = vpack.c.b16 %v473, %v472
  %v574 = vpack.c.b16 %v475, %v474
  %v575 = vpack.c.b16 %v477, %v476
  %v576 = vpack.c.b16 %v479, %v478
  %v577 = vpack.c.b16 %v481, %v480
  %v578 = vpack.c.b16 %v483, %v482
  %v579 = vpack.c.b16 %v485, %v484
  %v580 = vpack.c.b16 %v487, %v486
  %v581 = vpack.c.b16 %v489, %v488
  %v582 = vpack.c.b16 %v491, %v490
  %v583 = vpack.c.b16 %v493, %v492
  %v584 = vpack.c.b16 %v495, %v494
  %v585 = vpack.c.b16 %v497, %v496
  %v586 = vpack.c.b16 %v499, %v498
  %v587 = vpack.c.b16 %v501, %v500
  %v588 = vpack.c.b16 %v503, %v502
  %v589 = vpack.c.b16 %v505, %v504
  %v590 = vpack.c.b16 %v507, %v506
  %v591 = vpack.c.b16 %v509, %v508
  %v592 = vpack.c.b16 %v511, %v510
  %v593 = vpack.c.b16 %v513, %v512
  %v594 = vpack.c.b16 %v515, %v514
  %v595 = vpack.c.b16 %v517, %v516
  %v596 = vpack.c.b16 %v519, %v518
  %v597 = vpack.c.b16 %v521, %v520
  %v598 = vpack.c.b16 %v523, %v522
  %v599 = vpack.c.b16 %v525, %v524
  %v600 = vpack.c.b16 %v527, %v526
  %v601 = vpack.c.b16 %v529, %v528
  %674 = vmatprep.subr.bf16.mxu0 0
  %675 = vmatpush1.bf16.msra.mxu0 %v530
  %676 = vmatprep.subr.bf16.mxu0 0
  %677 = vmatpush1.bf16.msra.mxu0 %v531
  %678 = vmatprep.subr.bf16.mxu0 0
  %679 = vmatpush1.bf16.msra.mxu0 %v532
  %680 = vmatprep.subr.bf16.mxu0 0
  %681 = vmatpush1.bf16.msra.mxu0 %v533
  %682 = vmatprep.subr.bf16.mxu0 0
  %683 = vmatpush1.bf16.msra.mxu0 %v534
  %684 = vmatprep.subr.bf16.mxu0 0
  %685 = vmatpush1.bf16.msra.mxu0 %v535
  %686 = vmatprep.subr.bf16.mxu0 0
  %687 = vmatpush1.bf16.msra.mxu0 %v536
  %688 = vmatprep.subr.bf16.mxu0 0
  %689 = vmatpush1.bf16.msra.mxu0 %v537
  %690 = vmatprep.subr.bf16.mxu0 0
  %691 = vmatpush1.bf16.msra.mxu0 %v538
  %692 = vmatprep.subr.bf16.mxu0 0
  %693 = vmatpush1.bf16.msra.mxu0 %v539
  %694 = vmatprep.subr.bf16.mxu0 0
  %695 = vmatpush1.bf16.msra.mxu0 %v540
  %696 = vmatprep.subr.bf16.mxu0 0
  %697 = vmatpush1.bf16.msra.mxu0 %v541
  %698 = vmatprep.subr.bf16.mxu0 0
  %699 = vmatpush1.bf16.msra.mxu0 %v542
  %700 = vmatprep.subr.bf16.mxu0 0
  %701 = vmatpush1.bf16.msra.mxu0 %v543
  %702 = vmatprep.subr.bf16.mxu0 0
  %703 = vmatpush1.bf16.msra.mxu0 %v544
  %704 = vmatprep.subr.bf16.mxu0 0
  %705 = vmatpush1.bf16.msra.mxu0 %v545
  %706 = vmatprep.mubr.bf16.mxu0 %v207
  %707 = vmatmul.mubr.bf16.gmra.mrb[0].mxu0 %v193
  %v708 = vpop.f32.mrb[0].mxu0
  %v709 = vadd.f32 %v166, %v708
  %v710 = vpop.f32.mrb[0].mxu0
  %v711 = vpop.f32.mrb[0].mxu0
  %v712 = vpop.f32.mrb[0].mxu0
  %713 = vdwg.mxu0
  %714 = vmatprep.subr.bf16.mxu0 0
  %715 = vmatpush1.bf16.msra.mxu0 %v546
  %716 = vmatprep.subr.bf16.mxu0 0
  %717 = vmatpush1.bf16.msra.mxu0 %v547
  %718 = vmatprep.subr.bf16.mxu0 0
  %719 = vmatpush1.bf16.msra.mxu0 %v548
  %720 = vmatprep.subr.bf16.mxu0 0
  %721 = vmatpush1.bf16.msra.mxu0 %v549
  %722 = vmatprep.subr.bf16.mxu0 0
  %723 = vmatpush1.bf16.msra.mxu0 %v550
  %724 = vmatprep.subr.bf16.mxu0 0
  %725 = vmatpush1.bf16.msra.mxu0 %v551
  %726 = vmatprep.subr.bf16.mxu0 0
  %727 = vmatpush1.bf16.msra.mxu0 %v552
  %728 = vmatprep.subr.bf16.mxu0 0
  %729 = vmatpush1.bf16.msra.mxu0 %v553
  %730 = vmatprep.subr.bf16.mxu0 0
  %731 = vmatpush1.bf16.msra.mxu0 %v554
  %732 = vmatprep.subr.bf16.mxu0 0
  %733 = vmatpush1.bf16.msra.mxu0 %v555
  %734 = vmatprep.subr.bf16.mxu0 0
  %735 = vmatpush1.bf16.msra.mxu0 %v556
  %736 = vmatprep.subr.bf16.mxu0 0
  %737 = vmatpush1.bf16.msra.mxu0 %v557
  %738 = vmatprep.subr.bf16.mxu0 0
  %739 = vmatpush1.bf16.msra.mxu0 %v558
  %740 = vmatprep.subr.bf16.mxu0 0
  %741 = vmatpush1.bf16.msra.mxu0 %v559
  %742 = vmatprep.subr.bf16.mxu0 0
  %743 = vmatpush1.bf16.msra.mxu0 %v560
  %744 = vmatprep.subr.bf16.mxu0 0
  %745 = vmatpush1.bf16.msra.mxu0 %v561
  %746 = vmatprep.mubr.bf16.mxu0 %v217
  %747 = vmatmul.mubr.bf16.gmra.mrb[0].mxu0 %v215
  %v748 = vpop.f32.mrb[0].mxu0
  %v749 = vadd.f32 %v709, %v748
  %v750 = vpop.f32.mrb[0].mxu0
  %v751 = vpop.f32.mrb[0].mxu0
  %v752 = vpop.f32.mrb[0].mxu0
  %753 = vdwg.mxu0
  %754 = vmatprep.subr.bf16.mxu0 0
  %755 = vmatpush1.bf16.msra.mxu0 %v562
  %756 = vmatprep.subr.bf16.mxu0 0
  %757 = vmatpush1.bf16.msra.mxu0 %v563
  %758 = vmatprep.subr.bf16.mxu0 0
  %759 = vmatpush1.bf16.msra.mxu0 %v564
  %760 = vmatprep.subr.bf16.mxu0 0
  %761 = vmatpush1.bf16.msra.mxu0 %v565
  %762 = vmatprep.subr.bf16.mxu0 0
  %763 = vmatpush1.bf16.msra.mxu0 %v566
  %764 = vmatprep.subr.bf16.mxu0 0
  %765 = vmatpush1.bf16.msra.mxu0 %v567
  %766 = vmatprep.subr.bf16.mxu0 0
  %767 = vmatpush1.bf16.msra.mxu0 %v568
  %768 = vmatprep.subr.bf16.mxu0 0
  %769 = vmatpush1.bf16.msra.mxu0 %v569
  %770 = vmatprep.subr.bf16.mxu0 0
  %771 = vmatpush1.bf16.msra.mxu0 %v570
  %772 = vmatprep.subr.bf16.mxu0 0
  %773 = vmatpush1.bf16.msra.mxu0 %v571
  %774 = vmatprep.subr.bf16.mxu0 0
  %775 = vmatpush1.bf16.msra.mxu0 %v572
  %776 = vmatprep.subr.bf16.mxu0 0
  %777 = vmatpush1.bf16.msra.mxu0 %v573
  %778 = vmatprep.subr.bf16.mxu0 0
  %779 = vmatpush1.bf16.msra.mxu0 %v574
  %780 = vmatprep.subr.bf16.mxu0 0
  %781 = vmatpush1.bf16.msra.mxu0 %v575
  %782 = vmatprep.subr.bf16.mxu0 0
  %783 = vmatpush1.bf16.msra.mxu0 %v576
  %784 = vmatprep.subr.bf16.mxu0 0
  %785 = vmatpush1.bf16.msra.mxu0 %v577
  %786 = vmatprep.mubr.bf16.mxu0 %v214
  %787 = vmatmul.mubr.bf16.gmra.mrb[0].mxu0 %v200
  %v788 = vpop.f32.mrb[0].mxu0
  %v789 = vadd.f32 %v749, %v788
  %v790 = vpop.f32.mrb[0].mxu0
  %v791 = vpop.f32.mrb[0].mxu0
  %v792 = vpop.f32.mrb[0].mxu0
  %793 = vdwg.mxu0
  %794 = vmatprep.subr.bf16.mxu0 0
  %795 = vmatpush1.bf16.msra.mxu0 %v578
  %796 = vmatprep.subr.bf16.mxu0 0
  %797 = vmatpush1.bf16.msra.mxu0 %v579
  %798 = vmatprep.subr.bf16.mxu0 0
  %799 = vmatpush1.bf16.msra.mxu0 %v580
  %800 = vmatprep.subr.bf16.mxu0 0
  %801 = vmatpush1.bf16.msra.mxu0 %v581
  %802 = vmatprep.subr.bf16.mxu0 0
  %803 = vmatpush1.bf16.msra.mxu0 %v582
  %804 = vmatprep.subr.bf16.mxu0 0
  %805 = vmatpush1.bf16.msra.mxu0 %v583
  %806 = vmatprep.subr.bf16.mxu0 0
  %807 = vmatpush1.bf16.msra.mxu0 %v584
  %808 = vmatprep.subr.bf16.mxu0 0
  %809 = vmatpush1.bf16.msra.mxu0 %v585
  %810 = vmatprep.subr.bf16.mxu0 0
  %811 = vmatpush1.bf16.msra.mxu0 %v586
  %812 = vmatprep.subr.bf16.mxu0 0
  %813 = vmatpush1.bf16.msra.mxu0 %v587
  %814 = vmatprep.subr.bf16.mxu0 0
  %815 = vmatpush1.bf16.msra.mxu0 %v588
  %816 = vmatprep.subr.bf16.mxu0 0
  %817 = vmatpush1.bf16.msra.mxu0 %v589
  %818 = vmatprep.subr.bf16.mxu0 0
  %819 = vmatpush1.bf16.msra.mxu0 %v590
  %820 = vmatprep.subr.bf16.mxu0 0
  %821 = vmatpush1.bf16.msra.mxu0 %v591
  %822 = vmatprep.subr.bf16.mxu0 0
  %823 = vmatpush1.bf16.msra.mxu0 %v592
  %824 = vmatprep.subr.bf16.mxu0 0
  %825 = vmatpush1.bf16.msra.mxu0 %v593
  %826 = vmatprep.mubr.bf16.mxu0 %v218
  %827 = vmatmul.mubr.bf16.gmra.mrb[0].mxu0 %v216
  %v828 = vpop.f32.mrb[0].mxu0
  %v829 = vadd.f32 %v789, %v828
  %v830 = vpop.f32.mrb[0].mxu0
  %v831 = vpop.f32.mrb[0].mxu0
  %v832 = vpop.f32.mrb[0].mxu0
  %833 = vdwg.mxu0
  %834 = vmatprep.subr.bf16.mxu0 0
  %835 = vmatpush1.bf16.msra.mxu0 %v594
  %836 = vmatprep.subr.bf16.mxu0 0
  %837 = vmatpush1.bf16.msra.mxu0 %v595
  %838 = vmatprep.subr.bf16.mxu0 0
  %839 = vmatpush1.bf16.msra.mxu0 %v596
  %840 = vmatprep.subr.bf16.mxu0 0
  %841 = vmatpush1.bf16.msra.mxu0 %v597
  %842 = vmatprep.subr.bf16.mxu0 0
  %843 = vmatpush1.bf16.msra.mxu0 %v598
  %844 = vmatprep.subr.bf16.mxu0 0
  %845 = vmatpush1.bf16.msra.mxu0 %v599
  %846 = vmatprep.subr.bf16.mxu0 0
  %847 = vmatpush1.bf16.msra.mxu0 %v600
  %848 = vmatprep.subr.bf16.mxu0 0
  %849 = vmatpush1.bf16.msra.mxu0 %v601
  %850 = vmatprep.subr.bf16.mxu0 0
  %851 = vmatpush1.bf16.msra.mxu0 0
  %852 = vmatprep.subr.bf16.mxu0 0
  %853 = vmatpush1.bf16.msra.mxu0 0
  %854 = vmatprep.subr.bf16.mxu0 0
  %855 = vmatpush1.bf16.msra.mxu0 0
  %856 = vmatprep.subr.bf16.mxu0 0
  %857 = vmatpush1.bf16.msra.mxu0 0
  %858 = vmatprep.subr.bf16.mxu0 0
  %859 = vmatpush1.bf16.msra.mxu0 0
  %860 = vmatprep.subr.bf16.mxu0 0
  %861 = vmatpush1.bf16.msra.mxu0 0
  %862 = vmatprep.subr.bf16.mxu0 0
  %863 = vmatpush1.bf16.msra.mxu0 0
  %864 = vmatprep.subr.bf16.mxu0 0
  %865 = vmatpush1.bf16.msra.mxu0 0
  %866 = vmatprep.mubr.bf16.mxu0 0
  %867 = vmatmul.mubr.bf16.gmra.mrb[0].mxu0 %v232
  %v868 = vpop.f32.mrb[0].mxu0
  %v869 = vadd.f32 %v829, %v868
  %v870 = vpop.f32.mrb[0].mxu0
  %v871 = vpop.f32.mrb[0].mxu0
  %v872 = vpop.f32.mrb[0].mxu0
  %873 = vdwg.mxu0
  %v874 = vmax.f32 %v869, 0.0
  %v875 = vpack.c.bf16 %v874, %v874
  %876 = vst [vmem:[%s3] sm:$0x1] %v875
  // Predicated region
  $region14: #{resnet152fc_forward.34} parent=0 // pred_check
    _
  $region15: #{resnet152fc_forward.34} parent=0 // pred_check_branch
    %878 = sbr.rel (0) target = $region17
  $region16: #{resnet152fc_forward.34} parent=0 // pred_region
    _
  $region17: #{resnet152fc_forward.34} parent=0 // pred_fallthru
    _
  // Predicated region
  $region18: #{resnet152fc_forward.34} parent=0 // pred_check
    _
  $region19: #{resnet152fc_forward.34} parent=0 // pred_check_branch
    %880 = sbr.rel (0) target = $region21
  $region20: #{resnet152fc_forward.34} parent=0 // pred_region
    _
  $region21: #{resnet152fc_forward.34} parent=0 // pred_fallthru
    _

// kernel: resnet152fc_forward.37
$region0: #{resnet152fc_forward.37}
  #allocation0 [shape = 'u32[]', space=smem, size = 0x4, offset = 0x4, fixed_abs, tag = 'smem constant byte address 0x4 - core index']
  #allocation1 [shape = 'u32[144,128]{1,0:T(1,128)}', space=vmem, size = 0x12000, scoped, tag = 'internal scratch']
  %s0 = inlined_call_operand.vmem [shape: bf16[2,1,256], index: 0, kind: input, shape index: {}]
  %s1 = inlined_call_operand.hbm [shape: f32[2,256], index: 1, kind: output, shape index: {}]
  %s2 = sld [smem:[#allocation0]]
  $region14: #{resnet152fc_forward.37} parent=0
    _
  %s4 = ssub.s32 1, %s2
  %s5 = scalar_select 0, %s4, %s2
  $region1: #{resnet152fc_forward.37} parent=0
    #allocation2 [shape = 'u8[2048]{0}', space=vmem, size = 0x800, scoped, tag = 'output window, operand 0, single buffered']
    #allocation3 [shape = 's32[1]{0}', space=sflag, size = 0x4, scoped, tag = 'scoped memory for resnet152fc_forward.37']
    %6 = vsyncpa [#allocation3], 0
    // Predicated region
    $region2: #{resnet152fc_forward.37} parent=1 // pred_check
      _
    $region3: #{resnet152fc_forward.37} parent=1 // pred_check_branch
      %8 = sbr.rel (0) target = $region5
    $region4: #{resnet152fc_forward.37} parent=1 // pred_region
      _
    $region5: #{resnet152fc_forward.37} parent=1 // pred_fallthru
      _
    %v9 = vld [vmem:[%s0] sm:$0x3]
    %v10 = vld [vmem:[%s0 + $0x2] sm:$0x3]
    %v11 = vunpack.c.l.bf16 %v9
    %v12 = vunpack.c.l.bf16 %v10
    %v13 = vadd.f32 %v11, 0.0
    %v14 = vadd.f32 %v12, 0.0
    %vm17 = vcmask 1044484
    %v18 = vsel %vm17, %v13, %v13
    %vm19 = vcmask 1046534
    %v20 = vsel %vm19, %v13, %v18
    %v21 = vrot.slane %v14, 7
    %vm22 = vcmask 1041409
    %v23 = vsel %vm22, %v21, %v20
    %vm24 = vcmask 1043459
    %v25 = vsel %vm24, %v21, %v23
    %vm26 = vcmask 1045509
    %v27 = vsel %vm26, %v21, %v25
    %vm28 = vcmask 1047559
    %v29 = vsel %vm28, %v21, %v27
    %31 = vst [vmem:[#allocation2] sm:$0xf] %v29
    // Predicated region
    $region6: #{resnet152fc_forward.37} parent=1 // pred_check
      _
    $region7: #{resnet152fc_forward.37} parent=1 // pred_check_branch
      %33 = sbr.rel (0) target = $region9
    $region8: #{resnet152fc_forward.37} parent=1 // pred_region
      %s35 = ssub.s32 64, 64
      %36 = vsyncadd [#allocation3], %s35
      %s38 = sshll.u32 [#allocation2], 4
      %s39 = int_to_ptr.vmem [resolvable:$true] %s38
      %41 = dma.vmem_to_hbm [thread:$0]  %s39, 64, %s1, [#allocation3]
    $region9: #{resnet152fc_forward.37} parent=1 // pred_fallthru
      _
    // Predicated region
    $region10: #{resnet152fc_forward.37} parent=1 // pred_check
      _
    $region11: #{resnet152fc_forward.37} parent=1 // pred_check_branch
      %43 = sbr.rel (0) target = $region13
    $region12: #{resnet152fc_forward.37} parent=1 // pred_region
      %44 = dma.done [#allocation3], 64
    $region13: #{resnet152fc_forward.37} parent=1 // pred_fallthru
      _
    %45 = vsyncpa [#allocation3], 1

</llo_original>
